<compile_context>
chip_gen: v5e
topology: v5e:2x2
jax: 0.10.0
libtpu: 0.0.40
codegen_flags: <defaults>
</compile_context>

<pallas_src>
import math

import jax
import jax.numpy as jnp
from jax.experimental import pallas as pl
from jax.experimental.pallas import tpu as pltpu

_N_STAGE_ARGS = 22


# ----------------------------------------------------------------------------
# In-kernel helpers.
# ----------------------------------------------------------------------------
def _ln_rows(y, gamma, beta, eps=1e-12):
    mu = jnp.mean(y, axis=-1, keepdims=True)
    var = jnp.mean((y - mu) ** 2, axis=-1, keepdims=True)
    return (y - mu) * jax.lax.rsqrt(var + eps) * gamma + beta


def _lgf_stage(cfg, B, txt_bf, kb, stage_refs, attn_ref, loc_ref, o_scr):
    """One LocalGlobalFusion stage in (C, B*N) channels-on-sublane layout."""
    (img_ref, qpos_ref, qb_ref, gate_ref,
     wkfc_ref, bkfc_ref, gk_ref, bkln_ref,
     wvfc_ref, bvfc_ref, gv_ref, bvln_ref,
     wq_ref, bq_ref, wk_ref, bk_ref, wv_ref, bv_ref,
     wo_ref, bo_ref, wlc_ref, blc_ref) = stage_refs
    C, N, nhead = cfg
    hd = C // nhead
    scale = 1.0 / math.sqrt(hd)
    f32, bf16 = jnp.float32, jnp.bfloat16

    # (C, B*N): channels on sublanes, column index = b*N + n.
    img_slabs = [img_ref[b] for b in range(B)]                       # B x (C, N) f32
    img_t = jnp.concatenate(img_slabs, axis=-1)                      # (C, BN) f32
    qpos = qpos_ref[...]                                             # (C, N)  f32
    qin_bf = jnp.concatenate([s + qpos for s in img_slabs],
                             axis=-1).astype(bf16)                   # (C, BN)

    # FeatureResizer = Linear + LayerNorm(eps=1e-12); dropout = eval identity.
    key_r = _ln_rows(jnp.dot(txt_bf, wkfc_ref[...], preferred_element_type=f32)
                     + bkfc_ref[...], gk_ref[...], bkln_ref[...])    # (BL, C) f32
    val_r = _ln_rows(jnp.dot(txt_bf, wvfc_ref[...], preferred_element_type=f32)
                     + bvfc_ref[...], gv_ref[...], bvln_ref[...])    # (BL, C) f32

    # Full-width MHA in-projections (heads are slices of these; one MXU pass each).
    q_t = jnp.dot(wq_ref[...], qin_bf, preferred_element_type=f32) + bq_ref[...]       # (C, BN)
    k = jnp.dot(key_r.astype(bf16), wk_ref[...], preferred_element_type=f32) \
        + bk_ref[...]                                                                   # (BL, C)
    v_t = jnp.dot(wv_ref[...], val_r.T.astype(bf16), preferred_element_type=f32) \
        + bv_ref[...]                                                                   # (C, BL)

    # Additive attention mask built in-kernel from tiny batch-id vectors:
    # key column batch id (-1 for padded keys) vs query column batch id.
    bias = jnp.where(kb == qb_ref[...], 0.0, -1e30)                  # (BL, BN) f32

    for h in range(nhead):                                           # static unroll
        sl = slice(h * hd, (h + 1) * hd)
        qh = q_t[sl, :].astype(bf16)                                 # (hd, BN)
        kh = k[:, sl].astype(bf16)                                   # (BL, hd)
        s = jnp.dot(kh, qh, preferred_element_type=f32) * scale + bias   # (BL, BN)
        s = s - jnp.max(s, axis=0, keepdims=True)
        p = jnp.exp(s)
        p = p / jnp.sum(p, axis=0, keepdims=True)
        vh = v_t[sl, :].astype(bf16)                                 # (hd, BL)
        o_scr[sl, :] = jnp.dot(vh, p.astype(bf16),
                               preferred_element_type=f32)           # (hd, BN)

    # Single out-projection over all heads: one K=C MXU pass from the scratch.
    attn_ref[...] = (jnp.dot(wo_ref[...], o_scr[...].astype(bf16),
                             preferred_element_type=f32) + bo_ref[...])

    # LPCF local fusion: spatially-constant text gate (precomputed, (C, B))
    # applied per batch, then 1x1 conv; image residual folded in here.
    gate = gate_ref[...]                                             # (C, B) f32
    gated_bf = jnp.concatenate(
        [img_slabs[b] * gate[:, b:b + 1] for b in range(B)],
        axis=-1).astype(bf16)                                        # (C, BN)
    local = jnp.dot(wlc_ref[...], gated_bf, preferred_element_type=f32) + blc_ref[...]
    loc_ref[...] = local + img_t


def make_fused_kernel(stage_cfgs, B):
    n_stage = len(stage_cfgs)

    def kernel(*refs):
        txt_ref, kb_ref = refs[0], refs[1]
        base = 2
        in_end = base + n_stage * _N_STAGE_ARGS
        out_end = in_end + 2 * n_stage
        txt_bf = txt_ref[...]                                        # (BL, Kd) bf16
        kb = kb_ref[...]                                             # (BL, 1) int32
        for i, cfg in enumerate(stage_cfgs):
            stage_refs = refs[base + i * _N_STAGE_ARGS:
                              base + (i + 1) * _N_STAGE_ARGS]
            attn_ref = refs[in_end + 2 * i]
            loc_ref = refs[in_end + 2 * i + 1]
            o_scr = refs[out_end + i]
            _lgf_stage(cfg, B, txt_bf, kb, stage_refs, attn_ref, loc_ref, o_scr)

    return kernel


# ----------------------------------------------------------------------------
# Positional encoding (guessed module, shared by kernel wrapper and reference).
# ----------------------------------------------------------------------------
def init_pos_params(key, num_feats, num_embed=50):
    k1, k2 = jax.random.split(key)
    return {'row': jax.random.normal(k1, (num_embed, num_feats), jnp.float32) * 0.1,
            'col': jax.random.normal(k2, (num_embed, num_feats), jnp.float32) * 0.1}


def learned_pos_encoding(pos_p, B, H, W):
    nf = pos_p['row'].shape[1]
    x_embed = pos_p['col'][:W]                                       # (W, nf)
    y_embed = pos_p['row'][:H]                                       # (H, nf)
    pos = jnp.concatenate([
        jnp.broadcast_to(x_embed[None, :, :], (H, W, nf)),
        jnp.broadcast_to(y_embed[:, None, :], (H, W, nf)),
    ], axis=-1)                                                      # (H, W, 2*nf)
    pos = jnp.transpose(pos, (2, 0, 1))[None]
    return jnp.broadcast_to(pos, (B, 2 * nf, H, W))


# ----------------------------------------------------------------------------
# Wrapper: the whole 3-stage forward as a single pallas_call + thin glue.
# ----------------------------------------------------------------------------
def three_stage_lgf_pallas(pts_feats, text_feat, text_pool, text_mask,
                           stage_params, pos_params, nhead_list):
    f32, bf16 = jnp.float32, jnp.bfloat16
    B = pts_feats[0].shape[0]
    L, Kd = text_feat.shape[1], text_feat.shape[2]
    BL = B * L

    txt_bf = text_feat.reshape(BL, Kd).astype(bf16)
    kb = jnp.arange(BL, dtype=jnp.int32) // L
    kb = jnp.where(text_mask.reshape(BL), -1, kb).astype(jnp.int32).reshape(BL, 1)

    col = lambda x: x.reshape(-1, 1)
    row = lambda x: x.reshape(1, -1)

    flat_args = [txt_bf, kb]
    out_shapes, scratch, cfgs, geom = [], [], [], []
    for i, feat in enumerate(pts_feats):
        _, C, H, W = feat.shape
        N, nhead = H * W, nhead_list[i]
        BN = B * N
        p = stage_params[i]
        cfgs.append((C, N, nhead))
        geom.append((C, H, W, N))

        # query_pos is batch-invariant: a single (C, N) slab, tiled in-kernel.
        qpos = learned_pos_encoding(pos_params[i], 1, H, W)[0].reshape(C, N)
        qb = (jnp.arange(BN, dtype=jnp.int32) // N).reshape(1, BN)
        # LPCF text gate is spatially constant: compute it once here.
        gate = jax.nn.sigmoid(
            jnp.dot(text_pool.astype(bf16), p['lp_w'].T.astype(bf16),
                    preferred_element_type=f32) + p['lp_b']).T        # (C, B)

        wq, bq = p['in_proj_w'][:C], p['in_proj_b'][:C]
        wk, bk = p['in_proj_w'][C:2 * C], p['in_proj_b'][C:2 * C]
        wv, bv = p['in_proj_w'][2 * C:], p['in_proj_b'][2 * C:]

        flat_args += [
            feat.reshape(B, C, N), qpos, qb, gate,
            p['key_fc_w'].T.astype(bf16), row(p['key_fc_b']),
            row(p['key_ln_g']), row(p['key_ln_b']),
            p['val_fc_w'].T.astype(bf16), row(p['val_fc_b']),
            row(p['val_ln_g']), row(p['val_ln_b']),
            wq.astype(bf16), col(bq),
            wk.T.astype(bf16), row(bk),
            wv.astype(bf16), col(bv),
            p['out_proj_w'].astype(bf16), col(p['out_proj_b']),
            p['lc_w'].astype(bf16), col(p['lc_b']),
        ]
        out_shapes += [jax.ShapeDtypeStruct((C, BN), f32),
                       jax.ShapeDtypeStruct((C, BN), f32)]
        scratch.append(pltpu.VMEM((C, BN), f32))

    outs = pl.pallas_call(
        make_fused_kernel(tuple(cfgs), B),
        out_shape=tuple(out_shapes),
        scratch_shapes=tuple(scratch),
    )(*flat_args)

    results = []
    for i in range(len(pts_feats)):
        C, H, W, N = geom[i]
        attn_t, loc_t = outs[2 * i], outs[2 * i + 1]
        # Torch semantics: the (HW, B, C) MHA output is flat-reinterpreted as
        # (B, C, H, W); the local/residual path is a plain permute.
        gfeat = jnp.transpose(attn_t.reshape(C, B, N), (2, 1, 0)).reshape(B, C, H, W)
        lfeat = jnp.transpose(loc_t.reshape(C, B, N), (1, 0, 2)).reshape(B, C, H, W)
        results.append(gfeat + lfeat)   # lfeat already contains + image_feat
    return tuple(results)


# ----------------------------------------------------------------------------
# Pure-JAX reference (PyTorch eval-mode semantics; bf16 MXU operands like the
# TPU default matmul precision, f32 accumulation / LN / softmax).
# ----------------------------------------------------------------------------
def _mm(a, b):
    return jnp.dot(a.astype(jnp.bfloat16), b.astype(jnp.bfloat16),
                   preferred_element_type=jnp.float32)


def lgf_reference(image_feat, qpos, text_feat, text_pool, text_mask, p, nhead):
    B, C, H, W = image_feat.shape
    L = text_feat.shape[1]
    hd = C // nhead
    scale = 1.0 / math.sqrt(hd)
    f32, bf16 = jnp.float32, jnp.bfloat16

    def fr(x, w, b, g, bb):
        y = _mm(x, w.T) + b
        mu = y.mean(-1, keepdims=True)
        var = ((y - mu) ** 2).mean(-1, keepdims=True)
        return (y - mu) * jax.lax.rsqrt(var + 1e-12) * g + bb

    key = fr(text_feat, p['key_fc_w'], p['key_fc_b'], p['key_ln_g'], p['key_ln_b'])
    val = fr(text_feat, p['val_fc_w'], p['val_fc_b'], p['val_ln_g'], p['val_ln_b'])
    qin = jnp.transpose((image_feat + qpos).reshape(B, C, H * W), (0, 2, 1))
    q = _mm(qin, p['in_proj_w'][:C].T) + p['in_proj_b'][:C]
    k = _mm(key, p['in_proj_w'][C:2 * C].T) + p['in_proj_b'][C:2 * C]
    v = _mm(val, p['in_proj_w'][2 * C:].T) + p['in_proj_b'][2 * C:]
    q = q.reshape(B, H * W, nhead, hd)
    k = k.reshape(B, L, nhead, hd)
    v = v.reshape(B, L, nhead, hd)
    s = jnp.einsum('bnhd,blhd->bhnl', q.astype(bf16), k.astype(bf16),
                   preferred_element_type=f32) * scale
    m = text_mask[:, None, None, :]
    s = jnp.where(m, -1e30, s)
    s = s - jnp.max(s, axis=-1, keepdims=True)
    pw = jnp.exp(s)
    pw = pw / jnp.sum(pw, axis=-1, keepdims=True)
    o = jnp.einsum('bhnl,blhd->bnhd', pw.astype(bf16), v.astype(bf16),
                   preferred_element_type=f32).reshape(B, H * W, C)
    o = _mm(o, p['out_proj_w'].T) + p['out_proj_b']
    gfeat = jnp.reshape(jnp.transpose(o, (1, 0, 2)), (B, C, H, W))
    gate = jax.nn.sigmoid(_mm(text_pool, p['lp_w'].T) + p['lp_b'])
    modulated = image_feat * gate[:, :, None, None]
    local = jnp.einsum('oc,bchw->bohw', p['lc_w'].astype(bf16),
                       modulated.astype(bf16), preferred_element_type=f32) \
        + p['lc_b'][None, :, None, None]
    return gfeat + local + image_feat


# ----------------------------------------------------------------------------
# Parameter init.
# ----------------------------------------------------------------------------
def init_lgf_params(key, key_dim, d_model):
    ks = jax.random.split(key, 16)
    s = 0.1
    n = lambda k, shp: jax.random.normal(k, shp, jnp.float32) * s
    return {
        'key_fc_w': n(ks[0], (d_model, key_dim)), 'key_fc_b': n(ks[1], (d_model,)),
        'key_ln_g': 1.0 + n(ks[2], (d_model,)), 'key_ln_b': n(ks[3], (d_model,)),
        'val_fc_w': n(ks[4], (d_model, key_dim)), 'val_fc_b': n(ks[5], (d_model,)),
        'val_ln_g': 1.0 + n(ks[6], (d_model,)), 'val_ln_b': n(ks[7], (d_model,)),
        'in_proj_w': n(ks[8], (3 * d_model, d_model)), 'in_proj_b': n(ks[9], (3 * d_model,)),
        'out_proj_w': n(ks[10], (d_model, d_model)), 'out_proj_b': n(ks[11], (d_model,)),
        'lp_w': n(ks[12], (d_model, key_dim)), 'lp_b': n(ks[13], (d_model,)),
        'lc_w': n(ks[14], (d_model, d_model)), 'lc_b': n(ks[15], (d_model,)),
    }


# ----------------------------------------------------------------------------
if __name__ == "__main__":
    key = jax.random.PRNGKey(0)
    text_dim = 16
    feature_dim_list = [32, 64, 128]
    nhead_list = (4, 4, 8)
    B, L = 2, 8
    spatial = [(16, 16), (8, 8), (4, 4)]

    keys = jax.random.split(key, 12)
    pts_feats = tuple(
        jax.random.normal(keys[i], (B, feature_dim_list[i],
                                    spatial[i][0], spatial[i][1]), jnp.float32)
        for i in range(3))
    text_feat = jax.random.normal(keys[3], (B, L, text_dim), jnp.float32)
    text_feat_pool = jax.random.normal(keys[4], (B, text_dim), jnp.float32)
    text_feat_mask = jnp.zeros((B, L), dtype=bool).at[1, -2:].set(True)  # True == pad

    stage_params = [init_lgf_params(keys[5 + i], text_dim, feature_dim_list[i])
                    for i in range(3)]
    pos_params = [init_pos_params(keys[8 + i], feature_dim_list[i] // 2)
                  for i in range(3)]

    # One jit over the full 3-stage forward: a single pallas_call plus the
    # small layout glue dispatch as one XLA program.
    fused = jax.jit(three_stage_lgf_pallas, static_argnames=("nhead_list",))
    outs = fused(pts_feats, text_feat, text_feat_pool, text_feat_mask,
                 stage_params, pos_params, nhead_list=nhead_list)
    outs = jax.block_until_ready(outs)

    # Verify against the pure-JAX reference.  Both sides feed bf16 operands to
    # the MXU (TPU default matmul precision) with f32 accumulation, so they
    # agree at the ~1e-3 level; remaining differences are accumulation order.
    for i in range(3):
        Bc, C, H, W = pts_feats[i].shape
        qpos = learned_pos_encoding(pos_params[i], Bc, H, W)
        ref = lgf_reference(pts_feats[i], qpos, text_feat, text_feat_pool,
                            text_feat_mask, stage_params[i], nhead_list[i])
        assert outs[i].shape == ref.shape == pts_feats[i].shape
        err = float(jnp.max(jnp.abs(outs[i] - ref)))
        assert err < 1e-2, f"stage {i}: max abs err {err}"

    print("KERNEL_OK")
</pallas_src>

<mosaic_0001>
module attributes {stable_mosaic.version = 11 : i64} {
  func.func @kernel(%arg0: memref<16x16xbf16, #tpu.memory_space<vmem>>, %arg1: memref<16x1xi32, #tpu.memory_space<vmem>>, %arg2: memref<2x32x256xf32, #tpu.memory_space<vmem>>, %arg3: memref<32x256xf32, #tpu.memory_space<vmem>>, %arg4: memref<1x512xi32, #tpu.memory_space<vmem>>, %arg5: memref<32x2xf32, #tpu.memory_space<vmem>>, %arg6: memref<16x32xbf16, #tpu.memory_space<vmem>>, %arg7: memref<1x32xf32, #tpu.memory_space<vmem>>, %arg8: memref<1x32xf32, #tpu.memory_space<vmem>>, %arg9: memref<1x32xf32, #tpu.memory_space<vmem>>, %arg10: memref<16x32xbf16, #tpu.memory_space<vmem>>, %arg11: memref<1x32xf32, #tpu.memory_space<vmem>>, %arg12: memref<1x32xf32, #tpu.memory_space<vmem>>, %arg13: memref<1x32xf32, #tpu.memory_space<vmem>>, %arg14: memref<32x32xbf16, #tpu.memory_space<vmem>>, %arg15: memref<32x1xf32, #tpu.memory_space<vmem>>, %arg16: memref<32x32xbf16, #tpu.memory_space<vmem>>, %arg17: memref<1x32xf32, #tpu.memory_space<vmem>>, %arg18: memref<32x32xbf16, #tpu.memory_space<vmem>>, %arg19: memref<32x1xf32, #tpu.memory_space<vmem>>, %arg20: memref<32x32xbf16, #tpu.memory_space<vmem>>, %arg21: memref<32x1xf32, #tpu.memory_space<vmem>>, %arg22: memref<32x32xbf16, #tpu.memory_space<vmem>>, %arg23: memref<32x1xf32, #tpu.memory_space<vmem>>, %arg24: memref<2x64x64xf32, #tpu.memory_space<vmem>>, %arg25: memref<64x64xf32, #tpu.memory_space<vmem>>, %arg26: memref<1x128xi32, #tpu.memory_space<vmem>>, %arg27: memref<64x2xf32, #tpu.memory_space<vmem>>, %arg28: memref<16x64xbf16, #tpu.memory_space<vmem>>, %arg29: memref<1x64xf32, #tpu.memory_space<vmem>>, %arg30: memref<1x64xf32, #tpu.memory_space<vmem>>, %arg31: memref<1x64xf32, #tpu.memory_space<vmem>>, %arg32: memref<16x64xbf16, #tpu.memory_space<vmem>>, %arg33: memref<1x64xf32, #tpu.memory_space<vmem>>, %arg34: memref<1x64xf32, #tpu.memory_space<vmem>>, %arg35: memref<1x64xf32, #tpu.memory_space<vmem>>, %arg36: memref<64x64xbf16, #tpu.memory_space<vmem>>, %arg37: memref<64x1xf32, #tpu.memory_space<vmem>>, %arg38: memref<64x64xbf16, #tpu.memory_space<vmem>>, %arg39: memref<1x64xf32, #tpu.memory_space<vmem>>, %arg40: memref<64x64xbf16, #tpu.memory_space<vmem>>, %arg41: memref<64x1xf32, #tpu.memory_space<vmem>>, %arg42: memref<64x64xbf16, #tpu.memory_space<vmem>>, %arg43: memref<64x1xf32, #tpu.memory_space<vmem>>, %arg44: memref<64x64xbf16, #tpu.memory_space<vmem>>, %arg45: memref<64x1xf32, #tpu.memory_space<vmem>>, %arg46: memref<2x128x16xf32, #tpu.memory_space<vmem>>, %arg47: memref<128x16xf32, #tpu.memory_space<vmem>>, %arg48: memref<1x32xi32, #tpu.memory_space<vmem>>, %arg49: memref<128x2xf32, #tpu.memory_space<vmem>>, %arg50: memref<16x128xbf16, #tpu.memory_space<vmem>>, %arg51: memref<1x128xf32, #tpu.memory_space<vmem>>, %arg52: memref<1x128xf32, #tpu.memory_space<vmem>>, %arg53: memref<1x128xf32, #tpu.memory_space<vmem>>, %arg54: memref<16x128xbf16, #tpu.memory_space<vmem>>, %arg55: memref<1x128xf32, #tpu.memory_space<vmem>>, %arg56: memref<1x128xf32, #tpu.memory_space<vmem>>, %arg57: memref<1x128xf32, #tpu.memory_space<vmem>>, %arg58: memref<128x128xbf16, #tpu.memory_space<vmem>>, %arg59: memref<128x1xf32, #tpu.memory_space<vmem>>, %arg60: memref<128x128xbf16, #tpu.memory_space<vmem>>, %arg61: memref<1x128xf32, #tpu.memory_space<vmem>>, %arg62: memref<128x128xbf16, #tpu.memory_space<vmem>>, %arg63: memref<128x1xf32, #tpu.memory_space<vmem>>, %arg64: memref<128x128xbf16, #tpu.memory_space<vmem>>, %arg65: memref<128x1xf32, #tpu.memory_space<vmem>>, %arg66: memref<128x128xbf16, #tpu.memory_space<vmem>>, %arg67: memref<128x1xf32, #tpu.memory_space<vmem>>, %arg68: memref<32x512xf32, #tpu.memory_space<vmem>>, %arg69: memref<32x512xf32, #tpu.memory_space<vmem>>, %arg70: memref<64x128xf32, #tpu.memory_space<vmem>>, %arg71: memref<64x128xf32, #tpu.memory_space<vmem>>, %arg72: memref<128x32xf32, #tpu.memory_space<vmem>>, %arg73: memref<128x32xf32, #tpu.memory_space<vmem>>, %arg74: memref<32x512xf32, #tpu.memory_space<vmem>>, %arg75: memref<64x128xf32, #tpu.memory_space<vmem>>, %arg76: memref<128x32xf32, #tpu.memory_space<vmem>>) attributes {dimension_semantics = [], scalar_prefetch = 0 : i64, scratch_operands = 3 : i64, tpu.core_type = #tpu.core_type<tc>} {
    %c0 = arith.constant 0 : index
    %c0_0 = arith.constant 0 : index
    %0 = vector.load %arg0[%c0, %c0_0] : memref<16x16xbf16, #tpu.memory_space<vmem>>, vector<16x16xbf16>
    %c0_1 = arith.constant 0 : index
    %c0_2 = arith.constant 0 : index
    %1 = vector.load %arg1[%c0_1, %c0_2] : memref<16x1xi32, #tpu.memory_space<vmem>>, vector<16x1xi32>
    %c0_3 = arith.constant 0 : index
    %c0_4 = arith.constant 0 : index
    %c0_5 = arith.constant 0 : index
    %2 = vector.load %arg2[%c0_3, %c0_4, %c0_5] : memref<2x32x256xf32, #tpu.memory_space<vmem>>, vector<1x32x256xf32>
    %3 = vector.shape_cast %2 : vector<1x32x256xf32> to vector<32x256xf32>
    %c1 = arith.constant 1 : index
    %c0_6 = arith.constant 0 : index
    %c0_7 = arith.constant 0 : index
    %4 = vector.load %arg2[%c1, %c0_6, %c0_7] : memref<2x32x256xf32, #tpu.memory_space<vmem>>, vector<1x32x256xf32>
    %5 = vector.shape_cast %4 : vector<1x32x256xf32> to vector<32x256xf32>
    %6 = tpu.concatenate %3, %5 in 1 : vector<32x256xf32>, vector<32x256xf32> -> vector<32x512xf32>
    %c0_8 = arith.constant 0 : index
    %c0_9 = arith.constant 0 : index
    %7 = vector.load %arg3[%c0_8, %c0_9] : memref<32x256xf32, #tpu.memory_space<vmem>>, vector<32x256xf32>
    %8 = arith.addf %3, %7 : vector<32x256xf32>
    %9 = arith.addf %5, %7 : vector<32x256xf32>
    %10 = tpu.concatenate %8, %9 in 1 : vector<32x256xf32>, vector<32x256xf32> -> vector<32x512xf32>
    %11 = arith.truncf %10 : vector<32x512xf32> to vector<32x512xbf16>
    %c0_10 = arith.constant 0 : index
    %c0_11 = arith.constant 0 : index
    %12 = vector.load %arg6[%c0_10, %c0_11] : memref<16x32xbf16, #tpu.memory_space<vmem>>, vector<16x32xbf16>
    %cst = arith.constant dense<0.000000e+00> : vector<16x32xf32>
    %13 = tpu.matmul %0, %12, %cst {dimension_numbers = #tpu.dot_dimension_numbers<[1], [0], [0], [1], [0, 0, 1, 1], [], []>} : vector<16x16xbf16>, vector<16x32xbf16>, vector<16x32xf32> -> vector<16x32xf32>
    %c0_12 = arith.constant 0 : index
    %c0_13 = arith.constant 0 : index
    %14 = vector.load %arg7[%c0_12, %c0_13] : memref<1x32xf32, #tpu.memory_space<vmem>>, vector<1x32xf32>
    %15 = vector.broadcast %14 : vector<1x32xf32> to vector<16x32xf32>
    %16 = arith.addf %13, %15 : vector<16x32xf32>
    %c0_14 = arith.constant 0 : index
    %c0_15 = arith.constant 0 : index
    %17 = vector.load %arg8[%c0_14, %c0_15] : memref<1x32xf32, #tpu.memory_space<vmem>>, vector<1x32xf32>
    %c0_16 = arith.constant 0 : index
    %c0_17 = arith.constant 0 : index
    %18 = vector.load %arg9[%c0_16, %c0_17] : memref<1x32xf32, #tpu.memory_space<vmem>>, vector<1x32xf32>
    %cst_18 = arith.constant dense<0.000000e+00> : vector<16xf32>
    %19 = vector.multi_reduction <add>, %16, %cst_18 [1] : vector<16x32xf32> to vector<16xf32>
    %20 = vector.shape_cast %19 : vector<16xf32> to vector<16x1xf32>
    %cst_19 = arith.constant 3.200000e+01 : f32
    %21 = vector.broadcast %cst_19 : f32 to vector<16x1xf32>
    %22 = arith.divf %20, %21 : vector<16x1xf32>
    %23 = vector.broadcast %22 : vector<16x1xf32> to vector<16x32xf32>
    %24 = arith.subf %16, %23 : vector<16x32xf32>
    %25 = arith.mulf %24, %24 : vector<16x32xf32>
    %cst_20 = arith.constant dense<0.000000e+00> : vector<16xf32>
    %26 = vector.multi_reduction <add>, %25, %cst_20 [1] : vector<16x32xf32> to vector<16xf32>
    %27 = vector.shape_cast %26 : vector<16xf32> to vector<16x1xf32>
    %cst_21 = arith.constant 3.200000e+01 : f32
    %28 = vector.broadcast %cst_21 : f32 to vector<16x1xf32>
    %29 = arith.divf %27, %28 : vector<16x1xf32>
    %30 = vector.broadcast %22 : vector<16x1xf32> to vector<16x32xf32>
    %31 = arith.subf %16, %30 : vector<16x32xf32>
    %cst_22 = arith.constant 9.99999996E-13 : f32
    %32 = vector.broadcast %cst_22 : f32 to vector<16x1xf32>
    %33 = arith.addf %29, %32 : vector<16x1xf32>
    %34 = math.rsqrt %33 : vector<16x1xf32>
    %35 = vector.broadcast %34 : vector<16x1xf32> to vector<16x32xf32>
    %36 = arith.mulf %31, %35 : vector<16x32xf32>
    %37 = vector.broadcast %17 : vector<1x32xf32> to vector<16x32xf32>
    %38 = arith.mulf %36, %37 : vector<16x32xf32>
    %39 = vector.broadcast %18 : vector<1x32xf32> to vector<16x32xf32>
    %40 = arith.addf %38, %39 : vector<16x32xf32>
    %c0_23 = arith.constant 0 : index
    %c0_24 = arith.constant 0 : index
    %41 = vector.load %arg10[%c0_23, %c0_24] : memref<16x32xbf16, #tpu.memory_space<vmem>>, vector<16x32xbf16>
    %cst_25 = arith.constant dense<0.000000e+00> : vector<16x32xf32>
    %42 = tpu.matmul %0, %41, %cst_25 {dimension_numbers = #tpu.dot_dimension_numbers<[1], [0], [0], [1], [0, 0, 1, 1], [], []>} : vector<16x16xbf16>, vector<16x32xbf16>, vector<16x32xf32> -> vector<16x32xf32>
    %c0_26 = arith.constant 0 : index
    %c0_27 = arith.constant 0 : index
    %43 = vector.load %arg11[%c0_26, %c0_27] : memref<1x32xf32, #tpu.memory_space<vmem>>, vector<1x32xf32>
    %44 = vector.broadcast %43 : vector<1x32xf32> to vector<16x32xf32>
    %45 = arith.addf %42, %44 : vector<16x32xf32>
    %c0_28 = arith.constant 0 : index
    %c0_29 = arith.constant 0 : index
    %46 = vector.load %arg12[%c0_28, %c0_29] : memref<1x32xf32, #tpu.memory_space<vmem>>, vector<1x32xf32>
    %c0_30 = arith.constant 0 : index
    %c0_31 = arith.constant 0 : index
    %47 = vector.load %arg13[%c0_30, %c0_31] : memref<1x32xf32, #tpu.memory_space<vmem>>, vector<1x32xf32>
    %cst_32 = arith.constant dense<0.000000e+00> : vector<16xf32>
    %48 = vector.multi_reduction <add>, %45, %cst_32 [1] : vector<16x32xf32> to vector<16xf32>
    %49 = vector.shape_cast %48 : vector<16xf32> to vector<16x1xf32>
    %cst_33 = arith.constant 3.200000e+01 : f32
    %50 = vector.broadcast %cst_33 : f32 to vector<16x1xf32>
    %51 = arith.divf %49, %50 : vector<16x1xf32>
    %52 = vector.broadcast %51 : vector<16x1xf32> to vector<16x32xf32>
    %53 = arith.subf %45, %52 : vector<16x32xf32>
    %54 = arith.mulf %53, %53 : vector<16x32xf32>
    %cst_34 = arith.constant dense<0.000000e+00> : vector<16xf32>
    %55 = vector.multi_reduction <add>, %54, %cst_34 [1] : vector<16x32xf32> to vector<16xf32>
    %56 = vector.shape_cast %55 : vector<16xf32> to vector<16x1xf32>
    %cst_35 = arith.constant 3.200000e+01 : f32
    %57 = vector.broadcast %cst_35 : f32 to vector<16x1xf32>
    %58 = arith.divf %56, %57 : vector<16x1xf32>
    %59 = vector.broadcast %51 : vector<16x1xf32> to vector<16x32xf32>
    %60 = arith.subf %45, %59 : vector<16x32xf32>
    %cst_36 = arith.constant 9.99999996E-13 : f32
    %61 = vector.broadcast %cst_36 : f32 to vector<16x1xf32>
    %62 = arith.addf %58, %61 : vector<16x1xf32>
    %63 = math.rsqrt %62 : vector<16x1xf32>
    %64 = vector.broadcast %63 : vector<16x1xf32> to vector<16x32xf32>
    %65 = arith.mulf %60, %64 : vector<16x32xf32>
    %66 = vector.broadcast %46 : vector<1x32xf32> to vector<16x32xf32>
    %67 = arith.mulf %65, %66 : vector<16x32xf32>
    %68 = vector.broadcast %47 : vector<1x32xf32> to vector<16x32xf32>
    %69 = arith.addf %67, %68 : vector<16x32xf32>
    %c0_37 = arith.constant 0 : index
    %c0_38 = arith.constant 0 : index
    %70 = vector.load %arg14[%c0_37, %c0_38] : memref<32x32xbf16, #tpu.memory_space<vmem>>, vector<32x32xbf16>
    %cst_39 = arith.constant dense<0.000000e+00> : vector<32x512xf32>
    %71 = tpu.matmul %70, %11, %cst_39 {dimension_numbers = #tpu.dot_dimension_numbers<[1], [0], [0], [1], [0, 0, 1, 1], [], []>} : vector<32x32xbf16>, vector<32x512xbf16>, vector<32x512xf32> -> vector<32x512xf32>
    %c0_40 = arith.constant 0 : index
    %c0_41 = arith.constant 0 : index
    %72 = vector.load %arg15[%c0_40, %c0_41] : memref<32x1xf32, #tpu.memory_space<vmem>>, vector<32x1xf32>
    %73 = vector.broadcast %72 : vector<32x1xf32> to vector<32x512xf32>
    %74 = arith.addf %71, %73 : vector<32x512xf32>
    %75 = arith.truncf %40 : vector<16x32xf32> to vector<16x32xbf16>
    %c0_42 = arith.constant 0 : index
    %c0_43 = arith.constant 0 : index
    %76 = vector.load %arg16[%c0_42, %c0_43] : memref<32x32xbf16, #tpu.memory_space<vmem>>, vector<32x32xbf16>
    %cst_44 = arith.constant dense<0.000000e+00> : vector<16x32xf32>
    %77 = tpu.matmul %75, %76, %cst_44 {dimension_numbers = #tpu.dot_dimension_numbers<[1], [0], [0], [1], [0, 0, 1, 1], [], []>} : vector<16x32xbf16>, vector<32x32xbf16>, vector<16x32xf32> -> vector<16x32xf32>
    %c0_45 = arith.constant 0 : index
    %c0_46 = arith.constant 0 : index
    %78 = vector.load %arg17[%c0_45, %c0_46] : memref<1x32xf32, #tpu.memory_space<vmem>>, vector<1x32xf32>
    %79 = vector.broadcast %78 : vector<1x32xf32> to vector<16x32xf32>
    %80 = arith.addf %77, %79 : vector<16x32xf32>
    %c0_47 = arith.constant 0 : index
    %c0_48 = arith.constant 0 : index
    %81 = vector.load %arg18[%c0_47, %c0_48] : memref<32x32xbf16, #tpu.memory_space<vmem>>, vector<32x32xbf16>
    %82 = tpu.transpose %69, [1, 0] : vector<16x32xf32> -> vector<32x16xf32>
    %83 = arith.truncf %82 : vector<32x16xf32> to vector<32x16xbf16>
    %cst_49 = arith.constant dense<0.000000e+00> : vector<32x16xf32>
    %84 = tpu.matmul %81, %83, %cst_49 {dimension_numbers = #tpu.dot_dimension_numbers<[1], [0], [0], [1], [0, 0, 1, 1], [], []>} : vector<32x32xbf16>, vector<32x16xbf16>, vector<32x16xf32> -> vector<32x16xf32>
    %c0_50 = arith.constant 0 : index
    %c0_51 = arith.constant 0 : index
    %85 = vector.load %arg19[%c0_50, %c0_51] : memref<32x1xf32, #tpu.memory_space<vmem>>, vector<32x1xf32>
    %86 = vector.broadcast %85 : vector<32x1xf32> to vector<32x16xf32>
    %87 = arith.addf %84, %86 : vector<32x16xf32>
    %c0_52 = arith.constant 0 : index
    %c0_53 = arith.constant 0 : index
    %88 = vector.load %arg4[%c0_52, %c0_53] : memref<1x512xi32, #tpu.memory_space<vmem>>, vector<1x512xi32>
    %89 = vector.broadcast %1 : vector<16x1xi32> to vector<16x512xi32>
    %90 = vector.broadcast %88 : vector<1x512xi32> to vector<16x512xi32>
    %91 = arith.cmpi eq, %89, %90 : vector<16x512xi32>
    %cst_54 = arith.constant 0.000000e+00 : f32
    %cst_55 = arith.constant -1.000000e+30 : f32
    %92 = vector.broadcast %cst_54 : f32 to vector<16x512xf32>
    %93 = vector.broadcast %cst_55 : f32 to vector<16x512xf32>
    %94 = arith.select %91, %92, %93 : vector<16x512xi1>, vector<16x512xf32>
    %95 = vector.extract_strided_slice %74 {offsets = [0, 0], sizes = [8, 512], strides = [1, 1]} : vector<32x512xf32> to vector<8x512xf32>
    %96 = arith.truncf %95 : vector<8x512xf32> to vector<8x512xbf16>
    %97 = vector.extract_strided_slice %80 {offsets = [0, 0], sizes = [16, 8], strides = [1, 1]} : vector<16x32xf32> to vector<16x8xf32>
    %98 = arith.truncf %97 : vector<16x8xf32> to vector<16x8xbf16>
    %cst_56 = arith.constant dense<0.000000e+00> : vector<16x512xf32>
    %99 = tpu.matmul %98, %96, %cst_56 {dimension_numbers = #tpu.dot_dimension_numbers<[1], [0], [0], [1], [0, 0, 1, 1], [], []>} : vector<16x8xbf16>, vector<8x512xbf16>, vector<16x512xf32> -> vector<16x512xf32>
    %cst_57 = arith.constant 0.353553385 : f32
    %100 = vector.broadcast %cst_57 : f32 to vector<16x512xf32>
    %101 = arith.mulf %99, %100 : vector<16x512xf32>
    %102 = arith.addf %101, %94 : vector<16x512xf32>
    %cst_58 = arith.constant dense<0xFF800000> : vector<512xf32>
    %103 = vector.multi_reduction <maximumf>, %102, %cst_58 [0] : vector<16x512xf32> to vector<512xf32>
    %104 = vector.shape_cast %103 : vector<512xf32> to vector<1x512xf32>
    %105 = vector.broadcast %104 : vector<1x512xf32> to vector<16x512xf32>
    %106 = arith.subf %102, %105 : vector<16x512xf32>
    %107 = math.exp %106 : vector<16x512xf32>
    %cst_59 = arith.constant dense<0.000000e+00> : vector<512xf32>
    %108 = vector.multi_reduction <add>, %107, %cst_59 [0] : vector<16x512xf32> to vector<512xf32>
    %109 = vector.shape_cast %108 : vector<512xf32> to vector<1x512xf32>
    %110 = vector.broadcast %109 : vector<1x512xf32> to vector<16x512xf32>
    %111 = arith.divf %107, %110 : vector<16x512xf32>
    %112 = vector.extract_strided_slice %87 {offsets = [0, 0], sizes = [8, 16], strides = [1, 1]} : vector<32x16xf32> to vector<8x16xf32>
    %113 = arith.truncf %112 : vector<8x16xf32> to vector<8x16xbf16>
    %114 = arith.truncf %111 : vector<16x512xf32> to vector<16x512xbf16>
    %cst_60 = arith.constant dense<0.000000e+00> : vector<8x512xf32>
    %115 = tpu.matmul %113, %114, %cst_60 {dimension_numbers = #tpu.dot_dimension_numbers<[1], [0], [0], [1], [0, 0, 1, 1], [], []>} : vector<8x16xbf16>, vector<16x512xbf16>, vector<8x512xf32> -> vector<8x512xf32>
    %c0_61 = arith.constant 0 : index
    %c0_62 = arith.constant 0 : index
    %116 = vector.load %arg74[%c0_61, %c0_62] : memref<32x512xf32, #tpu.memory_space<vmem>>, vector<8x512xf32>
    tpu.vector_store %arg74[%c0_61, %c0_62], %115 {strides = array<i32>} : memref<32x512xf32, #tpu.memory_space<vmem>>, vector<8x512xf32>,
    %117 = vector.extract_strided_slice %74 {offsets = [8, 0], sizes = [8, 512], strides = [1, 1]} : vector<32x512xf32> to vector<8x512xf32>
    %118 = arith.truncf %117 : vector<8x512xf32> to vector<8x512xbf16>
    %119 = vector.extract_strided_slice %80 {offsets = [0, 8], sizes = [16, 8], strides = [1, 1]} : vector<16x32xf32> to vector<16x8xf32>
    %120 = arith.truncf %119 : vector<16x8xf32> to vector<16x8xbf16>
    %cst_63 = arith.constant dense<0.000000e+00> : vector<16x512xf32>
    %121 = tpu.matmul %120, %118, %cst_63 {dimension_numbers = #tpu.dot_dimension_numbers<[1], [0], [0], [1], [0, 0, 1, 1], [], []>} : vector<16x8xbf16>, vector<8x512xbf16>, vector<16x512xf32> -> vector<16x512xf32>
    %cst_64 = arith.constant 0.353553385 : f32
    %122 = vector.broadcast %cst_64 : f32 to vector<16x512xf32>
    %123 = arith.mulf %121, %122 : vector<16x512xf32>
    %124 = arith.addf %123, %94 : vector<16x512xf32>
    %cst_65 = arith.constant dense<0xFF800000> : vector<512xf32>
    %125 = vector.multi_reduction <maximumf>, %124, %cst_65 [0] : vector<16x512xf32> to vector<512xf32>
    %126 = vector.shape_cast %125 : vector<512xf32> to vector<1x512xf32>
    %127 = vector.broadcast %126 : vector<1x512xf32> to vector<16x512xf32>
    %128 = arith.subf %124, %127 : vector<16x512xf32>
    %129 = math.exp %128 : vector<16x512xf32>
    %cst_66 = arith.constant dense<0.000000e+00> : vector<512xf32>
    %130 = vector.multi_reduction <add>, %129, %cst_66 [0] : vector<16x512xf32> to vector<512xf32>
    %131 = vector.shape_cast %130 : vector<512xf32> to vector<1x512xf32>
    %132 = vector.broadcast %131 : vector<1x512xf32> to vector<16x512xf32>
    %133 = arith.divf %129, %132 : vector<16x512xf32>
    %134 = vector.extract_strided_slice %87 {offsets = [8, 0], sizes = [8, 16], strides = [1, 1]} : vector<32x16xf32> to vector<8x16xf32>
    %135 = arith.truncf %134 : vector<8x16xf32> to vector<8x16xbf16>
    %136 = arith.truncf %133 : vector<16x512xf32> to vector<16x512xbf16>
    %cst_67 = arith.constant dense<0.000000e+00> : vector<8x512xf32>
    %137 = tpu.matmul %135, %136, %cst_67 {dimension_numbers = #tpu.dot_dimension_numbers<[1], [0], [0], [1], [0, 0, 1, 1], [], []>} : vector<8x16xbf16>, vector<16x512xbf16>, vector<8x512xf32> -> vector<8x512xf32>
    %c8 = arith.constant 8 : index
    %c0_68 = arith.constant 0 : index
    %138 = vector.load %arg74[%c8, %c0_68] : memref<32x512xf32, #tpu.memory_space<vmem>>, vector<8x512xf32>
    tpu.vector_store %arg74[%c8, %c0_68], %137 {strides = array<i32>} : memref<32x512xf32, #tpu.memory_space<vmem>>, vector<8x512xf32>,
    %139 = vector.extract_strided_slice %74 {offsets = [16, 0], sizes = [8, 512], strides = [1, 1]} : vector<32x512xf32> to vector<8x512xf32>
    %140 = arith.truncf %139 : vector<8x512xf32> to vector<8x512xbf16>
    %141 = vector.extract_strided_slice %80 {offsets = [0, 16], sizes = [16, 8], strides = [1, 1]} : vector<16x32xf32> to vector<16x8xf32>
    %142 = arith.truncf %141 : vector<16x8xf32> to vector<16x8xbf16>
    %cst_69 = arith.constant dense<0.000000e+00> : vector<16x512xf32>
    %143 = tpu.matmul %142, %140, %cst_69 {dimension_numbers = #tpu.dot_dimension_numbers<[1], [0], [0], [1], [0, 0, 1, 1], [], []>} : vector<16x8xbf16>, vector<8x512xbf16>, vector<16x512xf32> -> vector<16x512xf32>
    %cst_70 = arith.constant 0.353553385 : f32
    %144 = vector.broadcast %cst_70 : f32 to vector<16x512xf32>
    %145 = arith.mulf %143, %144 : vector<16x512xf32>
    %146 = arith.addf %145, %94 : vector<16x512xf32>
    %cst_71 = arith.constant dense<0xFF800000> : vector<512xf32>
    %147 = vector.multi_reduction <maximumf>, %146, %cst_71 [0] : vector<16x512xf32> to vector<512xf32>
    %148 = vector.shape_cast %147 : vector<512xf32> to vector<1x512xf32>
    %149 = vector.broadcast %148 : vector<1x512xf32> to vector<16x512xf32>
    %150 = arith.subf %146, %149 : vector<16x512xf32>
    %151 = math.exp %150 : vector<16x512xf32>
    %cst_72 = arith.constant dense<0.000000e+00> : vector<512xf32>
    %152 = vector.multi_reduction <add>, %151, %cst_72 [0] : vector<16x512xf32> to vector<512xf32>
    %153 = vector.shape_cast %152 : vector<512xf32> to vector<1x512xf32>
    %154 = vector.broadcast %153 : vector<1x512xf32> to vector<16x512xf32>
    %155 = arith.divf %151, %154 : vector<16x512xf32>
    %156 = vector.extract_strided_slice %87 {offsets = [16, 0], sizes = [8, 16], strides = [1, 1]} : vector<32x16xf32> to vector<8x16xf32>
    %157 = arith.truncf %156 : vector<8x16xf32> to vector<8x16xbf16>
    %158 = arith.truncf %155 : vector<16x512xf32> to vector<16x512xbf16>
    %cst_73 = arith.constant dense<0.000000e+00> : vector<8x512xf32>
    %159 = tpu.matmul %157, %158, %cst_73 {dimension_numbers = #tpu.dot_dimension_numbers<[1], [0], [0], [1], [0, 0, 1, 1], [], []>} : vector<8x16xbf16>, vector<16x512xbf16>, vector<8x512xf32> -> vector<8x512xf32>
    %c16 = arith.constant 16 : index
    %c0_74 = arith.constant 0 : index
    %160 = vector.load %arg74[%c16, %c0_74] : memref<32x512xf32, #tpu.memory_space<vmem>>, vector<8x512xf32>
    tpu.vector_store %arg74[%c16, %c0_74], %159 {strides = array<i32>} : memref<32x512xf32, #tpu.memory_space<vmem>>, vector<8x512xf32>,
    %161 = vector.extract_strided_slice %74 {offsets = [24, 0], sizes = [8, 512], strides = [1, 1]} : vector<32x512xf32> to vector<8x512xf32>
    %162 = arith.truncf %161 : vector<8x512xf32> to vector<8x512xbf16>
    %163 = vector.extract_strided_slice %80 {offsets = [0, 24], sizes = [16, 8], strides = [1, 1]} : vector<16x32xf32> to vector<16x8xf32>
    %164 = arith.truncf %163 : vector<16x8xf32> to vector<16x8xbf16>
    %cst_75 = arith.constant dense<0.000000e+00> : vector<16x512xf32>
    %165 = tpu.matmul %164, %162, %cst_75 {dimension_numbers = #tpu.dot_dimension_numbers<[1], [0], [0], [1], [0, 0, 1, 1], [], []>} : vector<16x8xbf16>, vector<8x512xbf16>, vector<16x512xf32> -> vector<16x512xf32>
    %cst_76 = arith.constant 0.353553385 : f32
    %166 = vector.broadcast %cst_76 : f32 to vector<16x512xf32>
    %167 = arith.mulf %165, %166 : vector<16x512xf32>
    %168 = arith.addf %167, %94 : vector<16x512xf32>
    %cst_77 = arith.constant dense<0xFF800000> : vector<512xf32>
    %169 = vector.multi_reduction <maximumf>, %168, %cst_77 [0] : vector<16x512xf32> to vector<512xf32>
    %170 = vector.shape_cast %169 : vector<512xf32> to vector<1x512xf32>
    %171 = vector.broadcast %170 : vector<1x512xf32> to vector<16x512xf32>
    %172 = arith.subf %168, %171 : vector<16x512xf32>
    %173 = math.exp %172 : vector<16x512xf32>
    %cst_78 = arith.constant dense<0.000000e+00> : vector<512xf32>
    %174 = vector.multi_reduction <add>, %173, %cst_78 [0] : vector<16x512xf32> to vector<512xf32>
    %175 = vector.shape_cast %174 : vector<512xf32> to vector<1x512xf32>
    %176 = vector.broadcast %175 : vector<1x512xf32> to vector<16x512xf32>
    %177 = arith.divf %173, %176 : vector<16x512xf32>
    %178 = vector.extract_strided_slice %87 {offsets = [24, 0], sizes = [8, 16], strides = [1, 1]} : vector<32x16xf32> to vector<8x16xf32>
    %179 = arith.truncf %178 : vector<8x16xf32> to vector<8x16xbf16>
    %180 = arith.truncf %177 : vector<16x512xf32> to vector<16x512xbf16>
    %cst_79 = arith.constant dense<0.000000e+00> : vector<8x512xf32>
    %181 = tpu.matmul %179, %180, %cst_79 {dimension_numbers = #tpu.dot_dimension_numbers<[1], [0], [0], [1], [0, 0, 1, 1], [], []>} : vector<8x16xbf16>, vector<16x512xbf16>, vector<8x512xf32> -> vector<8x512xf32>
    %c24 = arith.constant 24 : index
    %c0_80 = arith.constant 0 : index
    %182 = vector.load %arg74[%c24, %c0_80] : memref<32x512xf32, #tpu.memory_space<vmem>>, vector<8x512xf32>
    tpu.vector_store %arg74[%c24, %c0_80], %181 {strides = array<i32>} : memref<32x512xf32, #tpu.memory_space<vmem>>, vector<8x512xf32>,
    %c0_81 = arith.constant 0 : index
    %c0_82 = arith.constant 0 : index
    %183 = vector.load %arg20[%c0_81, %c0_82] : memref<32x32xbf16, #tpu.memory_space<vmem>>, vector<32x32xbf16>
    %c0_83 = arith.constant 0 : index
    %c0_84 = arith.constant 0 : index
    %184 = vector.load %arg74[%c0_83, %c0_84] : memref<32x512xf32, #tpu.memory_space<vmem>>, vector<32x512xf32>
    %185 = arith.truncf %184 : vector<32x512xf32> to vector<32x512xbf16>
    %cst_85 = arith.constant dense<0.000000e+00> : vector<32x512xf32>
    %186 = tpu.matmul %183, %185, %cst_85 {dimension_numbers = #tpu.dot_dimension_numbers<[1], [0], [0], [1], [0, 0, 1, 1], [], []>} : vector<32x32xbf16>, vector<32x512xbf16>, vector<32x512xf32> -> vector<32x512xf32>
    %c0_86 = arith.constant 0 : index
    %c0_87 = arith.constant 0 : index
    %187 = vector.load %arg21[%c0_86, %c0_87] : memref<32x1xf32, #tpu.memory_space<vmem>>, vector<32x1xf32>
    %188 = vector.broadcast %187 : vector<32x1xf32> to vector<32x512xf32>
    %189 = arith.addf %186, %188 : vector<32x512xf32>
    %c0_88 = arith.constant 0 : index
    %c0_89 = arith.constant 0 : index
    %190 = vector.load %arg68[%c0_88, %c0_89] : memref<32x512xf32, #tpu.memory_space<vmem>>, vector<32x512xf32>
    tpu.vector_store %arg68[%c0_88, %c0_89], %189 {strides = array<i32>} : memref<32x512xf32, #tpu.memory_space<vmem>>, vector<32x512xf32>,
    %c0_90 = arith.constant 0 : index
    %c0_91 = arith.constant 0 : index
    %191 = vector.load %arg5[%c0_90, %c0_91] : memref<32x2xf32, #tpu.memory_space<vmem>>, vector<32x2xf32>
    %192 = vector.extract_strided_slice %191 {offsets = [0, 0], sizes = [32, 1], strides = [1, 1]} : vector<32x2xf32> to vector<32x1xf32>
    %193 = vector.broadcast %192 : vector<32x1xf32> to vector<32x256xf32>
    %194 = arith.mulf %3, %193 : vector<32x256xf32>
    %195 = vector.extract_strided_slice %191 {offsets = [0, 1], sizes = [32, 1], strides = [1, 1]} : vector<32x2xf32> to vector<32x1xf32>
    %196 = vector.broadcast %195 : vector<32x1xf32> to vector<32x256xf32>
    %197 = arith.mulf %5, %196 : vector<32x256xf32>
    %198 = tpu.concatenate %194, %197 in 1 : vector<32x256xf32>, vector<32x256xf32> -> vector<32x512xf32>
    %199 = arith.truncf %198 : vector<32x512xf32> to vector<32x512xbf16>
    %c0_92 = arith.constant 0 : index
    %c0_93 = arith.constant 0 : index
    %200 = vector.load %arg22[%c0_92, %c0_93] : memref<32x32xbf16, #tpu.memory_space<vmem>>, vector<32x32xbf16>
    %cst_94 = arith.constant dense<0.000000e+00> : vector<32x512xf32>
    %201 = tpu.matmul %200, %199, %cst_94 {dimension_numbers = #tpu.dot_dimension_numbers<[1], [0], [0], [1], [0, 0, 1, 1], [], []>} : vector<32x32xbf16>, vector<32x512xbf16>, vector<32x512xf32> -> vector<32x512xf32>
    %c0_95 = arith.constant 0 : index
    %c0_96 = arith.constant 0 : index
    %202 = vector.load %arg23[%c0_95, %c0_96] : memref<32x1xf32, #tpu.memory_space<vmem>>, vector<32x1xf32>
    %203 = vector.broadcast %202 : vector<32x1xf32> to vector<32x512xf32>
    %204 = arith.addf %201, %203 : vector<32x512xf32>
    %205 = arith.addf %204, %6 : vector<32x512xf32>
    %c0_97 = arith.constant 0 : index
    %c0_98 = arith.constant 0 : index
    %206 = vector.load %arg69[%c0_97, %c0_98] : memref<32x512xf32, #tpu.memory_space<vmem>>, vector<32x512xf32>
    tpu.vector_store %arg69[%c0_97, %c0_98], %205 {strides = array<i32>} : memref<32x512xf32, #tpu.memory_space<vmem>>, vector<32x512xf32>,
    %c0_99 = arith.constant 0 : index
    %c0_100 = arith.constant 0 : index
    %c0_101 = arith.constant 0 : index
    %207 = vector.load %arg24[%c0_99, %c0_100, %c0_101] : memref<2x64x64xf32, #tpu.memory_space<vmem>>, vector<1x64x64xf32>
    %208 = vector.shape_cast %207 : vector<1x64x64xf32> to vector<64x64xf32>
    %c1_102 = arith.constant 1 : index
    %c0_103 = arith.constant 0 : index
    %c0_104 = arith.constant 0 : index
    %209 = vector.load %arg24[%c1_102, %c0_103, %c0_104] : memref<2x64x64xf32, #tpu.memory_space<vmem>>, vector<1x64x64xf32>
    %210 = vector.shape_cast %209 : vector<1x64x64xf32> to vector<64x64xf32>
    %211 = tpu.concatenate %208, %210 in 1 : vector<64x64xf32>, vector<64x64xf32> -> vector<64x128xf32>
    %c0_105 = arith.constant 0 : index
    %c0_106 = arith.constant 0 : index
    %212 = vector.load %arg25[%c0_105, %c0_106] : memref<64x64xf32, #tpu.memory_space<vmem>>, vector<64x64xf32>
    %213 = arith.addf %208, %212 : vector<64x64xf32>
    %214 = arith.addf %210, %212 : vector<64x64xf32>
    %215 = tpu.concatenate %213, %214 in 1 : vector<64x64xf32>, vector<64x64xf32> -> vector<64x128xf32>
    %216 = arith.truncf %215 : vector<64x128xf32> to vector<64x128xbf16>
    %c0_107 = arith.constant 0 : index
    %c0_108 = arith.constant 0 : index
    %217 = vector.load %arg28[%c0_107, %c0_108] : memref<16x64xbf16, #tpu.memory_space<vmem>>, vector<16x64xbf16>
    %cst_109 = arith.constant dense<0.000000e+00> : vector<16x64xf32>
    %218 = tpu.matmul %0, %217, %cst_109 {dimension_numbers = #tpu.dot_dimension_numbers<[1], [0], [0], [1], [0, 0, 1, 1], [], []>} : vector<16x16xbf16>, vector<16x64xbf16>, vector<16x64xf32> -> vector<16x64xf32>
    %c0_110 = arith.constant 0 : index
    %c0_111 = arith.constant 0 : index
    %219 = vector.load %arg29[%c0_110, %c0_111] : memref<1x64xf32, #tpu.memory_space<vmem>>, vector<1x64xf32>
    %220 = vector.broadcast %219 : vector<1x64xf32> to vector<16x64xf32>
    %221 = arith.addf %218, %220 : vector<16x64xf32>
    %c0_112 = arith.constant 0 : index
    %c0_113 = arith.constant 0 : index
    %222 = vector.load %arg30[%c0_112, %c0_113] : memref<1x64xf32, #tpu.memory_space<vmem>>, vector<1x64xf32>
    %c0_114 = arith.constant 0 : index
    %c0_115 = arith.constant 0 : index
    %223 = vector.load %arg31[%c0_114, %c0_115] : memref<1x64xf32, #tpu.memory_space<vmem>>, vector<1x64xf32>
    %cst_116 = arith.constant dense<0.000000e+00> : vector<16xf32>
    %224 = vector.multi_reduction <add>, %221, %cst_116 [1] : vector<16x64xf32> to vector<16xf32>
    %225 = vector.shape_cast %224 : vector<16xf32> to vector<16x1xf32>
    %cst_117 = arith.constant 6.400000e+01 : f32
    %226 = vector.broadcast %cst_117 : f32 to vector<16x1xf32>
    %227 = arith.divf %225, %226 : vector<16x1xf32>
    %228 = vector.broadcast %227 : vector<16x1xf32> to vector<16x64xf32>
    %229 = arith.subf %221, %228 : vector<16x64xf32>
    %230 = arith.mulf %229, %229 : vector<16x64xf32>
    %cst_118 = arith.constant dense<0.000000e+00> : vector<16xf32>
    %231 = vector.multi_reduction <add>, %230, %cst_118 [1] : vector<16x64xf32> to vector<16xf32>
    %232 = vector.shape_cast %231 : vector<16xf32> to vector<16x1xf32>
    %cst_119 = arith.constant 6.400000e+01 : f32
    %233 = vector.broadcast %cst_119 : f32 to vector<16x1xf32>
    %234 = arith.divf %232, %233 : vector<16x1xf32>
    %235 = vector.broadcast %227 : vector<16x1xf32> to vector<16x64xf32>
    %236 = arith.subf %221, %235 : vector<16x64xf32>
    %cst_120 = arith.constant 9.99999996E-13 : f32
    %237 = vector.broadcast %cst_120 : f32 to vector<16x1xf32>
    %238 = arith.addf %234, %237 : vector<16x1xf32>
    %239 = math.rsqrt %238 : vector<16x1xf32>
    %240 = vector.broadcast %239 : vector<16x1xf32> to vector<16x64xf32>
    %241 = arith.mulf %236, %240 : vector<16x64xf32>
    %242 = vector.broadcast %222 : vector<1x64xf32> to vector<16x64xf32>
    %243 = arith.mulf %241, %242 : vector<16x64xf32>
    %244 = vector.broadcast %223 : vector<1x64xf32> to vector<16x64xf32>
    %245 = arith.addf %243, %244 : vector<16x64xf32>
    %c0_121 = arith.constant 0 : index
    %c0_122 = arith.constant 0 : index
    %246 = vector.load %arg32[%c0_121, %c0_122] : memref<16x64xbf16, #tpu.memory_space<vmem>>, vector<16x64xbf16>
    %cst_123 = arith.constant dense<0.000000e+00> : vector<16x64xf32>
    %247 = tpu.matmul %0, %246, %cst_123 {dimension_numbers = #tpu.dot_dimension_numbers<[1], [0], [0], [1], [0, 0, 1, 1], [], []>} : vector<16x16xbf16>, vector<16x64xbf16>, vector<16x64xf32> -> vector<16x64xf32>
    %c0_124 = arith.constant 0 : index
    %c0_125 = arith.constant 0 : index
    %248 = vector.load %arg33[%c0_124, %c0_125] : memref<1x64xf32, #tpu.memory_space<vmem>>, vector<1x64xf32>
    %249 = vector.broadcast %248 : vector<1x64xf32> to vector<16x64xf32>
    %250 = arith.addf %247, %249 : vector<16x64xf32>
    %c0_126 = arith.constant 0 : index
    %c0_127 = arith.constant 0 : index
    %251 = vector.load %arg34[%c0_126, %c0_127] : memref<1x64xf32, #tpu.memory_space<vmem>>, vector<1x64xf32>
    %c0_128 = arith.constant 0 : index
    %c0_129 = arith.constant 0 : index
    %252 = vector.load %arg35[%c0_128, %c0_129] : memref<1x64xf32, #tpu.memory_space<vmem>>, vector<1x64xf32>
    %cst_130 = arith.constant dense<0.000000e+00> : vector<16xf32>
    %253 = vector.multi_reduction <add>, %250, %cst_130 [1] : vector<16x64xf32> to vector<16xf32>
    %254 = vector.shape_cast %253 : vector<16xf32> to vector<16x1xf32>
    %cst_131 = arith.constant 6.400000e+01 : f32
    %255 = vector.broadcast %cst_131 : f32 to vector<16x1xf32>
    %256 = arith.divf %254, %255 : vector<16x1xf32>
    %257 = vector.broadcast %256 : vector<16x1xf32> to vector<16x64xf32>
    %258 = arith.subf %250, %257 : vector<16x64xf32>
    %259 = arith.mulf %258, %258 : vector<16x64xf32>
    %cst_132 = arith.constant dense<0.000000e+00> : vector<16xf32>
    %260 = vector.multi_reduction <add>, %259, %cst_132 [1] : vector<16x64xf32> to vector<16xf32>
    %261 = vector.shape_cast %260 : vector<16xf32> to vector<16x1xf32>
    %cst_133 = arith.constant 6.400000e+01 : f32
    %262 = vector.broadcast %cst_133 : f32 to vector<16x1xf32>
    %263 = arith.divf %261, %262 : vector<16x1xf32>
    %264 = vector.broadcast %256 : vector<16x1xf32> to vector<16x64xf32>
    %265 = arith.subf %250, %264 : vector<16x64xf32>
    %cst_134 = arith.constant 9.99999996E-13 : f32
    %266 = vector.broadcast %cst_134 : f32 to vector<16x1xf32>
    %267 = arith.addf %263, %266 : vector<16x1xf32>
    %268 = math.rsqrt %267 : vector<16x1xf32>
    %269 = vector.broadcast %268 : vector<16x1xf32> to vector<16x64xf32>
    %270 = arith.mulf %265, %269 : vector<16x64xf32>
    %271 = vector.broadcast %251 : vector<1x64xf32> to vector<16x64xf32>
    %272 = arith.mulf %270, %271 : vector<16x64xf32>
    %273 = vector.broadcast %252 : vector<1x64xf32> to vector<16x64xf32>
    %274 = arith.addf %272, %273 : vector<16x64xf32>
    %c0_135 = arith.constant 0 : index
    %c0_136 = arith.constant 0 : index
    %275 = vector.load %arg36[%c0_135, %c0_136] : memref<64x64xbf16, #tpu.memory_space<vmem>>, vector<64x64xbf16>
    %cst_137 = arith.constant dense<0.000000e+00> : vector<64x128xf32>
    %276 = tpu.matmul %275, %216, %cst_137 {dimension_numbers = #tpu.dot_dimension_numbers<[1], [0], [0], [1], [0, 0, 1, 1], [], []>} : vector<64x64xbf16>, vector<64x128xbf16>, vector<64x128xf32> -> vector<64x128xf32>
    %c0_138 = arith.constant 0 : index
    %c0_139 = arith.constant 0 : index
    %277 = vector.load %arg37[%c0_138, %c0_139] : memref<64x1xf32, #tpu.memory_space<vmem>>, vector<64x1xf32>
    %278 = vector.broadcast %277 : vector<64x1xf32> to vector<64x128xf32>
    %279 = arith.addf %276, %278 : vector<64x128xf32>
    %280 = arith.truncf %245 : vector<16x64xf32> to vector<16x64xbf16>
    %c0_140 = arith.constant 0 : index
    %c0_141 = arith.constant 0 : index
    %281 = vector.load %arg38[%c0_140, %c0_141] : memref<64x64xbf16, #tpu.memory_space<vmem>>, vector<64x64xbf16>
    %cst_142 = arith.constant dense<0.000000e+00> : vector<16x64xf32>
    %282 = tpu.matmul %280, %281, %cst_142 {dimension_numbers = #tpu.dot_dimension_numbers<[1], [0], [0], [1], [0, 0, 1, 1], [], []>} : vector<16x64xbf16>, vector<64x64xbf16>, vector<16x64xf32> -> vector<16x64xf32>
    %c0_143 = arith.constant 0 : index
    %c0_144 = arith.constant 0 : index
    %283 = vector.load %arg39[%c0_143, %c0_144] : memref<1x64xf32, #tpu.memory_space<vmem>>, vector<1x64xf32>
    %284 = vector.broadcast %283 : vector<1x64xf32> to vector<16x64xf32>
    %285 = arith.addf %282, %284 : vector<16x64xf32>
    %c0_145 = arith.constant 0 : index
    %c0_146 = arith.constant 0 : index
    %286 = vector.load %arg40[%c0_145, %c0_146] : memref<64x64xbf16, #tpu.memory_space<vmem>>, vector<64x64xbf16>
    %287 = tpu.transpose %274, [1, 0] : vector<16x64xf32> -> vector<64x16xf32>
    %288 = arith.truncf %287 : vector<64x16xf32> to vector<64x16xbf16>
    %cst_147 = arith.constant dense<0.000000e+00> : vector<64x16xf32>
    %289 = tpu.matmul %286, %288, %cst_147 {dimension_numbers = #tpu.dot_dimension_numbers<[1], [0], [0], [1], [0, 0, 1, 1], [], []>} : vector<64x64xbf16>, vector<64x16xbf16>, vector<64x16xf32> -> vector<64x16xf32>
    %c0_148 = arith.constant 0 : index
    %c0_149 = arith.constant 0 : index
    %290 = vector.load %arg41[%c0_148, %c0_149] : memref<64x1xf32, #tpu.memory_space<vmem>>, vector<64x1xf32>
    %291 = vector.broadcast %290 : vector<64x1xf32> to vector<64x16xf32>
    %292 = arith.addf %289, %291 : vector<64x16xf32>
    %c0_150 = arith.constant 0 : index
    %c0_151 = arith.constant 0 : index
    %293 = vector.load %arg26[%c0_150, %c0_151] : memref<1x128xi32, #tpu.memory_space<vmem>>, vector<1x128xi32>
    %294 = vector.broadcast %1 : vector<16x1xi32> to vector<16x128xi32>
    %295 = vector.broadcast %293 : vector<1x128xi32> to vector<16x128xi32>
    %296 = arith.cmpi eq, %294, %295 : vector<16x128xi32>
    %cst_152 = arith.constant 0.000000e+00 : f32
    %cst_153 = arith.constant -1.000000e+30 : f32
    %297 = vector.broadcast %cst_152 : f32 to vector<16x128xf32>
    %298 = vector.broadcast %cst_153 : f32 to vector<16x128xf32>
    %299 = arith.select %296, %297, %298 : vector<16x128xi1>, vector<16x128xf32>
    %300 = vector.extract_strided_slice %279 {offsets = [0, 0], sizes = [16, 128], strides = [1, 1]} : vector<64x128xf32> to vector<16x128xf32>
    %301 = arith.truncf %300 : vector<16x128xf32> to vector<16x128xbf16>
    %302 = vector.extract_strided_slice %285 {offsets = [0, 0], sizes = [16, 16], strides = [1, 1]} : vector<16x64xf32> to vector<16x16xf32>
    %303 = arith.truncf %302 : vector<16x16xf32> to vector<16x16xbf16>
    %cst_154 = arith.constant dense<0.000000e+00> : vector<16x128xf32>
    %304 = tpu.matmul %303, %301, %cst_154 {dimension_numbers = #tpu.dot_dimension_numbers<[1], [0], [0], [1], [0, 0, 1, 1], [], []>} : vector<16x16xbf16>, vector<16x128xbf16>, vector<16x128xf32> -> vector<16x128xf32>
    %cst_155 = arith.constant 2.500000e-01 : f32
    %305 = vector.broadcast %cst_155 : f32 to vector<16x128xf32>
    %306 = arith.mulf %304, %305 : vector<16x128xf32>
    %307 = arith.addf %306, %299 : vector<16x128xf32>
    %cst_156 = arith.constant dense<0xFF800000> : vector<128xf32>
    %308 = vector.multi_reduction <maximumf>, %307, %cst_156 [0] : vector<16x128xf32> to vector<128xf32>
    %309 = vector.shape_cast %308 : vector<128xf32> to vector<1x128xf32>
    %310 = vector.broadcast %309 : vector<1x128xf32> to vector<16x128xf32>
    %311 = arith.subf %307, %310 : vector<16x128xf32>
    %312 = math.exp %311 : vector<16x128xf32>
    %cst_157 = arith.constant dense<0.000000e+00> : vector<128xf32>
    %313 = vector.multi_reduction <add>, %312, %cst_157 [0] : vector<16x128xf32> to vector<128xf32>
    %314 = vector.shape_cast %313 : vector<128xf32> to vector<1x128xf32>
    %315 = vector.broadcast %314 : vector<1x128xf32> to vector<16x128xf32>
    %316 = arith.divf %312, %315 : vector<16x128xf32>
    %317 = vector.extract_strided_slice %292 {offsets = [0, 0], sizes = [16, 16], strides = [1, 1]} : vector<64x16xf32> to vector<16x16xf32>
    %318 = arith.truncf %317 : vector<16x16xf32> to vector<16x16xbf16>
    %319 = arith.truncf %316 : vector<16x128xf32> to vector<16x128xbf16>
    %cst_158 = arith.constant dense<0.000000e+00> : vector<16x128xf32>
    %320 = tpu.matmul %318, %319, %cst_158 {dimension_numbers = #tpu.dot_dimension_numbers<[1], [0], [0], [1], [0, 0, 1, 1], [], []>} : vector<16x16xbf16>, vector<16x128xbf16>, vector<16x128xf32> -> vector<16x128xf32>
    %c0_159 = arith.constant 0 : index
    %c0_160 = arith.constant 0 : index
    %321 = vector.load %arg75[%c0_159, %c0_160] : memref<64x128xf32, #tpu.memory_space<vmem>>, vector<16x128xf32>
    tpu.vector_store %arg75[%c0_159, %c0_160], %320 {strides = array<i32>} : memref<64x128xf32, #tpu.memory_space<vmem>>, vector<16x128xf32>,
    %322 = vector.extract_strided_slice %279 {offsets = [16, 0], sizes = [16, 128], strides = [1, 1]} : vector<64x128xf32> to vector<16x128xf32>
    %323 = arith.truncf %322 : vector<16x128xf32> to vector<16x128xbf16>
    %324 = vector.extract_strided_slice %285 {offsets = [0, 16], sizes = [16, 16], strides = [1, 1]} : vector<16x64xf32> to vector<16x16xf32>
    %325 = arith.truncf %324 : vector<16x16xf32> to vector<16x16xbf16>
    %cst_161 = arith.constant dense<0.000000e+00> : vector<16x128xf32>
    %326 = tpu.matmul %325, %323, %cst_161 {dimension_numbers = #tpu.dot_dimension_numbers<[1], [0], [0], [1], [0, 0, 1, 1], [], []>} : vector<16x16xbf16>, vector<16x128xbf16>, vector<16x128xf32> -> vector<16x128xf32>
    %cst_162 = arith.constant 2.500000e-01 : f32
    %327 = vector.broadcast %cst_162 : f32 to vector<16x128xf32>
    %328 = arith.mulf %326, %327 : vector<16x128xf32>
    %329 = arith.addf %328, %299 : vector<16x128xf32>
    %cst_163 = arith.constant dense<0xFF800000> : vector<128xf32>
    %330 = vector.multi_reduction <maximumf>, %329, %cst_163 [0] : vector<16x128xf32> to vector<128xf32>
    %331 = vector.shape_cast %330 : vector<128xf32> to vector<1x128xf32>
    %332 = vector.broadcast %331 : vector<1x128xf32> to vector<16x128xf32>
    %333 = arith.subf %329, %332 : vector<16x128xf32>
    %334 = math.exp %333 : vector<16x128xf32>
    %cst_164 = arith.constant dense<0.000000e+00> : vector<128xf32>
    %335 = vector.multi_reduction <add>, %334, %cst_164 [0] : vector<16x128xf32> to vector<128xf32>
    %336 = vector.shape_cast %335 : vector<128xf32> to vector<1x128xf32>
    %337 = vector.broadcast %336 : vector<1x128xf32> to vector<16x128xf32>
    %338 = arith.divf %334, %337 : vector<16x128xf32>
    %339 = vector.extract_strided_slice %292 {offsets = [16, 0], sizes = [16, 16], strides = [1, 1]} : vector<64x16xf32> to vector<16x16xf32>
    %340 = arith.truncf %339 : vector<16x16xf32> to vector<16x16xbf16>
    %341 = arith.truncf %338 : vector<16x128xf32> to vector<16x128xbf16>
    %cst_165 = arith.constant dense<0.000000e+00> : vector<16x128xf32>
    %342 = tpu.matmul %340, %341, %cst_165 {dimension_numbers = #tpu.dot_dimension_numbers<[1], [0], [0], [1], [0, 0, 1, 1], [], []>} : vector<16x16xbf16>, vector<16x128xbf16>, vector<16x128xf32> -> vector<16x128xf32>
    %c16_166 = arith.constant 16 : index
    %c0_167 = arith.constant 0 : index
    %343 = vector.load %arg75[%c16_166, %c0_167] : memref<64x128xf32, #tpu.memory_space<vmem>>, vector<16x128xf32>
    tpu.vector_store %arg75[%c16_166, %c0_167], %342 {strides = array<i32>} : memref<64x128xf32, #tpu.memory_space<vmem>>, vector<16x128xf32>,
    %344 = vector.extract_strided_slice %279 {offsets = [32, 0], sizes = [16, 128], strides = [1, 1]} : vector<64x128xf32> to vector<16x128xf32>
    %345 = arith.truncf %344 : vector<16x128xf32> to vector<16x128xbf16>
    %346 = vector.extract_strided_slice %285 {offsets = [0, 32], sizes = [16, 16], strides = [1, 1]} : vector<16x64xf32> to vector<16x16xf32>
    %347 = arith.truncf %346 : vector<16x16xf32> to vector<16x16xbf16>
    %cst_168 = arith.constant dense<0.000000e+00> : vector<16x128xf32>
    %348 = tpu.matmul %347, %345, %cst_168 {dimension_numbers = #tpu.dot_dimension_numbers<[1], [0], [0], [1], [0, 0, 1, 1], [], []>} : vector<16x16xbf16>, vector<16x128xbf16>, vector<16x128xf32> -> vector<16x128xf32>
    %cst_169 = arith.constant 2.500000e-01 : f32
    %349 = vector.broadcast %cst_169 : f32 to vector<16x128xf32>
    %350 = arith.mulf %348, %349 : vector<16x128xf32>
    %351 = arith.addf %350, %299 : vector<16x128xf32>
    %cst_170 = arith.constant dense<0xFF800000> : vector<128xf32>
    %352 = vector.multi_reduction <maximumf>, %351, %cst_170 [0] : vector<16x128xf32> to vector<128xf32>
    %353 = vector.shape_cast %352 : vector<128xf32> to vector<1x128xf32>
    %354 = vector.broadcast %353 : vector<1x128xf32> to vector<16x128xf32>
    %355 = arith.subf %351, %354 : vector<16x128xf32>
    %356 = math.exp %355 : vector<16x128xf32>
    %cst_171 = arith.constant dense<0.000000e+00> : vector<128xf32>
    %357 = vector.multi_reduction <add>, %356, %cst_171 [0] : vector<16x128xf32> to vector<128xf32>
    %358 = vector.shape_cast %357 : vector<128xf32> to vector<1x128xf32>
    %359 = vector.broadcast %358 : vector<1x128xf32> to vector<16x128xf32>
    %360 = arith.divf %356, %359 : vector<16x128xf32>
    %361 = vector.extract_strided_slice %292 {offsets = [32, 0], sizes = [16, 16], strides = [1, 1]} : vector<64x16xf32> to vector<16x16xf32>
    %362 = arith.truncf %361 : vector<16x16xf32> to vector<16x16xbf16>
    %363 = arith.truncf %360 : vector<16x128xf32> to vector<16x128xbf16>
    %cst_172 = arith.constant dense<0.000000e+00> : vector<16x128xf32>
    %364 = tpu.matmul %362, %363, %cst_172 {dimension_numbers = #tpu.dot_dimension_numbers<[1], [0], [0], [1], [0, 0, 1, 1], [], []>} : vector<16x16xbf16>, vector<16x128xbf16>, vector<16x128xf32> -> vector<16x128xf32>
    %c32 = arith.constant 32 : index
    %c0_173 = arith.constant 0 : index
    %365 = vector.load %arg75[%c32, %c0_173] : memref<64x128xf32, #tpu.memory_space<vmem>>, vector<16x128xf32>
    tpu.vector_store %arg75[%c32, %c0_173], %364 {strides = array<i32>} : memref<64x128xf32, #tpu.memory_space<vmem>>, vector<16x128xf32>,
    %366 = vector.extract_strided_slice %279 {offsets = [48, 0], sizes = [16, 128], strides = [1, 1]} : vector<64x128xf32> to vector<16x128xf32>
    %367 = arith.truncf %366 : vector<16x128xf32> to vector<16x128xbf16>
    %368 = vector.extract_strided_slice %285 {offsets = [0, 48], sizes = [16, 16], strides = [1, 1]} : vector<16x64xf32> to vector<16x16xf32>
    %369 = arith.truncf %368 : vector<16x16xf32> to vector<16x16xbf16>
    %cst_174 = arith.constant dense<0.000000e+00> : vector<16x128xf32>
    %370 = tpu.matmul %369, %367, %cst_174 {dimension_numbers = #tpu.dot_dimension_numbers<[1], [0], [0], [1], [0, 0, 1, 1], [], []>} : vector<16x16xbf16>, vector<16x128xbf16>, vector<16x128xf32> -> vector<16x128xf32>
    %cst_175 = arith.constant 2.500000e-01 : f32
    %371 = vector.broadcast %cst_175 : f32 to vector<16x128xf32>
    %372 = arith.mulf %370, %371 : vector<16x128xf32>
    %373 = arith.addf %372, %299 : vector<16x128xf32>
    %cst_176 = arith.constant dense<0xFF800000> : vector<128xf32>
    %374 = vector.multi_reduction <maximumf>, %373, %cst_176 [0] : vector<16x128xf32> to vector<128xf32>
    %375 = vector.shape_cast %374 : vector<128xf32> to vector<1x128xf32>
    %376 = vector.broadcast %375 : vector<1x128xf32> to vector<16x128xf32>
    %377 = arith.subf %373, %376 : vector<16x128xf32>
    %378 = math.exp %377 : vector<16x128xf32>
    %cst_177 = arith.constant dense<0.000000e+00> : vector<128xf32>
    %379 = vector.multi_reduction <add>, %378, %cst_177 [0] : vector<16x128xf32> to vector<128xf32>
    %380 = vector.shape_cast %379 : vector<128xf32> to vector<1x128xf32>
    %381 = vector.broadcast %380 : vector<1x128xf32> to vector<16x128xf32>
    %382 = arith.divf %378, %381 : vector<16x128xf32>
    %383 = vector.extract_strided_slice %292 {offsets = [48, 0], sizes = [16, 16], strides = [1, 1]} : vector<64x16xf32> to vector<16x16xf32>
    %384 = arith.truncf %383 : vector<16x16xf32> to vector<16x16xbf16>
    %385 = arith.truncf %382 : vector<16x128xf32> to vector<16x128xbf16>
    %cst_178 = arith.constant dense<0.000000e+00> : vector<16x128xf32>
    %386 = tpu.matmul %384, %385, %cst_178 {dimension_numbers = #tpu.dot_dimension_numbers<[1], [0], [0], [1], [0, 0, 1, 1], [], []>} : vector<16x16xbf16>, vector<16x128xbf16>, vector<16x128xf32> -> vector<16x128xf32>
    %c48 = arith.constant 48 : index
    %c0_179 = arith.constant 0 : index
    %387 = vector.load %arg75[%c48, %c0_179] : memref<64x128xf32, #tpu.memory_space<vmem>>, vector<16x128xf32>
    tpu.vector_store %arg75[%c48, %c0_179], %386 {strides = array<i32>} : memref<64x128xf32, #tpu.memory_space<vmem>>, vector<16x128xf32>,
    %c0_180 = arith.constant 0 : index
    %c0_181 = arith.constant 0 : index
    %388 = vector.load %arg42[%c0_180, %c0_181] : memref<64x64xbf16, #tpu.memory_space<vmem>>, vector<64x64xbf16>
    %c0_182 = arith.constant 0 : index
    %c0_183 = arith.constant 0 : index
    %389 = vector.load %arg75[%c0_182, %c0_183] : memref<64x128xf32, #tpu.memory_space<vmem>>, vector<64x128xf32>
    %390 = arith.truncf %389 : vector<64x128xf32> to vector<64x128xbf16>
    %cst_184 = arith.constant dense<0.000000e+00> : vector<64x128xf32>
    %391 = tpu.matmul %388, %390, %cst_184 {dimension_numbers = #tpu.dot_dimension_numbers<[1], [0], [0], [1], [0, 0, 1, 1], [], []>} : vector<64x64xbf16>, vector<64x128xbf16>, vector<64x128xf32> -> vector<64x128xf32>
    %c0_185 = arith.constant 0 : index
    %c0_186 = arith.constant 0 : index
    %392 = vector.load %arg43[%c0_185, %c0_186] : memref<64x1xf32, #tpu.memory_space<vmem>>, vector<64x1xf32>
    %393 = vector.broadcast %392 : vector<64x1xf32> to vector<64x128xf32>
    %394 = arith.addf %391, %393 : vector<64x128xf32>
    %c0_187 = arith.constant 0 : index
    %c0_188 = arith.constant 0 : index
    %395 = vector.load %arg70[%c0_187, %c0_188] : memref<64x128xf32, #tpu.memory_space<vmem>>, vector<64x128xf32>
    tpu.vector_store %arg70[%c0_187, %c0_188], %394 {strides = array<i32>} : memref<64x128xf32, #tpu.memory_space<vmem>>, vector<64x128xf32>,
    %c0_189 = arith.constant 0 : index
    %c0_190 = arith.constant 0 : index
    %396 = vector.load %arg27[%c0_189, %c0_190] : memref<64x2xf32, #tpu.memory_space<vmem>>, vector<64x2xf32>
    %397 = vector.extract_strided_slice %396 {offsets = [0, 0], sizes = [64, 1], strides = [1, 1]} : vector<64x2xf32> to vector<64x1xf32>
    %398 = vector.broadcast %397 : vector<64x1xf32> to vector<64x64xf32>
    %399 = arith.mulf %208, %398 : vector<64x64xf32>
    %400 = vector.extract_strided_slice %396 {offsets = [0, 1], sizes = [64, 1], strides = [1, 1]} : vector<64x2xf32> to vector<64x1xf32>
    %401 = vector.broadcast %400 : vector<64x1xf32> to vector<64x64xf32>
    %402 = arith.mulf %210, %401 : vector<64x64xf32>
    %403 = tpu.concatenate %399, %402 in 1 : vector<64x64xf32>, vector<64x64xf32> -> vector<64x128xf32>
    %404 = arith.truncf %403 : vector<64x128xf32> to vector<64x128xbf16>
    %c0_191 = arith.constant 0 : index
    %c0_192 = arith.constant 0 : index
    %405 = vector.load %arg44[%c0_191, %c0_192] : memref<64x64xbf16, #tpu.memory_space<vmem>>, vector<64x64xbf16>
    %cst_193 = arith.constant dense<0.000000e+00> : vector<64x128xf32>
    %406 = tpu.matmul %405, %404, %cst_193 {dimension_numbers = #tpu.dot_dimension_numbers<[1], [0], [0], [1], [0, 0, 1, 1], [], []>} : vector<64x64xbf16>, vector<64x128xbf16>, vector<64x128xf32> -> vector<64x128xf32>
    %c0_194 = arith.constant 0 : index
    %c0_195 = arith.constant 0 : index
    %407 = vector.load %arg45[%c0_194, %c0_195] : memref<64x1xf32, #tpu.memory_space<vmem>>, vector<64x1xf32>
    %408 = vector.broadcast %407 : vector<64x1xf32> to vector<64x128xf32>
    %409 = arith.addf %406, %408 : vector<64x128xf32>
    %410 = arith.addf %409, %211 : vector<64x128xf32>
    %c0_196 = arith.constant 0 : index
    %c0_197 = arith.constant 0 : index
    %411 = vector.load %arg71[%c0_196, %c0_197] : memref<64x128xf32, #tpu.memory_space<vmem>>, vector<64x128xf32>
    tpu.vector_store %arg71[%c0_196, %c0_197], %410 {strides = array<i32>} : memref<64x128xf32, #tpu.memory_space<vmem>>, vector<64x128xf32>,
    %c0_198 = arith.constant 0 : index
    %c0_199 = arith.constant 0 : index
    %c0_200 = arith.constant 0 : index
    %412 = vector.load %arg46[%c0_198, %c0_199, %c0_200] : memref<2x128x16xf32, #tpu.memory_space<vmem>>, vector<1x128x16xf32>
    %413 = vector.shape_cast %412 : vector<1x128x16xf32> to vector<128x16xf32>
    %c1_201 = arith.constant 1 : index
    %c0_202 = arith.constant 0 : index
    %c0_203 = arith.constant 0 : index
    %414 = vector.load %arg46[%c1_201, %c0_202, %c0_203] : memref<2x128x16xf32, #tpu.memory_space<vmem>>, vector<1x128x16xf32>
    %415 = vector.shape_cast %414 : vector<1x128x16xf32> to vector<128x16xf32>
    %416 = tpu.concatenate %413, %415 in 1 : vector<128x16xf32>, vector<128x16xf32> -> vector<128x32xf32>
    %c0_204 = arith.constant 0 : index
    %c0_205 = arith.constant 0 : index
    %417 = vector.load %arg47[%c0_204, %c0_205] : memref<128x16xf32, #tpu.memory_space<vmem>>, vector<128x16xf32>
    %418 = arith.addf %413, %417 : vector<128x16xf32>
    %419 = arith.addf %415, %417 : vector<128x16xf32>
    %420 = tpu.concatenate %418, %419 in 1 : vector<128x16xf32>, vector<128x16xf32> -> vector<128x32xf32>
    %421 = arith.truncf %420 : vector<128x32xf32> to vector<128x32xbf16>
    %c0_206 = arith.constant 0 : index
    %c0_207 = arith.constant 0 : index
    %422 = vector.load %arg50[%c0_206, %c0_207] : memref<16x128xbf16, #tpu.memory_space<vmem>>, vector<16x128xbf16>
    %cst_208 = arith.constant dense<0.000000e+00> : vector<16x128xf32>
    %423 = tpu.matmul %0, %422, %cst_208 {dimension_numbers = #tpu.dot_dimension_numbers<[1], [0], [0], [1], [0, 0, 1, 1], [], []>} : vector<16x16xbf16>, vector<16x128xbf16>, vector<16x128xf32> -> vector<16x128xf32>
    %c0_209 = arith.constant 0 : index
    %c0_210 = arith.constant 0 : index
    %424 = vector.load %arg51[%c0_209, %c0_210] : memref<1x128xf32, #tpu.memory_space<vmem>>, vector<1x128xf32>
    %425 = vector.broadcast %424 : vector<1x128xf32> to vector<16x128xf32>
    %426 = arith.addf %423, %425 : vector<16x128xf32>
    %c0_211 = arith.constant 0 : index
    %c0_212 = arith.constant 0 : index
    %427 = vector.load %arg52[%c0_211, %c0_212] : memref<1x128xf32, #tpu.memory_space<vmem>>, vector<1x128xf32>
    %c0_213 = arith.constant 0 : index
    %c0_214 = arith.constant 0 : index
    %428 = vector.load %arg53[%c0_213, %c0_214] : memref<1x128xf32, #tpu.memory_space<vmem>>, vector<1x128xf32>
    %cst_215 = arith.constant dense<0.000000e+00> : vector<16xf32>
    %429 = vector.multi_reduction <add>, %426, %cst_215 [1] : vector<16x128xf32> to vector<16xf32>
    %430 = vector.shape_cast %429 : vector<16xf32> to vector<16x1xf32>
    %cst_216 = arith.constant 1.280000e+02 : f32
    %431 = vector.broadcast %cst_216 : f32 to vector<16x1xf32>
    %432 = arith.divf %430, %431 : vector<16x1xf32>
    %433 = vector.broadcast %432 : vector<16x1xf32> to vector<16x128xf32>
    %434 = arith.subf %426, %433 : vector<16x128xf32>
    %435 = arith.mulf %434, %434 : vector<16x128xf32>
    %cst_217 = arith.constant dense<0.000000e+00> : vector<16xf32>
    %436 = vector.multi_reduction <add>, %435, %cst_217 [1] : vector<16x128xf32> to vector<16xf32>
    %437 = vector.shape_cast %436 : vector<16xf32> to vector<16x1xf32>
    %cst_218 = arith.constant 1.280000e+02 : f32
    %438 = vector.broadcast %cst_218 : f32 to vector<16x1xf32>
    %439 = arith.divf %437, %438 : vector<16x1xf32>
    %440 = vector.broadcast %432 : vector<16x1xf32> to vector<16x128xf32>
    %441 = arith.subf %426, %440 : vector<16x128xf32>
    %cst_219 = arith.constant 9.99999996E-13 : f32
    %442 = vector.broadcast %cst_219 : f32 to vector<16x1xf32>
    %443 = arith.addf %439, %442 : vector<16x1xf32>
    %444 = math.rsqrt %443 : vector<16x1xf32>
    %445 = vector.broadcast %444 : vector<16x1xf32> to vector<16x128xf32>
    %446 = arith.mulf %441, %445 : vector<16x128xf32>
    %447 = vector.broadcast %427 : vector<1x128xf32> to vector<16x128xf32>
    %448 = arith.mulf %446, %447 : vector<16x128xf32>
    %449 = vector.broadcast %428 : vector<1x128xf32> to vector<16x128xf32>
    %450 = arith.addf %448, %449 : vector<16x128xf32>
    %c0_220 = arith.constant 0 : index
    %c0_221 = arith.constant 0 : index
    %451 = vector.load %arg54[%c0_220, %c0_221] : memref<16x128xbf16, #tpu.memory_space<vmem>>, vector<16x128xbf16>
    %cst_222 = arith.constant dense<0.000000e+00> : vector<16x128xf32>
    %452 = tpu.matmul %0, %451, %cst_222 {dimension_numbers = #tpu.dot_dimension_numbers<[1], [0], [0], [1], [0, 0, 1, 1], [], []>} : vector<16x16xbf16>, vector<16x128xbf16>, vector<16x128xf32> -> vector<16x128xf32>
    %c0_223 = arith.constant 0 : index
    %c0_224 = arith.constant 0 : index
    %453 = vector.load %arg55[%c0_223, %c0_224] : memref<1x128xf32, #tpu.memory_space<vmem>>, vector<1x128xf32>
    %454 = vector.broadcast %453 : vector<1x128xf32> to vector<16x128xf32>
    %455 = arith.addf %452, %454 : vector<16x128xf32>
    %c0_225 = arith.constant 0 : index
    %c0_226 = arith.constant 0 : index
    %456 = vector.load %arg56[%c0_225, %c0_226] : memref<1x128xf32, #tpu.memory_space<vmem>>, vector<1x128xf32>
    %c0_227 = arith.constant 0 : index
    %c0_228 = arith.constant 0 : index
    %457 = vector.load %arg57[%c0_227, %c0_228] : memref<1x128xf32, #tpu.memory_space<vmem>>, vector<1x128xf32>
    %cst_229 = arith.constant dense<0.000000e+00> : vector<16xf32>
    %458 = vector.multi_reduction <add>, %455, %cst_229 [1] : vector<16x128xf32> to vector<16xf32>
    %459 = vector.shape_cast %458 : vector<16xf32> to vector<16x1xf32>
    %cst_230 = arith.constant 1.280000e+02 : f32
    %460 = vector.broadcast %cst_230 : f32 to vector<16x1xf32>
    %461 = arith.divf %459, %460 : vector<16x1xf32>
    %462 = vector.broadcast %461 : vector<16x1xf32> to vector<16x128xf32>
    %463 = arith.subf %455, %462 : vector<16x128xf32>
    %464 = arith.mulf %463, %463 : vector<16x128xf32>
    %cst_231 = arith.constant dense<0.000000e+00> : vector<16xf32>
    %465 = vector.multi_reduction <add>, %464, %cst_231 [1] : vector<16x128xf32> to vector<16xf32>
    %466 = vector.shape_cast %465 : vector<16xf32> to vector<16x1xf32>
    %cst_232 = arith.constant 1.280000e+02 : f32
    %467 = vector.broadcast %cst_232 : f32 to vector<16x1xf32>
    %468 = arith.divf %466, %467 : vector<16x1xf32>
    %469 = vector.broadcast %461 : vector<16x1xf32> to vector<16x128xf32>
    %470 = arith.subf %455, %469 : vector<16x128xf32>
    %cst_233 = arith.constant 9.99999996E-13 : f32
    %471 = vector.broadcast %cst_233 : f32 to vector<16x1xf32>
    %472 = arith.addf %468, %471 : vector<16x1xf32>
    %473 = math.rsqrt %472 : vector<16x1xf32>
    %474 = vector.broadcast %473 : vector<16x1xf32> to vector<16x128xf32>
    %475 = arith.mulf %470, %474 : vector<16x128xf32>
    %476 = vector.broadcast %456 : vector<1x128xf32> to vector<16x128xf32>
    %477 = arith.mulf %475, %476 : vector<16x128xf32>
    %478 = vector.broadcast %457 : vector<1x128xf32> to vector<16x128xf32>
    %479 = arith.addf %477, %478 : vector<16x128xf32>
    %c0_234 = arith.constant 0 : index
    %c0_235 = arith.constant 0 : index
    %480 = vector.load %arg58[%c0_234, %c0_235] : memref<128x128xbf16, #tpu.memory_space<vmem>>, vector<128x128xbf16>
    %cst_236 = arith.constant dense<0.000000e+00> : vector<128x32xf32>
    %481 = tpu.matmul %480, %421, %cst_236 {dimension_numbers = #tpu.dot_dimension_numbers<[1], [0], [0], [1], [0, 0, 1, 1], [], []>} : vector<128x128xbf16>, vector<128x32xbf16>, vector<128x32xf32> -> vector<128x32xf32>
    %c0_237 = arith.constant 0 : index
    %c0_238 = arith.constant 0 : index
    %482 = vector.load %arg59[%c0_237, %c0_238] : memref<128x1xf32, #tpu.memory_space<vmem>>, vector<128x1xf32>
    %483 = vector.broadcast %482 : vector<128x1xf32> to vector<128x32xf32>
    %484 = arith.addf %481, %483 : vector<128x32xf32>
    %485 = arith.truncf %450 : vector<16x128xf32> to vector<16x128xbf16>
    %c0_239 = arith.constant 0 : index
    %c0_240 = arith.constant 0 : index
    %486 = vector.load %arg60[%c0_239, %c0_240] : memref<128x128xbf16, #tpu.memory_space<vmem>>, vector<128x128xbf16>
    %cst_241 = arith.constant dense<0.000000e+00> : vector<16x128xf32>
    %487 = tpu.matmul %485, %486, %cst_241 {dimension_numbers = #tpu.dot_dimension_numbers<[1], [0], [0], [1], [0, 0, 1, 1], [], []>} : vector<16x128xbf16>, vector<128x128xbf16>, vector<16x128xf32> -> vector<16x128xf32>
    %c0_242 = arith.constant 0 : index
    %c0_243 = arith.constant 0 : index
    %488 = vector.load %arg61[%c0_242, %c0_243] : memref<1x128xf32, #tpu.memory_space<vmem>>, vector<1x128xf32>
    %489 = vector.broadcast %488 : vector<1x128xf32> to vector<16x128xf32>
    %490 = arith.addf %487, %489 : vector<16x128xf32>
    %c0_244 = arith.constant 0 : index
    %c0_245 = arith.constant 0 : index
    %491 = vector.load %arg62[%c0_244, %c0_245] : memref<128x128xbf16, #tpu.memory_space<vmem>>, vector<128x128xbf16>
    %492 = tpu.transpose %479, [1, 0] : vector<16x128xf32> -> vector<128x16xf32>
    %493 = arith.truncf %492 : vector<128x16xf32> to vector<128x16xbf16>
    %cst_246 = arith.constant dense<0.000000e+00> : vector<128x16xf32>
    %494 = tpu.matmul %491, %493, %cst_246 {dimension_numbers = #tpu.dot_dimension_numbers<[1], [0], [0], [1], [0, 0, 1, 1], [], []>} : vector<128x128xbf16>, vector<128x16xbf16>, vector<128x16xf32> -> vector<128x16xf32>
    %c0_247 = arith.constant 0 : index
    %c0_248 = arith.constant 0 : index
    %495 = vector.load %arg63[%c0_247, %c0_248] : memref<128x1xf32, #tpu.memory_space<vmem>>, vector<128x1xf32>
    %496 = vector.broadcast %495 : vector<128x1xf32> to vector<128x16xf32>
    %497 = arith.addf %494, %496 : vector<128x16xf32>
    %c0_249 = arith.constant 0 : index
    %c0_250 = arith.constant 0 : index
    %498 = vector.load %arg48[%c0_249, %c0_250] : memref<1x32xi32, #tpu.memory_space<vmem>>, vector<1x32xi32>
    %499 = vector.broadcast %1 : vector<16x1xi32> to vector<16x32xi32>
    %500 = vector.broadcast %498 : vector<1x32xi32> to vector<16x32xi32>
    %501 = arith.cmpi eq, %499, %500 : vector<16x32xi32>
    %cst_251 = arith.constant 0.000000e+00 : f32
    %cst_252 = arith.constant -1.000000e+30 : f32
    %502 = vector.broadcast %cst_251 : f32 to vector<16x32xf32>
    %503 = vector.broadcast %cst_252 : f32 to vector<16x32xf32>
    %504 = arith.select %501, %502, %503 : vector<16x32xi1>, vector<16x32xf32>
    %505 = vector.extract_strided_slice %484 {offsets = [0, 0], sizes = [16, 32], strides = [1, 1]} : vector<128x32xf32> to vector<16x32xf32>
    %506 = arith.truncf %505 : vector<16x32xf32> to vector<16x32xbf16>
    %507 = vector.extract_strided_slice %490 {offsets = [0, 0], sizes = [16, 16], strides = [1, 1]} : vector<16x128xf32> to vector<16x16xf32>
    %508 = arith.truncf %507 : vector<16x16xf32> to vector<16x16xbf16>
    %cst_253 = arith.constant dense<0.000000e+00> : vector<16x32xf32>
    %509 = tpu.matmul %508, %506, %cst_253 {dimension_numbers = #tpu.dot_dimension_numbers<[1], [0], [0], [1], [0, 0, 1, 1], [], []>} : vector<16x16xbf16>, vector<16x32xbf16>, vector<16x32xf32> -> vector<16x32xf32>
    %cst_254 = arith.constant 2.500000e-01 : f32
    %510 = vector.broadcast %cst_254 : f32 to vector<16x32xf32>
    %511 = arith.mulf %509, %510 : vector<16x32xf32>
    %512 = arith.addf %511, %504 : vector<16x32xf32>
    %cst_255 = arith.constant dense<0xFF800000> : vector<32xf32>
    %513 = vector.multi_reduction <maximumf>, %512, %cst_255 [0] : vector<16x32xf32> to vector<32xf32>
    %514 = vector.shape_cast %513 : vector<32xf32> to vector<1x32xf32>
    %515 = vector.broadcast %514 : vector<1x32xf32> to vector<16x32xf32>
    %516 = arith.subf %512, %515 : vector<16x32xf32>
    %517 = math.exp %516 : vector<16x32xf32>
    %cst_256 = arith.constant dense<0.000000e+00> : vector<32xf32>
    %518 = vector.multi_reduction <add>, %517, %cst_256 [0] : vector<16x32xf32> to vector<32xf32>
    %519 = vector.shape_cast %518 : vector<32xf32> to vector<1x32xf32>
    %520 = vector.broadcast %519 : vector<1x32xf32> to vector<16x32xf32>
    %521 = arith.divf %517, %520 : vector<16x32xf32>
    %522 = vector.extract_strided_slice %497 {offsets = [0, 0], sizes = [16, 16], strides = [1, 1]} : vector<128x16xf32> to vector<16x16xf32>
    %523 = arith.truncf %522 : vector<16x16xf32> to vector<16x16xbf16>
    %524 = arith.truncf %521 : vector<16x32xf32> to vector<16x32xbf16>
    %cst_257 = arith.constant dense<0.000000e+00> : vector<16x32xf32>
    %525 = tpu.matmul %523, %524, %cst_257 {dimension_numbers = #tpu.dot_dimension_numbers<[1], [0], [0], [1], [0, 0, 1, 1], [], []>} : vector<16x16xbf16>, vector<16x32xbf16>, vector<16x32xf32> -> vector<16x32xf32>
    %c0_258 = arith.constant 0 : index
    %c0_259 = arith.constant 0 : index
    %526 = vector.load %arg76[%c0_258, %c0_259] : memref<128x32xf32, #tpu.memory_space<vmem>>, vector<16x32xf32>
    tpu.vector_store %arg76[%c0_258, %c0_259], %525 {strides = array<i32>} : memref<128x32xf32, #tpu.memory_space<vmem>>, vector<16x32xf32>,
    %527 = vector.extract_strided_slice %484 {offsets = [16, 0], sizes = [16, 32], strides = [1, 1]} : vector<128x32xf32> to vector<16x32xf32>
    %528 = arith.truncf %527 : vector<16x32xf32> to vector<16x32xbf16>
    %529 = vector.extract_strided_slice %490 {offsets = [0, 16], sizes = [16, 16], strides = [1, 1]} : vector<16x128xf32> to vector<16x16xf32>
    %530 = arith.truncf %529 : vector<16x16xf32> to vector<16x16xbf16>
    %cst_260 = arith.constant dense<0.000000e+00> : vector<16x32xf32>
    %531 = tpu.matmul %530, %528, %cst_260 {dimension_numbers = #tpu.dot_dimension_numbers<[1], [0], [0], [1], [0, 0, 1, 1], [], []>} : vector<16x16xbf16>, vector<16x32xbf16>, vector<16x32xf32> -> vector<16x32xf32>
    %cst_261 = arith.constant 2.500000e-01 : f32
    %532 = vector.broadcast %cst_261 : f32 to vector<16x32xf32>
    %533 = arith.mulf %531, %532 : vector<16x32xf32>
    %534 = arith.addf %533, %504 : vector<16x32xf32>
    %cst_262 = arith.constant dense<0xFF800000> : vector<32xf32>
    %535 = vector.multi_reduction <maximumf>, %534, %cst_262 [0] : vector<16x32xf32> to vector<32xf32>
    %536 = vector.shape_cast %535 : vector<32xf32> to vector<1x32xf32>
    %537 = vector.broadcast %536 : vector<1x32xf32> to vector<16x32xf32>
    %538 = arith.subf %534, %537 : vector<16x32xf32>
    %539 = math.exp %538 : vector<16x32xf32>
    %cst_263 = arith.constant dense<0.000000e+00> : vector<32xf32>
    %540 = vector.multi_reduction <add>, %539, %cst_263 [0] : vector<16x32xf32> to vector<32xf32>
    %541 = vector.shape_cast %540 : vector<32xf32> to vector<1x32xf32>
    %542 = vector.broadcast %541 : vector<1x32xf32> to vector<16x32xf32>
    %543 = arith.divf %539, %542 : vector<16x32xf32>
    %544 = vector.extract_strided_slice %497 {offsets = [16, 0], sizes = [16, 16], strides = [1, 1]} : vector<128x16xf32> to vector<16x16xf32>
    %545 = arith.truncf %544 : vector<16x16xf32> to vector<16x16xbf16>
    %546 = arith.truncf %543 : vector<16x32xf32> to vector<16x32xbf16>
    %cst_264 = arith.constant dense<0.000000e+00> : vector<16x32xf32>
    %547 = tpu.matmul %545, %546, %cst_264 {dimension_numbers = #tpu.dot_dimension_numbers<[1], [0], [0], [1], [0, 0, 1, 1], [], []>} : vector<16x16xbf16>, vector<16x32xbf16>, vector<16x32xf32> -> vector<16x32xf32>
    %c16_265 = arith.constant 16 : index
    %c0_266 = arith.constant 0 : index
    %548 = vector.load %arg76[%c16_265, %c0_266] : memref<128x32xf32, #tpu.memory_space<vmem>>, vector<16x32xf32>
    tpu.vector_store %arg76[%c16_265, %c0_266], %547 {strides = array<i32>} : memref<128x32xf32, #tpu.memory_space<vmem>>, vector<16x32xf32>,
    %549 = vector.extract_strided_slice %484 {offsets = [32, 0], sizes = [16, 32], strides = [1, 1]} : vector<128x32xf32> to vector<16x32xf32>
    %550 = arith.truncf %549 : vector<16x32xf32> to vector<16x32xbf16>
    %551 = vector.extract_strided_slice %490 {offsets = [0, 32], sizes = [16, 16], strides = [1, 1]} : vector<16x128xf32> to vector<16x16xf32>
    %552 = arith.truncf %551 : vector<16x16xf32> to vector<16x16xbf16>
    %cst_267 = arith.constant dense<0.000000e+00> : vector<16x32xf32>
    %553 = tpu.matmul %552, %550, %cst_267 {dimension_numbers = #tpu.dot_dimension_numbers<[1], [0], [0], [1], [0, 0, 1, 1], [], []>} : vector<16x16xbf16>, vector<16x32xbf16>, vector<16x32xf32> -> vector<16x32xf32>
    %cst_268 = arith.constant 2.500000e-01 : f32
    %554 = vector.broadcast %cst_268 : f32 to vector<16x32xf32>
    %555 = arith.mulf %553, %554 : vector<16x32xf32>
    %556 = arith.addf %555, %504 : vector<16x32xf32>
    %cst_269 = arith.constant dense<0xFF800000> : vector<32xf32>
    %557 = vector.multi_reduction <maximumf>, %556, %cst_269 [0] : vector<16x32xf32> to vector<32xf32>
    %558 = vector.shape_cast %557 : vector<32xf32> to vector<1x32xf32>
    %559 = vector.broadcast %558 : vector<1x32xf32> to vector<16x32xf32>
    %560 = arith.subf %556, %559 : vector<16x32xf32>
    %561 = math.exp %560 : vector<16x32xf32>
    %cst_270 = arith.constant dense<0.000000e+00> : vector<32xf32>
    %562 = vector.multi_reduction <add>, %561, %cst_270 [0] : vector<16x32xf32> to vector<32xf32>
    %563 = vector.shape_cast %562 : vector<32xf32> to vector<1x32xf32>
    %564 = vector.broadcast %563 : vector<1x32xf32> to vector<16x32xf32>
    %565 = arith.divf %561, %564 : vector<16x32xf32>
    %566 = vector.extract_strided_slice %497 {offsets = [32, 0], sizes = [16, 16], strides = [1, 1]} : vector<128x16xf32> to vector<16x16xf32>
    %567 = arith.truncf %566 : vector<16x16xf32> to vector<16x16xbf16>
    %568 = arith.truncf %565 : vector<16x32xf32> to vector<16x32xbf16>
    %cst_271 = arith.constant dense<0.000000e+00> : vector<16x32xf32>
    %569 = tpu.matmul %567, %568, %cst_271 {dimension_numbers = #tpu.dot_dimension_numbers<[1], [0], [0], [1], [0, 0, 1, 1], [], []>} : vector<16x16xbf16>, vector<16x32xbf16>, vector<16x32xf32> -> vector<16x32xf32>
    %c32_272 = arith.constant 32 : index
    %c0_273 = arith.constant 0 : index
    %570 = vector.load %arg76[%c32_272, %c0_273] : memref<128x32xf32, #tpu.memory_space<vmem>>, vector<16x32xf32>
    tpu.vector_store %arg76[%c32_272, %c0_273], %569 {strides = array<i32>} : memref<128x32xf32, #tpu.memory_space<vmem>>, vector<16x32xf32>,
    %571 = vector.extract_strided_slice %484 {offsets = [48, 0], sizes = [16, 32], strides = [1, 1]} : vector<128x32xf32> to vector<16x32xf32>
    %572 = arith.truncf %571 : vector<16x32xf32> to vector<16x32xbf16>
    %573 = vector.extract_strided_slice %490 {offsets = [0, 48], sizes = [16, 16], strides = [1, 1]} : vector<16x128xf32> to vector<16x16xf32>
    %574 = arith.truncf %573 : vector<16x16xf32> to vector<16x16xbf16>
    %cst_274 = arith.constant dense<0.000000e+00> : vector<16x32xf32>
    %575 = tpu.matmul %574, %572, %cst_274 {dimension_numbers = #tpu.dot_dimension_numbers<[1], [0], [0], [1], [0, 0, 1, 1], [], []>} : vector<16x16xbf16>, vector<16x32xbf16>, vector<16x32xf32> -> vector<16x32xf32>
    %cst_275 = arith.constant 2.500000e-01 : f32
    %576 = vector.broadcast %cst_275 : f32 to vector<16x32xf32>
    %577 = arith.mulf %575, %576 : vector<16x32xf32>
    %578 = arith.addf %577, %504 : vector<16x32xf32>
    %cst_276 = arith.constant dense<0xFF800000> : vector<32xf32>
    %579 = vector.multi_reduction <maximumf>, %578, %cst_276 [0] : vector<16x32xf32> to vector<32xf32>
    %580 = vector.shape_cast %579 : vector<32xf32> to vector<1x32xf32>
    %581 = vector.broadcast %580 : vector<1x32xf32> to vector<16x32xf32>
    %582 = arith.subf %578, %581 : vector<16x32xf32>
    %583 = math.exp %582 : vector<16x32xf32>
    %cst_277 = arith.constant dense<0.000000e+00> : vector<32xf32>
    %584 = vector.multi_reduction <add>, %583, %cst_277 [0] : vector<16x32xf32> to vector<32xf32>
    %585 = vector.shape_cast %584 : vector<32xf32> to vector<1x32xf32>
    %586 = vector.broadcast %585 : vector<1x32xf32> to vector<16x32xf32>
    %587 = arith.divf %583, %586 : vector<16x32xf32>
    %588 = vector.extract_strided_slice %497 {offsets = [48, 0], sizes = [16, 16], strides = [1, 1]} : vector<128x16xf32> to vector<16x16xf32>
    %589 = arith.truncf %588 : vector<16x16xf32> to vector<16x16xbf16>
    %590 = arith.truncf %587 : vector<16x32xf32> to vector<16x32xbf16>
    %cst_278 = arith.constant dense<0.000000e+00> : vector<16x32xf32>
    %591 = tpu.matmul %589, %590, %cst_278 {dimension_numbers = #tpu.dot_dimension_numbers<[1], [0], [0], [1], [0, 0, 1, 1], [], []>} : vector<16x16xbf16>, vector<16x32xbf16>, vector<16x32xf32> -> vector<16x32xf32>
    %c48_279 = arith.constant 48 : index
    %c0_280 = arith.constant 0 : index
    %592 = vector.load %arg76[%c48_279, %c0_280] : memref<128x32xf32, #tpu.memory_space<vmem>>, vector<16x32xf32>
    tpu.vector_store %arg76[%c48_279, %c0_280], %591 {strides = array<i32>} : memref<128x32xf32, #tpu.memory_space<vmem>>, vector<16x32xf32>,
    %593 = vector.extract_strided_slice %484 {offsets = [64, 0], sizes = [16, 32], strides = [1, 1]} : vector<128x32xf32> to vector<16x32xf32>
    %594 = arith.truncf %593 : vector<16x32xf32> to vector<16x32xbf16>
    %595 = vector.extract_strided_slice %490 {offsets = [0, 64], sizes = [16, 16], strides = [1, 1]} : vector<16x128xf32> to vector<16x16xf32>
    %596 = arith.truncf %595 : vector<16x16xf32> to vector<16x16xbf16>
    %cst_281 = arith.constant dense<0.000000e+00> : vector<16x32xf32>
    %597 = tpu.matmul %596, %594, %cst_281 {dimension_numbers = #tpu.dot_dimension_numbers<[1], [0], [0], [1], [0, 0, 1, 1], [], []>} : vector<16x16xbf16>, vector<16x32xbf16>, vector<16x32xf32> -> vector<16x32xf32>
    %cst_282 = arith.constant 2.500000e-01 : f32
    %598 = vector.broadcast %cst_282 : f32 to vector<16x32xf32>
    %599 = arith.mulf %597, %598 : vector<16x32xf32>
    %600 = arith.addf %599, %504 : vector<16x32xf32>
    %cst_283 = arith.constant dense<0xFF800000> : vector<32xf32>
    %601 = vector.multi_reduction <maximumf>, %600, %cst_283 [0] : vector<16x32xf32> to vector<32xf32>
    %602 = vector.shape_cast %601 : vector<32xf32> to vector<1x32xf32>
    %603 = vector.broadcast %602 : vector<1x32xf32> to vector<16x32xf32>
    %604 = arith.subf %600, %603 : vector<16x32xf32>
    %605 = math.exp %604 : vector<16x32xf32>
    %cst_284 = arith.constant dense<0.000000e+00> : vector<32xf32>
    %606 = vector.multi_reduction <add>, %605, %cst_284 [0] : vector<16x32xf32> to vector<32xf32>
    %607 = vector.shape_cast %606 : vector<32xf32> to vector<1x32xf32>
    %608 = vector.broadcast %607 : vector<1x32xf32> to vector<16x32xf32>
    %609 = arith.divf %605, %608 : vector<16x32xf32>
    %610 = vector.extract_strided_slice %497 {offsets = [64, 0], sizes = [16, 16], strides = [1, 1]} : vector<128x16xf32> to vector<16x16xf32>
    %611 = arith.truncf %610 : vector<16x16xf32> to vector<16x16xbf16>
    %612 = arith.truncf %609 : vector<16x32xf32> to vector<16x32xbf16>
    %cst_285 = arith.constant dense<0.000000e+00> : vector<16x32xf32>
    %613 = tpu.matmul %611, %612, %cst_285 {dimension_numbers = #tpu.dot_dimension_numbers<[1], [0], [0], [1], [0, 0, 1, 1], [], []>} : vector<16x16xbf16>, vector<16x32xbf16>, vector<16x32xf32> -> vector<16x32xf32>
    %c64 = arith.constant 64 : index
    %c0_286 = arith.constant 0 : index
    %614 = vector.load %arg76[%c64, %c0_286] : memref<128x32xf32, #tpu.memory_space<vmem>>, vector<16x32xf32>
    tpu.vector_store %arg76[%c64, %c0_286], %613 {strides = array<i32>} : memref<128x32xf32, #tpu.memory_space<vmem>>, vector<16x32xf32>,
    %615 = vector.extract_strided_slice %484 {offsets = [80, 0], sizes = [16, 32], strides = [1, 1]} : vector<128x32xf32> to vector<16x32xf32>
    %616 = arith.truncf %615 : vector<16x32xf32> to vector<16x32xbf16>
    %617 = vector.extract_strided_slice %490 {offsets = [0, 80], sizes = [16, 16], strides = [1, 1]} : vector<16x128xf32> to vector<16x16xf32>
    %618 = arith.truncf %617 : vector<16x16xf32> to vector<16x16xbf16>
    %cst_287 = arith.constant dense<0.000000e+00> : vector<16x32xf32>
    %619 = tpu.matmul %618, %616, %cst_287 {dimension_numbers = #tpu.dot_dimension_numbers<[1], [0], [0], [1], [0, 0, 1, 1], [], []>} : vector<16x16xbf16>, vector<16x32xbf16>, vector<16x32xf32> -> vector<16x32xf32>
    %cst_288 = arith.constant 2.500000e-01 : f32
    %620 = vector.broadcast %cst_288 : f32 to vector<16x32xf32>
    %621 = arith.mulf %619, %620 : vector<16x32xf32>
    %622 = arith.addf %621, %504 : vector<16x32xf32>
    %cst_289 = arith.constant dense<0xFF800000> : vector<32xf32>
    %623 = vector.multi_reduction <maximumf>, %622, %cst_289 [0] : vector<16x32xf32> to vector<32xf32>
    %624 = vector.shape_cast %623 : vector<32xf32> to vector<1x32xf32>
    %625 = vector.broadcast %624 : vector<1x32xf32> to vector<16x32xf32>
    %626 = arith.subf %622, %625 : vector<16x32xf32>
    %627 = math.exp %626 : vector<16x32xf32>
    %cst_290 = arith.constant dense<0.000000e+00> : vector<32xf32>
    %628 = vector.multi_reduction <add>, %627, %cst_290 [0] : vector<16x32xf32> to vector<32xf32>
    %629 = vector.shape_cast %628 : vector<32xf32> to vector<1x32xf32>
    %630 = vector.broadcast %629 : vector<1x32xf32> to vector<16x32xf32>
    %631 = arith.divf %627, %630 : vector<16x32xf32>
    %632 = vector.extract_strided_slice %497 {offsets = [80, 0], sizes = [16, 16], strides = [1, 1]} : vector<128x16xf32> to vector<16x16xf32>
    %633 = arith.truncf %632 : vector<16x16xf32> to vector<16x16xbf16>
    %634 = arith.truncf %631 : vector<16x32xf32> to vector<16x32xbf16>
    %cst_291 = arith.constant dense<0.000000e+00> : vector<16x32xf32>
    %635 = tpu.matmul %633, %634, %cst_291 {dimension_numbers = #tpu.dot_dimension_numbers<[1], [0], [0], [1], [0, 0, 1, 1], [], []>} : vector<16x16xbf16>, vector<16x32xbf16>, vector<16x32xf32> -> vector<16x32xf32>
    %c80 = arith.constant 80 : index
    %c0_292 = arith.constant 0 : index
    %636 = vector.load %arg76[%c80, %c0_292] : memref<128x32xf32, #tpu.memory_space<vmem>>, vector<16x32xf32>
    tpu.vector_store %arg76[%c80, %c0_292], %635 {strides = array<i32>} : memref<128x32xf32, #tpu.memory_space<vmem>>, vector<16x32xf32>,
    %637 = vector.extract_strided_slice %484 {offsets = [96, 0], sizes = [16, 32], strides = [1, 1]} : vector<128x32xf32> to vector<16x32xf32>
    %638 = arith.truncf %637 : vector<16x32xf32> to vector<16x32xbf16>
    %639 = vector.extract_strided_slice %490 {offsets = [0, 96], sizes = [16, 16], strides = [1, 1]} : vector<16x128xf32> to vector<16x16xf32>
    %640 = arith.truncf %639 : vector<16x16xf32> to vector<16x16xbf16>
    %cst_293 = arith.constant dense<0.000000e+00> : vector<16x32xf32>
    %641 = tpu.matmul %640, %638, %cst_293 {dimension_numbers = #tpu.dot_dimension_numbers<[1], [0], [0], [1], [0, 0, 1, 1], [], []>} : vector<16x16xbf16>, vector<16x32xbf16>, vector<16x32xf32> -> vector<16x32xf32>
    %cst_294 = arith.constant 2.500000e-01 : f32
    %642 = vector.broadcast %cst_294 : f32 to vector<16x32xf32>
    %643 = arith.mulf %641, %642 : vector<16x32xf32>
    %644 = arith.addf %643, %504 : vector<16x32xf32>
    %cst_295 = arith.constant dense<0xFF800000> : vector<32xf32>
    %645 = vector.multi_reduction <maximumf>, %644, %cst_295 [0] : vector<16x32xf32> to vector<32xf32>
    %646 = vector.shape_cast %645 : vector<32xf32> to vector<1x32xf32>
    %647 = vector.broadcast %646 : vector<1x32xf32> to vector<16x32xf32>
    %648 = arith.subf %644, %647 : vector<16x32xf32>
    %649 = math.exp %648 : vector<16x32xf32>
    %cst_296 = arith.constant dense<0.000000e+00> : vector<32xf32>
    %650 = vector.multi_reduction <add>, %649, %cst_296 [0] : vector<16x32xf32> to vector<32xf32>
    %651 = vector.shape_cast %650 : vector<32xf32> to vector<1x32xf32>
    %652 = vector.broadcast %651 : vector<1x32xf32> to vector<16x32xf32>
    %653 = arith.divf %649, %652 : vector<16x32xf32>
    %654 = vector.extract_strided_slice %497 {offsets = [96, 0], sizes = [16, 16], strides = [1, 1]} : vector<128x16xf32> to vector<16x16xf32>
    %655 = arith.truncf %654 : vector<16x16xf32> to vector<16x16xbf16>
    %656 = arith.truncf %653 : vector<16x32xf32> to vector<16x32xbf16>
    %cst_297 = arith.constant dense<0.000000e+00> : vector<16x32xf32>
    %657 = tpu.matmul %655, %656, %cst_297 {dimension_numbers = #tpu.dot_dimension_numbers<[1], [0], [0], [1], [0, 0, 1, 1], [], []>} : vector<16x16xbf16>, vector<16x32xbf16>, vector<16x32xf32> -> vector<16x32xf32>
    %c96 = arith.constant 96 : index
    %c0_298 = arith.constant 0 : index
    %658 = vector.load %arg76[%c96, %c0_298] : memref<128x32xf32, #tpu.memory_space<vmem>>, vector<16x32xf32>
    tpu.vector_store %arg76[%c96, %c0_298], %657 {strides = array<i32>} : memref<128x32xf32, #tpu.memory_space<vmem>>, vector<16x32xf32>,
    %659 = vector.extract_strided_slice %484 {offsets = [112, 0], sizes = [16, 32], strides = [1, 1]} : vector<128x32xf32> to vector<16x32xf32>
    %660 = arith.truncf %659 : vector<16x32xf32> to vector<16x32xbf16>
    %661 = vector.extract_strided_slice %490 {offsets = [0, 112], sizes = [16, 16], strides = [1, 1]} : vector<16x128xf32> to vector<16x16xf32>
    %662 = arith.truncf %661 : vector<16x16xf32> to vector<16x16xbf16>
    %cst_299 = arith.constant dense<0.000000e+00> : vector<16x32xf32>
    %663 = tpu.matmul %662, %660, %cst_299 {dimension_numbers = #tpu.dot_dimension_numbers<[1], [0], [0], [1], [0, 0, 1, 1], [], []>} : vector<16x16xbf16>, vector<16x32xbf16>, vector<16x32xf32> -> vector<16x32xf32>
    %cst_300 = arith.constant 2.500000e-01 : f32
    %664 = vector.broadcast %cst_300 : f32 to vector<16x32xf32>
    %665 = arith.mulf %663, %664 : vector<16x32xf32>
    %666 = arith.addf %665, %504 : vector<16x32xf32>
    %cst_301 = arith.constant dense<0xFF800000> : vector<32xf32>
    %667 = vector.multi_reduction <maximumf>, %666, %cst_301 [0] : vector<16x32xf32> to vector<32xf32>
    %668 = vector.shape_cast %667 : vector<32xf32> to vector<1x32xf32>
    %669 = vector.broadcast %668 : vector<1x32xf32> to vector<16x32xf32>
    %670 = arith.subf %666, %669 : vector<16x32xf32>
    %671 = math.exp %670 : vector<16x32xf32>
    %cst_302 = arith.constant dense<0.000000e+00> : vector<32xf32>
    %672 = vector.multi_reduction <add>, %671, %cst_302 [0] : vector<16x32xf32> to vector<32xf32>
    %673 = vector.shape_cast %672 : vector<32xf32> to vector<1x32xf32>
    %674 = vector.broadcast %673 : vector<1x32xf32> to vector<16x32xf32>
    %675 = arith.divf %671, %674 : vector<16x32xf32>
    %676 = vector.extract_strided_slice %497 {offsets = [112, 0], sizes = [16, 16], strides = [1, 1]} : vector<128x16xf32> to vector<16x16xf32>
    %677 = arith.truncf %676 : vector<16x16xf32> to vector<16x16xbf16>
    %678 = arith.truncf %675 : vector<16x32xf32> to vector<16x32xbf16>
    %cst_303 = arith.constant dense<0.000000e+00> : vector<16x32xf32>
    %679 = tpu.matmul %677, %678, %cst_303 {dimension_numbers = #tpu.dot_dimension_numbers<[1], [0], [0], [1], [0, 0, 1, 1], [], []>} : vector<16x16xbf16>, vector<16x32xbf16>, vector<16x32xf32> -> vector<16x32xf32>
    %c112 = arith.constant 112 : index
    %c0_304 = arith.constant 0 : index
    %680 = vector.load %arg76[%c112, %c0_304] : memref<128x32xf32, #tpu.memory_space<vmem>>, vector<16x32xf32>
    tpu.vector_store %arg76[%c112, %c0_304], %679 {strides = array<i32>} : memref<128x32xf32, #tpu.memory_space<vmem>>, vector<16x32xf32>,
    %c0_305 = arith.constant 0 : index
    %c0_306 = arith.constant 0 : index
    %681 = vector.load %arg64[%c0_305, %c0_306] : memref<128x128xbf16, #tpu.memory_space<vmem>>, vector<128x128xbf16>
    %c0_307 = arith.constant 0 : index
    %c0_308 = arith.constant 0 : index
    %682 = vector.load %arg76[%c0_307, %c0_308] : memref<128x32xf32, #tpu.memory_space<vmem>>, vector<128x32xf32>
    %683 = arith.truncf %682 : vector<128x32xf32> to vector<128x32xbf16>
    %cst_309 = arith.constant dense<0.000000e+00> : vector<128x32xf32>
    %684 = tpu.matmul %681, %683, %cst_309 {dimension_numbers = #tpu.dot_dimension_numbers<[1], [0], [0], [1], [0, 0, 1, 1], [], []>} : vector<128x128xbf16>, vector<128x32xbf16>, vector<128x32xf32> -> vector<128x32xf32>
    %c0_310 = arith.constant 0 : index
    %c0_311 = arith.constant 0 : index
    %685 = vector.load %arg65[%c0_310, %c0_311] : memref<128x1xf32, #tpu.memory_space<vmem>>, vector<128x1xf32>
    %686 = vector.broadcast %685 : vector<128x1xf32> to vector<128x32xf32>
    %687 = arith.addf %684, %686 : vector<128x32xf32>
    %c0_312 = arith.constant 0 : index
    %c0_313 = arith.constant 0 : index
    %688 = vector.load %arg72[%c0_312, %c0_313] : memref<128x32xf32, #tpu.memory_space<vmem>>, vector<128x32xf32>
    tpu.vector_store %arg72[%c0_312, %c0_313], %687 {strides = array<i32>} : memref<128x32xf32, #tpu.memory_space<vmem>>, vector<128x32xf32>,
    %c0_314 = arith.constant 0 : index
    %c0_315 = arith.constant 0 : index
    %689 = vector.load %arg49[%c0_314, %c0_315] : memref<128x2xf32, #tpu.memory_space<vmem>>, vector<128x2xf32>
    %690 = vector.extract_strided_slice %689 {offsets = [0, 0], sizes = [128, 1], strides = [1, 1]} : vector<128x2xf32> to vector<128x1xf32>
    %691 = vector.broadcast %690 : vector<128x1xf32> to vector<128x16xf32>
    %692 = arith.mulf %413, %691 : vector<128x16xf32>
    %693 = vector.extract_strided_slice %689 {offsets = [0, 1], sizes = [128, 1], strides = [1, 1]} : vector<128x2xf32> to vector<128x1xf32>
    %694 = vector.broadcast %693 : vector<128x1xf32> to vector<128x16xf32>
    %695 = arith.mulf %415, %694 : vector<128x16xf32>
    %696 = tpu.concatenate %692, %695 in 1 : vector<128x16xf32>, vector<128x16xf32> -> vector<128x32xf32>
    %697 = arith.truncf %696 : vector<128x32xf32> to vector<128x32xbf16>
    %c0_316 = arith.constant 0 : index
    %c0_317 = arith.constant 0 : index
    %698 = vector.load %arg66[%c0_316, %c0_317] : memref<128x128xbf16, #tpu.memory_space<vmem>>, vector<128x128xbf16>
    %cst_318 = arith.constant dense<0.000000e+00> : vector<128x32xf32>
    %699 = tpu.matmul %698, %697, %cst_318 {dimension_numbers = #tpu.dot_dimension_numbers<[1], [0], [0], [1], [0, 0, 1, 1], [], []>} : vector<128x128xbf16>, vector<128x32xbf16>, vector<128x32xf32> -> vector<128x32xf32>
    %c0_319 = arith.constant 0 : index
    %c0_320 = arith.constant 0 : index
    %700 = vector.load %arg67[%c0_319, %c0_320] : memref<128x1xf32, #tpu.memory_space<vmem>>, vector<128x1xf32>
    %701 = vector.broadcast %700 : vector<128x1xf32> to vector<128x32xf32>
    %702 = arith.addf %699, %701 : vector<128x32xf32>
    %703 = arith.addf %702, %416 : vector<128x32xf32>
    %c0_321 = arith.constant 0 : index
    %c0_322 = arith.constant 0 : index
    %704 = vector.load %arg73[%c0_321, %c0_322] : memref<128x32xf32, #tpu.memory_space<vmem>>, vector<128x32xf32>
    tpu.vector_store %arg73[%c0_321, %c0_322], %703 {strides = array<i32>} : memref<128x32xf32, #tpu.memory_space<vmem>>, vector<128x32xf32>,
    return
  }
}

</mosaic_0001>

<llo_original>
// kernel: three_stage_lgf_pallas.1
$region0: #{three_stage_lgf_pallas.1}
  #allocation0 [shape = 'u32[]', space=smem, size = 0x4, offset = 0x4, fixed_abs, tag = 'smem constant byte address 0x4 - core index']
  #allocation1 [shape = 'u32[72,128]{1,0:T(1,128)}', space=vmem, size = 0x9000, scoped, tag = 'internal scratch']
  #allocation2 [shape = 'f32[32,512]{1,0:T(8,128)}', space=vmem, size = 0x10000, scoped, tag = 'scratch operand']
  #allocation3 [shape = 'f32[64,128]{1,0:T(8,128)}', space=vmem, size = 0x8000, scoped, tag = 'scratch operand']
  #allocation4 [shape = 'f32[128,32]{1,0:T(8,128)}', space=vmem, size = 0x10000, scoped, tag = 'scratch operand']
  %s0 = inlined_call_operand.smem [shape: u32[74], index: -1, kind: input, shape index: {}]
  %s1 = sld [smem:[%s0]]
  %s2 = scalar_lea.smem %s0, 1
  %s3 = sld [smem:[%s2]]
  %s4 = scalar_lea.smem %s0, 2
  %s5 = sld [smem:[%s4]]
  %s6 = scalar_lea.smem %s0, 3
  %s7 = sld [smem:[%s6]]
  %s8 = scalar_lea.smem %s0, 4
  %s9 = sld [smem:[%s8]]
  %s10 = scalar_lea.smem %s0, 5
  %s11 = sld [smem:[%s10]]
  %s12 = scalar_lea.smem %s0, 6
  %s13 = sld [smem:[%s12]]
  %s14 = scalar_lea.smem %s0, 7
  %s15 = sld [smem:[%s14]]
  %s16 = scalar_lea.smem %s0, 8
  %s17 = sld [smem:[%s16]]
  %s18 = scalar_lea.smem %s0, 9
  %s19 = sld [smem:[%s18]]
  %s20 = scalar_lea.smem %s0, 10
  %s21 = sld [smem:[%s20]]
  %s22 = scalar_lea.smem %s0, 11
  %s23 = sld [smem:[%s22]]
  %s24 = scalar_lea.smem %s0, 12
  %s25 = sld [smem:[%s24]]
  %s26 = scalar_lea.smem %s0, 13
  %s27 = sld [smem:[%s26]]
  %s28 = scalar_lea.smem %s0, 14
  %s29 = sld [smem:[%s28]]
  %s30 = scalar_lea.smem %s0, 15
  %s31 = sld [smem:[%s30]]
  %s32 = scalar_lea.smem %s0, 16
  %s33 = sld [smem:[%s32]]
  %s34 = scalar_lea.smem %s0, 17
  %s35 = sld [smem:[%s34]]
  %s36 = scalar_lea.smem %s0, 18
  %s37 = sld [smem:[%s36]]
  %s38 = scalar_lea.smem %s0, 19
  %s39 = sld [smem:[%s38]]
  %s40 = scalar_lea.smem %s0, 20
  %s41 = sld [smem:[%s40]]
  %s42 = scalar_lea.smem %s0, 21
  %s43 = sld [smem:[%s42]]
  %s44 = scalar_lea.smem %s0, 22
  %s45 = sld [smem:[%s44]]
  %s46 = scalar_lea.smem %s0, 23
  %s47 = sld [smem:[%s46]]
  %s48 = scalar_lea.smem %s0, 24
  %s49 = sld [smem:[%s48]]
  %s50 = scalar_lea.smem %s0, 25
  %s51 = sld [smem:[%s50]]
  %s52 = scalar_lea.smem %s0, 26
  %s53 = sld [smem:[%s52]]
  %s54 = scalar_lea.smem %s0, 27
  %s55 = sld [smem:[%s54]]
  %s56 = scalar_lea.smem %s0, 28
  %s57 = sld [smem:[%s56]]
  %s58 = scalar_lea.smem %s0, 29
  %s59 = sld [smem:[%s58]]
  %s60 = scalar_lea.smem %s0, 30
  %s61 = sld [smem:[%s60]]
  %s62 = scalar_lea.smem %s0, 31
  %s63 = sld [smem:[%s62]]
  %s64 = scalar_lea.smem %s0, 32
  %s65 = sld [smem:[%s64]]
  %s66 = scalar_lea.smem %s0, 33
  %s67 = sld [smem:[%s66]]
  %s68 = scalar_lea.smem %s0, 34
  %s69 = sld [smem:[%s68]]
  %s70 = scalar_lea.smem %s0, 35
  %s71 = sld [smem:[%s70]]
  %s72 = scalar_lea.smem %s0, 36
  %s73 = sld [smem:[%s72]]
  %s74 = scalar_lea.smem %s0, 37
  %s75 = sld [smem:[%s74]]
  %s76 = scalar_lea.smem %s0, 38
  %s77 = sld [smem:[%s76]]
  %s78 = scalar_lea.smem %s0, 39
  %s79 = sld [smem:[%s78]]
  %s80 = scalar_lea.smem %s0, 40
  %s81 = sld [smem:[%s80]]
  %s82 = scalar_lea.smem %s0, 41
  %s83 = sld [smem:[%s82]]
  %s84 = scalar_lea.smem %s0, 42
  %s85 = sld [smem:[%s84]]
  %s86 = scalar_lea.smem %s0, 43
  %s87 = sld [smem:[%s86]]
  %s88 = scalar_lea.smem %s0, 44
  %s89 = sld [smem:[%s88]]
  %s90 = scalar_lea.smem %s0, 45
  %s91 = sld [smem:[%s90]]
  %s92 = scalar_lea.smem %s0, 46
  %s93 = sld [smem:[%s92]]
  %s94 = scalar_lea.smem %s0, 47
  %s95 = sld [smem:[%s94]]
  %s96 = scalar_lea.smem %s0, 48
  %s97 = sld [smem:[%s96]]
  %s98 = scalar_lea.smem %s0, 49
  %s99 = sld [smem:[%s98]]
  %s100 = scalar_lea.smem %s0, 50
  %s101 = sld [smem:[%s100]]
  %s102 = scalar_lea.smem %s0, 51
  %s103 = sld [smem:[%s102]]
  %s104 = scalar_lea.smem %s0, 52
  %s105 = sld [smem:[%s104]]
  %s106 = scalar_lea.smem %s0, 53
  %s107 = sld [smem:[%s106]]
  %s108 = scalar_lea.smem %s0, 54
  %s109 = sld [smem:[%s108]]
  %s110 = scalar_lea.smem %s0, 55
  %s111 = sld [smem:[%s110]]
  %s112 = scalar_lea.smem %s0, 56
  %s113 = sld [smem:[%s112]]
  %s114 = scalar_lea.smem %s0, 57
  %s115 = sld [smem:[%s114]]
  %s116 = scalar_lea.smem %s0, 58
  %s117 = sld [smem:[%s116]]
  %s118 = scalar_lea.smem %s0, 59
  %s119 = sld [smem:[%s118]]
  %s120 = scalar_lea.smem %s0, 60
  %s121 = sld [smem:[%s120]]
  %s122 = scalar_lea.smem %s0, 61
  %s123 = sld [smem:[%s122]]
  %s124 = scalar_lea.smem %s0, 62
  %s125 = sld [smem:[%s124]]
  %s126 = scalar_lea.smem %s0, 63
  %s127 = sld [smem:[%s126]]
  %s128 = scalar_lea.smem %s0, 64
  %s129 = sld [smem:[%s128]]
  %s130 = scalar_lea.smem %s0, 65
  %s131 = sld [smem:[%s130]]
  %s132 = scalar_lea.smem %s0, 66
  %s133 = sld [smem:[%s132]]
  %s134 = scalar_lea.smem %s0, 67
  %s135 = sld [smem:[%s134]]
  %s136 = scalar_lea.smem %s0, 68
  %s137 = sld [smem:[%s136]]
  %s138 = scalar_lea.smem %s0, 69
  %s139 = sld [smem:[%s138]]
  %s140 = scalar_lea.smem %s0, 70
  %s141 = sld [smem:[%s140]]
  %s142 = scalar_lea.smem %s0, 71
  %s143 = sld [smem:[%s142]]
  %s144 = scalar_lea.smem %s0, 72
  %s145 = sld [smem:[%s144]]
  %s146 = scalar_lea.smem %s0, 73
  %s147 = sld [smem:[%s146]]
  %148 = xla_tuple %s137, %s139, %s141, %s143, %s145, %s147
  %s149 = sld [smem:[#allocation0]]
  $region322: #{three_stage_lgf_pallas.1} parent=0
    _
  %s151 = ssub.s32 1, %s149
  %s152 = scalar_select 0, %s151, %s149
  // Predicated region
  $region2: #{three_stage_lgf_pallas.1} parent=0 // pred_check
    _
  $region3: #{three_stage_lgf_pallas.1} parent=0 // pred_check_branch
    %154 = sbr.rel (0) target = $region5
  $region4: #{three_stage_lgf_pallas.1} parent=0 // pred_region
    _
  $region5: #{three_stage_lgf_pallas.1} parent=0 // pred_fallthru
    _
  // Predicated region
  $region6: #{three_stage_lgf_pallas.1} parent=0 // pred_check
    _
  $region7: #{three_stage_lgf_pallas.1} parent=0 // pred_check_branch
    %156 = sbr.rel (0) target = $region9
  $region8: #{three_stage_lgf_pallas.1} parent=0 // pred_region
    _
  $region9: #{three_stage_lgf_pallas.1} parent=0 // pred_fallthru
    _
  // Predicated region
  $region10: #{three_stage_lgf_pallas.1} parent=0 // pred_check
    _
  $region11: #{three_stage_lgf_pallas.1} parent=0 // pred_check_branch
    %158 = sbr.rel (0) target = $region13
  $region12: #{three_stage_lgf_pallas.1} parent=0 // pred_region
    _
  $region13: #{three_stage_lgf_pallas.1} parent=0 // pred_fallthru
    _
  // Predicated region
  $region14: #{three_stage_lgf_pallas.1} parent=0 // pred_check
    _
  $region15: #{three_stage_lgf_pallas.1} parent=0 // pred_check_branch
    %160 = sbr.rel (0) target = $region17
  $region16: #{three_stage_lgf_pallas.1} parent=0 // pred_region
    _
  $region17: #{three_stage_lgf_pallas.1} parent=0 // pred_fallthru
    _
  // Predicated region
  $region18: #{three_stage_lgf_pallas.1} parent=0 // pred_check
    _
  $region19: #{three_stage_lgf_pallas.1} parent=0 // pred_check_branch
    %162 = sbr.rel (0) target = $region21
  $region20: #{three_stage_lgf_pallas.1} parent=0 // pred_region
    _
  $region21: #{three_stage_lgf_pallas.1} parent=0 // pred_fallthru
    _
  // Predicated region
  $region22: #{three_stage_lgf_pallas.1} parent=0 // pred_check
    _
  $region23: #{three_stage_lgf_pallas.1} parent=0 // pred_check_branch
    %164 = sbr.rel (0) target = $region25
  $region24: #{three_stage_lgf_pallas.1} parent=0 // pred_region
    _
  $region25: #{three_stage_lgf_pallas.1} parent=0 // pred_fallthru
    _
  // Predicated region
  $region26: #{three_stage_lgf_pallas.1} parent=0 // pred_check
    _
  $region27: #{three_stage_lgf_pallas.1} parent=0 // pred_check_branch
    %166 = sbr.rel (0) target = $region29
  $region28: #{three_stage_lgf_pallas.1} parent=0 // pred_region
    _
  $region29: #{three_stage_lgf_pallas.1} parent=0 // pred_fallthru
    _
  // Predicated region
  $region30: #{three_stage_lgf_pallas.1} parent=0 // pred_check
    _
  $region31: #{three_stage_lgf_pallas.1} parent=0 // pred_check_branch
    %168 = sbr.rel (0) target = $region33
  $region32: #{three_stage_lgf_pallas.1} parent=0 // pred_region
    _
  $region33: #{three_stage_lgf_pallas.1} parent=0 // pred_fallthru
    _
  // Predicated region
  $region34: #{three_stage_lgf_pallas.1} parent=0 // pred_check
    _
  $region35: #{three_stage_lgf_pallas.1} parent=0 // pred_check_branch
    %170 = sbr.rel (0) target = $region37
  $region36: #{three_stage_lgf_pallas.1} parent=0 // pred_region
    _
  $region37: #{three_stage_lgf_pallas.1} parent=0 // pred_fallthru
    _
  // Predicated region
  $region38: #{three_stage_lgf_pallas.1} parent=0 // pred_check
    _
  $region39: #{three_stage_lgf_pallas.1} parent=0 // pred_check_branch
    %172 = sbr.rel (0) target = $region41
  $region40: #{three_stage_lgf_pallas.1} parent=0 // pred_region
    _
  $region41: #{three_stage_lgf_pallas.1} parent=0 // pred_fallthru
    _
  // Predicated region
  $region42: #{three_stage_lgf_pallas.1} parent=0 // pred_check
    _
  $region43: #{three_stage_lgf_pallas.1} parent=0 // pred_check_branch
    %174 = sbr.rel (0) target = $region45
  $region44: #{three_stage_lgf_pallas.1} parent=0 // pred_region
    _
  $region45: #{three_stage_lgf_pallas.1} parent=0 // pred_fallthru
    _
  // Predicated region
  $region46: #{three_stage_lgf_pallas.1} parent=0 // pred_check
    _
  $region47: #{three_stage_lgf_pallas.1} parent=0 // pred_check_branch
    %176 = sbr.rel (0) target = $region49
  $region48: #{three_stage_lgf_pallas.1} parent=0 // pred_region
    _
  $region49: #{three_stage_lgf_pallas.1} parent=0 // pred_fallthru
    _
  // Predicated region
  $region50: #{three_stage_lgf_pallas.1} parent=0 // pred_check
    _
  $region51: #{three_stage_lgf_pallas.1} parent=0 // pred_check_branch
    %178 = sbr.rel (0) target = $region53
  $region52: #{three_stage_lgf_pallas.1} parent=0 // pred_region
    _
  $region53: #{three_stage_lgf_pallas.1} parent=0 // pred_fallthru
    _
  // Predicated region
  $region54: #{three_stage_lgf_pallas.1} parent=0 // pred_check
    _
  $region55: #{three_stage_lgf_pallas.1} parent=0 // pred_check_branch
    %180 = sbr.rel (0) target = $region57
  $region56: #{three_stage_lgf_pallas.1} parent=0 // pred_region
    _
  $region57: #{three_stage_lgf_pallas.1} parent=0 // pred_fallthru
    _
  // Predicated region
  $region58: #{three_stage_lgf_pallas.1} parent=0 // pred_check
    _
  $region59: #{three_stage_lgf_pallas.1} parent=0 // pred_check_branch
    %182 = sbr.rel (0) target = $region61
  $region60: #{three_stage_lgf_pallas.1} parent=0 // pred_region
    _
  $region61: #{three_stage_lgf_pallas.1} parent=0 // pred_fallthru
    _
  // Predicated region
  $region62: #{three_stage_lgf_pallas.1} parent=0 // pred_check
    _
  $region63: #{three_stage_lgf_pallas.1} parent=0 // pred_check_branch
    %184 = sbr.rel (0) target = $region65
  $region64: #{three_stage_lgf_pallas.1} parent=0 // pred_region
    _
  $region65: #{three_stage_lgf_pallas.1} parent=0 // pred_fallthru
    _
  // Predicated region
  $region66: #{three_stage_lgf_pallas.1} parent=0 // pred_check
    _
  $region67: #{three_stage_lgf_pallas.1} parent=0 // pred_check_branch
    %186 = sbr.rel (0) target = $region69
  $region68: #{three_stage_lgf_pallas.1} parent=0 // pred_region
    _
  $region69: #{three_stage_lgf_pallas.1} parent=0 // pred_fallthru
    _
  // Predicated region
  $region70: #{three_stage_lgf_pallas.1} parent=0 // pred_check
    _
  $region71: #{three_stage_lgf_pallas.1} parent=0 // pred_check_branch
    %188 = sbr.rel (0) target = $region73
  $region72: #{three_stage_lgf_pallas.1} parent=0 // pred_region
    _
  $region73: #{three_stage_lgf_pallas.1} parent=0 // pred_fallthru
    _
  // Predicated region
  $region74: #{three_stage_lgf_pallas.1} parent=0 // pred_check
    _
  $region75: #{three_stage_lgf_pallas.1} parent=0 // pred_check_branch
    %190 = sbr.rel (0) target = $region77
  $region76: #{three_stage_lgf_pallas.1} parent=0 // pred_region
    _
  $region77: #{three_stage_lgf_pallas.1} parent=0 // pred_fallthru
    _
  // Predicated region
  $region78: #{three_stage_lgf_pallas.1} parent=0 // pred_check
    _
  $region79: #{three_stage_lgf_pallas.1} parent=0 // pred_check_branch
    %192 = sbr.rel (0) target = $region81
  $region80: #{three_stage_lgf_pallas.1} parent=0 // pred_region
    _
  $region81: #{three_stage_lgf_pallas.1} parent=0 // pred_fallthru
    _
  // Predicated region
  $region82: #{three_stage_lgf_pallas.1} parent=0 // pred_check
    _
  $region83: #{three_stage_lgf_pallas.1} parent=0 // pred_check_branch
    %194 = sbr.rel (0) target = $region85
  $region84: #{three_stage_lgf_pallas.1} parent=0 // pred_region
    _
  $region85: #{three_stage_lgf_pallas.1} parent=0 // pred_fallthru
    _
  // Predicated region
  $region86: #{three_stage_lgf_pallas.1} parent=0 // pred_check
    _
  $region87: #{three_stage_lgf_pallas.1} parent=0 // pred_check_branch
    %196 = sbr.rel (0) target = $region89
  $region88: #{three_stage_lgf_pallas.1} parent=0 // pred_region
    _
  $region89: #{three_stage_lgf_pallas.1} parent=0 // pred_fallthru
    _
  // Predicated region
  $region90: #{three_stage_lgf_pallas.1} parent=0 // pred_check
    _
  $region91: #{three_stage_lgf_pallas.1} parent=0 // pred_check_branch
    %198 = sbr.rel (0) target = $region93
  $region92: #{three_stage_lgf_pallas.1} parent=0 // pred_region
    _
  $region93: #{three_stage_lgf_pallas.1} parent=0 // pred_fallthru
    _
  // Predicated region
  $region94: #{three_stage_lgf_pallas.1} parent=0 // pred_check
    _
  $region95: #{three_stage_lgf_pallas.1} parent=0 // pred_check_branch
    %200 = sbr.rel (0) target = $region97
  $region96: #{three_stage_lgf_pallas.1} parent=0 // pred_region
    _
  $region97: #{three_stage_lgf_pallas.1} parent=0 // pred_fallthru
    _
  // Predicated region
  $region98: #{three_stage_lgf_pallas.1} parent=0 // pred_check
    _
  $region99: #{three_stage_lgf_pallas.1} parent=0 // pred_check_branch
    %202 = sbr.rel (0) target = $region101
  $region100: #{three_stage_lgf_pallas.1} parent=0 // pred_region
    _
  $region101: #{three_stage_lgf_pallas.1} parent=0 // pred_fallthru
    _
  // Predicated region
  $region102: #{three_stage_lgf_pallas.1} parent=0 // pred_check
    _
  $region103: #{three_stage_lgf_pallas.1} parent=0 // pred_check_branch
    %204 = sbr.rel (0) target = $region105
  $region104: #{three_stage_lgf_pallas.1} parent=0 // pred_region
    _
  $region105: #{three_stage_lgf_pallas.1} parent=0 // pred_fallthru
    _
  // Predicated region
  $region106: #{three_stage_lgf_pallas.1} parent=0 // pred_check
    _
  $region107: #{three_stage_lgf_pallas.1} parent=0 // pred_check_branch
    %206 = sbr.rel (0) target = $region109
  $region108: #{three_stage_lgf_pallas.1} parent=0 // pred_region
    _
  $region109: #{three_stage_lgf_pallas.1} parent=0 // pred_fallthru
    _
  // Predicated region
  $region110: #{three_stage_lgf_pallas.1} parent=0 // pred_check
    _
  $region111: #{three_stage_lgf_pallas.1} parent=0 // pred_check_branch
    %208 = sbr.rel (0) target = $region113
  $region112: #{three_stage_lgf_pallas.1} parent=0 // pred_region
    _
  $region113: #{three_stage_lgf_pallas.1} parent=0 // pred_fallthru
    _
  // Predicated region
  $region114: #{three_stage_lgf_pallas.1} parent=0 // pred_check
    _
  $region115: #{three_stage_lgf_pallas.1} parent=0 // pred_check_branch
    %210 = sbr.rel (0) target = $region117
  $region116: #{three_stage_lgf_pallas.1} parent=0 // pred_region
    _
  $region117: #{three_stage_lgf_pallas.1} parent=0 // pred_fallthru
    _
  // Predicated region
  $region118: #{three_stage_lgf_pallas.1} parent=0 // pred_check
    _
  $region119: #{three_stage_lgf_pallas.1} parent=0 // pred_check_branch
    %212 = sbr.rel (0) target = $region121
  $region120: #{three_stage_lgf_pallas.1} parent=0 // pred_region
    _
  $region121: #{three_stage_lgf_pallas.1} parent=0 // pred_fallthru
    _
  // Predicated region
  $region122: #{three_stage_lgf_pallas.1} parent=0 // pred_check
    _
  $region123: #{three_stage_lgf_pallas.1} parent=0 // pred_check_branch
    %214 = sbr.rel (0) target = $region125
  $region124: #{three_stage_lgf_pallas.1} parent=0 // pred_region
    _
  $region125: #{three_stage_lgf_pallas.1} parent=0 // pred_fallthru
    _
  // Predicated region
  $region126: #{three_stage_lgf_pallas.1} parent=0 // pred_check
    _
  $region127: #{three_stage_lgf_pallas.1} parent=0 // pred_check_branch
    %216 = sbr.rel (0) target = $region129
  $region128: #{three_stage_lgf_pallas.1} parent=0 // pred_region
    _
  $region129: #{three_stage_lgf_pallas.1} parent=0 // pred_fallthru
    _
  // Predicated region
  $region130: #{three_stage_lgf_pallas.1} parent=0 // pred_check
    _
  $region131: #{three_stage_lgf_pallas.1} parent=0 // pred_check_branch
    %218 = sbr.rel (0) target = $region133
  $region132: #{three_stage_lgf_pallas.1} parent=0 // pred_region
    _
  $region133: #{three_stage_lgf_pallas.1} parent=0 // pred_fallthru
    _
  // Predicated region
  $region134: #{three_stage_lgf_pallas.1} parent=0 // pred_check
    _
  $region135: #{three_stage_lgf_pallas.1} parent=0 // pred_check_branch
    %220 = sbr.rel (0) target = $region137
  $region136: #{three_stage_lgf_pallas.1} parent=0 // pred_region
    _
  $region137: #{three_stage_lgf_pallas.1} parent=0 // pred_fallthru
    _
  // Predicated region
  $region138: #{three_stage_lgf_pallas.1} parent=0 // pred_check
    _
  $region139: #{three_stage_lgf_pallas.1} parent=0 // pred_check_branch
    %222 = sbr.rel (0) target = $region141
  $region140: #{three_stage_lgf_pallas.1} parent=0 // pred_region
    _
  $region141: #{three_stage_lgf_pallas.1} parent=0 // pred_fallthru
    _
  // Predicated region
  $region142: #{three_stage_lgf_pallas.1} parent=0 // pred_check
    _
  $region143: #{three_stage_lgf_pallas.1} parent=0 // pred_check_branch
    %224 = sbr.rel (0) target = $region145
  $region144: #{three_stage_lgf_pallas.1} parent=0 // pred_region
    _
  $region145: #{three_stage_lgf_pallas.1} parent=0 // pred_fallthru
    _
  // Predicated region
  $region146: #{three_stage_lgf_pallas.1} parent=0 // pred_check
    _
  $region147: #{three_stage_lgf_pallas.1} parent=0 // pred_check_branch
    %226 = sbr.rel (0) target = $region149
  $region148: #{three_stage_lgf_pallas.1} parent=0 // pred_region
    _
  $region149: #{three_stage_lgf_pallas.1} parent=0 // pred_fallthru
    _
  // Predicated region
  $region150: #{three_stage_lgf_pallas.1} parent=0 // pred_check
    _
  $region151: #{three_stage_lgf_pallas.1} parent=0 // pred_check_branch
    %228 = sbr.rel (0) target = $region153
  $region152: #{three_stage_lgf_pallas.1} parent=0 // pred_region
    _
  $region153: #{three_stage_lgf_pallas.1} parent=0 // pred_fallthru
    _
  // Predicated region
  $region154: #{three_stage_lgf_pallas.1} parent=0 // pred_check
    _
  $region155: #{three_stage_lgf_pallas.1} parent=0 // pred_check_branch
    %230 = sbr.rel (0) target = $region157
  $region156: #{three_stage_lgf_pallas.1} parent=0 // pred_region
    _
  $region157: #{three_stage_lgf_pallas.1} parent=0 // pred_fallthru
    _
  // Predicated region
  $region158: #{three_stage_lgf_pallas.1} parent=0 // pred_check
    _
  $region159: #{three_stage_lgf_pallas.1} parent=0 // pred_check_branch
    %232 = sbr.rel (0) target = $region161
  $region160: #{three_stage_lgf_pallas.1} parent=0 // pred_region
    _
  $region161: #{three_stage_lgf_pallas.1} parent=0 // pred_fallthru
    _
  // Predicated region
  $region162: #{three_stage_lgf_pallas.1} parent=0 // pred_check
    _
  $region163: #{three_stage_lgf_pallas.1} parent=0 // pred_check_branch
    %234 = sbr.rel (0) target = $region165
  $region164: #{three_stage_lgf_pallas.1} parent=0 // pred_region
    _
  $region165: #{three_stage_lgf_pallas.1} parent=0 // pred_fallthru
    _
  // Predicated region
  $region166: #{three_stage_lgf_pallas.1} parent=0 // pred_check
    _
  $region167: #{three_stage_lgf_pallas.1} parent=0 // pred_check_branch
    %236 = sbr.rel (0) target = $region169
  $region168: #{three_stage_lgf_pallas.1} parent=0 // pred_region
    _
  $region169: #{three_stage_lgf_pallas.1} parent=0 // pred_fallthru
    _
  // Predicated region
  $region170: #{three_stage_lgf_pallas.1} parent=0 // pred_check
    _
  $region171: #{three_stage_lgf_pallas.1} parent=0 // pred_check_branch
    %238 = sbr.rel (0) target = $region173
  $region172: #{three_stage_lgf_pallas.1} parent=0 // pred_region
    _
  $region173: #{three_stage_lgf_pallas.1} parent=0 // pred_fallthru
    _
  // Predicated region
  $region174: #{three_stage_lgf_pallas.1} parent=0 // pred_check
    _
  $region175: #{three_stage_lgf_pallas.1} parent=0 // pred_check_branch
    %240 = sbr.rel (0) target = $region177
  $region176: #{three_stage_lgf_pallas.1} parent=0 // pred_region
    _
  $region177: #{three_stage_lgf_pallas.1} parent=0 // pred_fallthru
    _
  // Predicated region
  $region178: #{three_stage_lgf_pallas.1} parent=0 // pred_check
    _
  $region179: #{three_stage_lgf_pallas.1} parent=0 // pred_check_branch
    %242 = sbr.rel (0) target = $region181
  $region180: #{three_stage_lgf_pallas.1} parent=0 // pred_region
    _
  $region181: #{three_stage_lgf_pallas.1} parent=0 // pred_fallthru
    _
  // Predicated region
  $region182: #{three_stage_lgf_pallas.1} parent=0 // pred_check
    _
  $region183: #{three_stage_lgf_pallas.1} parent=0 // pred_check_branch
    %244 = sbr.rel (0) target = $region185
  $region184: #{three_stage_lgf_pallas.1} parent=0 // pred_region
    _
  $region185: #{three_stage_lgf_pallas.1} parent=0 // pred_fallthru
    _
  // Predicated region
  $region186: #{three_stage_lgf_pallas.1} parent=0 // pred_check
    _
  $region187: #{three_stage_lgf_pallas.1} parent=0 // pred_check_branch
    %246 = sbr.rel (0) target = $region189
  $region188: #{three_stage_lgf_pallas.1} parent=0 // pred_region
    _
  $region189: #{three_stage_lgf_pallas.1} parent=0 // pred_fallthru
    _
  // Predicated region
  $region190: #{three_stage_lgf_pallas.1} parent=0 // pred_check
    _
  $region191: #{three_stage_lgf_pallas.1} parent=0 // pred_check_branch
    %248 = sbr.rel (0) target = $region193
  $region192: #{three_stage_lgf_pallas.1} parent=0 // pred_region
    _
  $region193: #{three_stage_lgf_pallas.1} parent=0 // pred_fallthru
    _
  // Predicated region
  $region194: #{three_stage_lgf_pallas.1} parent=0 // pred_check
    _
  $region195: #{three_stage_lgf_pallas.1} parent=0 // pred_check_branch
    %250 = sbr.rel (0) target = $region197
  $region196: #{three_stage_lgf_pallas.1} parent=0 // pred_region
    _
  $region197: #{three_stage_lgf_pallas.1} parent=0 // pred_fallthru
    _
  // Predicated region
  $region198: #{three_stage_lgf_pallas.1} parent=0 // pred_check
    _
  $region199: #{three_stage_lgf_pallas.1} parent=0 // pred_check_branch
    %252 = sbr.rel (0) target = $region201
  $region200: #{three_stage_lgf_pallas.1} parent=0 // pred_region
    _
  $region201: #{three_stage_lgf_pallas.1} parent=0 // pred_fallthru
    _
  // Predicated region
  $region202: #{three_stage_lgf_pallas.1} parent=0 // pred_check
    _
  $region203: #{three_stage_lgf_pallas.1} parent=0 // pred_check_branch
    %254 = sbr.rel (0) target = $region205
  $region204: #{three_stage_lgf_pallas.1} parent=0 // pred_region
    _
  $region205: #{three_stage_lgf_pallas.1} parent=0 // pred_fallthru
    _
  // Predicated region
  $region206: #{three_stage_lgf_pallas.1} parent=0 // pred_check
    _
  $region207: #{three_stage_lgf_pallas.1} parent=0 // pred_check_branch
    %256 = sbr.rel (0) target = $region209
  $region208: #{three_stage_lgf_pallas.1} parent=0 // pred_region
    _
  $region209: #{three_stage_lgf_pallas.1} parent=0 // pred_fallthru
    _
  // Predicated region
  $region210: #{three_stage_lgf_pallas.1} parent=0 // pred_check
    _
  $region211: #{three_stage_lgf_pallas.1} parent=0 // pred_check_branch
    %258 = sbr.rel (0) target = $region213
  $region212: #{three_stage_lgf_pallas.1} parent=0 // pred_region
    _
  $region213: #{three_stage_lgf_pallas.1} parent=0 // pred_fallthru
    _
  // Predicated region
  $region214: #{three_stage_lgf_pallas.1} parent=0 // pred_check
    _
  $region215: #{three_stage_lgf_pallas.1} parent=0 // pred_check_branch
    %260 = sbr.rel (0) target = $region217
  $region216: #{three_stage_lgf_pallas.1} parent=0 // pred_region
    _
  $region217: #{three_stage_lgf_pallas.1} parent=0 // pred_fallthru
    _
  // Predicated region
  $region218: #{three_stage_lgf_pallas.1} parent=0 // pred_check
    _
  $region219: #{three_stage_lgf_pallas.1} parent=0 // pred_check_branch
    %262 = sbr.rel (0) target = $region221
  $region220: #{three_stage_lgf_pallas.1} parent=0 // pred_region
    _
  $region221: #{three_stage_lgf_pallas.1} parent=0 // pred_fallthru
    _
  // Predicated region
  $region222: #{three_stage_lgf_pallas.1} parent=0 // pred_check
    _
  $region223: #{three_stage_lgf_pallas.1} parent=0 // pred_check_branch
    %264 = sbr.rel (0) target = $region225
  $region224: #{three_stage_lgf_pallas.1} parent=0 // pred_region
    _
  $region225: #{three_stage_lgf_pallas.1} parent=0 // pred_fallthru
    _
  // Predicated region
  $region226: #{three_stage_lgf_pallas.1} parent=0 // pred_check
    _
  $region227: #{three_stage_lgf_pallas.1} parent=0 // pred_check_branch
    %266 = sbr.rel (0) target = $region229
  $region228: #{three_stage_lgf_pallas.1} parent=0 // pred_region
    _
  $region229: #{three_stage_lgf_pallas.1} parent=0 // pred_fallthru
    _
  // Predicated region
  $region230: #{three_stage_lgf_pallas.1} parent=0 // pred_check
    _
  $region231: #{three_stage_lgf_pallas.1} parent=0 // pred_check_branch
    %268 = sbr.rel (0) target = $region233
  $region232: #{three_stage_lgf_pallas.1} parent=0 // pred_region
    _
  $region233: #{three_stage_lgf_pallas.1} parent=0 // pred_fallthru
    _
  // Predicated region
  $region234: #{three_stage_lgf_pallas.1} parent=0 // pred_check
    _
  $region235: #{three_stage_lgf_pallas.1} parent=0 // pred_check_branch
    %270 = sbr.rel (0) target = $region237
  $region236: #{three_stage_lgf_pallas.1} parent=0 // pred_region
    _
  $region237: #{three_stage_lgf_pallas.1} parent=0 // pred_fallthru
    _
  // Predicated region
  $region238: #{three_stage_lgf_pallas.1} parent=0 // pred_check
    _
  $region239: #{three_stage_lgf_pallas.1} parent=0 // pred_check_branch
    %272 = sbr.rel (0) target = $region241
  $region240: #{three_stage_lgf_pallas.1} parent=0 // pred_region
    _
  $region241: #{three_stage_lgf_pallas.1} parent=0 // pred_fallthru
    _
  // Predicated region
  $region242: #{three_stage_lgf_pallas.1} parent=0 // pred_check
    _
  $region243: #{three_stage_lgf_pallas.1} parent=0 // pred_check_branch
    %274 = sbr.rel (0) target = $region245
  $region244: #{three_stage_lgf_pallas.1} parent=0 // pred_region
    _
  $region245: #{three_stage_lgf_pallas.1} parent=0 // pred_fallthru
    _
  // Predicated region
  $region246: #{three_stage_lgf_pallas.1} parent=0 // pred_check
    _
  $region247: #{three_stage_lgf_pallas.1} parent=0 // pred_check_branch
    %276 = sbr.rel (0) target = $region249
  $region248: #{three_stage_lgf_pallas.1} parent=0 // pred_region
    _
  $region249: #{three_stage_lgf_pallas.1} parent=0 // pred_fallthru
    _
  // Predicated region
  $region250: #{three_stage_lgf_pallas.1} parent=0 // pred_check
    _
  $region251: #{three_stage_lgf_pallas.1} parent=0 // pred_check_branch
    %278 = sbr.rel (0) target = $region253
  $region252: #{three_stage_lgf_pallas.1} parent=0 // pred_region
    _
  $region253: #{three_stage_lgf_pallas.1} parent=0 // pred_fallthru
    _
  // Predicated region
  $region254: #{three_stage_lgf_pallas.1} parent=0 // pred_check
    _
  $region255: #{three_stage_lgf_pallas.1} parent=0 // pred_check_branch
    %280 = sbr.rel (0) target = $region257
  $region256: #{three_stage_lgf_pallas.1} parent=0 // pred_region
    _
  $region257: #{three_stage_lgf_pallas.1} parent=0 // pred_fallthru
    _
  // Predicated region
  $region258: #{three_stage_lgf_pallas.1} parent=0 // pred_check
    _
  $region259: #{three_stage_lgf_pallas.1} parent=0 // pred_check_branch
    %282 = sbr.rel (0) target = $region261
  $region260: #{three_stage_lgf_pallas.1} parent=0 // pred_region
    _
  $region261: #{three_stage_lgf_pallas.1} parent=0 // pred_fallthru
    _
  // Predicated region
  $region262: #{three_stage_lgf_pallas.1} parent=0 // pred_check
    _
  $region263: #{three_stage_lgf_pallas.1} parent=0 // pred_check_branch
    %284 = sbr.rel (0) target = $region265
  $region264: #{three_stage_lgf_pallas.1} parent=0 // pred_region
    _
  $region265: #{three_stage_lgf_pallas.1} parent=0 // pred_fallthru
    _
  // Predicated region
  $region266: #{three_stage_lgf_pallas.1} parent=0 // pred_check
    _
  $region267: #{three_stage_lgf_pallas.1} parent=0 // pred_check_branch
    %286 = sbr.rel (0) target = $region269
  $region268: #{three_stage_lgf_pallas.1} parent=0 // pred_region
    _
  $region269: #{three_stage_lgf_pallas.1} parent=0 // pred_fallthru
    _
  // Predicated region
  $region270: #{three_stage_lgf_pallas.1} parent=0 // pred_check
    _
  $region271: #{three_stage_lgf_pallas.1} parent=0 // pred_check_branch
    %288 = sbr.rel (0) target = $region273
  $region272: #{three_stage_lgf_pallas.1} parent=0 // pred_region
    _
  $region273: #{three_stage_lgf_pallas.1} parent=0 // pred_fallthru
    _
  %v290 = vld [vmem:[%s1] sm:$0xf]
  %v291 = vld [vmem:[%s1 + $0x4] sm:$0xf]
  %v292 = vld [vmem:[%s3] sm:$0xff]
  %v293 = vld [vmem:[%s3 + $0x8] sm:$0xff]
  %v294 = vld [vmem:[%s5] sm:$0xff]
  %v295 = vld [vmem:[%s5 + $0x8] sm:$0xff]
  %v296 = vld [vmem:[%s5 + $0x10] sm:$0xff]
  %v297 = vld [vmem:[%s5 + $0x18] sm:$0xff]
  %v298 = vld [vmem:[%s5 + $0x20] sm:$0xff]
  %v299 = vld [vmem:[%s5 + $0x28] sm:$0xff]
  %v300 = vld [vmem:[%s5 + $0x30] sm:$0xff]
  %v301 = vld [vmem:[%s5 + $0x38] sm:$0xff]
  %s302 = scalar_lea.vmem %s5, 64
  %v303 = vld [vmem:[%s302] sm:$0xff]
  %v304 = vld [vmem:[%s302 + $0x8] sm:$0xff]
  %v305 = vld [vmem:[%s302 + $0x10] sm:$0xff]
  %v306 = vld [vmem:[%s302 + $0x18] sm:$0xff]
  %v307 = vld [vmem:[%s302 + $0x20] sm:$0xff]
  %v308 = vld [vmem:[%s302 + $0x28] sm:$0xff]
  %v309 = vld [vmem:[%s302 + $0x30] sm:$0xff]
  %v310 = vld [vmem:[%s302 + $0x38] sm:$0xff]
  %v311 = vld [vmem:[%s7] sm:$0xff]
  %v312 = vld [vmem:[%s7 + $0x8] sm:$0xff]
  %v313 = vld [vmem:[%s7 + $0x10] sm:$0xff]
  %v314 = vld [vmem:[%s7 + $0x18] sm:$0xff]
  %v315 = vld [vmem:[%s7 + $0x20] sm:$0xff]
  %v316 = vld [vmem:[%s7 + $0x28] sm:$0xff]
  %v317 = vld [vmem:[%s7 + $0x30] sm:$0xff]
  %v318 = vld [vmem:[%s7 + $0x38] sm:$0xff]
  %v319 = vadd.f32 %v294, %v311
  %v320 = vadd.f32 %v295, %v312
  %v321 = vadd.f32 %v296, %v313
  %v322 = vadd.f32 %v297, %v314
  %v323 = vadd.f32 %v298, %v315
  %v324 = vadd.f32 %v299, %v316
  %v325 = vadd.f32 %v300, %v317
  %v326 = vadd.f32 %v301, %v318
  %v327 = vadd.f32 %v303, %v311
  %v328 = vadd.f32 %v304, %v312
  %v329 = vadd.f32 %v305, %v313
  %v330 = vadd.f32 %v306, %v314
  %v331 = vadd.f32 %v307, %v315
  %v332 = vadd.f32 %v308, %v316
  %v333 = vadd.f32 %v309, %v317
  %v334 = vadd.f32 %v310, %v318
  %v335 = vpack.c.bf16 %v321, %v319
  %v336 = vpack.c.bf16 %v322, %v320
  %v337 = vpack.c.bf16 %v329, %v327
  %v338 = vpack.c.bf16 %v330, %v328
  %v339 = vpack.c.bf16 %v325, %v323
  %v340 = vpack.c.bf16 %v326, %v324
  %v341 = vpack.c.bf16 %v333, %v331
  %v342 = vpack.c.bf16 %v334, %v332
  %v343 = vld [vmem:[%s13] sm:$0xf]
  %v344 = vld [vmem:[%s13 + $0x4] sm:$0xf]
  %v345 = vld [vmem:[%s15] sm:$0x1]
  %v347 = vperm.slane %v345, 0
  %v351 = vunpack.c.l.b16 %v290
  %v352 = vunpack.c.l.b16 %v291
  %v353 = vpack.c.b16 %v352, %v351
  %v356 = vunpack.c.l.b16 %v343
  %v357 = vunpack.c.l.b16 %v344
  %v358 = vpack.c.b16 %v357, %v356
  %vm360 = vcmask 130048
  %v362 = vsel %vm360, %v353, 0
  %364 = vmatpush.bf16.msra.mxu0 0
  %365 = vmatpush.bf16.msra.mxu0 0
  %366 = vmatpush.bf16.msra.mxu0 0
  %367 = vmatpush.bf16.msra.mxu0 0
  %368 = vmatpush.bf16.msra.mxu0 0
  %369 = vmatpush.bf16.msra.mxu0 0
  %370 = vmatpush.bf16.msra.mxu0 0
  %371 = vmatpush.bf16.msra.mxu0 %v358
  %372 = vmatmul.bf16.gmra.mxu0 %v362
  %v373 = vpop.f32.mrf.mxu0
  %v374 = vadd.f32 %v347, %v373
  %v375 = vpop.f32.mrf.mxu0
  %v376 = vadd.f32 %v347, %v375
  %377 = vdwg.mxu0
  %v378 = vld [vmem:[%s17] sm:$0x1]
  %v379 = vld [vmem:[%s19] sm:$0x1]
  %vm380 = vcmask 261120
  %v381 = vsel %vm380, %v374, 0.0
  %382 = vadd.xlane.f32.xlu0 %v381
  %v383 = vpop.xlane.xlu0 %382
  %v384 = vsel %vm380, %v376, 0.0
  %385 = vadd.xlane.f32.xlu0 %v384
  %v386 = vpop.xlane.xlu0 %385
  %v387 = vrcp.pop 32.0
  %v388 = vmul.f32 32.0, %v387
  %v389 = vsub.f32 1.0, %v388
  %v390 = vmul.f32 %v387, %v389
  %v391 = vadd.f32 %v387, %v390
  %vm392 = vweird.f32 %v387
  %v393 = vsel %vm392, %v387, %v391
  %v394 = vmul.f32 %v383, %v393
  %v395 = vmul.f32 %v386, %v393
  %v396 = vsub.f32 %v374, %v394
  %v397 = vsub.f32 %v376, %v395
  %v398 = vmul.f32 %v396, %v396
  %v399 = vmul.f32 %v397, %v397
  %v400 = vsel %vm380, %v398, 0.0
  %401 = vadd.xlane.f32.xlu0 %v400
  %v402 = vpop.xlane.xlu0 %401
  %v403 = vsel %vm380, %v399, 0.0
  %404 = vadd.xlane.f32.xlu0 %v403
  %v405 = vpop.xlane.xlu0 %404
  %v406 = vmul.f32 %v402, %v393
  %v407 = vmul.f32 %v405, %v393
  %v408 = vadd.f32 %v406, 1e-12
  %v409 = vadd.f32 %v407, 1e-12
  %v410 = vrsqrt.pop %v408
  %v411 = vmul.f32 %v410, %v408
  %v412 = vmul.f32 %v411, %v410
  %v413 = vmul.f32 0.5, %v412
  %v414 = vsub.f32 1.5, %v413
  %v415 = vmul.f32 %v410, %v414
  %vm416 = vweird.f32 %v408
  %vm417 = vweird.f32 %v410
  %vm418 = vmor %vm416, %vm417
  %v419 = vsel %vm418, %v410, %v415
  %v420 = vrsqrt.pop %v409
  %v421 = vmul.f32 %v420, %v409
  %v422 = vmul.f32 %v421, %v420
  %v423 = vmul.f32 0.5, %v422
  %v424 = vsub.f32 1.5, %v423
  %v425 = vmul.f32 %v420, %v424
  %vm426 = vweird.f32 %v409
  %vm427 = vweird.f32 %v420
  %vm428 = vmor %vm426, %vm427
  %v429 = vsel %vm428, %v420, %v425
  %v430 = vmul.f32 %v396, %v419
  %v431 = vmul.f32 %v397, %v429
  %v433 = vperm.slane %v378, 0
  %v435 = vmul.f32 %v430, %v433
  %v436 = vmul.f32 %v431, %v433
  %v438 = vperm.slane %v379, 0
  %v440 = vadd.f32 %v435, %v438
  %v441 = vadd.f32 %v436, %v438
  %v442 = vld [vmem:[%s21] sm:$0xf]
  %v443 = vld [vmem:[%s21 + $0x4] sm:$0xf]
  %v444 = vld [vmem:[%s23] sm:$0x1]
  %v446 = vperm.slane %v444, 0
  %v450 = vunpack.c.l.b16 %v442
  %v451 = vunpack.c.l.b16 %v443
  %v452 = vpack.c.b16 %v451, %v450
  %454 = vmatpush.bf16.msra.mxu0 0
  %455 = vmatpush.bf16.msra.mxu0 0
  %456 = vmatpush.bf16.msra.mxu0 0
  %457 = vmatpush.bf16.msra.mxu0 0
  %458 = vmatpush.bf16.msra.mxu0 0
  %459 = vmatpush.bf16.msra.mxu0 0
  %460 = vmatpush.bf16.msra.mxu0 0
  %461 = vmatpush.bf16.msra.mxu0 %v452
  %462 = vmatmul.bf16.gmra.mxu0 %v362
  %v463 = vpop.f32.mrf.mxu0
  %v464 = vadd.f32 %v446, %v463
  %v465 = vpop.f32.mrf.mxu0
  %v466 = vadd.f32 %v446, %v465
  %467 = vdwg.mxu0
  %v468 = vld [vmem:[%s25] sm:$0x1]
  %v469 = vld [vmem:[%s27] sm:$0x1]
  %v470 = vsel %vm380, %v464, 0.0
  %471 = vadd.xlane.f32.xlu0 %v470
  %v472 = vpop.xlane.xlu0 %471
  %v473 = vsel %vm380, %v466, 0.0
  %474 = vadd.xlane.f32.xlu0 %v473
  %v475 = vpop.xlane.xlu0 %474
  %v476 = vmul.f32 %v472, %v393
  %v477 = vmul.f32 %v475, %v393
  %v478 = vsub.f32 %v464, %v476
  %v479 = vsub.f32 %v466, %v477
  %v480 = vmul.f32 %v478, %v478
  %v481 = vmul.f32 %v479, %v479
  %v482 = vsel %vm380, %v480, 0.0
  %483 = vadd.xlane.f32.xlu0 %v482
  %v484 = vpop.xlane.xlu0 %483
  %v485 = vsel %vm380, %v481, 0.0
  %486 = vadd.xlane.f32.xlu0 %v485
  %v487 = vpop.xlane.xlu0 %486
  %v488 = vmul.f32 %v484, %v393
  %v489 = vmul.f32 %v487, %v393
  %v490 = vadd.f32 %v488, 1e-12
  %v491 = vadd.f32 %v489, 1e-12
  %v492 = vrsqrt.pop %v490
  %v493 = vmul.f32 %v492, %v490
  %v494 = vmul.f32 %v493, %v492
  %v495 = vmul.f32 0.5, %v494
  %v496 = vsub.f32 1.5, %v495
  %v497 = vmul.f32 %v492, %v496
  %vm498 = vweird.f32 %v490
  %vm499 = vweird.f32 %v492
  %vm500 = vmor %vm498, %vm499
  %v501 = vsel %vm500, %v492, %v497
  %v502 = vrsqrt.pop %v491
  %v503 = vmul.f32 %v502, %v491
  %v504 = vmul.f32 %v503, %v502
  %v505 = vmul.f32 0.5, %v504
  %v506 = vsub.f32 1.5, %v505
  %v507 = vmul.f32 %v502, %v506
  %vm508 = vweird.f32 %v491
  %vm509 = vweird.f32 %v502
  %vm510 = vmor %vm508, %vm509
  %v511 = vsel %vm510, %v502, %v507
  %v512 = vmul.f32 %v478, %v501
  %v513 = vmul.f32 %v479, %v511
  %v515 = vperm.slane %v468, 0
  %v517 = vmul.f32 %v512, %v515
  %v518 = vmul.f32 %v513, %v515
  %v520 = vperm.slane %v469, 0
  %v522 = vadd.f32 %v517, %v520
  %v523 = vadd.f32 %v518, %v520
  %v524 = vld [vmem:[%s29] sm:$0xf]
  %v525 = vld [vmem:[%s29 + $0x4] sm:$0xf]
  %v526 = vld [vmem:[%s29 + $0x8] sm:$0xf]
  %v527 = vld [vmem:[%s29 + $0xc] sm:$0xf]
  %v528 = vld [vmem:[%s31] sm:$0xff]
  %v529 = vld [vmem:[%s31 + $0x8] sm:$0xff]
  %v530 = vld [vmem:[%s31 + $0x10] sm:$0xff]
  %v531 = vld [vmem:[%s31 + $0x18] sm:$0xff]
  %533 = vset.pattern.permute.xlu0 0
  %534 = vperm.xlu0 %533, %v528
  %v535 = vpop.permute.xlu0 %534
  %538 = vset.pattern.permute.xlu0 0
  %539 = vperm.xlu0 %538, %v529
  %v540 = vpop.permute.xlu0 %539
  %543 = vset.pattern.permute.xlu0 0
  %544 = vperm.xlu0 %543, %v530
  %v545 = vpop.permute.xlu0 %544
  %548 = vset.pattern.permute.xlu0 0
  %549 = vperm.xlu0 %548, %v531
  %v550 = vpop.permute.xlu0 %549
  %v556 = vunpack.c.l.b16 %v524
  %v557 = vunpack.c.l.b16 %v525
  %v558 = vunpack.c.l.b16 %v526
  %v559 = vunpack.c.l.b16 %v527
  %v560 = vpack.c.b16 %v557, %v556
  %v561 = vpack.c.b16 %v559, %v558
  %v563 = vsel %vm380, %v560, 0
  %v566 = vsel %vm380, %v561, 0
  %568 = vmatpush.bf16.msra.mxu0 0
  %569 = vmatpush.bf16.msra.mxu0 0
  %570 = vmatpush.bf16.msra.mxu0 0
  %571 = vmatpush.bf16.msra.mxu0 0
  %572 = vmatpush.bf16.msra.mxu0 0
  %573 = vmatpush.bf16.msra.mxu0 0
  %574 = vmatpush.bf16.msra.mxu0 %v339
  %575 = vmatpush.bf16.msra.mxu0 %v335
  %576 = vmatmul.bf16.gmra.mxu0 %v563
  %v577 = vpop.f32.mrf.mxu0
  %v578 = vadd.f32 %v535, %v577
  %v579 = vpop.f32.mrf.mxu0
  %v580 = vadd.f32 %v540, %v579
  %581 = vmatmul.bf16.gmra.mxu0 %v566
  %v582 = vpop.f32.mrf.mxu0
  %v583 = vadd.f32 %v545, %v582
  %v584 = vpop.f32.mrf.mxu0
  %v585 = vadd.f32 %v550, %v584
  %586 = vdwg.mxu0
  %587 = vmatpush.bf16.msra.mxu0 0
  %588 = vmatpush.bf16.msra.mxu0 0
  %589 = vmatpush.bf16.msra.mxu0 0
  %590 = vmatpush.bf16.msra.mxu0 0
  %591 = vmatpush.bf16.msra.mxu0 0
  %592 = vmatpush.bf16.msra.mxu0 0
  %593 = vmatpush.bf16.msra.mxu0 %v340
  %594 = vmatpush.bf16.msra.mxu0 %v336
  %595 = vmatmul.bf16.gmra.mxu0 %v563
  %v596 = vpop.f32.mrf.mxu0
  %v597 = vadd.f32 %v535, %v596
  %v598 = vpop.f32.mrf.mxu0
  %v599 = vadd.f32 %v540, %v598
  %600 = vmatmul.bf16.gmra.mxu0 %v566
  %v601 = vpop.f32.mrf.mxu0
  %v602 = vadd.f32 %v545, %v601
  %v603 = vpop.f32.mrf.mxu0
  %v604 = vadd.f32 %v550, %v603
  %605 = vdwg.mxu0
  %606 = vmatpush.bf16.msra.mxu0 0
  %607 = vmatpush.bf16.msra.mxu0 0
  %608 = vmatpush.bf16.msra.mxu0 0
  %609 = vmatpush.bf16.msra.mxu0 0
  %610 = vmatpush.bf16.msra.mxu0 0
  %611 = vmatpush.bf16.msra.mxu0 0
  %612 = vmatpush.bf16.msra.mxu0 %v341
  %613 = vmatpush.bf16.msra.mxu0 %v337
  %614 = vmatmul.bf16.gmra.mxu0 %v563
  %v615 = vpop.f32.mrf.mxu0
  %v616 = vadd.f32 %v535, %v615
  %v617 = vpop.f32.mrf.mxu0
  %v618 = vadd.f32 %v540, %v617
  %619 = vmatmul.bf16.gmra.mxu0 %v566
  %v620 = vpop.f32.mrf.mxu0
  %v621 = vadd.f32 %v545, %v620
  %v622 = vpop.f32.mrf.mxu0
  %v623 = vadd.f32 %v550, %v622
  %624 = vdwg.mxu0
  %625 = vmatpush.bf16.msra.mxu0 0
  %626 = vmatpush.bf16.msra.mxu0 0
  %627 = vmatpush.bf16.msra.mxu0 0
  %628 = vmatpush.bf16.msra.mxu0 0
  %629 = vmatpush.bf16.msra.mxu0 0
  %630 = vmatpush.bf16.msra.mxu0 0
  %631 = vmatpush.bf16.msra.mxu0 %v342
  %632 = vmatpush.bf16.msra.mxu0 %v338
  %633 = vmatmul.bf16.gmra.mxu0 %v563
  %v634 = vpop.f32.mrf.mxu0
  %v635 = vadd.f32 %v535, %v634
  %v636 = vpop.f32.mrf.mxu0
  %v637 = vadd.f32 %v540, %v636
  %638 = vmatmul.bf16.gmra.mxu0 %v566
  %v639 = vpop.f32.mrf.mxu0
  %v640 = vadd.f32 %v545, %v639
  %v641 = vpop.f32.mrf.mxu0
  %v642 = vadd.f32 %v550, %v641
  %643 = vdwg.mxu0
  %v644 = vpack.c.bf16 %v441, %v440
  %v645 = vld [vmem:[%s33] sm:$0xf]
  %v646 = vld [vmem:[%s33 + $0x4] sm:$0xf]
  %v647 = vld [vmem:[%s33 + $0x8] sm:$0xf]
  %v648 = vld [vmem:[%s33 + $0xc] sm:$0xf]
  %v649 = vld [vmem:[%s35] sm:$0x1]
  %v651 = vperm.slane %v649, 0
  %v657 = vunpack.c.l.b16 %v645
  %v658 = vunpack.c.l.b16 %v646
  %v659 = vunpack.c.l.b16 %v647
  %v660 = vunpack.c.l.b16 %v648
  %v661 = vpack.c.b16 %v658, %v657
  %v662 = vpack.c.b16 %v660, %v659
  %v666 = vsel %vm380, %v644, 0
  %668 = vmatpush.bf16.msra.mxu0 0
  %669 = vmatpush.bf16.msra.mxu0 0
  %670 = vmatpush.bf16.msra.mxu0 0
  %671 = vmatpush.bf16.msra.mxu0 0
  %672 = vmatpush.bf16.msra.mxu0 0
  %673 = vmatpush.bf16.msra.mxu0 0
  %674 = vmatpush.bf16.msra.mxu0 %v662
  %675 = vmatpush.bf16.msra.mxu0 %v661
  %676 = vmatmul.bf16.gmra.mxu0 %v666
  %v677 = vpop.f32.mrf.mxu0
  %v678 = vadd.f32 %v651, %v677
  %v679 = vpop.f32.mrf.mxu0
  %v680 = vadd.f32 %v651, %v679
  %681 = vdwg.mxu0
  %v682 = vld [vmem:[%s37] sm:$0xf]
  %v683 = vld [vmem:[%s37 + $0x4] sm:$0xf]
  %v684 = vld [vmem:[%s37 + $0x8] sm:$0xf]
  %v685 = vld [vmem:[%s37 + $0xc] sm:$0xf]
  %686 = vxpose.xlu0.b32.start [1/16] %v522, 128
  %687 = vxpose.xlu0.b32.cont [2/16] %v523, 128
  %688 = vxpose.xlu0.b32.cont [3/16] 0.0, 128
  %689 = vxpose.xlu0.b32.cont [4/16] 0.0, 128
  %690 = vxpose.xlu0.b32.cont [5/16] 0.0, 128
  %691 = vxpose.xlu0.b32.cont [6/16] 0.0, 128
  %692 = vxpose.xlu0.b32.cont [7/16] 0.0, 128
  %693 = vxpose.xlu0.b32.cont [8/16] 0.0, 128
  %694 = vxpose.xlu0.b32.cont [9/16] 0.0, 128
  %695 = vxpose.xlu0.b32.cont [10/16] 0.0, 128
  %696 = vxpose.xlu0.b32.cont [11/16] 0.0, 128
  %697 = vxpose.xlu0.b32.cont [12/16] 0.0, 128
  %698 = vxpose.xlu0.b32.cont [13/16] 0.0, 128
  %699 = vxpose.xlu0.b32.cont [14/16] 0.0, 128
  %700 = vxpose.xlu0.b32.cont [15/16] 0.0, 128
  %701 = vxpose.xlu0.b32.end [16/16] 0.0, 128
  %v702 = vpop.trf.xlu0
  %v703 = vpop.trf.xlu0
  %v704 = vpop.trf.xlu0
  %v705 = vpop.trf.xlu0
  %v706 = vpop.trf.xlu0
  %v707 = vpop.trf.xlu0
  %v708 = vpop.trf.xlu0
  %v709 = vpop.trf.xlu0
  %v710 = vpop.trf.xlu0
  %v711 = vpop.trf.xlu0
  %v712 = vpop.trf.xlu0
  %v713 = vpop.trf.xlu0
  %v714 = vpop.trf.xlu0
  %v715 = vpop.trf.xlu0
  %v716 = vpop.trf.xlu0
  %v717 = vpop.trf.xlu0
  %v718 = vpack.c.bf16 %v703, %v702
  %v719 = vpack.c.bf16 %v705, %v704
  %v720 = vld [vmem:[%s39] sm:$0xff]
  %v721 = vld [vmem:[%s39 + $0x8] sm:$0xff]
  %v722 = vld [vmem:[%s39 + $0x10] sm:$0xff]
  %v723 = vld [vmem:[%s39 + $0x18] sm:$0xff]
  %725 = vset.pattern.permute.xlu0 0
  %726 = vperm.xlu0 %725, %v720
  %v727 = vpop.permute.xlu0 %726
  %730 = vset.pattern.permute.xlu0 0
  %731 = vperm.xlu0 %730, %v721
  %v732 = vpop.permute.xlu0 %731
  %735 = vset.pattern.permute.xlu0 0
  %736 = vperm.xlu0 %735, %v722
  %v737 = vpop.permute.xlu0 %736
  %740 = vset.pattern.permute.xlu0 0
  %741 = vperm.xlu0 %740, %v723
  %v742 = vpop.permute.xlu0 %741
  %v748 = vunpack.c.l.b16 %v682
  %v749 = vunpack.c.l.b16 %v683
  %v750 = vunpack.c.l.b16 %v684
  %v751 = vunpack.c.l.b16 %v685
  %v752 = vpack.c.b16 %v749, %v748
  %v753 = vpack.c.b16 %v751, %v750
  %v755 = vsel %vm380, %v752, 0
  %v758 = vsel %vm380, %v753, 0
  %760 = vmatpush.bf16.msra.mxu0 0
  %761 = vmatpush.bf16.msra.mxu0 0
  %762 = vmatpush.bf16.msra.mxu0 0
  %763 = vmatpush.bf16.msra.mxu0 0
  %764 = vmatpush.bf16.msra.mxu0 0
  %765 = vmatpush.bf16.msra.mxu0 0
  %766 = vmatpush.bf16.msra.mxu0 %v719
  %767 = vmatpush.bf16.msra.mxu0 %v718
  %768 = vmatmul.bf16.gmra.mxu0 %v755
  %v769 = vpop.f32.mrf.mxu0
  %v770 = vadd.f32 %v727, %v769
  %v771 = vpop.f32.mrf.mxu0
  %v772 = vadd.f32 %v732, %v771
  %773 = vmatmul.bf16.gmra.mxu0 %v758
  %v774 = vpop.f32.mrf.mxu0
  %v775 = vadd.f32 %v737, %v774
  %v776 = vpop.f32.mrf.mxu0
  %v777 = vadd.f32 %v742, %v776
  %778 = vdwg.mxu0
  %v779 = vld [vmem:[%s9] sm:$0xf]
  %780 = vset.pattern.permute.xlu0 0
  %781 = vperm.xlu0 %780, %v292
  %v782 = vpop.permute.xlu0 %781
  %783 = vset.pattern.permute.xlu0 0
  %784 = vperm.xlu0 %783, %v293
  %v785 = vpop.permute.xlu0 %784
  %v786 = vperm.slane %v779, 0
  %v787 = vperm.slane %v779, 1
  %v788 = vperm.slane %v779, 2
  %v789 = vperm.slane %v779, 3
  %vm790 = vcmp.eq.s32.totalorder %v782, %v786
  %vm791 = vcmp.eq.s32.totalorder %v782, %v787
  %vm792 = vcmp.eq.s32.totalorder %v782, %v788
  %vm793 = vcmp.eq.s32.totalorder %v782, %v789
  %vm794 = vcmp.eq.s32.totalorder %v785, %v786
  %vm795 = vcmp.eq.s32.totalorder %v785, %v787
  %vm796 = vcmp.eq.s32.totalorder %v785, %v788
  %vm797 = vcmp.eq.s32.totalorder %v785, %v789
  %v798 = vsel %vm790, 0.0, -1e+30
  %v799 = vsel %vm791, 0.0, -1e+30
  %v800 = vsel %vm792, 0.0, -1e+30
  %v801 = vsel %vm793, 0.0, -1e+30
  %v802 = vsel %vm794, 0.0, -1e+30
  %v803 = vsel %vm795, 0.0, -1e+30
  %v804 = vsel %vm796, 0.0, -1e+30
  %v805 = vsel %vm797, 0.0, -1e+30
  %v806 = vpack.c.bf16 %v578, %v578
  %v807 = vpack.c.bf16 %v597, %v597
  %v808 = vpack.c.bf16 %v616, %v616
  %v809 = vpack.c.bf16 %v635, %v635
  %v810 = vpack.c.bf16 %v680, %v678
  %vm811 = vcmask 64512
  %v813 = vsel %vm811, %v810, 0
  %vm815 = vcmask 1043456
  %v817 = vsel %vm815, %v806, 0
  %v820 = vsel %vm815, %v807, 0
  %v823 = vsel %vm815, %v808, 0
  %v826 = vsel %vm815, %v809, 0
  %828 = vmatpush.bf16.msra.mxu0 0
  %829 = vmatpush.bf16.msra.mxu0 0
  %830 = vmatpush.bf16.msra.mxu0 0
  %831 = vmatpush.bf16.msra.mxu0 0
  %832 = vmatpush.bf16.msra.mxu0 0
  %833 = vmatpush.bf16.msra.mxu0 0
  %834 = vmatpush.bf16.msra.mxu0 0
  %835 = vmatpush.bf16.msra.mxu0 %v817
  %836 = vmatmul.bf16.gmra.mxu0 %v813
  %v837 = vpop.f32.mrf.mxu0
  %v838 = vadd.f32 0.0, %v837
  %v839 = vpop.f32.mrf.mxu0
  %v840 = vadd.f32 0.0, %v839
  %841 = vdwg.mxu0
  %842 = vmatpush.bf16.msra.mxu0 0
  %843 = vmatpush.bf16.msra.mxu0 0
  %844 = vmatpush.bf16.msra.mxu0 0
  %845 = vmatpush.bf16.msra.mxu0 0
  %846 = vmatpush.bf16.msra.mxu0 0
  %847 = vmatpush.bf16.msra.mxu0 0
  %848 = vmatpush.bf16.msra.mxu0 0
  %849 = vmatpush.bf16.msra.mxu0 %v820
  %850 = vmatmul.bf16.gmra.mxu0 %v813
  %v851 = vpop.f32.mrf.mxu0
  %v852 = vadd.f32 0.0, %v851
  %v853 = vpop.f32.mrf.mxu0
  %v854 = vadd.f32 0.0, %v853
  %855 = vdwg.mxu0
  %856 = vmatpush.bf16.msra.mxu0 0
  %857 = vmatpush.bf16.msra.mxu0 0
  %858 = vmatpush.bf16.msra.mxu0 0
  %859 = vmatpush.bf16.msra.mxu0 0
  %860 = vmatpush.bf16.msra.mxu0 0
  %861 = vmatpush.bf16.msra.mxu0 0
  %862 = vmatpush.bf16.msra.mxu0 0
  %863 = vmatpush.bf16.msra.mxu0 %v823
  %864 = vmatmul.bf16.gmra.mxu0 %v813
  %v865 = vpop.f32.mrf.mxu0
  %v866 = vadd.f32 0.0, %v865
  %v867 = vpop.f32.mrf.mxu0
  %v868 = vadd.f32 0.0, %v867
  %869 = vdwg.mxu0
  %870 = vmatpush.bf16.msra.mxu0 0
  %871 = vmatpush.bf16.msra.mxu0 0
  %872 = vmatpush.bf16.msra.mxu0 0
  %873 = vmatpush.bf16.msra.mxu0 0
  %874 = vmatpush.bf16.msra.mxu0 0
  %875 = vmatpush.bf16.msra.mxu0 0
  %876 = vmatpush.bf16.msra.mxu0 0
  %877 = vmatpush.bf16.msra.mxu0 %v826
  %878 = vmatmul.bf16.gmra.mxu0 %v813
  %v879 = vpop.f32.mrf.mxu0
  %v880 = vadd.f32 0.0, %v879
  %v881 = vpop.f32.mrf.mxu0
  %v882 = vadd.f32 0.0, %v881
  %883 = vdwg.mxu0
  %v884 = vmul.f32 %v838, 0.35355338
  %v885 = vmul.f32 %v852, 0.35355338
  %v886 = vmul.f32 %v866, 0.35355338
  %v887 = vmul.f32 %v880, 0.35355338
  %v888 = vmul.f32 %v840, 0.35355338
  %v889 = vmul.f32 %v854, 0.35355338
  %v890 = vmul.f32 %v868, 0.35355338
  %v891 = vmul.f32 %v882, 0.35355338
  %v892 = vadd.f32 %v884, %v798
  %v893 = vadd.f32 %v885, %v799
  %v894 = vadd.f32 %v886, %v800
  %v895 = vadd.f32 %v887, %v801
  %v896 = vadd.f32 %v888, %v802
  %v897 = vadd.f32 %v889, %v803
  %v898 = vadd.f32 %v890, %v804
  %v899 = vadd.f32 %v891, %v805
  %v900 = vmax.f32 %v892, %v896
  %v901 = vrot.slane %v900, 4
  %v902 = vmax.f32 %v900, %v901
  %v903 = vrot.slane %v902, 2
  %v904 = vmax.f32 %v902, %v903
  %v905 = vrot.slane %v904, 1
  %v906 = vmax.f32 %v904, %v905
  %v907 = vmax.f32 %v893, %v897
  %v908 = vrot.slane %v907, 4
  %v909 = vmax.f32 %v907, %v908
  %v910 = vrot.slane %v909, 2
  %v911 = vmax.f32 %v909, %v910
  %v912 = vrot.slane %v911, 1
  %v913 = vmax.f32 %v911, %v912
  %v914 = vmax.f32 %v894, %v898
  %v915 = vrot.slane %v914, 4
  %v916 = vmax.f32 %v914, %v915
  %v917 = vrot.slane %v916, 2
  %v918 = vmax.f32 %v916, %v917
  %v919 = vrot.slane %v918, 1
  %v920 = vmax.f32 %v918, %v919
  %v921 = vmax.f32 %v895, %v899
  %v922 = vrot.slane %v921, 4
  %v923 = vmax.f32 %v921, %v922
  %v924 = vrot.slane %v923, 2
  %v925 = vmax.f32 %v923, %v924
  %v926 = vrot.slane %v925, 1
  %v927 = vmax.f32 %v925, %v926
  %v928 = vsub.f32 %v892, %v906
  %v929 = vsub.f32 %v893, %v913
  %v930 = vsub.f32 %v894, %v920
  %v931 = vsub.f32 %v895, %v927
  %v932 = vsub.f32 %v896, %v906
  %v933 = vsub.f32 %v897, %v913
  %v934 = vsub.f32 %v898, %v920
  %v935 = vsub.f32 %v899, %v927
  %v936 = vmul.f32 %v928, 1.442695
  %v937 = vpow.pop %v936
  %v938 = vmul.f32 %v929, 1.442695
  %v939 = vpow.pop %v938
  %v940 = vmul.f32 %v930, 1.442695
  %v941 = vpow.pop %v940
  %v942 = vmul.f32 %v931, 1.442695
  %v943 = vpow.pop %v942
  %v944 = vmul.f32 %v932, 1.442695
  %v945 = vpow.pop %v944
  %v946 = vmul.f32 %v933, 1.442695
  %v947 = vpow.pop %v946
  %v948 = vmul.f32 %v934, 1.442695
  %v949 = vpow.pop %v948
  %v950 = vmul.f32 %v935, 1.442695
  %v951 = vpow.pop %v950
  %v952 = vadd.f32 %v937, %v945
  %v953 = vrot.slane %v952, 4
  %v954 = vadd.f32 %v952, %v953
  %v955 = vrot.slane %v954, 2
  %v956 = vadd.f32 %v954, %v955
  %v957 = vrot.slane %v956, 1
  %v958 = vadd.f32 %v956, %v957
  %v959 = vadd.f32 %v939, %v947
  %v960 = vrot.slane %v959, 4
  %v961 = vadd.f32 %v959, %v960
  %v962 = vrot.slane %v961, 2
  %v963 = vadd.f32 %v961, %v962
  %v964 = vrot.slane %v963, 1
  %v965 = vadd.f32 %v963, %v964
  %v966 = vadd.f32 %v941, %v949
  %v967 = vrot.slane %v966, 4
  %v968 = vadd.f32 %v966, %v967
  %v969 = vrot.slane %v968, 2
  %v970 = vadd.f32 %v968, %v969
  %v971 = vrot.slane %v970, 1
  %v972 = vadd.f32 %v970, %v971
  %v973 = vadd.f32 %v943, %v951
  %v974 = vrot.slane %v973, 4
  %v975 = vadd.f32 %v973, %v974
  %v976 = vrot.slane %v975, 2
  %v977 = vadd.f32 %v975, %v976
  %v978 = vrot.slane %v977, 1
  %v979 = vadd.f32 %v977, %v978
  %v980 = vrcp.pop %v958
  %v981 = vmul.f32 %v958, %v980
  %v982 = vsub.f32 1.0, %v981
  %v983 = vmul.f32 %v980, %v982
  %v984 = vadd.f32 %v980, %v983
  %vm985 = vweird.f32 %v958
  %vm986 = vweird.f32 %v980
  %vm987 = vmor %vm985, %vm986
  %v988 = vsel %vm987, %v980, %v984
  %v989 = vand.u32 2147483647, %v958
  %vm990 = vcmp.eq.f32.partialorder %v989, 8.507059e+37
  %v991 = vand.u32 %v958, 2147483648
  %v992 = vor.u32 1.1754944e-38, %v991
  %v993 = vsel %vm990, %v992, %v988
  %v994 = vmul.f32 %v937, %v993
  %v995 = vrcp.pop %v965
  %v996 = vmul.f32 %v965, %v995
  %v997 = vsub.f32 1.0, %v996
  %v998 = vmul.f32 %v995, %v997
  %v999 = vadd.f32 %v995, %v998
  %vm1000 = vweird.f32 %v965
  %vm1001 = vweird.f32 %v995
  %vm1002 = vmor %vm1000, %vm1001
  %v1003 = vsel %vm1002, %v995, %v999
  %v1004 = vand.u32 2147483647, %v965
  %vm1005 = vcmp.eq.f32.partialorder %v1004, 8.507059e+37
  %v1006 = vand.u32 %v965, 2147483648
  %v1007 = vor.u32 1.1754944e-38, %v1006
  %v1008 = vsel %vm1005, %v1007, %v1003
  %v1009 = vmul.f32 %v939, %v1008
  %v1010 = vrcp.pop %v972
  %v1011 = vmul.f32 %v972, %v1010
  %v1012 = vsub.f32 1.0, %v1011
  %v1013 = vmul.f32 %v1010, %v1012
  %v1014 = vadd.f32 %v1010, %v1013
  %vm1015 = vweird.f32 %v972
  %vm1016 = vweird.f32 %v1010
  %vm1017 = vmor %vm1015, %vm1016
  %v1018 = vsel %vm1017, %v1010, %v1014
  %v1019 = vand.u32 2147483647, %v972
  %vm1020 = vcmp.eq.f32.partialorder %v1019, 8.507059e+37
  %v1021 = vand.u32 %v972, 2147483648
  %v1022 = vor.u32 1.1754944e-38, %v1021
  %v1023 = vsel %vm1020, %v1022, %v1018
  %v1024 = vmul.f32 %v941, %v1023
  %v1025 = vrcp.pop %v979
  %v1026 = vmul.f32 %v979, %v1025
  %v1027 = vsub.f32 1.0, %v1026
  %v1028 = vmul.f32 %v1025, %v1027
  %v1029 = vadd.f32 %v1025, %v1028
  %vm1030 = vweird.f32 %v979
  %vm1031 = vweird.f32 %v1025
  %vm1032 = vmor %vm1030, %vm1031
  %v1033 = vsel %vm1032, %v1025, %v1029
  %v1034 = vand.u32 2147483647, %v979
  %vm1035 = vcmp.eq.f32.partialorder %v1034, 8.507059e+37
  %v1036 = vand.u32 %v979, 2147483648
  %v1037 = vor.u32 1.1754944e-38, %v1036
  %v1038 = vsel %vm1035, %v1037, %v1033
  %v1039 = vmul.f32 %v943, %v1038
  %v1040 = vmul.f32 %v945, %v993
  %v1041 = vmul.f32 %v947, %v1008
  %v1042 = vmul.f32 %v949, %v1023
  %v1043 = vmul.f32 %v951, %v1038
  %v1044 = vpack.c.bf16 %v770, %v770
  %v1045 = vpack.c.bf16 %v1040, %v994
  %v1046 = vpack.c.bf16 %v1041, %v1009
  %v1047 = vpack.c.bf16 %v1042, %v1024
  %v1048 = vpack.c.bf16 %v1043, %v1039
  %v1050 = vsel %vm360, %v1044, 0
  %1052 = vmatpush.bf16.msra.mxu0 0
  %1053 = vmatpush.bf16.msra.mxu0 0
  %1054 = vmatpush.bf16.msra.mxu0 0
  %1055 = vmatpush.bf16.msra.mxu0 0
  %1056 = vmatpush.bf16.msra.mxu0 0
  %1057 = vmatpush.bf16.msra.mxu0 0
  %1058 = vmatpush.bf16.msra.mxu0 0
  %1059 = vmatpush.bf16.msra.mxu0 %v1045
  %1060 = vmatmul.bf16.gmra.mxu0 %v1050
  %v1061 = vpop.f32.mrf.mxu0
  %v1062 = vadd.f32 0.0, %v1061
  %v1063 = vpop.f32.mrf.mxu0
  %1064 = vdwg.mxu0
  %1065 = vmatpush.bf16.msra.mxu0 0
  %1066 = vmatpush.bf16.msra.mxu0 0
  %1067 = vmatpush.bf16.msra.mxu0 0
  %1068 = vmatpush.bf16.msra.mxu0 0
  %1069 = vmatpush.bf16.msra.mxu0 0
  %1070 = vmatpush.bf16.msra.mxu0 0
  %1071 = vmatpush.bf16.msra.mxu0 0
  %1072 = vmatpush.bf16.msra.mxu0 %v1046
  %1073 = vmatmul.bf16.gmra.mxu0 %v1050
  %v1074 = vpop.f32.mrf.mxu0
  %v1075 = vadd.f32 0.0, %v1074
  %v1076 = vpop.f32.mrf.mxu0
  %1077 = vdwg.mxu0
  %1078 = vmatpush.bf16.msra.mxu0 0
  %1079 = vmatpush.bf16.msra.mxu0 0
  %1080 = vmatpush.bf16.msra.mxu0 0
  %1081 = vmatpush.bf16.msra.mxu0 0
  %1082 = vmatpush.bf16.msra.mxu0 0
  %1083 = vmatpush.bf16.msra.mxu0 0
  %1084 = vmatpush.bf16.msra.mxu0 0
  %1085 = vmatpush.bf16.msra.mxu0 %v1047
  %1086 = vmatmul.bf16.gmra.mxu0 %v1050
  %v1087 = vpop.f32.mrf.mxu0
  %v1088 = vadd.f32 0.0, %v1087
  %v1089 = vpop.f32.mrf.mxu0
  %1090 = vdwg.mxu0
  %1091 = vmatpush.bf16.msra.mxu0 0
  %1092 = vmatpush.bf16.msra.mxu0 0
  %1093 = vmatpush.bf16.msra.mxu0 0
  %1094 = vmatpush.bf16.msra.mxu0 0
  %1095 = vmatpush.bf16.msra.mxu0 0
  %1096 = vmatpush.bf16.msra.mxu0 0
  %1097 = vmatpush.bf16.msra.mxu0 0
  %1098 = vmatpush.bf16.msra.mxu0 %v1048
  %1099 = vmatmul.bf16.gmra.mxu0 %v1050
  %v1100 = vpop.f32.mrf.mxu0
  %v1101 = vadd.f32 0.0, %v1100
  %v1102 = vpop.f32.mrf.mxu0
  %1103 = vdwg.mxu0
  %1104 = vst [vmem:[#allocation2] sm:$0xff] %v1062
  %1105 = vst [vmem:[#allocation2 + $0x8] sm:$0xff] %v1075
  %1106 = vst [vmem:[#allocation2 + $0x10] sm:$0xff] %v1088
  %1107 = vst [vmem:[#allocation2 + $0x18] sm:$0xff] %v1101
  %v1108 = vpack.c.bf16 %v580, %v580
  %v1109 = vpack.c.bf16 %v599, %v599
  %v1110 = vpack.c.bf16 %v618, %v618
  %v1111 = vpack.c.bf16 %v637, %v637
  %1113 = vrot.lane.b32.xlu0 %v810, 120
  %v1114 = vpop.permute.xlu0 %1113
  %v1116 = vsel %vm811, %v1114, 0
  %v1119 = vsel %vm815, %v1108, 0
  %v1122 = vsel %vm815, %v1109, 0
  %v1125 = vsel %vm815, %v1110, 0
  %v1128 = vsel %vm815, %v1111, 0
  %1130 = vmatpush.bf16.msra.mxu0 0
  %1131 = vmatpush.bf16.msra.mxu0 0
  %1132 = vmatpush.bf16.msra.mxu0 0
  %1133 = vmatpush.bf16.msra.mxu0 0
  %1134 = vmatpush.bf16.msra.mxu0 0
  %1135 = vmatpush.bf16.msra.mxu0 0
  %1136 = vmatpush.bf16.msra.mxu0 0
  %1137 = vmatpush.bf16.msra.mxu0 %v1119
  %1138 = vmatmul.bf16.gmra.mxu0 %v1116
  %v1139 = vpop.f32.mrf.mxu0
  %v1140 = vadd.f32 0.0, %v1139
  %v1141 = vpop.f32.mrf.mxu0
  %v1142 = vadd.f32 0.0, %v1141
  %1143 = vdwg.mxu0
  %1144 = vmatpush.bf16.msra.mxu0 0
  %1145 = vmatpush.bf16.msra.mxu0 0
  %1146 = vmatpush.bf16.msra.mxu0 0
  %1147 = vmatpush.bf16.msra.mxu0 0
  %1148 = vmatpush.bf16.msra.mxu0 0
  %1149 = vmatpush.bf16.msra.mxu0 0
  %1150 = vmatpush.bf16.msra.mxu0 0
  %1151 = vmatpush.bf16.msra.mxu0 %v1122
  %1152 = vmatmul.bf16.gmra.mxu0 %v1116
  %v1153 = vpop.f32.mrf.mxu0
  %v1154 = vadd.f32 0.0, %v1153
  %v1155 = vpop.f32.mrf.mxu0
  %v1156 = vadd.f32 0.0, %v1155
  %1157 = vdwg.mxu0
  %1158 = vmatpush.bf16.msra.mxu0 0
  %1159 = vmatpush.bf16.msra.mxu0 0
  %1160 = vmatpush.bf16.msra.mxu0 0
  %1161 = vmatpush.bf16.msra.mxu0 0
  %1162 = vmatpush.bf16.msra.mxu0 0
  %1163 = vmatpush.bf16.msra.mxu0 0
  %1164 = vmatpush.bf16.msra.mxu0 0
  %1165 = vmatpush.bf16.msra.mxu0 %v1125
  %1166 = vmatmul.bf16.gmra.mxu0 %v1116
  %v1167 = vpop.f32.mrf.mxu0
  %v1168 = vadd.f32 0.0, %v1167
  %v1169 = vpop.f32.mrf.mxu0
  %v1170 = vadd.f32 0.0, %v1169
  %1171 = vdwg.mxu0
  %1172 = vmatpush.bf16.msra.mxu0 0
  %1173 = vmatpush.bf16.msra.mxu0 0
  %1174 = vmatpush.bf16.msra.mxu0 0
  %1175 = vmatpush.bf16.msra.mxu0 0
  %1176 = vmatpush.bf16.msra.mxu0 0
  %1177 = vmatpush.bf16.msra.mxu0 0
  %1178 = vmatpush.bf16.msra.mxu0 0
  %1179 = vmatpush.bf16.msra.mxu0 %v1128
  %1180 = vmatmul.bf16.gmra.mxu0 %v1116
  %v1181 = vpop.f32.mrf.mxu0
  %v1182 = vadd.f32 0.0, %v1181
  %v1183 = vpop.f32.mrf.mxu0
  %v1184 = vadd.f32 0.0, %v1183
  %1185 = vdwg.mxu0
  %v1186 = vmul.f32 %v1140, 0.35355338
  %v1187 = vmul.f32 %v1154, 0.35355338
  %v1188 = vmul.f32 %v1168, 0.35355338
  %v1189 = vmul.f32 %v1182, 0.35355338
  %v1190 = vmul.f32 %v1142, 0.35355338
  %v1191 = vmul.f32 %v1156, 0.35355338
  %v1192 = vmul.f32 %v1170, 0.35355338
  %v1193 = vmul.f32 %v1184, 0.35355338
  %v1194 = vadd.f32 %v1186, %v798
  %v1195 = vadd.f32 %v1187, %v799
  %v1196 = vadd.f32 %v1188, %v800
  %v1197 = vadd.f32 %v1189, %v801
  %v1198 = vadd.f32 %v1190, %v802
  %v1199 = vadd.f32 %v1191, %v803
  %v1200 = vadd.f32 %v1192, %v804
  %v1201 = vadd.f32 %v1193, %v805
  %v1202 = vmax.f32 %v1194, %v1198
  %v1203 = vrot.slane %v1202, 4
  %v1204 = vmax.f32 %v1202, %v1203
  %v1205 = vrot.slane %v1204, 2
  %v1206 = vmax.f32 %v1204, %v1205
  %v1207 = vrot.slane %v1206, 1
  %v1208 = vmax.f32 %v1206, %v1207
  %v1209 = vmax.f32 %v1195, %v1199
  %v1210 = vrot.slane %v1209, 4
  %v1211 = vmax.f32 %v1209, %v1210
  %v1212 = vrot.slane %v1211, 2
  %v1213 = vmax.f32 %v1211, %v1212
  %v1214 = vrot.slane %v1213, 1
  %v1215 = vmax.f32 %v1213, %v1214
  %v1216 = vmax.f32 %v1196, %v1200
  %v1217 = vrot.slane %v1216, 4
  %v1218 = vmax.f32 %v1216, %v1217
  %v1219 = vrot.slane %v1218, 2
  %v1220 = vmax.f32 %v1218, %v1219
  %v1221 = vrot.slane %v1220, 1
  %v1222 = vmax.f32 %v1220, %v1221
  %v1223 = vmax.f32 %v1197, %v1201
  %v1224 = vrot.slane %v1223, 4
  %v1225 = vmax.f32 %v1223, %v1224
  %v1226 = vrot.slane %v1225, 2
  %v1227 = vmax.f32 %v1225, %v1226
  %v1228 = vrot.slane %v1227, 1
  %v1229 = vmax.f32 %v1227, %v1228
  %v1230 = vsub.f32 %v1194, %v1208
  %v1231 = vsub.f32 %v1195, %v1215
  %v1232 = vsub.f32 %v1196, %v1222
  %v1233 = vsub.f32 %v1197, %v1229
  %v1234 = vsub.f32 %v1198, %v1208
  %v1235 = vsub.f32 %v1199, %v1215
  %v1236 = vsub.f32 %v1200, %v1222
  %v1237 = vsub.f32 %v1201, %v1229
  %v1238 = vmul.f32 %v1230, 1.442695
  %v1239 = vpow.pop %v1238
  %v1240 = vmul.f32 %v1231, 1.442695
  %v1241 = vpow.pop %v1240
  %v1242 = vmul.f32 %v1232, 1.442695
  %v1243 = vpow.pop %v1242
  %v1244 = vmul.f32 %v1233, 1.442695
  %v1245 = vpow.pop %v1244
  %v1246 = vmul.f32 %v1234, 1.442695
  %v1247 = vpow.pop %v1246
  %v1248 = vmul.f32 %v1235, 1.442695
  %v1249 = vpow.pop %v1248
  %v1250 = vmul.f32 %v1236, 1.442695
  %v1251 = vpow.pop %v1250
  %v1252 = vmul.f32 %v1237, 1.442695
  %v1253 = vpow.pop %v1252
  %v1254 = vadd.f32 %v1239, %v1247
  %v1255 = vrot.slane %v1254, 4
  %v1256 = vadd.f32 %v1254, %v1255
  %v1257 = vrot.slane %v1256, 2
  %v1258 = vadd.f32 %v1256, %v1257
  %v1259 = vrot.slane %v1258, 1
  %v1260 = vadd.f32 %v1258, %v1259
  %v1261 = vadd.f32 %v1241, %v1249
  %v1262 = vrot.slane %v1261, 4
  %v1263 = vadd.f32 %v1261, %v1262
  %v1264 = vrot.slane %v1263, 2
  %v1265 = vadd.f32 %v1263, %v1264
  %v1266 = vrot.slane %v1265, 1
  %v1267 = vadd.f32 %v1265, %v1266
  %v1268 = vadd.f32 %v1243, %v1251
  %v1269 = vrot.slane %v1268, 4
  %v1270 = vadd.f32 %v1268, %v1269
  %v1271 = vrot.slane %v1270, 2
  %v1272 = vadd.f32 %v1270, %v1271
  %v1273 = vrot.slane %v1272, 1
  %v1274 = vadd.f32 %v1272, %v1273
  %v1275 = vadd.f32 %v1245, %v1253
  %v1276 = vrot.slane %v1275, 4
  %v1277 = vadd.f32 %v1275, %v1276
  %v1278 = vrot.slane %v1277, 2
  %v1279 = vadd.f32 %v1277, %v1278
  %v1280 = vrot.slane %v1279, 1
  %v1281 = vadd.f32 %v1279, %v1280
  %v1282 = vrcp.pop %v1260
  %v1283 = vmul.f32 %v1260, %v1282
  %v1284 = vsub.f32 1.0, %v1283
  %v1285 = vmul.f32 %v1282, %v1284
  %v1286 = vadd.f32 %v1282, %v1285
  %vm1287 = vweird.f32 %v1260
  %vm1288 = vweird.f32 %v1282
  %vm1289 = vmor %vm1287, %vm1288
  %v1290 = vsel %vm1289, %v1282, %v1286
  %v1291 = vand.u32 2147483647, %v1260
  %vm1292 = vcmp.eq.f32.partialorder %v1291, 8.507059e+37
  %v1293 = vand.u32 %v1260, 2147483648
  %v1294 = vor.u32 1.1754944e-38, %v1293
  %v1295 = vsel %vm1292, %v1294, %v1290
  %v1296 = vmul.f32 %v1239, %v1295
  %v1297 = vrcp.pop %v1267
  %v1298 = vmul.f32 %v1267, %v1297
  %v1299 = vsub.f32 1.0, %v1298
  %v1300 = vmul.f32 %v1297, %v1299
  %v1301 = vadd.f32 %v1297, %v1300
  %vm1302 = vweird.f32 %v1267
  %vm1303 = vweird.f32 %v1297
  %vm1304 = vmor %vm1302, %vm1303
  %v1305 = vsel %vm1304, %v1297, %v1301
  %v1306 = vand.u32 2147483647, %v1267
  %vm1307 = vcmp.eq.f32.partialorder %v1306, 8.507059e+37
  %v1308 = vand.u32 %v1267, 2147483648
  %v1309 = vor.u32 1.1754944e-38, %v1308
  %v1310 = vsel %vm1307, %v1309, %v1305
  %v1311 = vmul.f32 %v1241, %v1310
  %v1312 = vrcp.pop %v1274
  %v1313 = vmul.f32 %v1274, %v1312
  %v1314 = vsub.f32 1.0, %v1313
  %v1315 = vmul.f32 %v1312, %v1314
  %v1316 = vadd.f32 %v1312, %v1315
  %vm1317 = vweird.f32 %v1274
  %vm1318 = vweird.f32 %v1312
  %vm1319 = vmor %vm1317, %vm1318
  %v1320 = vsel %vm1319, %v1312, %v1316
  %v1321 = vand.u32 2147483647, %v1274
  %vm1322 = vcmp.eq.f32.partialorder %v1321, 8.507059e+37
  %v1323 = vand.u32 %v1274, 2147483648
  %v1324 = vor.u32 1.1754944e-38, %v1323
  %v1325 = vsel %vm1322, %v1324, %v1320
  %v1326 = vmul.f32 %v1243, %v1325
  %v1327 = vrcp.pop %v1281
  %v1328 = vmul.f32 %v1281, %v1327
  %v1329 = vsub.f32 1.0, %v1328
  %v1330 = vmul.f32 %v1327, %v1329
  %v1331 = vadd.f32 %v1327, %v1330
  %vm1332 = vweird.f32 %v1281
  %vm1333 = vweird.f32 %v1327
  %vm1334 = vmor %vm1332, %vm1333
  %v1335 = vsel %vm1334, %v1327, %v1331
  %v1336 = vand.u32 2147483647, %v1281
  %vm1337 = vcmp.eq.f32.partialorder %v1336, 8.507059e+37
  %v1338 = vand.u32 %v1281, 2147483648
  %v1339 = vor.u32 1.1754944e-38, %v1338
  %v1340 = vsel %vm1337, %v1339, %v1335
  %v1341 = vmul.f32 %v1245, %v1340
  %v1342 = vmul.f32 %v1247, %v1295
  %v1343 = vmul.f32 %v1249, %v1310
  %v1344 = vmul.f32 %v1251, %v1325
  %v1345 = vmul.f32 %v1253, %v1340
  %v1346 = vpack.c.bf16 %v772, %v772
  %v1347 = vpack.c.bf16 %v1342, %v1296
  %v1348 = vpack.c.bf16 %v1343, %v1311
  %v1349 = vpack.c.bf16 %v1344, %v1326
  %v1350 = vpack.c.bf16 %v1345, %v1341
  %v1352 = vsel %vm360, %v1346, 0
  %1354 = vmatpush.bf16.msra.mxu0 0
  %1355 = vmatpush.bf16.msra.mxu0 0
  %1356 = vmatpush.bf16.msra.mxu0 0
  %1357 = vmatpush.bf16.msra.mxu0 0
  %1358 = vmatpush.bf16.msra.mxu0 0
  %1359 = vmatpush.bf16.msra.mxu0 0
  %1360 = vmatpush.bf16.msra.mxu0 0
  %1361 = vmatpush.bf16.msra.mxu0 %v1347
  %1362 = vmatmul.bf16.gmra.mxu0 %v1352
  %v1363 = vpop.f32.mrf.mxu0
  %v1364 = vadd.f32 0.0, %v1363
  %v1365 = vpop.f32.mrf.mxu0
  %1366 = vdwg.mxu0
  %1367 = vmatpush.bf16.msra.mxu0 0
  %1368 = vmatpush.bf16.msra.mxu0 0
  %1369 = vmatpush.bf16.msra.mxu0 0
  %1370 = vmatpush.bf16.msra.mxu0 0
  %1371 = vmatpush.bf16.msra.mxu0 0
  %1372 = vmatpush.bf16.msra.mxu0 0
  %1373 = vmatpush.bf16.msra.mxu0 0
  %1374 = vmatpush.bf16.msra.mxu0 %v1348
  %1375 = vmatmul.bf16.gmra.mxu0 %v1352
  %v1376 = vpop.f32.mrf.mxu0
  %v1377 = vadd.f32 0.0, %v1376
  %v1378 = vpop.f32.mrf.mxu0
  %1379 = vdwg.mxu0
  %1380 = vmatpush.bf16.msra.mxu0 0
  %1381 = vmatpush.bf16.msra.mxu0 0
  %1382 = vmatpush.bf16.msra.mxu0 0
  %1383 = vmatpush.bf16.msra.mxu0 0
  %1384 = vmatpush.bf16.msra.mxu0 0
  %1385 = vmatpush.bf16.msra.mxu0 0
  %1386 = vmatpush.bf16.msra.mxu0 0
  %1387 = vmatpush.bf16.msra.mxu0 %v1349
  %1388 = vmatmul.bf16.gmra.mxu0 %v1352
  %v1389 = vpop.f32.mrf.mxu0
  %v1390 = vadd.f32 0.0, %v1389
  %v1391 = vpop.f32.mrf.mxu0
  %1392 = vdwg.mxu0
  %1393 = vmatpush.bf16.msra.mxu0 0
  %1394 = vmatpush.bf16.msra.mxu0 0
  %1395 = vmatpush.bf16.msra.mxu0 0
  %1396 = vmatpush.bf16.msra.mxu0 0
  %1397 = vmatpush.bf16.msra.mxu0 0
  %1398 = vmatpush.bf16.msra.mxu0 0
  %1399 = vmatpush.bf16.msra.mxu0 0
  %1400 = vmatpush.bf16.msra.mxu0 %v1350
  %1401 = vmatmul.bf16.gmra.mxu0 %v1352
  %v1402 = vpop.f32.mrf.mxu0
  %v1403 = vadd.f32 0.0, %v1402
  %v1404 = vpop.f32.mrf.mxu0
  %1405 = vdwg.mxu0
  %1406 = vst [vmem:[#allocation2 + $0x20] sm:$0xff] %v1364
  %1407 = vst [vmem:[#allocation2 + $0x28] sm:$0xff] %v1377
  %1408 = vst [vmem:[#allocation2 + $0x30] sm:$0xff] %v1390
  %1409 = vst [vmem:[#allocation2 + $0x38] sm:$0xff] %v1403
  %v1410 = vpack.c.bf16 %v583, %v583
  %v1411 = vpack.c.bf16 %v602, %v602
  %v1412 = vpack.c.bf16 %v621, %v621
  %v1413 = vpack.c.bf16 %v640, %v640
  %1414 = vrot.lane.b32.xlu0 %v810, 112
  %v1415 = vpop.permute.xlu0 %1414
  %v1417 = vsel %vm811, %v1415, 0
  %v1420 = vsel %vm815, %v1410, 0
  %v1423 = vsel %vm815, %v1411, 0
  %v1426 = vsel %vm815, %v1412, 0
  %v1429 = vsel %vm815, %v1413, 0
  %1431 = vmatpush.bf16.msra.mxu0 0
  %1432 = vmatpush.bf16.msra.mxu0 0
  %1433 = vmatpush.bf16.msra.mxu0 0
  %1434 = vmatpush.bf16.msra.mxu0 0
  %1435 = vmatpush.bf16.msra.mxu0 0
  %1436 = vmatpush.bf16.msra.mxu0 0
  %1437 = vmatpush.bf16.msra.mxu0 0
  %1438 = vmatpush.bf16.msra.mxu0 %v1420
  %1439 = vmatmul.bf16.gmra.mxu0 %v1417
  %v1440 = vpop.f32.mrf.mxu0
  %v1441 = vadd.f32 0.0, %v1440
  %v1442 = vpop.f32.mrf.mxu0
  %v1443 = vadd.f32 0.0, %v1442
  %1444 = vdwg.mxu0
  %1445 = vmatpush.bf16.msra.mxu0 0
  %1446 = vmatpush.bf16.msra.mxu0 0
  %1447 = vmatpush.bf16.msra.mxu0 0
  %1448 = vmatpush.bf16.msra.mxu0 0
  %1449 = vmatpush.bf16.msra.mxu0 0
  %1450 = vmatpush.bf16.msra.mxu0 0
  %1451 = vmatpush.bf16.msra.mxu0 0
  %1452 = vmatpush.bf16.msra.mxu0 %v1423
  %1453 = vmatmul.bf16.gmra.mxu0 %v1417
  %v1454 = vpop.f32.mrf.mxu0
  %v1455 = vadd.f32 0.0, %v1454
  %v1456 = vpop.f32.mrf.mxu0
  %v1457 = vadd.f32 0.0, %v1456
  %1458 = vdwg.mxu0
  %1459 = vmatpush.bf16.msra.mxu0 0
  %1460 = vmatpush.bf16.msra.mxu0 0
  %1461 = vmatpush.bf16.msra.mxu0 0
  %1462 = vmatpush.bf16.msra.mxu0 0
  %1463 = vmatpush.bf16.msra.mxu0 0
  %1464 = vmatpush.bf16.msra.mxu0 0
  %1465 = vmatpush.bf16.msra.mxu0 0
  %1466 = vmatpush.bf16.msra.mxu0 %v1426
  %1467 = vmatmul.bf16.gmra.mxu0 %v1417
  %v1468 = vpop.f32.mrf.mxu0
  %v1469 = vadd.f32 0.0, %v1468
  %v1470 = vpop.f32.mrf.mxu0
  %v1471 = vadd.f32 0.0, %v1470
  %1472 = vdwg.mxu0
  %1473 = vmatpush.bf16.msra.mxu0 0
  %1474 = vmatpush.bf16.msra.mxu0 0
  %1475 = vmatpush.bf16.msra.mxu0 0
  %1476 = vmatpush.bf16.msra.mxu0 0
  %1477 = vmatpush.bf16.msra.mxu0 0
  %1478 = vmatpush.bf16.msra.mxu0 0
  %1479 = vmatpush.bf16.msra.mxu0 0
  %1480 = vmatpush.bf16.msra.mxu0 %v1429
  %1481 = vmatmul.bf16.gmra.mxu0 %v1417
  %v1482 = vpop.f32.mrf.mxu0
  %v1483 = vadd.f32 0.0, %v1482
  %v1484 = vpop.f32.mrf.mxu0
  %v1485 = vadd.f32 0.0, %v1484
  %1486 = vdwg.mxu0
  %v1487 = vmul.f32 %v1441, 0.35355338
  %v1488 = vmul.f32 %v1455, 0.35355338
  %v1489 = vmul.f32 %v1469, 0.35355338
  %v1490 = vmul.f32 %v1483, 0.35355338
  %v1491 = vmul.f32 %v1443, 0.35355338
  %v1492 = vmul.f32 %v1457, 0.35355338
  %v1493 = vmul.f32 %v1471, 0.35355338
  %v1494 = vmul.f32 %v1485, 0.35355338
  %v1495 = vadd.f32 %v1487, %v798
  %v1496 = vadd.f32 %v1488, %v799
  %v1497 = vadd.f32 %v1489, %v800
  %v1498 = vadd.f32 %v1490, %v801
  %v1499 = vadd.f32 %v1491, %v802
  %v1500 = vadd.f32 %v1492, %v803
  %v1501 = vadd.f32 %v1493, %v804
  %v1502 = vadd.f32 %v1494, %v805
  %v1503 = vmax.f32 %v1495, %v1499
  %v1504 = vrot.slane %v1503, 4
  %v1505 = vmax.f32 %v1503, %v1504
  %v1506 = vrot.slane %v1505, 2
  %v1507 = vmax.f32 %v1505, %v1506
  %v1508 = vrot.slane %v1507, 1
  %v1509 = vmax.f32 %v1507, %v1508
  %v1510 = vmax.f32 %v1496, %v1500
  %v1511 = vrot.slane %v1510, 4
  %v1512 = vmax.f32 %v1510, %v1511
  %v1513 = vrot.slane %v1512, 2
  %v1514 = vmax.f32 %v1512, %v1513
  %v1515 = vrot.slane %v1514, 1
  %v1516 = vmax.f32 %v1514, %v1515
  %v1517 = vmax.f32 %v1497, %v1501
  %v1518 = vrot.slane %v1517, 4
  %v1519 = vmax.f32 %v1517, %v1518
  %v1520 = vrot.slane %v1519, 2
  %v1521 = vmax.f32 %v1519, %v1520
  %v1522 = vrot.slane %v1521, 1
  %v1523 = vmax.f32 %v1521, %v1522
  %v1524 = vmax.f32 %v1498, %v1502
  %v1525 = vrot.slane %v1524, 4
  %v1526 = vmax.f32 %v1524, %v1525
  %v1527 = vrot.slane %v1526, 2
  %v1528 = vmax.f32 %v1526, %v1527
  %v1529 = vrot.slane %v1528, 1
  %v1530 = vmax.f32 %v1528, %v1529
  %v1531 = vsub.f32 %v1495, %v1509
  %v1532 = vsub.f32 %v1496, %v1516
  %v1533 = vsub.f32 %v1497, %v1523
  %v1534 = vsub.f32 %v1498, %v1530
  %v1535 = vsub.f32 %v1499, %v1509
  %v1536 = vsub.f32 %v1500, %v1516
  %v1537 = vsub.f32 %v1501, %v1523
  %v1538 = vsub.f32 %v1502, %v1530
  %v1539 = vmul.f32 %v1531, 1.442695
  %v1540 = vpow.pop %v1539
  %v1541 = vmul.f32 %v1532, 1.442695
  %v1542 = vpow.pop %v1541
  %v1543 = vmul.f32 %v1533, 1.442695
  %v1544 = vpow.pop %v1543
  %v1545 = vmul.f32 %v1534, 1.442695
  %v1546 = vpow.pop %v1545
  %v1547 = vmul.f32 %v1535, 1.442695
  %v1548 = vpow.pop %v1547
  %v1549 = vmul.f32 %v1536, 1.442695
  %v1550 = vpow.pop %v1549
  %v1551 = vmul.f32 %v1537, 1.442695
  %v1552 = vpow.pop %v1551
  %v1553 = vmul.f32 %v1538, 1.442695
  %v1554 = vpow.pop %v1553
  %v1555 = vadd.f32 %v1540, %v1548
  %v1556 = vrot.slane %v1555, 4
  %v1557 = vadd.f32 %v1555, %v1556
  %v1558 = vrot.slane %v1557, 2
  %v1559 = vadd.f32 %v1557, %v1558
  %v1560 = vrot.slane %v1559, 1
  %v1561 = vadd.f32 %v1559, %v1560
  %v1562 = vadd.f32 %v1542, %v1550
  %v1563 = vrot.slane %v1562, 4
  %v1564 = vadd.f32 %v1562, %v1563
  %v1565 = vrot.slane %v1564, 2
  %v1566 = vadd.f32 %v1564, %v1565
  %v1567 = vrot.slane %v1566, 1
  %v1568 = vadd.f32 %v1566, %v1567
  %v1569 = vadd.f32 %v1544, %v1552
  %v1570 = vrot.slane %v1569, 4
  %v1571 = vadd.f32 %v1569, %v1570
  %v1572 = vrot.slane %v1571, 2
  %v1573 = vadd.f32 %v1571, %v1572
  %v1574 = vrot.slane %v1573, 1
  %v1575 = vadd.f32 %v1573, %v1574
  %v1576 = vadd.f32 %v1546, %v1554
  %v1577 = vrot.slane %v1576, 4
  %v1578 = vadd.f32 %v1576, %v1577
  %v1579 = vrot.slane %v1578, 2
  %v1580 = vadd.f32 %v1578, %v1579
  %v1581 = vrot.slane %v1580, 1
  %v1582 = vadd.f32 %v1580, %v1581
  %v1583 = vrcp.pop %v1561
  %v1584 = vmul.f32 %v1561, %v1583
  %v1585 = vsub.f32 1.0, %v1584
  %v1586 = vmul.f32 %v1583, %v1585
  %v1587 = vadd.f32 %v1583, %v1586
  %vm1588 = vweird.f32 %v1561
  %vm1589 = vweird.f32 %v1583
  %vm1590 = vmor %vm1588, %vm1589
  %v1591 = vsel %vm1590, %v1583, %v1587
  %v1592 = vand.u32 2147483647, %v1561
  %vm1593 = vcmp.eq.f32.partialorder %v1592, 8.507059e+37
  %v1594 = vand.u32 %v1561, 2147483648
  %v1595 = vor.u32 1.1754944e-38, %v1594
  %v1596 = vsel %vm1593, %v1595, %v1591
  %v1597 = vmul.f32 %v1540, %v1596
  %v1598 = vrcp.pop %v1568
  %v1599 = vmul.f32 %v1568, %v1598
  %v1600 = vsub.f32 1.0, %v1599
  %v1601 = vmul.f32 %v1598, %v1600
  %v1602 = vadd.f32 %v1598, %v1601
  %vm1603 = vweird.f32 %v1568
  %vm1604 = vweird.f32 %v1598
  %vm1605 = vmor %vm1603, %vm1604
  %v1606 = vsel %vm1605, %v1598, %v1602
  %v1607 = vand.u32 2147483647, %v1568
  %vm1608 = vcmp.eq.f32.partialorder %v1607, 8.507059e+37
  %v1609 = vand.u32 %v1568, 2147483648
  %v1610 = vor.u32 1.1754944e-38, %v1609
  %v1611 = vsel %vm1608, %v1610, %v1606
  %v1612 = vmul.f32 %v1542, %v1611
  %v1613 = vrcp.pop %v1575
  %v1614 = vmul.f32 %v1575, %v1613
  %v1615 = vsub.f32 1.0, %v1614
  %v1616 = vmul.f32 %v1613, %v1615
  %v1617 = vadd.f32 %v1613, %v1616
  %vm1618 = vweird.f32 %v1575
  %vm1619 = vweird.f32 %v1613
  %vm1620 = vmor %vm1618, %vm1619
  %v1621 = vsel %vm1620, %v1613, %v1617
  %v1622 = vand.u32 2147483647, %v1575
  %vm1623 = vcmp.eq.f32.partialorder %v1622, 8.507059e+37
  %v1624 = vand.u32 %v1575, 2147483648
  %v1625 = vor.u32 1.1754944e-38, %v1624
  %v1626 = vsel %vm1623, %v1625, %v1621
  %v1627 = vmul.f32 %v1544, %v1626
  %v1628 = vrcp.pop %v1582
  %v1629 = vmul.f32 %v1582, %v1628
  %v1630 = vsub.f32 1.0, %v1629
  %v1631 = vmul.f32 %v1628, %v1630
  %v1632 = vadd.f32 %v1628, %v1631
  %vm1633 = vweird.f32 %v1582
  %vm1634 = vweird.f32 %v1628
  %vm1635 = vmor %vm1633, %vm1634
  %v1636 = vsel %vm1635, %v1628, %v1632
  %v1637 = vand.u32 2147483647, %v1582
  %vm1638 = vcmp.eq.f32.partialorder %v1637, 8.507059e+37
  %v1639 = vand.u32 %v1582, 2147483648
  %v1640 = vor.u32 1.1754944e-38, %v1639
  %v1641 = vsel %vm1638, %v1640, %v1636
  %v1642 = vmul.f32 %v1546, %v1641
  %v1643 = vmul.f32 %v1548, %v1596
  %v1644 = vmul.f32 %v1550, %v1611
  %v1645 = vmul.f32 %v1552, %v1626
  %v1646 = vmul.f32 %v1554, %v1641
  %v1647 = vpack.c.bf16 %v775, %v775
  %v1648 = vpack.c.bf16 %v1643, %v1597
  %v1649 = vpack.c.bf16 %v1644, %v1612
  %v1650 = vpack.c.bf16 %v1645, %v1627
  %v1651 = vpack.c.bf16 %v1646, %v1642
  %v1653 = vsel %vm360, %v1647, 0
  %1655 = vmatpush.bf16.msra.mxu0 0
  %1656 = vmatpush.bf16.msra.mxu0 0
  %1657 = vmatpush.bf16.msra.mxu0 0
  %1658 = vmatpush.bf16.msra.mxu0 0
  %1659 = vmatpush.bf16.msra.mxu0 0
  %1660 = vmatpush.bf16.msra.mxu0 0
  %1661 = vmatpush.bf16.msra.mxu0 0
  %1662 = vmatpush.bf16.msra.mxu0 %v1648
  %1663 = vmatmul.bf16.gmra.mxu0 %v1653
  %v1664 = vpop.f32.mrf.mxu0
  %v1665 = vadd.f32 0.0, %v1664
  %v1666 = vpop.f32.mrf.mxu0
  %1667 = vdwg.mxu0
  %1668 = vmatpush.bf16.msra.mxu0 0
  %1669 = vmatpush.bf16.msra.mxu0 0
  %1670 = vmatpush.bf16.msra.mxu0 0
  %1671 = vmatpush.bf16.msra.mxu0 0
  %1672 = vmatpush.bf16.msra.mxu0 0
  %1673 = vmatpush.bf16.msra.mxu0 0
  %1674 = vmatpush.bf16.msra.mxu0 0
  %1675 = vmatpush.bf16.msra.mxu0 %v1649
  %1676 = vmatmul.bf16.gmra.mxu0 %v1653
  %v1677 = vpop.f32.mrf.mxu0
  %v1678 = vadd.f32 0.0, %v1677
  %v1679 = vpop.f32.mrf.mxu0
  %1680 = vdwg.mxu0
  %1681 = vmatpush.bf16.msra.mxu0 0
  %1682 = vmatpush.bf16.msra.mxu0 0
  %1683 = vmatpush.bf16.msra.mxu0 0
  %1684 = vmatpush.bf16.msra.mxu0 0
  %1685 = vmatpush.bf16.msra.mxu0 0
  %1686 = vmatpush.bf16.msra.mxu0 0
  %1687 = vmatpush.bf16.msra.mxu0 0
  %1688 = vmatpush.bf16.msra.mxu0 %v1650
  %1689 = vmatmul.bf16.gmra.mxu0 %v1653
  %v1690 = vpop.f32.mrf.mxu0
  %v1691 = vadd.f32 0.0, %v1690
  %v1692 = vpop.f32.mrf.mxu0
  %1693 = vdwg.mxu0
  %1694 = vmatpush.bf16.msra.mxu0 0
  %1695 = vmatpush.bf16.msra.mxu0 0
  %1696 = vmatpush.bf16.msra.mxu0 0
  %1697 = vmatpush.bf16.msra.mxu0 0
  %1698 = vmatpush.bf16.msra.mxu0 0
  %1699 = vmatpush.bf16.msra.mxu0 0
  %1700 = vmatpush.bf16.msra.mxu0 0
  %1701 = vmatpush.bf16.msra.mxu0 %v1651
  %1702 = vmatmul.bf16.gmra.mxu0 %v1653
  %v1703 = vpop.f32.mrf.mxu0
  %v1704 = vadd.f32 0.0, %v1703
  %v1705 = vpop.f32.mrf.mxu0
  %1706 = vdwg.mxu0
  %1707 = vst [vmem:[#allocation2 + $0x40] sm:$0xff] %v1665
  %1708 = vst [vmem:[#allocation2 + $0x48] sm:$0xff] %v1678
  %1709 = vst [vmem:[#allocation2 + $0x50] sm:$0xff] %v1691
  %1710 = vst [vmem:[#allocation2 + $0x58] sm:$0xff] %v1704
  %v1711 = vpack.c.bf16 %v585, %v585
  %v1712 = vpack.c.bf16 %v604, %v604
  %v1713 = vpack.c.bf16 %v623, %v623
  %v1714 = vpack.c.bf16 %v642, %v642
  %1715 = vrot.lane.b32.xlu0 %v810, 104
  %v1716 = vpop.permute.xlu0 %1715
  %v1718 = vsel %vm811, %v1716, 0
  %v1721 = vsel %vm815, %v1711, 0
  %v1724 = vsel %vm815, %v1712, 0
  %v1727 = vsel %vm815, %v1713, 0
  %v1730 = vsel %vm815, %v1714, 0
  %1732 = vmatpush.bf16.msra.mxu0 0
  %1733 = vmatpush.bf16.msra.mxu0 0
  %1734 = vmatpush.bf16.msra.mxu0 0
  %1735 = vmatpush.bf16.msra.mxu0 0
  %1736 = vmatpush.bf16.msra.mxu0 0
  %1737 = vmatpush.bf16.msra.mxu0 0
  %1738 = vmatpush.bf16.msra.mxu0 0
  %1739 = vmatpush.bf16.msra.mxu0 %v1721
  %1740 = vmatmul.bf16.gmra.mxu0 %v1718
  %v1741 = vpop.f32.mrf.mxu0
  %v1742 = vadd.f32 0.0, %v1741
  %v1743 = vpop.f32.mrf.mxu0
  %v1744 = vadd.f32 0.0, %v1743
  %1745 = vdwg.mxu0
  %1746 = vmatpush.bf16.msra.mxu0 0
  %1747 = vmatpush.bf16.msra.mxu0 0
  %1748 = vmatpush.bf16.msra.mxu0 0
  %1749 = vmatpush.bf16.msra.mxu0 0
  %1750 = vmatpush.bf16.msra.mxu0 0
  %1751 = vmatpush.bf16.msra.mxu0 0
  %1752 = vmatpush.bf16.msra.mxu0 0
  %1753 = vmatpush.bf16.msra.mxu0 %v1724
  %1754 = vmatmul.bf16.gmra.mxu0 %v1718
  %v1755 = vpop.f32.mrf.mxu0
  %v1756 = vadd.f32 0.0, %v1755
  %v1757 = vpop.f32.mrf.mxu0
  %v1758 = vadd.f32 0.0, %v1757
  %1759 = vdwg.mxu0
  %1760 = vmatpush.bf16.msra.mxu0 0
  %1761 = vmatpush.bf16.msra.mxu0 0
  %1762 = vmatpush.bf16.msra.mxu0 0
  %1763 = vmatpush.bf16.msra.mxu0 0
  %1764 = vmatpush.bf16.msra.mxu0 0
  %1765 = vmatpush.bf16.msra.mxu0 0
  %1766 = vmatpush.bf16.msra.mxu0 0
  %1767 = vmatpush.bf16.msra.mxu0 %v1727
  %1768 = vmatmul.bf16.gmra.mxu0 %v1718
  %v1769 = vpop.f32.mrf.mxu0
  %v1770 = vadd.f32 0.0, %v1769
  %v1771 = vpop.f32.mrf.mxu0
  %v1772 = vadd.f32 0.0, %v1771
  %1773 = vdwg.mxu0
  %1774 = vmatpush.bf16.msra.mxu0 0
  %1775 = vmatpush.bf16.msra.mxu0 0
  %1776 = vmatpush.bf16.msra.mxu0 0
  %1777 = vmatpush.bf16.msra.mxu0 0
  %1778 = vmatpush.bf16.msra.mxu0 0
  %1779 = vmatpush.bf16.msra.mxu0 0
  %1780 = vmatpush.bf16.msra.mxu0 0
  %1781 = vmatpush.bf16.msra.mxu0 %v1730
  %1782 = vmatmul.bf16.gmra.mxu0 %v1718
  %v1783 = vpop.f32.mrf.mxu0
  %v1784 = vadd.f32 0.0, %v1783
  %v1785 = vpop.f32.mrf.mxu0
  %v1786 = vadd.f32 0.0, %v1785
  %1787 = vdwg.mxu0
  %v1788 = vmul.f32 %v1742, 0.35355338
  %v1789 = vmul.f32 %v1756, 0.35355338
  %v1790 = vmul.f32 %v1770, 0.35355338
  %v1791 = vmul.f32 %v1784, 0.35355338
  %v1792 = vmul.f32 %v1744, 0.35355338
  %v1793 = vmul.f32 %v1758, 0.35355338
  %v1794 = vmul.f32 %v1772, 0.35355338
  %v1795 = vmul.f32 %v1786, 0.35355338
  %v1796 = vadd.f32 %v1788, %v798
  %v1797 = vadd.f32 %v1789, %v799
  %v1798 = vadd.f32 %v1790, %v800
  %v1799 = vadd.f32 %v1791, %v801
  %v1800 = vadd.f32 %v1792, %v802
  %v1801 = vadd.f32 %v1793, %v803
  %v1802 = vadd.f32 %v1794, %v804
  %v1803 = vadd.f32 %v1795, %v805
  %v1804 = vmax.f32 %v1796, %v1800
  %v1805 = vrot.slane %v1804, 4
  %v1806 = vmax.f32 %v1804, %v1805
  %v1807 = vrot.slane %v1806, 2
  %v1808 = vmax.f32 %v1806, %v1807
  %v1809 = vrot.slane %v1808, 1
  %v1810 = vmax.f32 %v1808, %v1809
  %v1811 = vmax.f32 %v1797, %v1801
  %v1812 = vrot.slane %v1811, 4
  %v1813 = vmax.f32 %v1811, %v1812
  %v1814 = vrot.slane %v1813, 2
  %v1815 = vmax.f32 %v1813, %v1814
  %v1816 = vrot.slane %v1815, 1
  %v1817 = vmax.f32 %v1815, %v1816
  %v1818 = vmax.f32 %v1798, %v1802
  %v1819 = vrot.slane %v1818, 4
  %v1820 = vmax.f32 %v1818, %v1819
  %v1821 = vrot.slane %v1820, 2
  %v1822 = vmax.f32 %v1820, %v1821
  %v1823 = vrot.slane %v1822, 1
  %v1824 = vmax.f32 %v1822, %v1823
  %v1825 = vmax.f32 %v1799, %v1803
  %v1826 = vrot.slane %v1825, 4
  %v1827 = vmax.f32 %v1825, %v1826
  %v1828 = vrot.slane %v1827, 2
  %v1829 = vmax.f32 %v1827, %v1828
  %v1830 = vrot.slane %v1829, 1
  %v1831 = vmax.f32 %v1829, %v1830
  %v1832 = vsub.f32 %v1796, %v1810
  %v1833 = vsub.f32 %v1797, %v1817
  %v1834 = vsub.f32 %v1798, %v1824
  %v1835 = vsub.f32 %v1799, %v1831
  %v1836 = vsub.f32 %v1800, %v1810
  %v1837 = vsub.f32 %v1801, %v1817
  %v1838 = vsub.f32 %v1802, %v1824
  %v1839 = vsub.f32 %v1803, %v1831
  %v1840 = vmul.f32 %v1832, 1.442695
  %v1841 = vpow.pop %v1840
  %v1842 = vmul.f32 %v1833, 1.442695
  %v1843 = vpow.pop %v1842
  %v1844 = vmul.f32 %v1834, 1.442695
  %v1845 = vpow.pop %v1844
  %v1846 = vmul.f32 %v1835, 1.442695
  %v1847 = vpow.pop %v1846
  %v1848 = vmul.f32 %v1836, 1.442695
  %v1849 = vpow.pop %v1848
  %v1850 = vmul.f32 %v1837, 1.442695
  %v1851 = vpow.pop %v1850
  %v1852 = vmul.f32 %v1838, 1.442695
  %v1853 = vpow.pop %v1852
  %v1854 = vmul.f32 %v1839, 1.442695
  %v1855 = vpow.pop %v1854
  %v1856 = vadd.f32 %v1841, %v1849
  %v1857 = vrot.slane %v1856, 4
  %v1858 = vadd.f32 %v1856, %v1857
  %v1859 = vrot.slane %v1858, 2
  %v1860 = vadd.f32 %v1858, %v1859
  %v1861 = vrot.slane %v1860, 1
  %v1862 = vadd.f32 %v1860, %v1861
  %v1863 = vadd.f32 %v1843, %v1851
  %v1864 = vrot.slane %v1863, 4
  %v1865 = vadd.f32 %v1863, %v1864
  %v1866 = vrot.slane %v1865, 2
  %v1867 = vadd.f32 %v1865, %v1866
  %v1868 = vrot.slane %v1867, 1
  %v1869 = vadd.f32 %v1867, %v1868
  %v1870 = vadd.f32 %v1845, %v1853
  %v1871 = vrot.slane %v1870, 4
  %v1872 = vadd.f32 %v1870, %v1871
  %v1873 = vrot.slane %v1872, 2
  %v1874 = vadd.f32 %v1872, %v1873
  %v1875 = vrot.slane %v1874, 1
  %v1876 = vadd.f32 %v1874, %v1875
  %v1877 = vadd.f32 %v1847, %v1855
  %v1878 = vrot.slane %v1877, 4
  %v1879 = vadd.f32 %v1877, %v1878
  %v1880 = vrot.slane %v1879, 2
  %v1881 = vadd.f32 %v1879, %v1880
  %v1882 = vrot.slane %v1881, 1
  %v1883 = vadd.f32 %v1881, %v1882
  %v1884 = vrcp.pop %v1862
  %v1885 = vmul.f32 %v1862, %v1884
  %v1886 = vsub.f32 1.0, %v1885
  %v1887 = vmul.f32 %v1884, %v1886
  %v1888 = vadd.f32 %v1884, %v1887
  %vm1889 = vweird.f32 %v1862
  %vm1890 = vweird.f32 %v1884
  %vm1891 = vmor %vm1889, %vm1890
  %v1892 = vsel %vm1891, %v1884, %v1888
  %v1893 = vand.u32 2147483647, %v1862
  %vm1894 = vcmp.eq.f32.partialorder %v1893, 8.507059e+37
  %v1895 = vand.u32 %v1862, 2147483648
  %v1896 = vor.u32 1.1754944e-38, %v1895
  %v1897 = vsel %vm1894, %v1896, %v1892
  %v1898 = vmul.f32 %v1841, %v1897
  %v1899 = vrcp.pop %v1869
  %v1900 = vmul.f32 %v1869, %v1899
  %v1901 = vsub.f32 1.0, %v1900
  %v1902 = vmul.f32 %v1899, %v1901
  %v1903 = vadd.f32 %v1899, %v1902
  %vm1904 = vweird.f32 %v1869
  %vm1905 = vweird.f32 %v1899
  %vm1906 = vmor %vm1904, %vm1905
  %v1907 = vsel %vm1906, %v1899, %v1903
  %v1908 = vand.u32 2147483647, %v1869
  %vm1909 = vcmp.eq.f32.partialorder %v1908, 8.507059e+37
  %v1910 = vand.u32 %v1869, 2147483648
  %v1911 = vor.u32 1.1754944e-38, %v1910
  %v1912 = vsel %vm1909, %v1911, %v1907
  %v1913 = vmul.f32 %v1843, %v1912
  %v1914 = vrcp.pop %v1876
  %v1915 = vmul.f32 %v1876, %v1914
  %v1916 = vsub.f32 1.0, %v1915
  %v1917 = vmul.f32 %v1914, %v1916
  %v1918 = vadd.f32 %v1914, %v1917
  %vm1919 = vweird.f32 %v1876
  %vm1920 = vweird.f32 %v1914
  %vm1921 = vmor %vm1919, %vm1920
  %v1922 = vsel %vm1921, %v1914, %v1918
  %v1923 = vand.u32 2147483647, %v1876
  %vm1924 = vcmp.eq.f32.partialorder %v1923, 8.507059e+37
  %v1925 = vand.u32 %v1876, 2147483648
  %v1926 = vor.u32 1.1754944e-38, %v1925
  %v1927 = vsel %vm1924, %v1926, %v1922
  %v1928 = vmul.f32 %v1845, %v1927
  %v1929 = vrcp.pop %v1883
  %v1930 = vmul.f32 %v1883, %v1929
  %v1931 = vsub.f32 1.0, %v1930
  %v1932 = vmul.f32 %v1929, %v1931
  %v1933 = vadd.f32 %v1929, %v1932
  %vm1934 = vweird.f32 %v1883
  %vm1935 = vweird.f32 %v1929
  %vm1936 = vmor %vm1934, %vm1935
  %v1937 = vsel %vm1936, %v1929, %v1933
  %v1938 = vand.u32 2147483647, %v1883
  %vm1939 = vcmp.eq.f32.partialorder %v1938, 8.507059e+37
  %v1940 = vand.u32 %v1883, 2147483648
  %v1941 = vor.u32 1.1754944e-38, %v1940
  %v1942 = vsel %vm1939, %v1941, %v1937
  %v1943 = vmul.f32 %v1847, %v1942
  %v1944 = vmul.f32 %v1849, %v1897
  %v1945 = vmul.f32 %v1851, %v1912
  %v1946 = vmul.f32 %v1853, %v1927
  %v1947 = vmul.f32 %v1855, %v1942
  %v1948 = vpack.c.bf16 %v777, %v777
  %v1949 = vpack.c.bf16 %v1944, %v1898
  %v1950 = vpack.c.bf16 %v1945, %v1913
  %v1951 = vpack.c.bf16 %v1946, %v1928
  %v1952 = vpack.c.bf16 %v1947, %v1943
  %v1954 = vsel %vm360, %v1948, 0
  %1956 = vmatpush.bf16.msra.mxu0 0
  %1957 = vmatpush.bf16.msra.mxu0 0
  %1958 = vmatpush.bf16.msra.mxu0 0
  %1959 = vmatpush.bf16.msra.mxu0 0
  %1960 = vmatpush.bf16.msra.mxu0 0
  %1961 = vmatpush.bf16.msra.mxu0 0
  %1962 = vmatpush.bf16.msra.mxu0 0
  %1963 = vmatpush.bf16.msra.mxu0 %v1949
  %1964 = vmatmul.bf16.gmra.mxu0 %v1954
  %v1965 = vpop.f32.mrf.mxu0
  %v1966 = vadd.f32 0.0, %v1965
  %v1967 = vpop.f32.mrf.mxu0
  %1968 = vdwg.mxu0
  %1969 = vmatpush.bf16.msra.mxu0 0
  %1970 = vmatpush.bf16.msra.mxu0 0
  %1971 = vmatpush.bf16.msra.mxu0 0
  %1972 = vmatpush.bf16.msra.mxu0 0
  %1973 = vmatpush.bf16.msra.mxu0 0
  %1974 = vmatpush.bf16.msra.mxu0 0
  %1975 = vmatpush.bf16.msra.mxu0 0
  %1976 = vmatpush.bf16.msra.mxu0 %v1950
  %1977 = vmatmul.bf16.gmra.mxu0 %v1954
  %v1978 = vpop.f32.mrf.mxu0
  %v1979 = vadd.f32 0.0, %v1978
  %v1980 = vpop.f32.mrf.mxu0
  %1981 = vdwg.mxu0
  %1982 = vmatpush.bf16.msra.mxu0 0
  %1983 = vmatpush.bf16.msra.mxu0 0
  %1984 = vmatpush.bf16.msra.mxu0 0
  %1985 = vmatpush.bf16.msra.mxu0 0
  %1986 = vmatpush.bf16.msra.mxu0 0
  %1987 = vmatpush.bf16.msra.mxu0 0
  %1988 = vmatpush.bf16.msra.mxu0 0
  %1989 = vmatpush.bf16.msra.mxu0 %v1951
  %1990 = vmatmul.bf16.gmra.mxu0 %v1954
  %v1991 = vpop.f32.mrf.mxu0
  %v1992 = vadd.f32 0.0, %v1991
  %v1993 = vpop.f32.mrf.mxu0
  %1994 = vdwg.mxu0
  %1995 = vmatpush.bf16.msra.mxu0 0
  %1996 = vmatpush.bf16.msra.mxu0 0
  %1997 = vmatpush.bf16.msra.mxu0 0
  %1998 = vmatpush.bf16.msra.mxu0 0
  %1999 = vmatpush.bf16.msra.mxu0 0
  %2000 = vmatpush.bf16.msra.mxu0 0
  %2001 = vmatpush.bf16.msra.mxu0 0
  %2002 = vmatpush.bf16.msra.mxu0 %v1952
  %2003 = vmatmul.bf16.gmra.mxu0 %v1954
  %v2004 = vpop.f32.mrf.mxu0
  %v2005 = vadd.f32 0.0, %v2004
  %v2006 = vpop.f32.mrf.mxu0
  %2007 = vdwg.mxu0
  %2008 = vst [vmem:[#allocation2 + $0x60] sm:$0xff] %v1966
  %2009 = vst [vmem:[#allocation2 + $0x68] sm:$0xff] %v1979
  %2010 = vst [vmem:[#allocation2 + $0x70] sm:$0xff] %v1992
  %2011 = vst [vmem:[#allocation2 + $0x78] sm:$0xff] %v2005
  %v2012 = vld [vmem:[%s41] sm:$0xf]
  %v2013 = vld [vmem:[%s41 + $0x4] sm:$0xf]
  %v2014 = vld [vmem:[%s41 + $0x8] sm:$0xf]
  %v2015 = vld [vmem:[%s41 + $0xc] sm:$0xf]
  %v2016 = vld [vmem:[#allocation2] sm:$0xff]
  %v2017 = vld [vmem:[#allocation2 + $0x8] sm:$0xff]
  %v2018 = vld [vmem:[#allocation2 + $0x10] sm:$0xff]
  %v2019 = vld [vmem:[#allocation2 + $0x18] sm:$0xff]
  %v2020 = vld [vmem:[#allocation2 + $0x20] sm:$0xff]
  %v2021 = vld [vmem:[#allocation2 + $0x28] sm:$0xff]
  %v2022 = vld [vmem:[#allocation2 + $0x30] sm:$0xff]
  %v2023 = vld [vmem:[#allocation2 + $0x38] sm:$0xff]
  %v2024 = vld [vmem:[#allocation2 + $0x40] sm:$0xff]
  %v2025 = vld [vmem:[#allocation2 + $0x48] sm:$0xff]
  %v2026 = vld [vmem:[#allocation2 + $0x50] sm:$0xff]
  %v2027 = vld [vmem:[#allocation2 + $0x58] sm:$0xff]
  %v2028 = vld [vmem:[#allocation2 + $0x60] sm:$0xff]
  %v2029 = vld [vmem:[#allocation2 + $0x68] sm:$0xff]
  %v2030 = vld [vmem:[#allocation2 + $0x70] sm:$0xff]
  %v2031 = vld [vmem:[#allocation2 + $0x78] sm:$0xff]
  %v2032 = vpack.c.bf16 %v2020, %v2016
  %v2033 = vpack.c.bf16 %v2021, %v2017
  %v2034 = vpack.c.bf16 %v2022, %v2018
  %v2035 = vpack.c.bf16 %v2023, %v2019
  %v2036 = vpack.c.bf16 %v2028, %v2024
  %v2037 = vpack.c.bf16 %v2029, %v2025
  %v2038 = vpack.c.bf16 %v2030, %v2026
  %v2039 = vpack.c.bf16 %v2031, %v2027
  %v2040 = vld [vmem:[%s43] sm:$0xff]
  %v2041 = vld [vmem:[%s43 + $0x8] sm:$0xff]
  %v2042 = vld [vmem:[%s43 + $0x10] sm:$0xff]
  %v2043 = vld [vmem:[%s43 + $0x18] sm:$0xff]
  %2045 = vset.pattern.permute.xlu0 0
  %2046 = vperm.xlu0 %2045, %v2040
  %v2047 = vpop.permute.xlu0 %2046
  %2050 = vset.pattern.permute.xlu0 0
  %2051 = vperm.xlu0 %2050, %v2041
  %v2052 = vpop.permute.xlu0 %2051
  %2055 = vset.pattern.permute.xlu0 0
  %2056 = vperm.xlu0 %2055, %v2042
  %v2057 = vpop.permute.xlu0 %2056
  %2060 = vset.pattern.permute.xlu0 0
  %2061 = vperm.xlu0 %2060, %v2043
  %v2062 = vpop.permute.xlu0 %2061
  %v2068 = vunpack.c.l.b16 %v2012
  %v2069 = vunpack.c.l.b16 %v2013
  %v2070 = vunpack.c.l.b16 %v2014
  %v2071 = vunpack.c.l.b16 %v2015
  %v2072 = vpack.c.b16 %v2069, %v2068
  %v2073 = vpack.c.b16 %v2071, %v2070
  %v2075 = vsel %vm380, %v2072, 0
  %v2078 = vsel %vm380, %v2073, 0
  %2080 = vmatpush.bf16.msra.mxu0 0
  %2081 = vmatpush.bf16.msra.mxu0 0
  %2082 = vmatpush.bf16.msra.mxu0 0
  %2083 = vmatpush.bf16.msra.mxu0 0
  %2084 = vmatpush.bf16.msra.mxu0 0
  %2085 = vmatpush.bf16.msra.mxu0 0
  %2086 = vmatpush.bf16.msra.mxu0 %v2036
  %2087 = vmatpush.bf16.msra.mxu0 %v2032
  %2088 = vmatmul.bf16.gmra.mxu0 %v2075
  %v2089 = vpop.f32.mrf.mxu0
  %v2090 = vadd.f32 %v2047, %v2089
  %v2091 = vpop.f32.mrf.mxu0
  %v2092 = vadd.f32 %v2052, %v2091
  %2093 = vmatmul.bf16.gmra.mxu0 %v2078
  %v2094 = vpop.f32.mrf.mxu0
  %v2095 = vadd.f32 %v2057, %v2094
  %v2096 = vpop.f32.mrf.mxu0
  %v2097 = vadd.f32 %v2062, %v2096
  %2098 = vdwg.mxu0
  %2099 = vmatpush.bf16.msra.mxu0 0
  %2100 = vmatpush.bf16.msra.mxu0 0
  %2101 = vmatpush.bf16.msra.mxu0 0
  %2102 = vmatpush.bf16.msra.mxu0 0
  %2103 = vmatpush.bf16.msra.mxu0 0
  %2104 = vmatpush.bf16.msra.mxu0 0
  %2105 = vmatpush.bf16.msra.mxu0 %v2037
  %2106 = vmatpush.bf16.msra.mxu0 %v2033
  %2107 = vmatmul.bf16.gmra.mxu0 %v2075
  %v2108 = vpop.f32.mrf.mxu0
  %v2109 = vadd.f32 %v2047, %v2108
  %v2110 = vpop.f32.mrf.mxu0
  %v2111 = vadd.f32 %v2052, %v2110
  %2112 = vmatmul.bf16.gmra.mxu0 %v2078
  %v2113 = vpop.f32.mrf.mxu0
  %v2114 = vadd.f32 %v2057, %v2113
  %v2115 = vpop.f32.mrf.mxu0
  %v2116 = vadd.f32 %v2062, %v2115
  %2117 = vdwg.mxu0
  %2118 = vmatpush.bf16.msra.mxu0 0
  %2119 = vmatpush.bf16.msra.mxu0 0
  %2120 = vmatpush.bf16.msra.mxu0 0
  %2121 = vmatpush.bf16.msra.mxu0 0
  %2122 = vmatpush.bf16.msra.mxu0 0
  %2123 = vmatpush.bf16.msra.mxu0 0
  %2124 = vmatpush.bf16.msra.mxu0 %v2038
  %2125 = vmatpush.bf16.msra.mxu0 %v2034
  %2126 = vmatmul.bf16.gmra.mxu0 %v2075
  %v2127 = vpop.f32.mrf.mxu0
  %v2128 = vadd.f32 %v2047, %v2127
  %v2129 = vpop.f32.mrf.mxu0
  %v2130 = vadd.f32 %v2052, %v2129
  %2131 = vmatmul.bf16.gmra.mxu0 %v2078
  %v2132 = vpop.f32.mrf.mxu0
  %v2133 = vadd.f32 %v2057, %v2132
  %v2134 = vpop.f32.mrf.mxu0
  %v2135 = vadd.f32 %v2062, %v2134
  %2136 = vdwg.mxu0
  %2137 = vmatpush.bf16.msra.mxu0 0
  %2138 = vmatpush.bf16.msra.mxu0 0
  %2139 = vmatpush.bf16.msra.mxu0 0
  %2140 = vmatpush.bf16.msra.mxu0 0
  %2141 = vmatpush.bf16.msra.mxu0 0
  %2142 = vmatpush.bf16.msra.mxu0 0
  %2143 = vmatpush.bf16.msra.mxu0 %v2039
  %2144 = vmatpush.bf16.msra.mxu0 %v2035
  %2145 = vmatmul.bf16.gmra.mxu0 %v2075
  %v2146 = vpop.f32.mrf.mxu0
  %v2147 = vadd.f32 %v2047, %v2146
  %v2148 = vpop.f32.mrf.mxu0
  %v2149 = vadd.f32 %v2052, %v2148
  %2150 = vmatmul.bf16.gmra.mxu0 %v2078
  %v2151 = vpop.f32.mrf.mxu0
  %v2152 = vadd.f32 %v2057, %v2151
  %v2153 = vpop.f32.mrf.mxu0
  %v2154 = vadd.f32 %v2062, %v2153
  %2155 = vdwg.mxu0
  %2156 = vst [vmem:[%s137] sm:$0xff] %v2090
  %2157 = vst [vmem:[%s137 + $0x8] sm:$0xff] %v2109
  %2158 = vst [vmem:[%s137 + $0x10] sm:$0xff] %v2128
  %2159 = vst [vmem:[%s137 + $0x18] sm:$0xff] %v2147
  %2160 = vst [vmem:[%s137 + $0x20] sm:$0xff] %v2092
  %2161 = vst [vmem:[%s137 + $0x28] sm:$0xff] %v2111
  %2162 = vst [vmem:[%s137 + $0x30] sm:$0xff] %v2130
  %2163 = vst [vmem:[%s137 + $0x38] sm:$0xff] %v2149
  %2164 = vst [vmem:[%s137 + $0x40] sm:$0xff] %v2095
  %2165 = vst [vmem:[%s137 + $0x48] sm:$0xff] %v2114
  %2166 = vst [vmem:[%s137 + $0x50] sm:$0xff] %v2133
  %2167 = vst [vmem:[%s137 + $0x58] sm:$0xff] %v2152
  %2168 = vst [vmem:[%s137 + $0x60] sm:$0xff] %v2097
  %2169 = vst [vmem:[%s137 + $0x68] sm:$0xff] %v2116
  %2170 = vst [vmem:[%s137 + $0x70] sm:$0xff] %v2135
  %2171 = vst [vmem:[%s137 + $0x78] sm:$0xff] %v2154
  %v2172 = vld [vmem:[%s11] sm:$0xff]
  %v2173 = vld [vmem:[%s11 + $0x8] sm:$0xff]
  %v2174 = vld [vmem:[%s11 + $0x10] sm:$0xff]
  %v2175 = vld [vmem:[%s11 + $0x18] sm:$0xff]
  %2177 = vset.pattern.permute.xlu0 0
  %2178 = vperm.xlu0 %2177, %v2172
  %v2179 = vpop.permute.xlu0 %2178
  %2182 = vset.pattern.permute.xlu0 0
  %2183 = vperm.xlu0 %2182, %v2173
  %v2184 = vpop.permute.xlu0 %2183
  %2187 = vset.pattern.permute.xlu0 0
  %2188 = vperm.xlu0 %2187, %v2174
  %v2189 = vpop.permute.xlu0 %2188
  %2192 = vset.pattern.permute.xlu0 0
  %2193 = vperm.xlu0 %2192, %v2175
  %v2194 = vpop.permute.xlu0 %2193
  %v2196 = vmul.f32 %v294, %v2179
  %v2197 = vmul.f32 %v295, %v2179
  %v2198 = vmul.f32 %v296, %v2184
  %v2199 = vmul.f32 %v297, %v2184
  %v2200 = vmul.f32 %v298, %v2189
  %v2201 = vmul.f32 %v299, %v2189
  %v2202 = vmul.f32 %v300, %v2194
  %v2203 = vmul.f32 %v301, %v2194
  %2204 = vset.pattern.permute.xlu0 1
  %2205 = vperm.xlu0 %2204, %v2172
  %v2206 = vpop.permute.xlu0 %2205
  %2208 = vset.pattern.permute.xlu0 1
  %2209 = vperm.xlu0 %2208, %v2173
  %v2210 = vpop.permute.xlu0 %2209
  %2212 = vset.pattern.permute.xlu0 1
  %2213 = vperm.xlu0 %2212, %v2174
  %v2214 = vpop.permute.xlu0 %2213
  %2216 = vset.pattern.permute.xlu0 1
  %2217 = vperm.xlu0 %2216, %v2175
  %v2218 = vpop.permute.xlu0 %2217
  %v2220 = vmul.f32 %v303, %v2206
  %v2221 = vmul.f32 %v304, %v2206
  %v2222 = vmul.f32 %v305, %v2210
  %v2223 = vmul.f32 %v306, %v2210
  %v2224 = vmul.f32 %v307, %v2214
  %v2225 = vmul.f32 %v308, %v2214
  %v2226 = vmul.f32 %v309, %v2218
  %v2227 = vmul.f32 %v310, %v2218
  %v2228 = vpack.c.bf16 %v2198, %v2196
  %v2229 = vpack.c.bf16 %v2199, %v2197
  %v2230 = vpack.c.bf16 %v2222, %v2220
  %v2231 = vpack.c.bf16 %v2223, %v2221
  %v2232 = vpack.c.bf16 %v2202, %v2200
  %v2233 = vpack.c.bf16 %v2203, %v2201
  %v2234 = vpack.c.bf16 %v2226, %v2224
  %v2235 = vpack.c.bf16 %v2227, %v2225
  %v2236 = vld [vmem:[%s45] sm:$0xf]
  %v2237 = vld [vmem:[%s45 + $0x4] sm:$0xf]
  %v2238 = vld [vmem:[%s45 + $0x8] sm:$0xf]
  %v2239 = vld [vmem:[%s45 + $0xc] sm:$0xf]
  %v2240 = vld [vmem:[%s47] sm:$0xff]
  %v2241 = vld [vmem:[%s47 + $0x8] sm:$0xff]
  %v2242 = vld [vmem:[%s47 + $0x10] sm:$0xff]
  %v2243 = vld [vmem:[%s47 + $0x18] sm:$0xff]
  %2245 = vset.pattern.permute.xlu0 0
  %2246 = vperm.xlu0 %2245, %v2240
  %v2247 = vpop.permute.xlu0 %2246
  %2250 = vset.pattern.permute.xlu0 0
  %2251 = vperm.xlu0 %2250, %v2241
  %v2252 = vpop.permute.xlu0 %2251
  %2255 = vset.pattern.permute.xlu0 0
  %2256 = vperm.xlu0 %2255, %v2242
  %v2257 = vpop.permute.xlu0 %2256
  %2260 = vset.pattern.permute.xlu0 0
  %2261 = vperm.xlu0 %2260, %v2243
  %v2262 = vpop.permute.xlu0 %2261
  %v2268 = vunpack.c.l.b16 %v2236
  %v2269 = vunpack.c.l.b16 %v2237
  %v2270 = vunpack.c.l.b16 %v2238
  %v2271 = vunpack.c.l.b16 %v2239
  %v2272 = vpack.c.b16 %v2269, %v2268
  %v2273 = vpack.c.b16 %v2271, %v2270
  %v2275 = vsel %vm380, %v2272, 0
  %v2278 = vsel %vm380, %v2273, 0
  %2280 = vmatpush.bf16.msra.mxu0 0
  %2281 = vmatpush.bf16.msra.mxu0 0
  %2282 = vmatpush.bf16.msra.mxu0 0
  %2283 = vmatpush.bf16.msra.mxu0 0
  %2284 = vmatpush.bf16.msra.mxu0 0
  %2285 = vmatpush.bf16.msra.mxu0 0
  %2286 = vmatpush.bf16.msra.mxu0 %v2232
  %2287 = vmatpush.bf16.msra.mxu0 %v2228
  %2288 = vmatmul.bf16.gmra.mxu0 %v2275
  %v2289 = vpop.f32.mrf.mxu0
  %v2290 = vadd.f32 %v2247, %v2289
  %v2291 = vpop.f32.mrf.mxu0
  %v2292 = vadd.f32 %v2252, %v2291
  %2293 = vmatmul.bf16.gmra.mxu0 %v2278
  %v2294 = vpop.f32.mrf.mxu0
  %v2295 = vadd.f32 %v2257, %v2294
  %v2296 = vpop.f32.mrf.mxu0
  %v2297 = vadd.f32 %v2262, %v2296
  %2298 = vdwg.mxu0
  %2299 = vmatpush.bf16.msra.mxu0 0
  %2300 = vmatpush.bf16.msra.mxu0 0
  %2301 = vmatpush.bf16.msra.mxu0 0
  %2302 = vmatpush.bf16.msra.mxu0 0
  %2303 = vmatpush.bf16.msra.mxu0 0
  %2304 = vmatpush.bf16.msra.mxu0 0
  %2305 = vmatpush.bf16.msra.mxu0 %v2233
  %2306 = vmatpush.bf16.msra.mxu0 %v2229
  %2307 = vmatmul.bf16.gmra.mxu0 %v2275
  %v2308 = vpop.f32.mrf.mxu0
  %v2309 = vadd.f32 %v2247, %v2308
  %v2310 = vpop.f32.mrf.mxu0
  %v2311 = vadd.f32 %v2252, %v2310
  %2312 = vmatmul.bf16.gmra.mxu0 %v2278
  %v2313 = vpop.f32.mrf.mxu0
  %v2314 = vadd.f32 %v2257, %v2313
  %v2315 = vpop.f32.mrf.mxu0
  %v2316 = vadd.f32 %v2262, %v2315
  %2317 = vdwg.mxu0
  %2318 = vmatpush.bf16.msra.mxu0 0
  %2319 = vmatpush.bf16.msra.mxu0 0
  %2320 = vmatpush.bf16.msra.mxu0 0
  %2321 = vmatpush.bf16.msra.mxu0 0
  %2322 = vmatpush.bf16.msra.mxu0 0
  %2323 = vmatpush.bf16.msra.mxu0 0
  %2324 = vmatpush.bf16.msra.mxu0 %v2234
  %2325 = vmatpush.bf16.msra.mxu0 %v2230
  %2326 = vmatmul.bf16.gmra.mxu0 %v2275
  %v2327 = vpop.f32.mrf.mxu0
  %v2328 = vadd.f32 %v2247, %v2327
  %v2329 = vpop.f32.mrf.mxu0
  %v2330 = vadd.f32 %v2252, %v2329
  %2331 = vmatmul.bf16.gmra.mxu0 %v2278
  %v2332 = vpop.f32.mrf.mxu0
  %v2333 = vadd.f32 %v2257, %v2332
  %v2334 = vpop.f32.mrf.mxu0
  %v2335 = vadd.f32 %v2262, %v2334
  %2336 = vdwg.mxu0
  %2337 = vmatpush.bf16.msra.mxu0 0
  %2338 = vmatpush.bf16.msra.mxu0 0
  %2339 = vmatpush.bf16.msra.mxu0 0
  %2340 = vmatpush.bf16.msra.mxu0 0
  %2341 = vmatpush.bf16.msra.mxu0 0
  %2342 = vmatpush.bf16.msra.mxu0 0
  %2343 = vmatpush.bf16.msra.mxu0 %v2235
  %2344 = vmatpush.bf16.msra.mxu0 %v2231
  %2345 = vmatmul.bf16.gmra.mxu0 %v2275
  %v2346 = vpop.f32.mrf.mxu0
  %v2347 = vadd.f32 %v2247, %v2346
  %v2348 = vpop.f32.mrf.mxu0
  %v2349 = vadd.f32 %v2252, %v2348
  %2350 = vmatmul.bf16.gmra.mxu0 %v2278
  %v2351 = vpop.f32.mrf.mxu0
  %v2352 = vadd.f32 %v2257, %v2351
  %v2353 = vpop.f32.mrf.mxu0
  %v2354 = vadd.f32 %v2262, %v2353
  %2355 = vdwg.mxu0
  %v2356 = vadd.f32 %v2290, %v294
  %v2357 = vadd.f32 %v2309, %v295
  %v2358 = vadd.f32 %v2328, %v303
  %v2359 = vadd.f32 %v2347, %v304
  %v2360 = vadd.f32 %v2292, %v296
  %v2361 = vadd.f32 %v2311, %v297
  %v2362 = vadd.f32 %v2330, %v305
  %v2363 = vadd.f32 %v2349, %v306
  %v2364 = vadd.f32 %v2295, %v298
  %v2365 = vadd.f32 %v2314, %v299
  %v2366 = vadd.f32 %v2333, %v307
  %v2367 = vadd.f32 %v2352, %v308
  %v2368 = vadd.f32 %v2297, %v300
  %v2369 = vadd.f32 %v2316, %v301
  %v2370 = vadd.f32 %v2335, %v309
  %v2371 = vadd.f32 %v2354, %v310
  %2372 = vst [vmem:[%s139] sm:$0xff] %v2356
  %2373 = vst [vmem:[%s139 + $0x8] sm:$0xff] %v2357
  %2374 = vst [vmem:[%s139 + $0x10] sm:$0xff] %v2358
  %2375 = vst [vmem:[%s139 + $0x18] sm:$0xff] %v2359
  %2376 = vst [vmem:[%s139 + $0x20] sm:$0xff] %v2360
  %2377 = vst [vmem:[%s139 + $0x28] sm:$0xff] %v2361
  %2378 = vst [vmem:[%s139 + $0x30] sm:$0xff] %v2362
  %2379 = vst [vmem:[%s139 + $0x38] sm:$0xff] %v2363
  %2380 = vst [vmem:[%s139 + $0x40] sm:$0xff] %v2364
  %2381 = vst [vmem:[%s139 + $0x48] sm:$0xff] %v2365
  %2382 = vst [vmem:[%s139 + $0x50] sm:$0xff] %v2366
  %2383 = vst [vmem:[%s139 + $0x58] sm:$0xff] %v2367
  %2384 = vst [vmem:[%s139 + $0x60] sm:$0xff] %v2368
  %2385 = vst [vmem:[%s139 + $0x68] sm:$0xff] %v2369
  %2386 = vst [vmem:[%s139 + $0x70] sm:$0xff] %v2370
  %2387 = vst [vmem:[%s139 + $0x78] sm:$0xff] %v2371
  %v2388 = vld [vmem:[%s49] sm:$0xff]
  %v2389 = vld [vmem:[%s49 + $0x8] sm:$0xff]
  %v2390 = vld [vmem:[%s49 + $0x10] sm:$0xff]
  %v2391 = vld [vmem:[%s49 + $0x18] sm:$0xff]
  %v2392 = vld [vmem:[%s49 + $0x20] sm:$0xff]
  %v2393 = vld [vmem:[%s49 + $0x28] sm:$0xff]
  %v2394 = vld [vmem:[%s49 + $0x30] sm:$0xff]
  %v2395 = vld [vmem:[%s49 + $0x38] sm:$0xff]
  %s2396 = scalar_lea.vmem %s49, 64
  %v2397 = vld [vmem:[%s2396] sm:$0xff]
  %v2398 = vld [vmem:[%s2396 + $0x8] sm:$0xff]
  %v2399 = vld [vmem:[%s2396 + $0x10] sm:$0xff]
  %v2400 = vld [vmem:[%s2396 + $0x18] sm:$0xff]
  %v2401 = vld [vmem:[%s2396 + $0x20] sm:$0xff]
  %v2402 = vld [vmem:[%s2396 + $0x28] sm:$0xff]
  %v2403 = vld [vmem:[%s2396 + $0x30] sm:$0xff]
  %v2404 = vld [vmem:[%s2396 + $0x38] sm:$0xff]
  %2413 = vrot.lane.b32.xlu0 %v2397, 64
  %v2414 = vpop.permute.xlu0 %2413
  %2415 = vrot.lane.b32.xlu0 %v2398, 64
  %v2416 = vpop.permute.xlu0 %2415
  %2417 = vrot.lane.b32.xlu0 %v2399, 64
  %v2418 = vpop.permute.xlu0 %2417
  %2419 = vrot.lane.b32.xlu0 %v2400, 64
  %v2420 = vpop.permute.xlu0 %2419
  %2421 = vrot.lane.b32.xlu0 %v2401, 64
  %v2422 = vpop.permute.xlu0 %2421
  %2423 = vrot.lane.b32.xlu0 %v2402, 64
  %v2424 = vpop.permute.xlu0 %2423
  %2425 = vrot.lane.b32.xlu0 %v2403, 64
  %v2426 = vpop.permute.xlu0 %2425
  %2427 = vrot.lane.b32.xlu0 %v2404, 64
  %v2428 = vpop.permute.xlu0 %2427
  %vm2437 = vcmask 523264
  %v2438 = vsel %vm2437, %v2388, %v2414
  %v2439 = vsel %vm2437, %v2389, %v2416
  %v2440 = vsel %vm2437, %v2390, %v2418
  %v2441 = vsel %vm2437, %v2391, %v2420
  %v2442 = vsel %vm2437, %v2392, %v2422
  %v2443 = vsel %vm2437, %v2393, %v2424
  %v2444 = vsel %vm2437, %v2394, %v2426
  %v2445 = vsel %vm2437, %v2395, %v2428
  %v2446 = vld [vmem:[%s51] sm:$0xff]
  %v2447 = vld [vmem:[%s51 + $0x8] sm:$0xff]
  %v2448 = vld [vmem:[%s51 + $0x10] sm:$0xff]
  %v2449 = vld [vmem:[%s51 + $0x18] sm:$0xff]
  %v2450 = vld [vmem:[%s51 + $0x20] sm:$0xff]
  %v2451 = vld [vmem:[%s51 + $0x28] sm:$0xff]
  %v2452 = vld [vmem:[%s51 + $0x30] sm:$0xff]
  %v2453 = vld [vmem:[%s51 + $0x38] sm:$0xff]
  %v2454 = vadd.f32 %v2388, %v2446
  %v2455 = vadd.f32 %v2389, %v2447
  %v2456 = vadd.f32 %v2390, %v2448
  %v2457 = vadd.f32 %v2391, %v2449
  %v2458 = vadd.f32 %v2392, %v2450
  %v2459 = vadd.f32 %v2393, %v2451
  %v2460 = vadd.f32 %v2394, %v2452
  %v2461 = vadd.f32 %v2395, %v2453
  %v2462 = vadd.f32 %v2397, %v2446
  %v2463 = vadd.f32 %v2398, %v2447
  %v2464 = vadd.f32 %v2399, %v2448
  %v2465 = vadd.f32 %v2400, %v2449
  %v2466 = vadd.f32 %v2401, %v2450
  %v2467 = vadd.f32 %v2402, %v2451
  %v2468 = vadd.f32 %v2403, %v2452
  %v2469 = vadd.f32 %v2404, %v2453
  %2478 = vrot.lane.b32.xlu0 %v2462, 64
  %v2479 = vpop.permute.xlu0 %2478
  %2480 = vrot.lane.b32.xlu0 %v2463, 64
  %v2481 = vpop.permute.xlu0 %2480
  %2482 = vrot.lane.b32.xlu0 %v2464, 64
  %v2483 = vpop.permute.xlu0 %2482
  %2484 = vrot.lane.b32.xlu0 %v2465, 64
  %v2485 = vpop.permute.xlu0 %2484
  %2486 = vrot.lane.b32.xlu0 %v2466, 64
  %v2487 = vpop.permute.xlu0 %2486
  %2488 = vrot.lane.b32.xlu0 %v2467, 64
  %v2489 = vpop.permute.xlu0 %2488
  %2490 = vrot.lane.b32.xlu0 %v2468, 64
  %v2491 = vpop.permute.xlu0 %2490
  %2492 = vrot.lane.b32.xlu0 %v2469, 64
  %v2493 = vpop.permute.xlu0 %2492
  %v2502 = vsel %vm2437, %v2454, %v2479
  %v2503 = vsel %vm2437, %v2455, %v2481
  %v2504 = vsel %vm2437, %v2456, %v2483
  %v2505 = vsel %vm2437, %v2457, %v2485
  %v2506 = vsel %vm2437, %v2458, %v2487
  %v2507 = vsel %vm2437, %v2459, %v2489
  %v2508 = vsel %vm2437, %v2460, %v2491
  %v2509 = vsel %vm2437, %v2461, %v2493
  %v2510 = vpack.c.bf16 %v2503, %v2502
  %v2511 = vpack.c.bf16 %v2505, %v2504
  %v2512 = vpack.c.bf16 %v2507, %v2506
  %v2513 = vpack.c.bf16 %v2509, %v2508
  %v2514 = vld [vmem:[%s57] sm:$0xf]
  %v2515 = vld [vmem:[%s57 + $0x4] sm:$0xf]
  %v2516 = vld [vmem:[%s59] sm:$0x1]
  %v2518 = vperm.slane %v2516, 0
  %v2522 = vunpack.c.l.b16 %v2514
  %v2523 = vunpack.c.l.b16 %v2515
  %v2524 = vpack.c.b16 %v2523, %v2522
  %2526 = vmatpush.bf16.msra.mxu0 0
  %2527 = vmatpush.bf16.msra.mxu0 0
  %2528 = vmatpush.bf16.msra.mxu0 0
  %2529 = vmatpush.bf16.msra.mxu0 0
  %2530 = vmatpush.bf16.msra.mxu0 0
  %2531 = vmatpush.bf16.msra.mxu0 0
  %2532 = vmatpush.bf16.msra.mxu0 0
  %2533 = vmatpush.bf16.msra.mxu0 %v2524
  %2534 = vmatmul.bf16.gmra.mxu0 %v362
  %v2535 = vpop.f32.mrf.mxu0
  %v2536 = vadd.f32 %v2518, %v2535
  %v2537 = vpop.f32.mrf.mxu0
  %v2538 = vadd.f32 %v2518, %v2537
  %2539 = vdwg.mxu0
  %v2540 = vld [vmem:[%s61] sm:$0x1]
  %v2541 = vld [vmem:[%s63] sm:$0x1]
  %v2542 = vsel %vm2437, %v2536, 0.0
  %2543 = vadd.xlane.f32.xlu0 %v2542
  %v2544 = vpop.xlane.xlu0 %2543
  %v2545 = vsel %vm2437, %v2538, 0.0
  %2546 = vadd.xlane.f32.xlu0 %v2545
  %v2547 = vpop.xlane.xlu0 %2546
  %v2548 = vrcp.pop 64.0
  %v2549 = vmul.f32 64.0, %v2548
  %v2550 = vsub.f32 1.0, %v2549
  %v2551 = vmul.f32 %v2548, %v2550
  %v2552 = vadd.f32 %v2548, %v2551
  %vm2553 = vweird.f32 %v2548
  %v2554 = vsel %vm2553, %v2548, %v2552
  %v2555 = vmul.f32 %v2544, %v2554
  %v2556 = vmul.f32 %v2547, %v2554
  %v2557 = vsub.f32 %v2536, %v2555
  %v2558 = vsub.f32 %v2538, %v2556
  %v2559 = vmul.f32 %v2557, %v2557
  %v2560 = vmul.f32 %v2558, %v2558
  %v2561 = vsel %vm2437, %v2559, 0.0
  %2562 = vadd.xlane.f32.xlu0 %v2561
  %v2563 = vpop.xlane.xlu0 %2562
  %v2564 = vsel %vm2437, %v2560, 0.0
  %2565 = vadd.xlane.f32.xlu0 %v2564
  %v2566 = vpop.xlane.xlu0 %2565
  %v2567 = vmul.f32 %v2563, %v2554
  %v2568 = vmul.f32 %v2566, %v2554
  %v2569 = vadd.f32 %v2567, 1e-12
  %v2570 = vadd.f32 %v2568, 1e-12
  %v2571 = vrsqrt.pop %v2569
  %v2572 = vmul.f32 %v2571, %v2569
  %v2573 = vmul.f32 %v2572, %v2571
  %v2574 = vmul.f32 0.5, %v2573
  %v2575 = vsub.f32 1.5, %v2574
  %v2576 = vmul.f32 %v2571, %v2575
  %vm2577 = vweird.f32 %v2569
  %vm2578 = vweird.f32 %v2571
  %vm2579 = vmor %vm2577, %vm2578
  %v2580 = vsel %vm2579, %v2571, %v2576
  %v2581 = vrsqrt.pop %v2570
  %v2582 = vmul.f32 %v2581, %v2570
  %v2583 = vmul.f32 %v2582, %v2581
  %v2584 = vmul.f32 0.5, %v2583
  %v2585 = vsub.f32 1.5, %v2584
  %v2586 = vmul.f32 %v2581, %v2585
  %vm2587 = vweird.f32 %v2570
  %vm2588 = vweird.f32 %v2581
  %vm2589 = vmor %vm2587, %vm2588
  %v2590 = vsel %vm2589, %v2581, %v2586
  %v2591 = vmul.f32 %v2557, %v2580
  %v2592 = vmul.f32 %v2558, %v2590
  %v2594 = vperm.slane %v2540, 0
  %v2596 = vmul.f32 %v2591, %v2594
  %v2597 = vmul.f32 %v2592, %v2594
  %v2599 = vperm.slane %v2541, 0
  %v2601 = vadd.f32 %v2596, %v2599
  %v2602 = vadd.f32 %v2597, %v2599
  %v2603 = vld [vmem:[%s65] sm:$0xf]
  %v2604 = vld [vmem:[%s65 + $0x4] sm:$0xf]
  %v2605 = vld [vmem:[%s67] sm:$0x1]
  %v2607 = vperm.slane %v2605, 0
  %v2611 = vunpack.c.l.b16 %v2603
  %v2612 = vunpack.c.l.b16 %v2604
  %v2613 = vpack.c.b16 %v2612, %v2611
  %2615 = vmatpush.bf16.msra.mxu0 0
  %2616 = vmatpush.bf16.msra.mxu0 0
  %2617 = vmatpush.bf16.msra.mxu0 0
  %2618 = vmatpush.bf16.msra.mxu0 0
  %2619 = vmatpush.bf16.msra.mxu0 0
  %2620 = vmatpush.bf16.msra.mxu0 0
  %2621 = vmatpush.bf16.msra.mxu0 0
  %2622 = vmatpush.bf16.msra.mxu0 %v2613
  %2623 = vmatmul.bf16.gmra.mxu0 %v362
  %v2624 = vpop.f32.mrf.mxu0
  %v2625 = vadd.f32 %v2607, %v2624
  %v2626 = vpop.f32.mrf.mxu0
  %v2627 = vadd.f32 %v2607, %v2626
  %2628 = vdwg.mxu0
  %v2629 = vld [vmem:[%s69] sm:$0x1]
  %v2630 = vld [vmem:[%s71] sm:$0x1]
  %v2631 = vsel %vm2437, %v2625, 0.0
  %2632 = vadd.xlane.f32.xlu0 %v2631
  %v2633 = vpop.xlane.xlu0 %2632
  %v2634 = vsel %vm2437, %v2627, 0.0
  %2635 = vadd.xlane.f32.xlu0 %v2634
  %v2636 = vpop.xlane.xlu0 %2635
  %v2637 = vmul.f32 %v2633, %v2554
  %v2638 = vmul.f32 %v2636, %v2554
  %v2639 = vsub.f32 %v2625, %v2637
  %v2640 = vsub.f32 %v2627, %v2638
  %v2641 = vmul.f32 %v2639, %v2639
  %v2642 = vmul.f32 %v2640, %v2640
  %v2643 = vsel %vm2437, %v2641, 0.0
  %2644 = vadd.xlane.f32.xlu0 %v2643
  %v2645 = vpop.xlane.xlu0 %2644
  %v2646 = vsel %vm2437, %v2642, 0.0
  %2647 = vadd.xlane.f32.xlu0 %v2646
  %v2648 = vpop.xlane.xlu0 %2647
  %v2649 = vmul.f32 %v2645, %v2554
  %v2650 = vmul.f32 %v2648, %v2554
  %v2651 = vadd.f32 %v2649, 1e-12
  %v2652 = vadd.f32 %v2650, 1e-12
  %v2653 = vrsqrt.pop %v2651
  %v2654 = vmul.f32 %v2653, %v2651
  %v2655 = vmul.f32 %v2654, %v2653
  %v2656 = vmul.f32 0.5, %v2655
  %v2657 = vsub.f32 1.5, %v2656
  %v2658 = vmul.f32 %v2653, %v2657
  %vm2659 = vweird.f32 %v2651
  %vm2660 = vweird.f32 %v2653
  %vm2661 = vmor %vm2659, %vm2660
  %v2662 = vsel %vm2661, %v2653, %v2658
  %v2663 = vrsqrt.pop %v2652
  %v2664 = vmul.f32 %v2663, %v2652
  %v2665 = vmul.f32 %v2664, %v2663
  %v2666 = vmul.f32 0.5, %v2665
  %v2667 = vsub.f32 1.5, %v2666
  %v2668 = vmul.f32 %v2663, %v2667
  %vm2669 = vweird.f32 %v2652
  %vm2670 = vweird.f32 %v2663
  %vm2671 = vmor %vm2669, %vm2670
  %v2672 = vsel %vm2671, %v2663, %v2668
  %v2673 = vmul.f32 %v2639, %v2662
  %v2674 = vmul.f32 %v2640, %v2672
  %v2676 = vperm.slane %v2629, 0
  %v2678 = vmul.f32 %v2673, %v2676
  %v2679 = vmul.f32 %v2674, %v2676
  %v2681 = vperm.slane %v2630, 0
  %v2683 = vadd.f32 %v2678, %v2681
  %v2684 = vadd.f32 %v2679, %v2681
  %v2685 = vld [vmem:[%s73] sm:$0xf]
  %v2686 = vld [vmem:[%s73 + $0x4] sm:$0xf]
  %v2687 = vld [vmem:[%s73 + $0x8] sm:$0xf]
  %v2688 = vld [vmem:[%s73 + $0xc] sm:$0xf]
  %v2689 = vld [vmem:[%s73 + $0x10] sm:$0xf]
  %v2690 = vld [vmem:[%s73 + $0x14] sm:$0xf]
  %v2691 = vld [vmem:[%s73 + $0x18] sm:$0xf]
  %v2692 = vld [vmem:[%s73 + $0x1c] sm:$0xf]
  %v2693 = vld [vmem:[%s75] sm:$0xff]
  %v2694 = vld [vmem:[%s75 + $0x8] sm:$0xff]
  %v2695 = vld [vmem:[%s75 + $0x10] sm:$0xff]
  %v2696 = vld [vmem:[%s75 + $0x18] sm:$0xff]
  %v2697 = vld [vmem:[%s75 + $0x20] sm:$0xff]
  %v2698 = vld [vmem:[%s75 + $0x28] sm:$0xff]
  %v2699 = vld [vmem:[%s75 + $0x30] sm:$0xff]
  %v2700 = vld [vmem:[%s75 + $0x38] sm:$0xff]
  %2702 = vset.pattern.permute.xlu0 0
  %2703 = vperm.xlu0 %2702, %v2693
  %v2704 = vpop.permute.xlu0 %2703
  %2707 = vset.pattern.permute.xlu0 0
  %2708 = vperm.xlu0 %2707, %v2694
  %v2709 = vpop.permute.xlu0 %2708
  %2712 = vset.pattern.permute.xlu0 0
  %2713 = vperm.xlu0 %2712, %v2695
  %v2714 = vpop.permute.xlu0 %2713
  %2717 = vset.pattern.permute.xlu0 0
  %2718 = vperm.xlu0 %2717, %v2696
  %v2719 = vpop.permute.xlu0 %2718
  %2722 = vset.pattern.permute.xlu0 0
  %2723 = vperm.xlu0 %2722, %v2697
  %v2724 = vpop.permute.xlu0 %2723
  %2727 = vset.pattern.permute.xlu0 0
  %2728 = vperm.xlu0 %2727, %v2698
  %v2729 = vpop.permute.xlu0 %2728
  %2732 = vset.pattern.permute.xlu0 0
  %2733 = vperm.xlu0 %2732, %v2699
  %v2734 = vpop.permute.xlu0 %2733
  %2737 = vset.pattern.permute.xlu0 0
  %2738 = vperm.xlu0 %2737, %v2700
  %v2739 = vpop.permute.xlu0 %2738
  %v2749 = vunpack.c.l.b16 %v2685
  %v2750 = vunpack.c.l.b16 %v2686
  %v2751 = vunpack.c.l.b16 %v2687
  %v2752 = vunpack.c.l.b16 %v2688
  %v2753 = vunpack.c.l.b16 %v2689
  %v2754 = vunpack.c.l.b16 %v2690
  %v2755 = vunpack.c.l.b16 %v2691
  %v2756 = vunpack.c.l.b16 %v2692
  %v2757 = vpack.c.b16 %v2750, %v2749
  %v2758 = vpack.c.b16 %v2752, %v2751
  %v2759 = vpack.c.b16 %v2754, %v2753
  %v2760 = vpack.c.b16 %v2756, %v2755
  %v2762 = vsel %vm2437, %v2757, 0
  %v2765 = vsel %vm2437, %v2758, 0
  %v2768 = vsel %vm2437, %v2759, 0
  %v2771 = vsel %vm2437, %v2760, 0
  %2773 = vmatpush.bf16.msra.mxu0 0
  %2774 = vmatpush.bf16.msra.mxu0 0
  %2775 = vmatpush.bf16.msra.mxu0 0
  %2776 = vmatpush.bf16.msra.mxu0 0
  %2777 = vmatpush.bf16.msra.mxu0 %v2513
  %2778 = vmatpush.bf16.msra.mxu0 %v2512
  %2779 = vmatpush.bf16.msra.mxu0 %v2511
  %2780 = vmatpush.bf16.msra.mxu0 %v2510
  %2781 = vmatmul.bf16.gmra.mxu0 %v2762
  %v2782 = vpop.f32.mrf.mxu0
  %v2783 = vadd.f32 %v2704, %v2782
  %v2784 = vpop.f32.mrf.mxu0
  %v2785 = vadd.f32 %v2709, %v2784
  %2786 = vmatmul.bf16.gmra.mxu0 %v2765
  %v2787 = vpop.f32.mrf.mxu0
  %v2788 = vadd.f32 %v2714, %v2787
  %v2789 = vpop.f32.mrf.mxu0
  %v2790 = vadd.f32 %v2719, %v2789
  %2791 = vmatmul.bf16.gmra.mxu0 %v2768
  %v2792 = vpop.f32.mrf.mxu0
  %v2793 = vadd.f32 %v2724, %v2792
  %v2794 = vpop.f32.mrf.mxu0
  %v2795 = vadd.f32 %v2729, %v2794
  %2796 = vmatmul.bf16.gmra.mxu0 %v2771
  %v2797 = vpop.f32.mrf.mxu0
  %v2798 = vadd.f32 %v2734, %v2797
  %v2799 = vpop.f32.mrf.mxu0
  %v2800 = vadd.f32 %v2739, %v2799
  %2801 = vdwg.mxu0
  %v2802 = vpack.c.bf16 %v2602, %v2601
  %v2803 = vld [vmem:[%s77] sm:$0xf]
  %v2804 = vld [vmem:[%s77 + $0x4] sm:$0xf]
  %v2805 = vld [vmem:[%s77 + $0x8] sm:$0xf]
  %v2806 = vld [vmem:[%s77 + $0xc] sm:$0xf]
  %v2807 = vld [vmem:[%s77 + $0x10] sm:$0xf]
  %v2808 = vld [vmem:[%s77 + $0x14] sm:$0xf]
  %v2809 = vld [vmem:[%s77 + $0x18] sm:$0xf]
  %v2810 = vld [vmem:[%s77 + $0x1c] sm:$0xf]
  %v2811 = vld [vmem:[%s79] sm:$0x1]
  %v2813 = vperm.slane %v2811, 0
  %v2823 = vunpack.c.l.b16 %v2803
  %v2824 = vunpack.c.l.b16 %v2804
  %v2825 = vunpack.c.l.b16 %v2805
  %v2826 = vunpack.c.l.b16 %v2806
  %v2827 = vunpack.c.l.b16 %v2807
  %v2828 = vunpack.c.l.b16 %v2808
  %v2829 = vunpack.c.l.b16 %v2809
  %v2830 = vunpack.c.l.b16 %v2810
  %v2831 = vpack.c.b16 %v2824, %v2823
  %v2832 = vpack.c.b16 %v2826, %v2825
  %v2833 = vpack.c.b16 %v2828, %v2827
  %v2834 = vpack.c.b16 %v2830, %v2829
  %v2840 = vsel %vm2437, %v2802, 0
  %2842 = vmatpush.bf16.msra.mxu0 0
  %2843 = vmatpush.bf16.msra.mxu0 0
  %2844 = vmatpush.bf16.msra.mxu0 0
  %2845 = vmatpush.bf16.msra.mxu0 0
  %2846 = vmatpush.bf16.msra.mxu0 %v2834
  %2847 = vmatpush.bf16.msra.mxu0 %v2833
  %2848 = vmatpush.bf16.msra.mxu0 %v2832
  %2849 = vmatpush.bf16.msra.mxu0 %v2831
  %2850 = vmatmul.bf16.gmra.mxu0 %v2840
  %v2851 = vpop.f32.mrf.mxu0
  %v2852 = vadd.f32 %v2813, %v2851
  %v2853 = vpop.f32.mrf.mxu0
  %v2854 = vadd.f32 %v2813, %v2853
  %2855 = vdwg.mxu0
  %v2856 = vld [vmem:[%s81] sm:$0xf]
  %v2857 = vld [vmem:[%s81 + $0x4] sm:$0xf]
  %v2858 = vld [vmem:[%s81 + $0x8] sm:$0xf]
  %v2859 = vld [vmem:[%s81 + $0xc] sm:$0xf]
  %v2860 = vld [vmem:[%s81 + $0x10] sm:$0xf]
  %v2861 = vld [vmem:[%s81 + $0x14] sm:$0xf]
  %v2862 = vld [vmem:[%s81 + $0x18] sm:$0xf]
  %v2863 = vld [vmem:[%s81 + $0x1c] sm:$0xf]
  %2864 = vxpose.xlu0.b32.start [1/16] %v2683, 128
  %2865 = vxpose.xlu0.b32.cont [2/16] %v2684, 128
  %2866 = vxpose.xlu0.b32.cont [3/16] 0.0, 128
  %2867 = vxpose.xlu0.b32.cont [4/16] 0.0, 128
  %2868 = vxpose.xlu0.b32.cont [5/16] 0.0, 128
  %2869 = vxpose.xlu0.b32.cont [6/16] 0.0, 128
  %2870 = vxpose.xlu0.b32.cont [7/16] 0.0, 128
  %2871 = vxpose.xlu0.b32.cont [8/16] 0.0, 128
  %2872 = vxpose.xlu0.b32.cont [9/16] 0.0, 128
  %2873 = vxpose.xlu0.b32.cont [10/16] 0.0, 128
  %2874 = vxpose.xlu0.b32.cont [11/16] 0.0, 128
  %2875 = vxpose.xlu0.b32.cont [12/16] 0.0, 128
  %2876 = vxpose.xlu0.b32.cont [13/16] 0.0, 128
  %2877 = vxpose.xlu0.b32.cont [14/16] 0.0, 128
  %2878 = vxpose.xlu0.b32.cont [15/16] 0.0, 128
  %2879 = vxpose.xlu0.b32.end [16/16] 0.0, 128
  %v2880 = vpop.trf.xlu0
  %v2881 = vpop.trf.xlu0
  %v2882 = vpop.trf.xlu0
  %v2883 = vpop.trf.xlu0
  %v2884 = vpop.trf.xlu0
  %v2885 = vpop.trf.xlu0
  %v2886 = vpop.trf.xlu0
  %v2887 = vpop.trf.xlu0
  %v2888 = vpop.trf.xlu0
  %v2889 = vpop.trf.xlu0
  %v2890 = vpop.trf.xlu0
  %v2891 = vpop.trf.xlu0
  %v2892 = vpop.trf.xlu0
  %v2893 = vpop.trf.xlu0
  %v2894 = vpop.trf.xlu0
  %v2895 = vpop.trf.xlu0
  %v2896 = vpack.c.bf16 %v2881, %v2880
  %v2897 = vpack.c.bf16 %v2883, %v2882
  %v2898 = vpack.c.bf16 %v2885, %v2884
  %v2899 = vpack.c.bf16 %v2887, %v2886
  %v2900 = vld [vmem:[%s83] sm:$0xff]
  %v2901 = vld [vmem:[%s83 + $0x8] sm:$0xff]
  %v2902 = vld [vmem:[%s83 + $0x10] sm:$0xff]
  %v2903 = vld [vmem:[%s83 + $0x18] sm:$0xff]
  %v2904 = vld [vmem:[%s83 + $0x20] sm:$0xff]
  %v2905 = vld [vmem:[%s83 + $0x28] sm:$0xff]
  %v2906 = vld [vmem:[%s83 + $0x30] sm:$0xff]
  %v2907 = vld [vmem:[%s83 + $0x38] sm:$0xff]
  %2909 = vset.pattern.permute.xlu0 0
  %2910 = vperm.xlu0 %2909, %v2900
  %v2911 = vpop.permute.xlu0 %2910
  %2914 = vset.pattern.permute.xlu0 0
  %2915 = vperm.xlu0 %2914, %v2901
  %v2916 = vpop.permute.xlu0 %2915
  %2919 = vset.pattern.permute.xlu0 0
  %2920 = vperm.xlu0 %2919, %v2902
  %v2921 = vpop.permute.xlu0 %2920
  %2924 = vset.pattern.permute.xlu0 0
  %2925 = vperm.xlu0 %2924, %v2903
  %v2926 = vpop.permute.xlu0 %2925
  %2929 = vset.pattern.permute.xlu0 0
  %2930 = vperm.xlu0 %2929, %v2904
  %v2931 = vpop.permute.xlu0 %2930
  %2934 = vset.pattern.permute.xlu0 0
  %2935 = vperm.xlu0 %2934, %v2905
  %v2936 = vpop.permute.xlu0 %2935
  %2939 = vset.pattern.permute.xlu0 0
  %2940 = vperm.xlu0 %2939, %v2906
  %v2941 = vpop.permute.xlu0 %2940
  %2944 = vset.pattern.permute.xlu0 0
  %2945 = vperm.xlu0 %2944, %v2907
  %v2946 = vpop.permute.xlu0 %2945
  %v2956 = vunpack.c.l.b16 %v2856
  %v2957 = vunpack.c.l.b16 %v2857
  %v2958 = vunpack.c.l.b16 %v2858
  %v2959 = vunpack.c.l.b16 %v2859
  %v2960 = vunpack.c.l.b16 %v2860
  %v2961 = vunpack.c.l.b16 %v2861
  %v2962 = vunpack.c.l.b16 %v2862
  %v2963 = vunpack.c.l.b16 %v2863
  %v2964 = vpack.c.b16 %v2957, %v2956
  %v2965 = vpack.c.b16 %v2959, %v2958
  %v2966 = vpack.c.b16 %v2961, %v2960
  %v2967 = vpack.c.b16 %v2963, %v2962
  %v2969 = vsel %vm2437, %v2964, 0
  %v2972 = vsel %vm2437, %v2965, 0
  %v2975 = vsel %vm2437, %v2966, 0
  %v2978 = vsel %vm2437, %v2967, 0
  %2980 = vmatpush.bf16.msra.mxu0 0
  %2981 = vmatpush.bf16.msra.mxu0 0
  %2982 = vmatpush.bf16.msra.mxu0 0
  %2983 = vmatpush.bf16.msra.mxu0 0
  %2984 = vmatpush.bf16.msra.mxu0 %v2899
  %2985 = vmatpush.bf16.msra.mxu0 %v2898
  %2986 = vmatpush.bf16.msra.mxu0 %v2897
  %2987 = vmatpush.bf16.msra.mxu0 %v2896
  %2988 = vmatmul.bf16.gmra.mxu0 %v2969
  %v2989 = vpop.f32.mrf.mxu0
  %v2990 = vadd.f32 %v2911, %v2989
  %v2991 = vpop.f32.mrf.mxu0
  %v2992 = vadd.f32 %v2916, %v2991
  %2993 = vmatmul.bf16.gmra.mxu0 %v2972
  %v2994 = vpop.f32.mrf.mxu0
  %v2995 = vadd.f32 %v2921, %v2994
  %v2996 = vpop.f32.mrf.mxu0
  %v2997 = vadd.f32 %v2926, %v2996
  %2998 = vmatmul.bf16.gmra.mxu0 %v2975
  %v2999 = vpop.f32.mrf.mxu0
  %v3000 = vadd.f32 %v2931, %v2999
  %v3001 = vpop.f32.mrf.mxu0
  %v3002 = vadd.f32 %v2936, %v3001
  %3003 = vmatmul.bf16.gmra.mxu0 %v2978
  %v3004 = vpop.f32.mrf.mxu0
  %v3005 = vadd.f32 %v2941, %v3004
  %v3006 = vpop.f32.mrf.mxu0
  %v3007 = vadd.f32 %v2946, %v3006
  %3008 = vdwg.mxu0
  %v3009 = vld [vmem:[%s53] sm:$0x1]
  %v3010 = vperm.slane %v3009, 0
  %vm3011 = vcmp.eq.s32.totalorder %v782, %v3010
  %vm3012 = vcmp.eq.s32.totalorder %v785, %v3010
  %v3013 = vsel %vm3011, 0.0, -1e+30
  %v3014 = vsel %vm3012, 0.0, -1e+30
  %v3015 = vpack.c.bf16 %v2785, %v2783
  %v3016 = vpack.c.bf16 %v2854, %v2852
  %v3018 = vsel %vm360, %v3016, 0
  %3020 = vmatpush.bf16.msra.mxu0 0
  %3021 = vmatpush.bf16.msra.mxu0 0
  %3022 = vmatpush.bf16.msra.mxu0 0
  %3023 = vmatpush.bf16.msra.mxu0 0
  %3024 = vmatpush.bf16.msra.mxu0 0
  %3025 = vmatpush.bf16.msra.mxu0 0
  %3026 = vmatpush.bf16.msra.mxu0 0
  %3027 = vmatpush.bf16.msra.mxu0 %v3015
  %3028 = vmatmul.bf16.gmra.mxu0 %v3018
  %v3029 = vpop.f32.mrf.mxu0
  %v3030 = vadd.f32 0.0, %v3029
  %v3031 = vpop.f32.mrf.mxu0
  %v3032 = vadd.f32 0.0, %v3031
  %3033 = vdwg.mxu0
  %v3034 = vmul.f32 %v3030, 0.25
  %v3035 = vmul.f32 %v3032, 0.25
  %v3036 = vadd.f32 %v3034, %v3013
  %v3037 = vadd.f32 %v3035, %v3014
  %v3038 = vmax.f32 %v3036, %v3037
  %v3039 = vrot.slane %v3038, 4
  %v3040 = vmax.f32 %v3038, %v3039
  %v3041 = vrot.slane %v3040, 2
  %v3042 = vmax.f32 %v3040, %v3041
  %v3043 = vrot.slane %v3042, 1
  %v3044 = vmax.f32 %v3042, %v3043
  %v3045 = vsub.f32 %v3036, %v3044
  %v3046 = vsub.f32 %v3037, %v3044
  %v3047 = vmul.f32 %v3045, 1.442695
  %v3048 = vpow.pop %v3047
  %v3049 = vmul.f32 %v3046, 1.442695
  %v3050 = vpow.pop %v3049
  %v3051 = vadd.f32 %v3048, %v3050
  %v3052 = vrot.slane %v3051, 4
  %v3053 = vadd.f32 %v3051, %v3052
  %v3054 = vrot.slane %v3053, 2
  %v3055 = vadd.f32 %v3053, %v3054
  %v3056 = vrot.slane %v3055, 1
  %v3057 = vadd.f32 %v3055, %v3056
  %v3058 = vrcp.pop %v3057
  %v3059 = vmul.f32 %v3057, %v3058
  %v3060 = vsub.f32 1.0, %v3059
  %v3061 = vmul.f32 %v3058, %v3060
  %v3062 = vadd.f32 %v3058, %v3061
  %vm3063 = vweird.f32 %v3057
  %vm3064 = vweird.f32 %v3058
  %vm3065 = vmor %vm3063, %vm3064
  %v3066 = vsel %vm3065, %v3058, %v3062
  %v3067 = vand.u32 2147483647, %v3057
  %vm3068 = vcmp.eq.f32.partialorder %v3067, 8.507059e+37
  %v3069 = vand.u32 %v3057, 2147483648
  %v3070 = vor.u32 1.1754944e-38, %v3069
  %v3071 = vsel %vm3068, %v3070, %v3066
  %v3072 = vmul.f32 %v3048, %v3071
  %v3073 = vmul.f32 %v3050, %v3071
  %v3074 = vpack.c.bf16 %v2992, %v2990
  %v3075 = vpack.c.bf16 %v3073, %v3072
  %v3077 = vsel %vm360, %v3074, 0
  %3079 = vmatpush.bf16.msra.mxu0 0
  %3080 = vmatpush.bf16.msra.mxu0 0
  %3081 = vmatpush.bf16.msra.mxu0 0
  %3082 = vmatpush.bf16.msra.mxu0 0
  %3083 = vmatpush.bf16.msra.mxu0 0
  %3084 = vmatpush.bf16.msra.mxu0 0
  %3085 = vmatpush.bf16.msra.mxu0 0
  %3086 = vmatpush.bf16.msra.mxu0 %v3075
  %3087 = vmatmul.bf16.gmra.mxu0 %v3077
  %v3088 = vpop.f32.mrf.mxu0
  %v3089 = vadd.f32 0.0, %v3088
  %v3090 = vpop.f32.mrf.mxu0
  %v3091 = vadd.f32 0.0, %v3090
  %3092 = vdwg.mxu0
  %3093 = vst [vmem:[#allocation3] sm:$0xff] %v3089
  %3094 = vst [vmem:[#allocation3 + $0x8] sm:$0xff] %v3091
  %v3095 = vpack.c.bf16 %v2790, %v2788
  %3097 = vrot.lane.b32.xlu0 %v3016, 112
  %v3098 = vpop.permute.xlu0 %3097
  %v3100 = vsel %vm360, %v3098, 0
  %3102 = vmatpush.bf16.msra.mxu0 0
  %3103 = vmatpush.bf16.msra.mxu0 0
  %3104 = vmatpush.bf16.msra.mxu0 0
  %3105 = vmatpush.bf16.msra.mxu0 0
  %3106 = vmatpush.bf16.msra.mxu0 0
  %3107 = vmatpush.bf16.msra.mxu0 0
  %3108 = vmatpush.bf16.msra.mxu0 0
  %3109 = vmatpush.bf16.msra.mxu0 %v3095
  %3110 = vmatmul.bf16.gmra.mxu0 %v3100
  %v3111 = vpop.f32.mrf.mxu0
  %v3112 = vadd.f32 0.0, %v3111
  %v3113 = vpop.f32.mrf.mxu0
  %v3114 = vadd.f32 0.0, %v3113
  %3115 = vdwg.mxu0
  %v3116 = vmul.f32 %v3112, 0.25
  %v3117 = vmul.f32 %v3114, 0.25
  %v3118 = vadd.f32 %v3116, %v3013
  %v3119 = vadd.f32 %v3117, %v3014
  %v3120 = vmax.f32 %v3118, %v3119
  %v3121 = vrot.slane %v3120, 4
  %v3122 = vmax.f32 %v3120, %v3121
  %v3123 = vrot.slane %v3122, 2
  %v3124 = vmax.f32 %v3122, %v3123
  %v3125 = vrot.slane %v3124, 1
  %v3126 = vmax.f32 %v3124, %v3125
  %v3127 = vsub.f32 %v3118, %v3126
  %v3128 = vsub.f32 %v3119, %v3126
  %v3129 = vmul.f32 %v3127, 1.442695
  %v3130 = vpow.pop %v3129
  %v3131 = vmul.f32 %v3128, 1.442695
  %v3132 = vpow.pop %v3131
  %v3133 = vadd.f32 %v3130, %v3132
  %v3134 = vrot.slane %v3133, 4
  %v3135 = vadd.f32 %v3133, %v3134
  %v3136 = vrot.slane %v3135, 2
  %v3137 = vadd.f32 %v3135, %v3136
  %v3138 = vrot.slane %v3137, 1
  %v3139 = vadd.f32 %v3137, %v3138
  %v3140 = vrcp.pop %v3139
  %v3141 = vmul.f32 %v3139, %v3140
  %v3142 = vsub.f32 1.0, %v3141
  %v3143 = vmul.f32 %v3140, %v3142
  %v3144 = vadd.f32 %v3140, %v3143
  %vm3145 = vweird.f32 %v3139
  %vm3146 = vweird.f32 %v3140
  %vm3147 = vmor %vm3145, %vm3146
  %v3148 = vsel %vm3147, %v3140, %v3144
  %v3149 = vand.u32 2147483647, %v3139
  %vm3150 = vcmp.eq.f32.partialorder %v3149, 8.507059e+37
  %v3151 = vand.u32 %v3139, 2147483648
  %v3152 = vor.u32 1.1754944e-38, %v3151
  %v3153 = vsel %vm3150, %v3152, %v3148
  %v3154 = vmul.f32 %v3130, %v3153
  %v3155 = vmul.f32 %v3132, %v3153
  %v3156 = vpack.c.bf16 %v2997, %v2995
  %v3157 = vpack.c.bf16 %v3155, %v3154
  %v3159 = vsel %vm360, %v3156, 0
  %3161 = vmatpush.bf16.msra.mxu0 0
  %3162 = vmatpush.bf16.msra.mxu0 0
  %3163 = vmatpush.bf16.msra.mxu0 0
  %3164 = vmatpush.bf16.msra.mxu0 0
  %3165 = vmatpush.bf16.msra.mxu0 0
  %3166 = vmatpush.bf16.msra.mxu0 0
  %3167 = vmatpush.bf16.msra.mxu0 0
  %3168 = vmatpush.bf16.msra.mxu0 %v3157
  %3169 = vmatmul.bf16.gmra.mxu0 %v3159
  %v3170 = vpop.f32.mrf.mxu0
  %v3171 = vadd.f32 0.0, %v3170
  %v3172 = vpop.f32.mrf.mxu0
  %v3173 = vadd.f32 0.0, %v3172
  %3174 = vdwg.mxu0
  %3175 = vst [vmem:[#allocation3 + $0x10] sm:$0xff] %v3171
  %3176 = vst [vmem:[#allocation3 + $0x18] sm:$0xff] %v3173
  %v3177 = vpack.c.bf16 %v2795, %v2793
  %3178 = vrot.lane.b32.xlu0 %v3016, 96
  %v3179 = vpop.permute.xlu0 %3178
  %v3181 = vsel %vm360, %v3179, 0
  %3183 = vmatpush.bf16.msra.mxu0 0
  %3184 = vmatpush.bf16.msra.mxu0 0
  %3185 = vmatpush.bf16.msra.mxu0 0
  %3186 = vmatpush.bf16.msra.mxu0 0
  %3187 = vmatpush.bf16.msra.mxu0 0
  %3188 = vmatpush.bf16.msra.mxu0 0
  %3189 = vmatpush.bf16.msra.mxu0 0
  %3190 = vmatpush.bf16.msra.mxu0 %v3177
  %3191 = vmatmul.bf16.gmra.mxu0 %v3181
  %v3192 = vpop.f32.mrf.mxu0
  %v3193 = vadd.f32 0.0, %v3192
  %v3194 = vpop.f32.mrf.mxu0
  %v3195 = vadd.f32 0.0, %v3194
  %3196 = vdwg.mxu0
  %v3197 = vmul.f32 %v3193, 0.25
  %v3198 = vmul.f32 %v3195, 0.25
  %v3199 = vadd.f32 %v3197, %v3013
  %v3200 = vadd.f32 %v3198, %v3014
  %v3201 = vmax.f32 %v3199, %v3200
  %v3202 = vrot.slane %v3201, 4
  %v3203 = vmax.f32 %v3201, %v3202
  %v3204 = vrot.slane %v3203, 2
  %v3205 = vmax.f32 %v3203, %v3204
  %v3206 = vrot.slane %v3205, 1
  %v3207 = vmax.f32 %v3205, %v3206
  %v3208 = vsub.f32 %v3199, %v3207
  %v3209 = vsub.f32 %v3200, %v3207
  %v3210 = vmul.f32 %v3208, 1.442695
  %v3211 = vpow.pop %v3210
  %v3212 = vmul.f32 %v3209, 1.442695
  %v3213 = vpow.pop %v3212
  %v3214 = vadd.f32 %v3211, %v3213
  %v3215 = vrot.slane %v3214, 4
  %v3216 = vadd.f32 %v3214, %v3215
  %v3217 = vrot.slane %v3216, 2
  %v3218 = vadd.f32 %v3216, %v3217
  %v3219 = vrot.slane %v3218, 1
  %v3220 = vadd.f32 %v3218, %v3219
  %v3221 = vrcp.pop %v3220
  %v3222 = vmul.f32 %v3220, %v3221
  %v3223 = vsub.f32 1.0, %v3222
  %v3224 = vmul.f32 %v3221, %v3223
  %v3225 = vadd.f32 %v3221, %v3224
  %vm3226 = vweird.f32 %v3220
  %vm3227 = vweird.f32 %v3221
  %vm3228 = vmor %vm3226, %vm3227
  %v3229 = vsel %vm3228, %v3221, %v3225
  %v3230 = vand.u32 2147483647, %v3220
  %vm3231 = vcmp.eq.f32.partialorder %v3230, 8.507059e+37
  %v3232 = vand.u32 %v3220, 2147483648
  %v3233 = vor.u32 1.1754944e-38, %v3232
  %v3234 = vsel %vm3231, %v3233, %v3229
  %v3235 = vmul.f32 %v3211, %v3234
  %v3236 = vmul.f32 %v3213, %v3234
  %v3237 = vpack.c.bf16 %v3002, %v3000
  %v3238 = vpack.c.bf16 %v3236, %v3235
  %v3240 = vsel %vm360, %v3237, 0
  %3242 = vmatpush.bf16.msra.mxu0 0
  %3243 = vmatpush.bf16.msra.mxu0 0
  %3244 = vmatpush.bf16.msra.mxu0 0
  %3245 = vmatpush.bf16.msra.mxu0 0
  %3246 = vmatpush.bf16.msra.mxu0 0
  %3247 = vmatpush.bf16.msra.mxu0 0
  %3248 = vmatpush.bf16.msra.mxu0 0
  %3249 = vmatpush.bf16.msra.mxu0 %v3238
  %3250 = vmatmul.bf16.gmra.mxu0 %v3240
  %v3251 = vpop.f32.mrf.mxu0
  %v3252 = vadd.f32 0.0, %v3251
  %v3253 = vpop.f32.mrf.mxu0
  %v3254 = vadd.f32 0.0, %v3253
  %3255 = vdwg.mxu0
  %3256 = vst [vmem:[#allocation3 + $0x20] sm:$0xff] %v3252
  %3257 = vst [vmem:[#allocation3 + $0x28] sm:$0xff] %v3254
  %v3258 = vpack.c.bf16 %v2800, %v2798
  %3259 = vrot.lane.b32.xlu0 %v3016, 80
  %v3260 = vpop.permute.xlu0 %3259
  %v3262 = vsel %vm360, %v3260, 0
  %3264 = vmatpush.bf16.msra.mxu0 0
  %3265 = vmatpush.bf16.msra.mxu0 0
  %3266 = vmatpush.bf16.msra.mxu0 0
  %3267 = vmatpush.bf16.msra.mxu0 0
  %3268 = vmatpush.bf16.msra.mxu0 0
  %3269 = vmatpush.bf16.msra.mxu0 0
  %3270 = vmatpush.bf16.msra.mxu0 0
  %3271 = vmatpush.bf16.msra.mxu0 %v3258
  %3272 = vmatmul.bf16.gmra.mxu0 %v3262
  %v3273 = vpop.f32.mrf.mxu0
  %v3274 = vadd.f32 0.0, %v3273
  %v3275 = vpop.f32.mrf.mxu0
  %v3276 = vadd.f32 0.0, %v3275
  %3277 = vdwg.mxu0
  %v3278 = vmul.f32 %v3274, 0.25
  %v3279 = vmul.f32 %v3276, 0.25
  %v3280 = vadd.f32 %v3278, %v3013
  %v3281 = vadd.f32 %v3279, %v3014
  %v3282 = vmax.f32 %v3280, %v3281
  %v3283 = vrot.slane %v3282, 4
  %v3284 = vmax.f32 %v3282, %v3283
  %v3285 = vrot.slane %v3284, 2
  %v3286 = vmax.f32 %v3284, %v3285
  %v3287 = vrot.slane %v3286, 1
  %v3288 = vmax.f32 %v3286, %v3287
  %v3289 = vsub.f32 %v3280, %v3288
  %v3290 = vsub.f32 %v3281, %v3288
  %v3291 = vmul.f32 %v3289, 1.442695
  %v3292 = vpow.pop %v3291
  %v3293 = vmul.f32 %v3290, 1.442695
  %v3294 = vpow.pop %v3293
  %v3295 = vadd.f32 %v3292, %v3294
  %v3296 = vrot.slane %v3295, 4
  %v3297 = vadd.f32 %v3295, %v3296
  %v3298 = vrot.slane %v3297, 2
  %v3299 = vadd.f32 %v3297, %v3298
  %v3300 = vrot.slane %v3299, 1
  %v3301 = vadd.f32 %v3299, %v3300
  %v3302 = vrcp.pop %v3301
  %v3303 = vmul.f32 %v3301, %v3302
  %v3304 = vsub.f32 1.0, %v3303
  %v3305 = vmul.f32 %v3302, %v3304
  %v3306 = vadd.f32 %v3302, %v3305
  %vm3307 = vweird.f32 %v3301
  %vm3308 = vweird.f32 %v3302
  %vm3309 = vmor %vm3307, %vm3308
  %v3310 = vsel %vm3309, %v3302, %v3306
  %v3311 = vand.u32 2147483647, %v3301
  %vm3312 = vcmp.eq.f32.partialorder %v3311, 8.507059e+37
  %v3313 = vand.u32 %v3301, 2147483648
  %v3314 = vor.u32 1.1754944e-38, %v3313
  %v3315 = vsel %vm3312, %v3314, %v3310
  %v3316 = vmul.f32 %v3292, %v3315
  %v3317 = vmul.f32 %v3294, %v3315
  %v3318 = vpack.c.bf16 %v3007, %v3005
  %v3319 = vpack.c.bf16 %v3317, %v3316
  %v3321 = vsel %vm360, %v3318, 0
  %3323 = vmatpush.bf16.msra.mxu0 0
  %3324 = vmatpush.bf16.msra.mxu0 0
  %3325 = vmatpush.bf16.msra.mxu0 0
  %3326 = vmatpush.bf16.msra.mxu0 0
  %3327 = vmatpush.bf16.msra.mxu0 0
  %3328 = vmatpush.bf16.msra.mxu0 0
  %3329 = vmatpush.bf16.msra.mxu0 0
  %3330 = vmatpush.bf16.msra.mxu0 %v3319
  %3331 = vmatmul.bf16.gmra.mxu0 %v3321
  %v3332 = vpop.f32.mrf.mxu0
  %v3333 = vadd.f32 0.0, %v3332
  %v3334 = vpop.f32.mrf.mxu0
  %v3335 = vadd.f32 0.0, %v3334
  %3336 = vdwg.mxu0
  %3337 = vst [vmem:[#allocation3 + $0x30] sm:$0xff] %v3333
  %3338 = vst [vmem:[#allocation3 + $0x38] sm:$0xff] %v3335
  %v3339 = vld [vmem:[%s85] sm:$0xf]
  %v3340 = vld [vmem:[%s85 + $0x4] sm:$0xf]
  %v3341 = vld [vmem:[%s85 + $0x8] sm:$0xf]
  %v3342 = vld [vmem:[%s85 + $0xc] sm:$0xf]
  %v3343 = vld [vmem:[%s85 + $0x10] sm:$0xf]
  %v3344 = vld [vmem:[%s85 + $0x14] sm:$0xf]
  %v3345 = vld [vmem:[%s85 + $0x18] sm:$0xf]
  %v3346 = vld [vmem:[%s85 + $0x1c] sm:$0xf]
  %v3347 = vld [vmem:[#allocation3] sm:$0xff]
  %v3348 = vld [vmem:[#allocation3 + $0x8] sm:$0xff]
  %v3349 = vld [vmem:[#allocation3 + $0x10] sm:$0xff]
  %v3350 = vld [vmem:[#allocation3 + $0x18] sm:$0xff]
  %v3351 = vld [vmem:[#allocation3 + $0x20] sm:$0xff]
  %v3352 = vld [vmem:[#allocation3 + $0x28] sm:$0xff]
  %v3353 = vld [vmem:[#allocation3 + $0x30] sm:$0xff]
  %v3354 = vld [vmem:[#allocation3 + $0x38] sm:$0xff]
  %v3355 = vpack.c.bf16 %v3348, %v3347
  %v3356 = vpack.c.bf16 %v3350, %v3349
  %v3357 = vpack.c.bf16 %v3352, %v3351
  %v3358 = vpack.c.bf16 %v3354, %v3353
  %v3359 = vld [vmem:[%s87] sm:$0xff]
  %v3360 = vld [vmem:[%s87 + $0x8] sm:$0xff]
  %v3361 = vld [vmem:[%s87 + $0x10] sm:$0xff]
  %v3362 = vld [vmem:[%s87 + $0x18] sm:$0xff]
  %v3363 = vld [vmem:[%s87 + $0x20] sm:$0xff]
  %v3364 = vld [vmem:[%s87 + $0x28] sm:$0xff]
  %v3365 = vld [vmem:[%s87 + $0x30] sm:$0xff]
  %v3366 = vld [vmem:[%s87 + $0x38] sm:$0xff]
  %3368 = vset.pattern.permute.xlu0 0
  %3369 = vperm.xlu0 %3368, %v3359
  %v3370 = vpop.permute.xlu0 %3369
  %3373 = vset.pattern.permute.xlu0 0
  %3374 = vperm.xlu0 %3373, %v3360
  %v3375 = vpop.permute.xlu0 %3374
  %3378 = vset.pattern.permute.xlu0 0
  %3379 = vperm.xlu0 %3378, %v3361
  %v3380 = vpop.permute.xlu0 %3379
  %3383 = vset.pattern.permute.xlu0 0
  %3384 = vperm.xlu0 %3383, %v3362
  %v3385 = vpop.permute.xlu0 %3384
  %3388 = vset.pattern.permute.xlu0 0
  %3389 = vperm.xlu0 %3388, %v3363
  %v3390 = vpop.permute.xlu0 %3389
  %3393 = vset.pattern.permute.xlu0 0
  %3394 = vperm.xlu0 %3393, %v3364
  %v3395 = vpop.permute.xlu0 %3394
  %3398 = vset.pattern.permute.xlu0 0
  %3399 = vperm.xlu0 %3398, %v3365
  %v3400 = vpop.permute.xlu0 %3399
  %3403 = vset.pattern.permute.xlu0 0
  %3404 = vperm.xlu0 %3403, %v3366
  %v3405 = vpop.permute.xlu0 %3404
  %v3415 = vunpack.c.l.b16 %v3339
  %v3416 = vunpack.c.l.b16 %v3340
  %v3417 = vunpack.c.l.b16 %v3341
  %v3418 = vunpack.c.l.b16 %v3342
  %v3419 = vunpack.c.l.b16 %v3343
  %v3420 = vunpack.c.l.b16 %v3344
  %v3421 = vunpack.c.l.b16 %v3345
  %v3422 = vunpack.c.l.b16 %v3346
  %v3423 = vpack.c.b16 %v3416, %v3415
  %v3424 = vpack.c.b16 %v3418, %v3417
  %v3425 = vpack.c.b16 %v3420, %v3419
  %v3426 = vpack.c.b16 %v3422, %v3421
  %v3428 = vsel %vm2437, %v3423, 0
  %v3431 = vsel %vm2437, %v3424, 0
  %v3434 = vsel %vm2437, %v3425, 0
  %v3437 = vsel %vm2437, %v3426, 0
  %3439 = vmatpush.bf16.msra.mxu0 0
  %3440 = vmatpush.bf16.msra.mxu0 0
  %3441 = vmatpush.bf16.msra.mxu0 0
  %3442 = vmatpush.bf16.msra.mxu0 0
  %3443 = vmatpush.bf16.msra.mxu0 %v3358
  %3444 = vmatpush.bf16.msra.mxu0 %v3357
  %3445 = vmatpush.bf16.msra.mxu0 %v3356
  %3446 = vmatpush.bf16.msra.mxu0 %v3355
  %3447 = vmatmul.bf16.gmra.mxu0 %v3428
  %v3448 = vpop.f32.mrf.mxu0
  %v3449 = vadd.f32 %v3370, %v3448
  %v3450 = vpop.f32.mrf.mxu0
  %v3451 = vadd.f32 %v3375, %v3450
  %3452 = vmatmul.bf16.gmra.mxu0 %v3431
  %v3453 = vpop.f32.mrf.mxu0
  %v3454 = vadd.f32 %v3380, %v3453
  %v3455 = vpop.f32.mrf.mxu0
  %v3456 = vadd.f32 %v3385, %v3455
  %3457 = vmatmul.bf16.gmra.mxu0 %v3434
  %v3458 = vpop.f32.mrf.mxu0
  %v3459 = vadd.f32 %v3390, %v3458
  %v3460 = vpop.f32.mrf.mxu0
  %v3461 = vadd.f32 %v3395, %v3460
  %3462 = vmatmul.bf16.gmra.mxu0 %v3437
  %v3463 = vpop.f32.mrf.mxu0
  %v3464 = vadd.f32 %v3400, %v3463
  %v3465 = vpop.f32.mrf.mxu0
  %v3466 = vadd.f32 %v3405, %v3465
  %3467 = vdwg.mxu0
  %3468 = vst [vmem:[%s141] sm:$0xff] %v3449
  %3469 = vst [vmem:[%s141 + $0x8] sm:$0xff] %v3451
  %3470 = vst [vmem:[%s141 + $0x10] sm:$0xff] %v3454
  %3471 = vst [vmem:[%s141 + $0x18] sm:$0xff] %v3456
  %3472 = vst [vmem:[%s141 + $0x20] sm:$0xff] %v3459
  %3473 = vst [vmem:[%s141 + $0x28] sm:$0xff] %v3461
  %3474 = vst [vmem:[%s141 + $0x30] sm:$0xff] %v3464
  %3475 = vst [vmem:[%s141 + $0x38] sm:$0xff] %v3466
  %v3476 = vld [vmem:[%s55] sm:$0xff]
  %v3477 = vld [vmem:[%s55 + $0x8] sm:$0xff]
  %v3478 = vld [vmem:[%s55 + $0x10] sm:$0xff]
  %v3479 = vld [vmem:[%s55 + $0x18] sm:$0xff]
  %v3480 = vld [vmem:[%s55 + $0x20] sm:$0xff]
  %v3481 = vld [vmem:[%s55 + $0x28] sm:$0xff]
  %v3482 = vld [vmem:[%s55 + $0x30] sm:$0xff]
  %v3483 = vld [vmem:[%s55 + $0x38] sm:$0xff]
  %3485 = vset.pattern.permute.xlu0 0
  %3486 = vperm.xlu0 %3485, %v3476
  %v3487 = vpop.permute.xlu0 %3486
  %3490 = vset.pattern.permute.xlu0 0
  %3491 = vperm.xlu0 %3490, %v3477
  %v3492 = vpop.permute.xlu0 %3491
  %3495 = vset.pattern.permute.xlu0 0
  %3496 = vperm.xlu0 %3495, %v3478
  %v3497 = vpop.permute.xlu0 %3496
  %3500 = vset.pattern.permute.xlu0 0
  %3501 = vperm.xlu0 %3500, %v3479
  %v3502 = vpop.permute.xlu0 %3501
  %3505 = vset.pattern.permute.xlu0 0
  %3506 = vperm.xlu0 %3505, %v3480
  %v3507 = vpop.permute.xlu0 %3506
  %3510 = vset.pattern.permute.xlu0 0
  %3511 = vperm.xlu0 %3510, %v3481
  %v3512 = vpop.permute.xlu0 %3511
  %3515 = vset.pattern.permute.xlu0 0
  %3516 = vperm.xlu0 %3515, %v3482
  %v3517 = vpop.permute.xlu0 %3516
  %3520 = vset.pattern.permute.xlu0 0
  %3521 = vperm.xlu0 %3520, %v3483
  %v3522 = vpop.permute.xlu0 %3521
  %v3524 = vmul.f32 %v2388, %v3487
  %v3525 = vmul.f32 %v2389, %v3492
  %v3526 = vmul.f32 %v2390, %v3497
  %v3527 = vmul.f32 %v2391, %v3502
  %v3528 = vmul.f32 %v2392, %v3507
  %v3529 = vmul.f32 %v2393, %v3512
  %v3530 = vmul.f32 %v2394, %v3517
  %v3531 = vmul.f32 %v2395, %v3522
  %3532 = vset.pattern.permute.xlu0 1
  %3533 = vperm.xlu0 %3532, %v3476
  %v3534 = vpop.permute.xlu0 %3533
  %3536 = vset.pattern.permute.xlu0 1
  %3537 = vperm.xlu0 %3536, %v3477
  %v3538 = vpop.permute.xlu0 %3537
  %3540 = vset.pattern.permute.xlu0 1
  %3541 = vperm.xlu0 %3540, %v3478
  %v3542 = vpop.permute.xlu0 %3541
  %3544 = vset.pattern.permute.xlu0 1
  %3545 = vperm.xlu0 %3544, %v3479
  %v3546 = vpop.permute.xlu0 %3545
  %3548 = vset.pattern.permute.xlu0 1
  %3549 = vperm.xlu0 %3548, %v3480
  %v3550 = vpop.permute.xlu0 %3549
  %3552 = vset.pattern.permute.xlu0 1
  %3553 = vperm.xlu0 %3552, %v3481
  %v3554 = vpop.permute.xlu0 %3553
  %3556 = vset.pattern.permute.xlu0 1
  %3557 = vperm.xlu0 %3556, %v3482
  %v3558 = vpop.permute.xlu0 %3557
  %3560 = vset.pattern.permute.xlu0 1
  %3561 = vperm.xlu0 %3560, %v3483
  %v3562 = vpop.permute.xlu0 %3561
  %v3564 = vmul.f32 %v2397, %v3534
  %v3565 = vmul.f32 %v2398, %v3538
  %v3566 = vmul.f32 %v2399, %v3542
  %v3567 = vmul.f32 %v2400, %v3546
  %v3568 = vmul.f32 %v2401, %v3550
  %v3569 = vmul.f32 %v2402, %v3554
  %v3570 = vmul.f32 %v2403, %v3558
  %v3571 = vmul.f32 %v2404, %v3562
  %3580 = vrot.lane.b32.xlu0 %v3564, 64
  %v3581 = vpop.permute.xlu0 %3580
  %3582 = vrot.lane.b32.xlu0 %v3565, 64
  %v3583 = vpop.permute.xlu0 %3582
  %3584 = vrot.lane.b32.xlu0 %v3566, 64
  %v3585 = vpop.permute.xlu0 %3584
  %3586 = vrot.lane.b32.xlu0 %v3567, 64
  %v3587 = vpop.permute.xlu0 %3586
  %3588 = vrot.lane.b32.xlu0 %v3568, 64
  %v3589 = vpop.permute.xlu0 %3588
  %3590 = vrot.lane.b32.xlu0 %v3569, 64
  %v3591 = vpop.permute.xlu0 %3590
  %3592 = vrot.lane.b32.xlu0 %v3570, 64
  %v3593 = vpop.permute.xlu0 %3592
  %3594 = vrot.lane.b32.xlu0 %v3571, 64
  %v3595 = vpop.permute.xlu0 %3594
  %v3604 = vsel %vm2437, %v3524, %v3581
  %v3605 = vsel %vm2437, %v3525, %v3583
  %v3606 = vsel %vm2437, %v3526, %v3585
  %v3607 = vsel %vm2437, %v3527, %v3587
  %v3608 = vsel %vm2437, %v3528, %v3589
  %v3609 = vsel %vm2437, %v3529, %v3591
  %v3610 = vsel %vm2437, %v3530, %v3593
  %v3611 = vsel %vm2437, %v3531, %v3595
  %v3612 = vpack.c.bf16 %v3605, %v3604
  %v3613 = vpack.c.bf16 %v3607, %v3606
  %v3614 = vpack.c.bf16 %v3609, %v3608
  %v3615 = vpack.c.bf16 %v3611, %v3610
  %v3616 = vld [vmem:[%s89] sm:$0xf]
  %v3617 = vld [vmem:[%s89 + $0x4] sm:$0xf]
  %v3618 = vld [vmem:[%s89 + $0x8] sm:$0xf]
  %v3619 = vld [vmem:[%s89 + $0xc] sm:$0xf]
  %v3620 = vld [vmem:[%s89 + $0x10] sm:$0xf]
  %v3621 = vld [vmem:[%s89 + $0x14] sm:$0xf]
  %v3622 = vld [vmem:[%s89 + $0x18] sm:$0xf]
  %v3623 = vld [vmem:[%s89 + $0x1c] sm:$0xf]
  %v3624 = vld [vmem:[%s91] sm:$0xff]
  %v3625 = vld [vmem:[%s91 + $0x8] sm:$0xff]
  %v3626 = vld [vmem:[%s91 + $0x10] sm:$0xff]
  %v3627 = vld [vmem:[%s91 + $0x18] sm:$0xff]
  %v3628 = vld [vmem:[%s91 + $0x20] sm:$0xff]
  %v3629 = vld [vmem:[%s91 + $0x28] sm:$0xff]
  %v3630 = vld [vmem:[%s91 + $0x30] sm:$0xff]
  %v3631 = vld [vmem:[%s91 + $0x38] sm:$0xff]
  %3633 = vset.pattern.permute.xlu0 0
  %3634 = vperm.xlu0 %3633, %v3624
  %v3635 = vpop.permute.xlu0 %3634
  %3638 = vset.pattern.permute.xlu0 0
  %3639 = vperm.xlu0 %3638, %v3625
  %v3640 = vpop.permute.xlu0 %3639
  %3643 = vset.pattern.permute.xlu0 0
  %3644 = vperm.xlu0 %3643, %v3626
  %v3645 = vpop.permute.xlu0 %3644
  %3648 = vset.pattern.permute.xlu0 0
  %3649 = vperm.xlu0 %3648, %v3627
  %v3650 = vpop.permute.xlu0 %3649
  %3653 = vset.pattern.permute.xlu0 0
  %3654 = vperm.xlu0 %3653, %v3628
  %v3655 = vpop.permute.xlu0 %3654
  %3658 = vset.pattern.permute.xlu0 0
  %3659 = vperm.xlu0 %3658, %v3629
  %v3660 = vpop.permute.xlu0 %3659
  %3663 = vset.pattern.permute.xlu0 0
  %3664 = vperm.xlu0 %3663, %v3630
  %v3665 = vpop.permute.xlu0 %3664
  %3668 = vset.pattern.permute.xlu0 0
  %3669 = vperm.xlu0 %3668, %v3631
  %v3670 = vpop.permute.xlu0 %3669
  %v3680 = vunpack.c.l.b16 %v3616
  %v3681 = vunpack.c.l.b16 %v3617
  %v3682 = vunpack.c.l.b16 %v3618
  %v3683 = vunpack.c.l.b16 %v3619
  %v3684 = vunpack.c.l.b16 %v3620
  %v3685 = vunpack.c.l.b16 %v3621
  %v3686 = vunpack.c.l.b16 %v3622
  %v3687 = vunpack.c.l.b16 %v3623
  %v3688 = vpack.c.b16 %v3681, %v3680
  %v3689 = vpack.c.b16 %v3683, %v3682
  %v3690 = vpack.c.b16 %v3685, %v3684
  %v3691 = vpack.c.b16 %v3687, %v3686
  %v3693 = vsel %vm2437, %v3688, 0
  %v3696 = vsel %vm2437, %v3689, 0
  %v3699 = vsel %vm2437, %v3690, 0
  %v3702 = vsel %vm2437, %v3691, 0
  %3704 = vmatpush.bf16.msra.mxu0 0
  %3705 = vmatpush.bf16.msra.mxu0 0
  %3706 = vmatpush.bf16.msra.mxu0 0
  %3707 = vmatpush.bf16.msra.mxu0 0
  %3708 = vmatpush.bf16.msra.mxu0 %v3615
  %3709 = vmatpush.bf16.msra.mxu0 %v3614
  %3710 = vmatpush.bf16.msra.mxu0 %v3613
  %3711 = vmatpush.bf16.msra.mxu0 %v3612
  %3712 = vmatmul.bf16.gmra.mxu0 %v3693
  %v3713 = vpop.f32.mrf.mxu0
  %v3714 = vadd.f32 %v3635, %v3713
  %v3715 = vpop.f32.mrf.mxu0
  %v3716 = vadd.f32 %v3640, %v3715
  %3717 = vmatmul.bf16.gmra.mxu0 %v3696
  %v3718 = vpop.f32.mrf.mxu0
  %v3719 = vadd.f32 %v3645, %v3718
  %v3720 = vpop.f32.mrf.mxu0
  %v3721 = vadd.f32 %v3650, %v3720
  %3722 = vmatmul.bf16.gmra.mxu0 %v3699
  %v3723 = vpop.f32.mrf.mxu0
  %v3724 = vadd.f32 %v3655, %v3723
  %v3725 = vpop.f32.mrf.mxu0
  %v3726 = vadd.f32 %v3660, %v3725
  %3727 = vmatmul.bf16.gmra.mxu0 %v3702
  %v3728 = vpop.f32.mrf.mxu0
  %v3729 = vadd.f32 %v3665, %v3728
  %v3730 = vpop.f32.mrf.mxu0
  %v3731 = vadd.f32 %v3670, %v3730
  %3732 = vdwg.mxu0
  %v3733 = vadd.f32 %v3714, %v2438
  %v3734 = vadd.f32 %v3716, %v2439
  %v3735 = vadd.f32 %v3719, %v2440
  %v3736 = vadd.f32 %v3721, %v2441
  %v3737 = vadd.f32 %v3724, %v2442
  %v3738 = vadd.f32 %v3726, %v2443
  %v3739 = vadd.f32 %v3729, %v2444
  %v3740 = vadd.f32 %v3731, %v2445
  %3741 = vst [vmem:[%s143] sm:$0xff] %v3733
  %3742 = vst [vmem:[%s143 + $0x8] sm:$0xff] %v3734
  %3743 = vst [vmem:[%s143 + $0x10] sm:$0xff] %v3735
  %3744 = vst [vmem:[%s143 + $0x18] sm:$0xff] %v3736
  %3745 = vst [vmem:[%s143 + $0x20] sm:$0xff] %v3737
  %3746 = vst [vmem:[%s143 + $0x28] sm:$0xff] %v3738
  %3747 = vst [vmem:[%s143 + $0x30] sm:$0xff] %v3739
  %3748 = vst [vmem:[%s143 + $0x38] sm:$0xff] %v3740
  %v3749 = vld [vmem:[%s93] sm:$0xff]
  %v3750 = vld [vmem:[%s93 + $0x8] sm:$0xff]
  %v3751 = vld [vmem:[%s93 + $0x10] sm:$0xff]
  %v3752 = vld [vmem:[%s93 + $0x18] sm:$0xff]
  %v3753 = vld [vmem:[%s93 + $0x20] sm:$0xff]
  %v3754 = vld [vmem:[%s93 + $0x28] sm:$0xff]
  %v3755 = vld [vmem:[%s93 + $0x30] sm:$0xff]
  %v3756 = vld [vmem:[%s93 + $0x38] sm:$0xff]
  %v3757 = vld [vmem:[%s93 + $0x40] sm:$0xff]
  %v3758 = vld [vmem:[%s93 + $0x48] sm:$0xff]
  %v3759 = vld [vmem:[%s93 + $0x50] sm:$0xff]
  %v3760 = vld [vmem:[%s93 + $0x58] sm:$0xff]
  %v3761 = vld [vmem:[%s93 + $0x60] sm:$0xff]
  %v3762 = vld [vmem:[%s93 + $0x68] sm:$0xff]
  %v3763 = vld [vmem:[%s93 + $0x70] sm:$0xff]
  %v3764 = vld [vmem:[%s93 + $0x78] sm:$0xff]
  %s3765 = scalar_lea.vmem %s93, 128
  %v3766 = vld [vmem:[%s3765] sm:$0xff]
  %v3767 = vld [vmem:[%s3765 + $0x8] sm:$0xff]
  %v3768 = vld [vmem:[%s3765 + $0x10] sm:$0xff]
  %v3769 = vld [vmem:[%s3765 + $0x18] sm:$0xff]
  %v3770 = vld [vmem:[%s3765 + $0x20] sm:$0xff]
  %v3771 = vld [vmem:[%s3765 + $0x28] sm:$0xff]
  %v3772 = vld [vmem:[%s3765 + $0x30] sm:$0xff]
  %v3773 = vld [vmem:[%s3765 + $0x38] sm:$0xff]
  %v3774 = vld [vmem:[%s3765 + $0x40] sm:$0xff]
  %v3775 = vld [vmem:[%s3765 + $0x48] sm:$0xff]
  %v3776 = vld [vmem:[%s3765 + $0x50] sm:$0xff]
  %v3777 = vld [vmem:[%s3765 + $0x58] sm:$0xff]
  %v3778 = vld [vmem:[%s3765 + $0x60] sm:$0xff]
  %v3779 = vld [vmem:[%s3765 + $0x68] sm:$0xff]
  %v3780 = vld [vmem:[%s3765 + $0x70] sm:$0xff]
  %v3781 = vld [vmem:[%s3765 + $0x78] sm:$0xff]
  %3798 = vrot.lane.b32.xlu0 %v3766, 16
  %v3799 = vpop.permute.xlu0 %3798
  %3800 = vrot.lane.b32.xlu0 %v3767, 16
  %v3801 = vpop.permute.xlu0 %3800
  %3802 = vrot.lane.b32.xlu0 %v3768, 16
  %v3803 = vpop.permute.xlu0 %3802
  %3804 = vrot.lane.b32.xlu0 %v3769, 16
  %v3805 = vpop.permute.xlu0 %3804
  %3806 = vrot.lane.b32.xlu0 %v3770, 16
  %v3807 = vpop.permute.xlu0 %3806
  %3808 = vrot.lane.b32.xlu0 %v3771, 16
  %v3809 = vpop.permute.xlu0 %3808
  %3810 = vrot.lane.b32.xlu0 %v3772, 16
  %v3811 = vpop.permute.xlu0 %3810
  %3812 = vrot.lane.b32.xlu0 %v3773, 16
  %v3813 = vpop.permute.xlu0 %3812
  %3814 = vrot.lane.b32.xlu0 %v3774, 16
  %v3815 = vpop.permute.xlu0 %3814
  %3816 = vrot.lane.b32.xlu0 %v3775, 16
  %v3817 = vpop.permute.xlu0 %3816
  %3818 = vrot.lane.b32.xlu0 %v3776, 16
  %v3819 = vpop.permute.xlu0 %3818
  %3820 = vrot.lane.b32.xlu0 %v3777, 16
  %v3821 = vpop.permute.xlu0 %3820
  %3822 = vrot.lane.b32.xlu0 %v3778, 16
  %v3823 = vpop.permute.xlu0 %3822
  %3824 = vrot.lane.b32.xlu0 %v3779, 16
  %v3825 = vpop.permute.xlu0 %3824
  %3826 = vrot.lane.b32.xlu0 %v3780, 16
  %v3827 = vpop.permute.xlu0 %3826
  %3828 = vrot.lane.b32.xlu0 %v3781, 16
  %v3829 = vpop.permute.xlu0 %3828
  %v3846 = vsel %vm360, %v3749, %v3799
  %v3847 = vsel %vm360, %v3750, %v3801
  %v3848 = vsel %vm360, %v3751, %v3803
  %v3849 = vsel %vm360, %v3752, %v3805
  %v3850 = vsel %vm360, %v3753, %v3807
  %v3851 = vsel %vm360, %v3754, %v3809
  %v3852 = vsel %vm360, %v3755, %v3811
  %v3853 = vsel %vm360, %v3756, %v3813
  %v3854 = vsel %vm360, %v3757, %v3815
  %v3855 = vsel %vm360, %v3758, %v3817
  %v3856 = vsel %vm360, %v3759, %v3819
  %v3857 = vsel %vm360, %v3760, %v3821
  %v3858 = vsel %vm360, %v3761, %v3823
  %v3859 = vsel %vm360, %v3762, %v3825
  %v3860 = vsel %vm360, %v3763, %v3827
  %v3861 = vsel %vm360, %v3764, %v3829
  %v3862 = vld [vmem:[%s95] sm:$0xff]
  %v3863 = vld [vmem:[%s95 + $0x8] sm:$0xff]
  %v3864 = vld [vmem:[%s95 + $0x10] sm:$0xff]
  %v3865 = vld [vmem:[%s95 + $0x18] sm:$0xff]
  %v3866 = vld [vmem:[%s95 + $0x20] sm:$0xff]
  %v3867 = vld [vmem:[%s95 + $0x28] sm:$0xff]
  %v3868 = vld [vmem:[%s95 + $0x30] sm:$0xff]
  %v3869 = vld [vmem:[%s95 + $0x38] sm:$0xff]
  %v3870 = vld [vmem:[%s95 + $0x40] sm:$0xff]
  %v3871 = vld [vmem:[%s95 + $0x48] sm:$0xff]
  %v3872 = vld [vmem:[%s95 + $0x50] sm:$0xff]
  %v3873 = vld [vmem:[%s95 + $0x58] sm:$0xff]
  %v3874 = vld [vmem:[%s95 + $0x60] sm:$0xff]
  %v3875 = vld [vmem:[%s95 + $0x68] sm:$0xff]
  %v3876 = vld [vmem:[%s95 + $0x70] sm:$0xff]
  %v3877 = vld [vmem:[%s95 + $0x78] sm:$0xff]
  %v3878 = vadd.f32 %v3749, %v3862
  %v3879 = vadd.f32 %v3750, %v3863
  %v3880 = vadd.f32 %v3751, %v3864
  %v3881 = vadd.f32 %v3752, %v3865
  %v3882 = vadd.f32 %v3753, %v3866
  %v3883 = vadd.f32 %v3754, %v3867
  %v3884 = vadd.f32 %v3755, %v3868
  %v3885 = vadd.f32 %v3756, %v3869
  %v3886 = vadd.f32 %v3757, %v3870
  %v3887 = vadd.f32 %v3758, %v3871
  %v3888 = vadd.f32 %v3759, %v3872
  %v3889 = vadd.f32 %v3760, %v3873
  %v3890 = vadd.f32 %v3761, %v3874
  %v3891 = vadd.f32 %v3762, %v3875
  %v3892 = vadd.f32 %v3763, %v3876
  %v3893 = vadd.f32 %v3764, %v3877
  %v3894 = vadd.f32 %v3766, %v3862
  %v3895 = vadd.f32 %v3767, %v3863
  %v3896 = vadd.f32 %v3768, %v3864
  %v3897 = vadd.f32 %v3769, %v3865
  %v3898 = vadd.f32 %v3770, %v3866
  %v3899 = vadd.f32 %v3771, %v3867
  %v3900 = vadd.f32 %v3772, %v3868
  %v3901 = vadd.f32 %v3773, %v3869
  %v3902 = vadd.f32 %v3774, %v3870
  %v3903 = vadd.f32 %v3775, %v3871
  %v3904 = vadd.f32 %v3776, %v3872
  %v3905 = vadd.f32 %v3777, %v3873
  %v3906 = vadd.f32 %v3778, %v3874
  %v3907 = vadd.f32 %v3779, %v3875
  %v3908 = vadd.f32 %v3780, %v3876
  %v3909 = vadd.f32 %v3781, %v3877
  %3926 = vrot.lane.b32.xlu0 %v3894, 16
  %v3927 = vpop.permute.xlu0 %3926
  %3928 = vrot.lane.b32.xlu0 %v3895, 16
  %v3929 = vpop.permute.xlu0 %3928
  %3930 = vrot.lane.b32.xlu0 %v3896, 16
  %v3931 = vpop.permute.xlu0 %3930
  %3932 = vrot.lane.b32.xlu0 %v3897, 16
  %v3933 = vpop.permute.xlu0 %3932
  %3934 = vrot.lane.b32.xlu0 %v3898, 16
  %v3935 = vpop.permute.xlu0 %3934
  %3936 = vrot.lane.b32.xlu0 %v3899, 16
  %v3937 = vpop.permute.xlu0 %3936
  %3938 = vrot.lane.b32.xlu0 %v3900, 16
  %v3939 = vpop.permute.xlu0 %3938
  %3940 = vrot.lane.b32.xlu0 %v3901, 16
  %v3941 = vpop.permute.xlu0 %3940
  %3942 = vrot.lane.b32.xlu0 %v3902, 16
  %v3943 = vpop.permute.xlu0 %3942
  %3944 = vrot.lane.b32.xlu0 %v3903, 16
  %v3945 = vpop.permute.xlu0 %3944
  %3946 = vrot.lane.b32.xlu0 %v3904, 16
  %v3947 = vpop.permute.xlu0 %3946
  %3948 = vrot.lane.b32.xlu0 %v3905, 16
  %v3949 = vpop.permute.xlu0 %3948
  %3950 = vrot.lane.b32.xlu0 %v3906, 16
  %v3951 = vpop.permute.xlu0 %3950
  %3952 = vrot.lane.b32.xlu0 %v3907, 16
  %v3953 = vpop.permute.xlu0 %3952
  %3954 = vrot.lane.b32.xlu0 %v3908, 16
  %v3955 = vpop.permute.xlu0 %3954
  %3956 = vrot.lane.b32.xlu0 %v3909, 16
  %v3957 = vpop.permute.xlu0 %3956
  %v3974 = vsel %vm360, %v3878, %v3927
  %v3975 = vsel %vm360, %v3879, %v3929
  %v3976 = vsel %vm360, %v3880, %v3931
  %v3977 = vsel %vm360, %v3881, %v3933
  %v3978 = vsel %vm360, %v3882, %v3935
  %v3979 = vsel %vm360, %v3883, %v3937
  %v3980 = vsel %vm360, %v3884, %v3939
  %v3981 = vsel %vm360, %v3885, %v3941
  %v3982 = vsel %vm360, %v3886, %v3943
  %v3983 = vsel %vm360, %v3887, %v3945
  %v3984 = vsel %vm360, %v3888, %v3947
  %v3985 = vsel %vm360, %v3889, %v3949
  %v3986 = vsel %vm360, %v3890, %v3951
  %v3987 = vsel %vm360, %v3891, %v3953
  %v3988 = vsel %vm360, %v3892, %v3955
  %v3989 = vsel %vm360, %v3893, %v3957
  %v3990 = vpack.c.bf16 %v3975, %v3974
  %v3991 = vpack.c.bf16 %v3977, %v3976
  %v3992 = vpack.c.bf16 %v3979, %v3978
  %v3993 = vpack.c.bf16 %v3981, %v3980
  %v3994 = vpack.c.bf16 %v3983, %v3982
  %v3995 = vpack.c.bf16 %v3985, %v3984
  %v3996 = vpack.c.bf16 %v3987, %v3986
  %v3997 = vpack.c.bf16 %v3989, %v3988
  %v3998 = vld [vmem:[%s101] sm:$0xf]
  %v3999 = vld [vmem:[%s101 + $0x4] sm:$0xf]
  %v4000 = vld [vmem:[%s103] sm:$0x1]
  %v4002 = vperm.slane %v4000, 0
  %v4006 = vunpack.c.l.b16 %v3998
  %v4007 = vunpack.c.l.b16 %v3999
  %v4008 = vpack.c.b16 %v4007, %v4006
  %4010 = vmatpush.bf16.msra.mxu0 0
  %4011 = vmatpush.bf16.msra.mxu0 0
  %4012 = vmatpush.bf16.msra.mxu0 0
  %4013 = vmatpush.bf16.msra.mxu0 0
  %4014 = vmatpush.bf16.msra.mxu0 0
  %4015 = vmatpush.bf16.msra.mxu0 0
  %4016 = vmatpush.bf16.msra.mxu0 0
  %4017 = vmatpush.bf16.msra.mxu0 %v4008
  %4018 = vmatmul.bf16.gmra.mxu0 %v362
  %v4019 = vpop.f32.mrf.mxu0
  %v4020 = vadd.f32 %v4002, %v4019
  %v4021 = vpop.f32.mrf.mxu0
  %v4022 = vadd.f32 %v4002, %v4021
  %4023 = vdwg.mxu0
  %v4024 = vld [vmem:[%s105] sm:$0x1]
  %v4025 = vld [vmem:[%s107] sm:$0x1]
  %4026 = vadd.xlane.f32.xlu0 %v4020
  %v4027 = vpop.xlane.xlu0 %4026
  %4028 = vadd.xlane.f32.xlu0 %v4022
  %v4029 = vpop.xlane.xlu0 %4028
  %v4030 = vrcp.pop 128.0
  %v4031 = vmul.f32 128.0, %v4030
  %v4032 = vsub.f32 1.0, %v4031
  %v4033 = vmul.f32 %v4030, %v4032
  %v4034 = vadd.f32 %v4030, %v4033
  %vm4035 = vweird.f32 %v4030
  %v4036 = vsel %vm4035, %v4030, %v4034
  %v4037 = vmul.f32 %v4027, %v4036
  %v4038 = vmul.f32 %v4029, %v4036
  %v4039 = vsub.f32 %v4020, %v4037
  %v4040 = vsub.f32 %v4022, %v4038
  %v4041 = vmul.f32 %v4039, %v4039
  %v4042 = vmul.f32 %v4040, %v4040
  %4043 = vadd.xlane.f32.xlu0 %v4041
  %v4044 = vpop.xlane.xlu0 %4043
  %4045 = vadd.xlane.f32.xlu0 %v4042
  %v4046 = vpop.xlane.xlu0 %4045
  %v4047 = vmul.f32 %v4044, %v4036
  %v4048 = vmul.f32 %v4046, %v4036
  %v4049 = vadd.f32 %v4047, 1e-12
  %v4050 = vadd.f32 %v4048, 1e-12
  %v4051 = vrsqrt.pop %v4049
  %v4052 = vmul.f32 %v4051, %v4049
  %v4053 = vmul.f32 %v4052, %v4051
  %v4054 = vmul.f32 0.5, %v4053
  %v4055 = vsub.f32 1.5, %v4054
  %v4056 = vmul.f32 %v4051, %v4055
  %vm4057 = vweird.f32 %v4049
  %vm4058 = vweird.f32 %v4051
  %vm4059 = vmor %vm4057, %vm4058
  %v4060 = vsel %vm4059, %v4051, %v4056
  %v4061 = vrsqrt.pop %v4050
  %v4062 = vmul.f32 %v4061, %v4050
  %v4063 = vmul.f32 %v4062, %v4061
  %v4064 = vmul.f32 0.5, %v4063
  %v4065 = vsub.f32 1.5, %v4064
  %v4066 = vmul.f32 %v4061, %v4065
  %vm4067 = vweird.f32 %v4050
  %vm4068 = vweird.f32 %v4061
  %vm4069 = vmor %vm4067, %vm4068
  %v4070 = vsel %vm4069, %v4061, %v4066
  %v4071 = vmul.f32 %v4039, %v4060
  %v4072 = vmul.f32 %v4040, %v4070
  %v4074 = vperm.slane %v4024, 0
  %v4076 = vmul.f32 %v4071, %v4074
  %v4077 = vmul.f32 %v4072, %v4074
  %v4079 = vperm.slane %v4025, 0
  %v4081 = vadd.f32 %v4076, %v4079
  %v4082 = vadd.f32 %v4077, %v4079
  %v4083 = vld [vmem:[%s109] sm:$0xf]
  %v4084 = vld [vmem:[%s109 + $0x4] sm:$0xf]
  %v4085 = vld [vmem:[%s111] sm:$0x1]
  %v4087 = vperm.slane %v4085, 0
  %v4091 = vunpack.c.l.b16 %v4083
  %v4092 = vunpack.c.l.b16 %v4084
  %v4093 = vpack.c.b16 %v4092, %v4091
  %4095 = vmatpush.bf16.msra.mxu0 0
  %4096 = vmatpush.bf16.msra.mxu0 0
  %4097 = vmatpush.bf16.msra.mxu0 0
  %4098 = vmatpush.bf16.msra.mxu0 0
  %4099 = vmatpush.bf16.msra.mxu0 0
  %4100 = vmatpush.bf16.msra.mxu0 0
  %4101 = vmatpush.bf16.msra.mxu0 0
  %4102 = vmatpush.bf16.msra.mxu0 %v4093
  %4103 = vmatmul.bf16.gmra.mxu0 %v362
  %v4104 = vpop.f32.mrf.mxu0
  %v4105 = vadd.f32 %v4087, %v4104
  %v4106 = vpop.f32.mrf.mxu0
  %v4107 = vadd.f32 %v4087, %v4106
  %4108 = vdwg.mxu0
  %v4109 = vld [vmem:[%s113] sm:$0x1]
  %v4110 = vld [vmem:[%s115] sm:$0x1]
  %4111 = vadd.xlane.f32.xlu0 %v4105
  %v4112 = vpop.xlane.xlu0 %4111
  %4113 = vadd.xlane.f32.xlu0 %v4107
  %v4114 = vpop.xlane.xlu0 %4113
  %v4115 = vmul.f32 %v4112, %v4036
  %v4116 = vmul.f32 %v4114, %v4036
  %v4117 = vsub.f32 %v4105, %v4115
  %v4118 = vsub.f32 %v4107, %v4116
  %v4119 = vmul.f32 %v4117, %v4117
  %v4120 = vmul.f32 %v4118, %v4118
  %4121 = vadd.xlane.f32.xlu0 %v4119
  %v4122 = vpop.xlane.xlu0 %4121
  %4123 = vadd.xlane.f32.xlu0 %v4120
  %v4124 = vpop.xlane.xlu0 %4123
  %v4125 = vmul.f32 %v4122, %v4036
  %v4126 = vmul.f32 %v4124, %v4036
  %v4127 = vadd.f32 %v4125, 1e-12
  %v4128 = vadd.f32 %v4126, 1e-12
  %v4129 = vrsqrt.pop %v4127
  %v4130 = vmul.f32 %v4129, %v4127
  %v4131 = vmul.f32 %v4130, %v4129
  %v4132 = vmul.f32 0.5, %v4131
  %v4133 = vsub.f32 1.5, %v4132
  %v4134 = vmul.f32 %v4129, %v4133
  %vm4135 = vweird.f32 %v4127
  %vm4136 = vweird.f32 %v4129
  %vm4137 = vmor %vm4135, %vm4136
  %v4138 = vsel %vm4137, %v4129, %v4134
  %v4139 = vrsqrt.pop %v4128
  %v4140 = vmul.f32 %v4139, %v4128
  %v4141 = vmul.f32 %v4140, %v4139
  %v4142 = vmul.f32 0.5, %v4141
  %v4143 = vsub.f32 1.5, %v4142
  %v4144 = vmul.f32 %v4139, %v4143
  %vm4145 = vweird.f32 %v4128
  %vm4146 = vweird.f32 %v4139
  %vm4147 = vmor %vm4145, %vm4146
  %v4148 = vsel %vm4147, %v4139, %v4144
  %v4149 = vmul.f32 %v4117, %v4138
  %v4150 = vmul.f32 %v4118, %v4148
  %v4152 = vperm.slane %v4109, 0
  %v4154 = vmul.f32 %v4149, %v4152
  %v4155 = vmul.f32 %v4150, %v4152
  %v4157 = vperm.slane %v4110, 0
  %v4159 = vadd.f32 %v4154, %v4157
  %v4160 = vadd.f32 %v4155, %v4157
  %v4161 = vld [vmem:[%s117] sm:$0xf]
  %v4162 = vld [vmem:[%s117 + $0x4] sm:$0xf]
  %v4163 = vld [vmem:[%s117 + $0x8] sm:$0xf]
  %v4164 = vld [vmem:[%s117 + $0xc] sm:$0xf]
  %v4165 = vld [vmem:[%s117 + $0x10] sm:$0xf]
  %v4166 = vld [vmem:[%s117 + $0x14] sm:$0xf]
  %v4167 = vld [vmem:[%s117 + $0x18] sm:$0xf]
  %v4168 = vld [vmem:[%s117 + $0x1c] sm:$0xf]
  %v4169 = vld [vmem:[%s117 + $0x20] sm:$0xf]
  %v4170 = vld [vmem:[%s117 + $0x24] sm:$0xf]
  %v4171 = vld [vmem:[%s117 + $0x28] sm:$0xf]
  %v4172 = vld [vmem:[%s117 + $0x2c] sm:$0xf]
  %v4173 = vld [vmem:[%s117 + $0x30] sm:$0xf]
  %v4174 = vld [vmem:[%s117 + $0x34] sm:$0xf]
  %v4175 = vld [vmem:[%s117 + $0x38] sm:$0xf]
  %v4176 = vld [vmem:[%s117 + $0x3c] sm:$0xf]
  %v4177 = vld [vmem:[%s119] sm:$0xff]
  %v4178 = vld [vmem:[%s119 + $0x8] sm:$0xff]
  %v4179 = vld [vmem:[%s119 + $0x10] sm:$0xff]
  %v4180 = vld [vmem:[%s119 + $0x18] sm:$0xff]
  %v4181 = vld [vmem:[%s119 + $0x20] sm:$0xff]
  %v4182 = vld [vmem:[%s119 + $0x28] sm:$0xff]
  %v4183 = vld [vmem:[%s119 + $0x30] sm:$0xff]
  %v4184 = vld [vmem:[%s119 + $0x38] sm:$0xff]
  %v4185 = vld [vmem:[%s119 + $0x40] sm:$0xff]
  %v4186 = vld [vmem:[%s119 + $0x48] sm:$0xff]
  %v4187 = vld [vmem:[%s119 + $0x50] sm:$0xff]
  %v4188 = vld [vmem:[%s119 + $0x58] sm:$0xff]
  %v4189 = vld [vmem:[%s119 + $0x60] sm:$0xff]
  %v4190 = vld [vmem:[%s119 + $0x68] sm:$0xff]
  %v4191 = vld [vmem:[%s119 + $0x70] sm:$0xff]
  %v4192 = vld [vmem:[%s119 + $0x78] sm:$0xff]
  %4194 = vset.pattern.permute.xlu0 0
  %4195 = vperm.xlu0 %4194, %v4177
  %v4196 = vpop.permute.xlu0 %4195
  %4199 = vset.pattern.permute.xlu0 0
  %4200 = vperm.xlu0 %4199, %v4178
  %v4201 = vpop.permute.xlu0 %4200
  %4204 = vset.pattern.permute.xlu0 0
  %4205 = vperm.xlu0 %4204, %v4179
  %v4206 = vpop.permute.xlu0 %4205
  %4209 = vset.pattern.permute.xlu0 0
  %4210 = vperm.xlu0 %4209, %v4180
  %v4211 = vpop.permute.xlu0 %4210
  %4214 = vset.pattern.permute.xlu0 0
  %4215 = vperm.xlu0 %4214, %v4181
  %v4216 = vpop.permute.xlu0 %4215
  %4219 = vset.pattern.permute.xlu0 0
  %4220 = vperm.xlu0 %4219, %v4182
  %v4221 = vpop.permute.xlu0 %4220
  %4224 = vset.pattern.permute.xlu0 0
  %4225 = vperm.xlu0 %4224, %v4183
  %v4226 = vpop.permute.xlu0 %4225
  %4229 = vset.pattern.permute.xlu0 0
  %4230 = vperm.xlu0 %4229, %v4184
  %v4231 = vpop.permute.xlu0 %4230
  %4234 = vset.pattern.permute.xlu0 0
  %4235 = vperm.xlu0 %4234, %v4185
  %v4236 = vpop.permute.xlu0 %4235
  %4239 = vset.pattern.permute.xlu0 0
  %4240 = vperm.xlu0 %4239, %v4186
  %v4241 = vpop.permute.xlu0 %4240
  %4244 = vset.pattern.permute.xlu0 0
  %4245 = vperm.xlu0 %4244, %v4187
  %v4246 = vpop.permute.xlu0 %4245
  %4249 = vset.pattern.permute.xlu0 0
  %4250 = vperm.xlu0 %4249, %v4188
  %v4251 = vpop.permute.xlu0 %4250
  %4254 = vset.pattern.permute.xlu0 0
  %4255 = vperm.xlu0 %4254, %v4189
  %v4256 = vpop.permute.xlu0 %4255
  %4259 = vset.pattern.permute.xlu0 0
  %4260 = vperm.xlu0 %4259, %v4190
  %v4261 = vpop.permute.xlu0 %4260
  %4264 = vset.pattern.permute.xlu0 0
  %4265 = vperm.xlu0 %4264, %v4191
  %v4266 = vpop.permute.xlu0 %4265
  %4269 = vset.pattern.permute.xlu0 0
  %4270 = vperm.xlu0 %4269, %v4192
  %v4271 = vpop.permute.xlu0 %4270
  %v4289 = vunpack.c.l.b16 %v4161
  %v4290 = vunpack.c.l.b16 %v4162
  %v4291 = vunpack.c.l.b16 %v4163
  %v4292 = vunpack.c.l.b16 %v4164
  %v4293 = vunpack.c.l.b16 %v4165
  %v4294 = vunpack.c.l.b16 %v4166
  %v4295 = vunpack.c.l.b16 %v4167
  %v4296 = vunpack.c.l.b16 %v4168
  %v4297 = vunpack.c.l.b16 %v4169
  %v4298 = vunpack.c.l.b16 %v4170
  %v4299 = vunpack.c.l.b16 %v4171
  %v4300 = vunpack.c.l.b16 %v4172
  %v4301 = vunpack.c.l.b16 %v4173
  %v4302 = vunpack.c.l.b16 %v4174
  %v4303 = vunpack.c.l.b16 %v4175
  %v4304 = vunpack.c.l.b16 %v4176
  %v4305 = vpack.c.b16 %v4290, %v4289
  %v4306 = vpack.c.b16 %v4292, %v4291
  %v4307 = vpack.c.b16 %v4294, %v4293
  %v4308 = vpack.c.b16 %v4296, %v4295
  %v4309 = vpack.c.b16 %v4298, %v4297
  %v4310 = vpack.c.b16 %v4300, %v4299
  %v4311 = vpack.c.b16 %v4302, %v4301
  %v4312 = vpack.c.b16 %v4304, %v4303
  %4321 = vmatpush.bf16.msra.mxu0 %v3997
  %4322 = vmatpush.bf16.msra.mxu0 %v3996
  %4323 = vmatpush.bf16.msra.mxu0 %v3995
  %4324 = vmatpush.bf16.msra.mxu0 %v3994
  %4325 = vmatpush.bf16.msra.mxu0 %v3993
  %4326 = vmatpush.bf16.msra.mxu0 %v3992
  %4327 = vmatpush.bf16.msra.mxu0 %v3991
  %4328 = vmatpush.bf16.msra.mxu0 %v3990
  %4329 = vmatmul.bf16.gmra.mxu0 %v4305
  %v4330 = vpop.f32.mrf.mxu0
  %v4331 = vadd.f32 %v4196, %v4330
  %v4332 = vpop.f32.mrf.mxu0
  %v4333 = vadd.f32 %v4201, %v4332
  %4334 = vmatmul.bf16.gmra.mxu0 %v4306
  %v4335 = vpop.f32.mrf.mxu0
  %v4336 = vadd.f32 %v4206, %v4335
  %v4337 = vpop.f32.mrf.mxu0
  %v4338 = vadd.f32 %v4211, %v4337
  %4339 = vmatmul.bf16.gmra.mxu0 %v4307
  %v4340 = vpop.f32.mrf.mxu0
  %v4341 = vadd.f32 %v4216, %v4340
  %v4342 = vpop.f32.mrf.mxu0
  %v4343 = vadd.f32 %v4221, %v4342
  %4344 = vmatmul.bf16.gmra.mxu0 %v4308
  %v4345 = vpop.f32.mrf.mxu0
  %v4346 = vadd.f32 %v4226, %v4345
  %v4347 = vpop.f32.mrf.mxu0
  %v4348 = vadd.f32 %v4231, %v4347
  %4349 = vmatmul.bf16.gmra.mxu0 %v4309
  %v4350 = vpop.f32.mrf.mxu0
  %v4351 = vadd.f32 %v4236, %v4350
  %v4352 = vpop.f32.mrf.mxu0
  %v4353 = vadd.f32 %v4241, %v4352
  %4354 = vmatmul.bf16.gmra.mxu0 %v4310
  %v4355 = vpop.f32.mrf.mxu0
  %v4356 = vadd.f32 %v4246, %v4355
  %v4357 = vpop.f32.mrf.mxu0
  %v4358 = vadd.f32 %v4251, %v4357
  %4359 = vmatmul.bf16.gmra.mxu0 %v4311
  %v4360 = vpop.f32.mrf.mxu0
  %v4361 = vadd.f32 %v4256, %v4360
  %v4362 = vpop.f32.mrf.mxu0
  %v4363 = vadd.f32 %v4261, %v4362
  %4364 = vmatmul.bf16.gmra.mxu0 %v4312
  %v4365 = vpop.f32.mrf.mxu0
  %v4366 = vadd.f32 %v4266, %v4365
  %v4367 = vpop.f32.mrf.mxu0
  %v4368 = vadd.f32 %v4271, %v4367
  %4369 = vdwg.mxu0
  %v4370 = vpack.c.bf16 %v4082, %v4081
  %v4371 = vld [vmem:[%s121] sm:$0xf]
  %v4372 = vld [vmem:[%s121 + $0x4] sm:$0xf]
  %v4373 = vld [vmem:[%s121 + $0x8] sm:$0xf]
  %v4374 = vld [vmem:[%s121 + $0xc] sm:$0xf]
  %v4375 = vld [vmem:[%s121 + $0x10] sm:$0xf]
  %v4376 = vld [vmem:[%s121 + $0x14] sm:$0xf]
  %v4377 = vld [vmem:[%s121 + $0x18] sm:$0xf]
  %v4378 = vld [vmem:[%s121 + $0x1c] sm:$0xf]
  %v4379 = vld [vmem:[%s121 + $0x20] sm:$0xf]
  %v4380 = vld [vmem:[%s121 + $0x24] sm:$0xf]
  %v4381 = vld [vmem:[%s121 + $0x28] sm:$0xf]
  %v4382 = vld [vmem:[%s121 + $0x2c] sm:$0xf]
  %v4383 = vld [vmem:[%s121 + $0x30] sm:$0xf]
  %v4384 = vld [vmem:[%s121 + $0x34] sm:$0xf]
  %v4385 = vld [vmem:[%s121 + $0x38] sm:$0xf]
  %v4386 = vld [vmem:[%s121 + $0x3c] sm:$0xf]
  %v4387 = vld [vmem:[%s123] sm:$0x1]
  %v4389 = vperm.slane %v4387, 0
  %v4407 = vunpack.c.l.b16 %v4371
  %v4408 = vunpack.c.l.b16 %v4372
  %v4409 = vunpack.c.l.b16 %v4373
  %v4410 = vunpack.c.l.b16 %v4374
  %v4411 = vunpack.c.l.b16 %v4375
  %v4412 = vunpack.c.l.b16 %v4376
  %v4413 = vunpack.c.l.b16 %v4377
  %v4414 = vunpack.c.l.b16 %v4378
  %v4415 = vunpack.c.l.b16 %v4379
  %v4416 = vunpack.c.l.b16 %v4380
  %v4417 = vunpack.c.l.b16 %v4381
  %v4418 = vunpack.c.l.b16 %v4382
  %v4419 = vunpack.c.l.b16 %v4383
  %v4420 = vunpack.c.l.b16 %v4384
  %v4421 = vunpack.c.l.b16 %v4385
  %v4422 = vunpack.c.l.b16 %v4386
  %v4423 = vpack.c.b16 %v4408, %v4407
  %v4424 = vpack.c.b16 %v4410, %v4409
  %v4425 = vpack.c.b16 %v4412, %v4411
  %v4426 = vpack.c.b16 %v4414, %v4413
  %v4427 = vpack.c.b16 %v4416, %v4415
  %v4428 = vpack.c.b16 %v4418, %v4417
  %v4429 = vpack.c.b16 %v4420, %v4419
  %v4430 = vpack.c.b16 %v4422, %v4421
  %4439 = vmatpush.bf16.msra.mxu0 %v4430
  %4440 = vmatpush.bf16.msra.mxu0 %v4429
  %4441 = vmatpush.bf16.msra.mxu0 %v4428
  %4442 = vmatpush.bf16.msra.mxu0 %v4427
  %4443 = vmatpush.bf16.msra.mxu0 %v4426
  %4444 = vmatpush.bf16.msra.mxu0 %v4425
  %4445 = vmatpush.bf16.msra.mxu0 %v4424
  %4446 = vmatpush.bf16.msra.mxu0 %v4423
  %4447 = vmatmul.bf16.gmra.mxu0 %v4370
  %v4448 = vpop.f32.mrf.mxu0
  %v4449 = vadd.f32 %v4389, %v4448
  %v4450 = vpop.f32.mrf.mxu0
  %v4451 = vadd.f32 %v4389, %v4450
  %4452 = vdwg.mxu0
  %v4453 = vld [vmem:[%s125] sm:$0xf]
  %v4454 = vld [vmem:[%s125 + $0x4] sm:$0xf]
  %v4455 = vld [vmem:[%s125 + $0x8] sm:$0xf]
  %v4456 = vld [vmem:[%s125 + $0xc] sm:$0xf]
  %v4457 = vld [vmem:[%s125 + $0x10] sm:$0xf]
  %v4458 = vld [vmem:[%s125 + $0x14] sm:$0xf]
  %v4459 = vld [vmem:[%s125 + $0x18] sm:$0xf]
  %v4460 = vld [vmem:[%s125 + $0x1c] sm:$0xf]
  %v4461 = vld [vmem:[%s125 + $0x20] sm:$0xf]
  %v4462 = vld [vmem:[%s125 + $0x24] sm:$0xf]
  %v4463 = vld [vmem:[%s125 + $0x28] sm:$0xf]
  %v4464 = vld [vmem:[%s125 + $0x2c] sm:$0xf]
  %v4465 = vld [vmem:[%s125 + $0x30] sm:$0xf]
  %v4466 = vld [vmem:[%s125 + $0x34] sm:$0xf]
  %v4467 = vld [vmem:[%s125 + $0x38] sm:$0xf]
  %v4468 = vld [vmem:[%s125 + $0x3c] sm:$0xf]
  %4469 = vxpose.xlu0.b32.start [1/16] %v4159, 128
  %4470 = vxpose.xlu0.b32.cont [2/16] %v4160, 128
  %4471 = vxpose.xlu0.b32.cont [3/16] 0.0, 128
  %4472 = vxpose.xlu0.b32.cont [4/16] 0.0, 128
  %4473 = vxpose.xlu0.b32.cont [5/16] 0.0, 128
  %4474 = vxpose.xlu0.b32.cont [6/16] 0.0, 128
  %4475 = vxpose.xlu0.b32.cont [7/16] 0.0, 128
  %4476 = vxpose.xlu0.b32.cont [8/16] 0.0, 128
  %4477 = vxpose.xlu0.b32.cont [9/16] 0.0, 128
  %4478 = vxpose.xlu0.b32.cont [10/16] 0.0, 128
  %4479 = vxpose.xlu0.b32.cont [11/16] 0.0, 128
  %4480 = vxpose.xlu0.b32.cont [12/16] 0.0, 128
  %4481 = vxpose.xlu0.b32.cont [13/16] 0.0, 128
  %4482 = vxpose.xlu0.b32.cont [14/16] 0.0, 128
  %4483 = vxpose.xlu0.b32.cont [15/16] 0.0, 128
  %4484 = vxpose.xlu0.b32.end [16/16] 0.0, 128
  %v4485 = vpop.trf.xlu0
  %v4486 = vpop.trf.xlu0
  %v4487 = vpop.trf.xlu0
  %v4488 = vpop.trf.xlu0
  %v4489 = vpop.trf.xlu0
  %v4490 = vpop.trf.xlu0
  %v4491 = vpop.trf.xlu0
  %v4492 = vpop.trf.xlu0
  %v4493 = vpop.trf.xlu0
  %v4494 = vpop.trf.xlu0
  %v4495 = vpop.trf.xlu0
  %v4496 = vpop.trf.xlu0
  %v4497 = vpop.trf.xlu0
  %v4498 = vpop.trf.xlu0
  %v4499 = vpop.trf.xlu0
  %v4500 = vpop.trf.xlu0
  %v4501 = vpack.c.bf16 %v4486, %v4485
  %v4502 = vpack.c.bf16 %v4488, %v4487
  %v4503 = vpack.c.bf16 %v4490, %v4489
  %v4504 = vpack.c.bf16 %v4492, %v4491
  %v4505 = vpack.c.bf16 %v4494, %v4493
  %v4506 = vpack.c.bf16 %v4496, %v4495
  %v4507 = vpack.c.bf16 %v4498, %v4497
  %v4508 = vpack.c.bf16 %v4500, %v4499
  %v4509 = vld [vmem:[%s127] sm:$0xff]
  %v4510 = vld [vmem:[%s127 + $0x8] sm:$0xff]
  %v4511 = vld [vmem:[%s127 + $0x10] sm:$0xff]
  %v4512 = vld [vmem:[%s127 + $0x18] sm:$0xff]
  %v4513 = vld [vmem:[%s127 + $0x20] sm:$0xff]
  %v4514 = vld [vmem:[%s127 + $0x28] sm:$0xff]
  %v4515 = vld [vmem:[%s127 + $0x30] sm:$0xff]
  %v4516 = vld [vmem:[%s127 + $0x38] sm:$0xff]
  %v4517 = vld [vmem:[%s127 + $0x40] sm:$0xff]
  %v4518 = vld [vmem:[%s127 + $0x48] sm:$0xff]
  %v4519 = vld [vmem:[%s127 + $0x50] sm:$0xff]
  %v4520 = vld [vmem:[%s127 + $0x58] sm:$0xff]
  %v4521 = vld [vmem:[%s127 + $0x60] sm:$0xff]
  %v4522 = vld [vmem:[%s127 + $0x68] sm:$0xff]
  %v4523 = vld [vmem:[%s127 + $0x70] sm:$0xff]
  %v4524 = vld [vmem:[%s127 + $0x78] sm:$0xff]
  %4526 = vset.pattern.permute.xlu0 0
  %4527 = vperm.xlu0 %4526, %v4509
  %v4528 = vpop.permute.xlu0 %4527
  %4531 = vset.pattern.permute.xlu0 0
  %4532 = vperm.xlu0 %4531, %v4510
  %v4533 = vpop.permute.xlu0 %4532
  %4536 = vset.pattern.permute.xlu0 0
  %4537 = vperm.xlu0 %4536, %v4511
  %v4538 = vpop.permute.xlu0 %4537
  %4541 = vset.pattern.permute.xlu0 0
  %4542 = vperm.xlu0 %4541, %v4512
  %v4543 = vpop.permute.xlu0 %4542
  %4546 = vset.pattern.permute.xlu0 0
  %4547 = vperm.xlu0 %4546, %v4513
  %v4548 = vpop.permute.xlu0 %4547
  %4551 = vset.pattern.permute.xlu0 0
  %4552 = vperm.xlu0 %4551, %v4514
  %v4553 = vpop.permute.xlu0 %4552
  %4556 = vset.pattern.permute.xlu0 0
  %4557 = vperm.xlu0 %4556, %v4515
  %v4558 = vpop.permute.xlu0 %4557
  %4561 = vset.pattern.permute.xlu0 0
  %4562 = vperm.xlu0 %4561, %v4516
  %v4563 = vpop.permute.xlu0 %4562
  %4566 = vset.pattern.permute.xlu0 0
  %4567 = vperm.xlu0 %4566, %v4517
  %v4568 = vpop.permute.xlu0 %4567
  %4571 = vset.pattern.permute.xlu0 0
  %4572 = vperm.xlu0 %4571, %v4518
  %v4573 = vpop.permute.xlu0 %4572
  %4576 = vset.pattern.permute.xlu0 0
  %4577 = vperm.xlu0 %4576, %v4519
  %v4578 = vpop.permute.xlu0 %4577
  %4581 = vset.pattern.permute.xlu0 0
  %4582 = vperm.xlu0 %4581, %v4520
  %v4583 = vpop.permute.xlu0 %4582
  %4586 = vset.pattern.permute.xlu0 0
  %4587 = vperm.xlu0 %4586, %v4521
  %v4588 = vpop.permute.xlu0 %4587
  %4591 = vset.pattern.permute.xlu0 0
  %4592 = vperm.xlu0 %4591, %v4522
  %v4593 = vpop.permute.xlu0 %4592
  %4596 = vset.pattern.permute.xlu0 0
  %4597 = vperm.xlu0 %4596, %v4523
  %v4598 = vpop.permute.xlu0 %4597
  %4601 = vset.pattern.permute.xlu0 0
  %4602 = vperm.xlu0 %4601, %v4524
  %v4603 = vpop.permute.xlu0 %4602
  %v4621 = vunpack.c.l.b16 %v4453
  %v4622 = vunpack.c.l.b16 %v4454
  %v4623 = vunpack.c.l.b16 %v4455
  %v4624 = vunpack.c.l.b16 %v4456
  %v4625 = vunpack.c.l.b16 %v4457
  %v4626 = vunpack.c.l.b16 %v4458
  %v4627 = vunpack.c.l.b16 %v4459
  %v4628 = vunpack.c.l.b16 %v4460
  %v4629 = vunpack.c.l.b16 %v4461
  %v4630 = vunpack.c.l.b16 %v4462
  %v4631 = vunpack.c.l.b16 %v4463
  %v4632 = vunpack.c.l.b16 %v4464
  %v4633 = vunpack.c.l.b16 %v4465
  %v4634 = vunpack.c.l.b16 %v4466
  %v4635 = vunpack.c.l.b16 %v4467
  %v4636 = vunpack.c.l.b16 %v4468
  %v4637 = vpack.c.b16 %v4622, %v4621
  %v4638 = vpack.c.b16 %v4624, %v4623
  %v4639 = vpack.c.b16 %v4626, %v4625
  %v4640 = vpack.c.b16 %v4628, %v4627
  %v4641 = vpack.c.b16 %v4630, %v4629
  %v4642 = vpack.c.b16 %v4632, %v4631
  %v4643 = vpack.c.b16 %v4634, %v4633
  %v4644 = vpack.c.b16 %v4636, %v4635
  %4653 = vmatpush.bf16.msra.mxu0 %v4508
  %4654 = vmatpush.bf16.msra.mxu0 %v4507
  %4655 = vmatpush.bf16.msra.mxu0 %v4506
  %4656 = vmatpush.bf16.msra.mxu0 %v4505
  %4657 = vmatpush.bf16.msra.mxu0 %v4504
  %4658 = vmatpush.bf16.msra.mxu0 %v4503
  %4659 = vmatpush.bf16.msra.mxu0 %v4502
  %4660 = vmatpush.bf16.msra.mxu0 %v4501
  %4661 = vmatmul.bf16.gmra.mxu0 %v4637
  %v4662 = vpop.f32.mrf.mxu0
  %v4663 = vadd.f32 %v4528, %v4662
  %v4664 = vpop.f32.mrf.mxu0
  %v4665 = vadd.f32 %v4533, %v4664
  %4666 = vmatmul.bf16.gmra.mxu0 %v4638
  %v4667 = vpop.f32.mrf.mxu0
  %v4668 = vadd.f32 %v4538, %v4667
  %v4669 = vpop.f32.mrf.mxu0
  %v4670 = vadd.f32 %v4543, %v4669
  %4671 = vmatmul.bf16.gmra.mxu0 %v4639
  %v4672 = vpop.f32.mrf.mxu0
  %v4673 = vadd.f32 %v4548, %v4672
  %v4674 = vpop.f32.mrf.mxu0
  %v4675 = vadd.f32 %v4553, %v4674
  %4676 = vmatmul.bf16.gmra.mxu0 %v4640
  %v4677 = vpop.f32.mrf.mxu0
  %v4678 = vadd.f32 %v4558, %v4677
  %v4679 = vpop.f32.mrf.mxu0
  %v4680 = vadd.f32 %v4563, %v4679
  %4681 = vmatmul.bf16.gmra.mxu0 %v4641
  %v4682 = vpop.f32.mrf.mxu0
  %v4683 = vadd.f32 %v4568, %v4682
  %v4684 = vpop.f32.mrf.mxu0
  %v4685 = vadd.f32 %v4573, %v4684
  %4686 = vmatmul.bf16.gmra.mxu0 %v4642
  %v4687 = vpop.f32.mrf.mxu0
  %v4688 = vadd.f32 %v4578, %v4687
  %v4689 = vpop.f32.mrf.mxu0
  %v4690 = vadd.f32 %v4583, %v4689
  %4691 = vmatmul.bf16.gmra.mxu0 %v4643
  %v4692 = vpop.f32.mrf.mxu0
  %v4693 = vadd.f32 %v4588, %v4692
  %v4694 = vpop.f32.mrf.mxu0
  %v4695 = vadd.f32 %v4593, %v4694
  %4696 = vmatmul.bf16.gmra.mxu0 %v4644
  %v4697 = vpop.f32.mrf.mxu0
  %v4698 = vadd.f32 %v4598, %v4697
  %v4699 = vpop.f32.mrf.mxu0
  %v4700 = vadd.f32 %v4603, %v4699
  %4701 = vdwg.mxu0
  %v4702 = vld [vmem:[%s97] sm:$0x1]
  %v4703 = vperm.slane %v4702, 0
  %vm4704 = vcmp.eq.s32.totalorder %v782, %v4703
  %vm4705 = vcmp.eq.s32.totalorder %v785, %v4703
  %v4706 = vsel %vm4704, 0.0, -1e+30
  %v4707 = vsel %vm4705, 0.0, -1e+30
  %v4708 = vpack.c.bf16 %v4333, %v4331
  %v4709 = vpack.c.bf16 %v4451, %v4449
  %v4711 = vsel %vm360, %v4709, 0
  %4713 = vmatpush.bf16.msra.mxu0 0
  %4714 = vmatpush.bf16.msra.mxu0 0
  %4715 = vmatpush.bf16.msra.mxu0 0
  %4716 = vmatpush.bf16.msra.mxu0 0
  %4717 = vmatpush.bf16.msra.mxu0 0
  %4718 = vmatpush.bf16.msra.mxu0 0
  %4719 = vmatpush.bf16.msra.mxu0 0
  %4720 = vmatpush.bf16.msra.mxu0 %v4708
  %4721 = vmatmul.bf16.gmra.mxu0 %v4711
  %v4722 = vpop.f32.mrf.mxu0
  %v4723 = vadd.f32 0.0, %v4722
  %v4724 = vpop.f32.mrf.mxu0
  %v4725 = vadd.f32 0.0, %v4724
  %4726 = vdwg.mxu0
  %v4727 = vmul.f32 %v4723, 0.25
  %v4728 = vmul.f32 %v4725, 0.25
  %v4729 = vadd.f32 %v4727, %v4706
  %v4730 = vadd.f32 %v4728, %v4707
  %v4731 = vsel %vm380, %v4729, -inf
  %v4732 = vsel %vm380, %v4730, -inf
  %v4733 = vmax.f32 %v4731, %v4732
  %v4734 = vrot.slane %v4733, 4
  %v4735 = vmax.f32 %v4733, %v4734
  %v4736 = vrot.slane %v4735, 2
  %v4737 = vmax.f32 %v4735, %v4736
  %v4738 = vrot.slane %v4737, 1
  %v4739 = vmax.f32 %v4737, %v4738
  %v4740 = vsub.f32 %v4729, %v4739
  %v4741 = vsub.f32 %v4730, %v4739
  %v4742 = vmul.f32 %v4740, 1.442695
  %v4743 = vpow.pop %v4742
  %v4744 = vmul.f32 %v4741, 1.442695
  %v4745 = vpow.pop %v4744
  %v4746 = vsel %vm380, %v4743, 0.0
  %v4747 = vsel %vm380, %v4745, 0.0
  %v4748 = vadd.f32 %v4746, %v4747
  %v4749 = vrot.slane %v4748, 4
  %v4750 = vadd.f32 %v4748, %v4749
  %v4751 = vrot.slane %v4750, 2
  %v4752 = vadd.f32 %v4750, %v4751
  %v4753 = vrot.slane %v4752, 1
  %v4754 = vadd.f32 %v4752, %v4753
  %v4755 = vrcp.pop %v4754
  %v4756 = vmul.f32 %v4754, %v4755
  %v4757 = vsub.f32 1.0, %v4756
  %v4758 = vmul.f32 %v4755, %v4757
  %v4759 = vadd.f32 %v4755, %v4758
  %vm4760 = vweird.f32 %v4754
  %vm4761 = vweird.f32 %v4755
  %vm4762 = vmor %vm4760, %vm4761
  %v4763 = vsel %vm4762, %v4755, %v4759
  %v4764 = vand.u32 2147483647, %v4754
  %vm4765 = vcmp.eq.f32.partialorder %v4764, 8.507059e+37
  %v4766 = vand.u32 %v4754, 2147483648
  %v4767 = vor.u32 1.1754944e-38, %v4766
  %v4768 = vsel %vm4765, %v4767, %v4763
  %v4769 = vmul.f32 %v4743, %v4768
  %v4770 = vmul.f32 %v4745, %v4768
  %v4771 = vpack.c.bf16 %v4665, %v4663
  %v4772 = vpack.c.bf16 %v4770, %v4769
  %v4774 = vsel %vm360, %v4771, 0
  %4776 = vmatpush.bf16.msra.mxu0 0
  %4777 = vmatpush.bf16.msra.mxu0 0
  %4778 = vmatpush.bf16.msra.mxu0 0
  %4779 = vmatpush.bf16.msra.mxu0 0
  %4780 = vmatpush.bf16.msra.mxu0 0
  %4781 = vmatpush.bf16.msra.mxu0 0
  %4782 = vmatpush.bf16.msra.mxu0 0
  %4783 = vmatpush.bf16.msra.mxu0 %v4772
  %4784 = vmatmul.bf16.gmra.mxu0 %v4774
  %v4785 = vpop.f32.mrf.mxu0
  %v4786 = vadd.f32 0.0, %v4785
  %v4787 = vpop.f32.mrf.mxu0
  %v4788 = vadd.f32 0.0, %v4787
  %4789 = vdwg.mxu0
  %4790 = vst.msk [vmem:[#allocation4] sm:$0xff] %vm380, %v4786
  %4791 = vst.msk [vmem:[#allocation4 + $0x8] sm:$0xff] %vm380, %v4788
  %v4792 = vpack.c.bf16 %v4338, %v4336
  %4794 = vrot.lane.b32.xlu0 %v4709, 112
  %v4795 = vpop.permute.xlu0 %4794
  %v4797 = vsel %vm360, %v4795, 0
  %4799 = vmatpush.bf16.msra.mxu0 0
  %4800 = vmatpush.bf16.msra.mxu0 0
  %4801 = vmatpush.bf16.msra.mxu0 0
  %4802 = vmatpush.bf16.msra.mxu0 0
  %4803 = vmatpush.bf16.msra.mxu0 0
  %4804 = vmatpush.bf16.msra.mxu0 0
  %4805 = vmatpush.bf16.msra.mxu0 0
  %4806 = vmatpush.bf16.msra.mxu0 %v4792
  %4807 = vmatmul.bf16.gmra.mxu0 %v4797
  %v4808 = vpop.f32.mrf.mxu0
  %v4809 = vadd.f32 0.0, %v4808
  %v4810 = vpop.f32.mrf.mxu0
  %v4811 = vadd.f32 0.0, %v4810
  %4812 = vdwg.mxu0
  %v4813 = vmul.f32 %v4809, 0.25
  %v4814 = vmul.f32 %v4811, 0.25
  %v4815 = vadd.f32 %v4813, %v4706
  %v4816 = vadd.f32 %v4814, %v4707
  %v4817 = vsel %vm380, %v4815, -inf
  %v4818 = vsel %vm380, %v4816, -inf
  %v4819 = vmax.f32 %v4817, %v4818
  %v4820 = vrot.slane %v4819, 4
  %v4821 = vmax.f32 %v4819, %v4820
  %v4822 = vrot.slane %v4821, 2
  %v4823 = vmax.f32 %v4821, %v4822
  %v4824 = vrot.slane %v4823, 1
  %v4825 = vmax.f32 %v4823, %v4824
  %v4826 = vsub.f32 %v4815, %v4825
  %v4827 = vsub.f32 %v4816, %v4825
  %v4828 = vmul.f32 %v4826, 1.442695
  %v4829 = vpow.pop %v4828
  %v4830 = vmul.f32 %v4827, 1.442695
  %v4831 = vpow.pop %v4830
  %v4832 = vsel %vm380, %v4829, 0.0
  %v4833 = vsel %vm380, %v4831, 0.0
  %v4834 = vadd.f32 %v4832, %v4833
  %v4835 = vrot.slane %v4834, 4
  %v4836 = vadd.f32 %v4834, %v4835
  %v4837 = vrot.slane %v4836, 2
  %v4838 = vadd.f32 %v4836, %v4837
  %v4839 = vrot.slane %v4838, 1
  %v4840 = vadd.f32 %v4838, %v4839
  %v4841 = vrcp.pop %v4840
  %v4842 = vmul.f32 %v4840, %v4841
  %v4843 = vsub.f32 1.0, %v4842
  %v4844 = vmul.f32 %v4841, %v4843
  %v4845 = vadd.f32 %v4841, %v4844
  %vm4846 = vweird.f32 %v4840
  %vm4847 = vweird.f32 %v4841
  %vm4848 = vmor %vm4846, %vm4847
  %v4849 = vsel %vm4848, %v4841, %v4845
  %v4850 = vand.u32 2147483647, %v4840
  %vm4851 = vcmp.eq.f32.partialorder %v4850, 8.507059e+37
  %v4852 = vand.u32 %v4840, 2147483648
  %v4853 = vor.u32 1.1754944e-38, %v4852
  %v4854 = vsel %vm4851, %v4853, %v4849
  %v4855 = vmul.f32 %v4829, %v4854
  %v4856 = vmul.f32 %v4831, %v4854
  %v4857 = vpack.c.bf16 %v4670, %v4668
  %v4858 = vpack.c.bf16 %v4856, %v4855
  %v4860 = vsel %vm360, %v4857, 0
  %4862 = vmatpush.bf16.msra.mxu0 0
  %4863 = vmatpush.bf16.msra.mxu0 0
  %4864 = vmatpush.bf16.msra.mxu0 0
  %4865 = vmatpush.bf16.msra.mxu0 0
  %4866 = vmatpush.bf16.msra.mxu0 0
  %4867 = vmatpush.bf16.msra.mxu0 0
  %4868 = vmatpush.bf16.msra.mxu0 0
  %4869 = vmatpush.bf16.msra.mxu0 %v4858
  %4870 = vmatmul.bf16.gmra.mxu0 %v4860
  %v4871 = vpop.f32.mrf.mxu0
  %v4872 = vadd.f32 0.0, %v4871
  %v4873 = vpop.f32.mrf.mxu0
  %v4874 = vadd.f32 0.0, %v4873
  %4875 = vdwg.mxu0
  %4876 = vst.msk [vmem:[#allocation4 + $0x10] sm:$0xff] %vm380, %v4872
  %4877 = vst.msk [vmem:[#allocation4 + $0x18] sm:$0xff] %vm380, %v4874
  %v4878 = vpack.c.bf16 %v4343, %v4341
  %4879 = vrot.lane.b32.xlu0 %v4709, 96
  %v4880 = vpop.permute.xlu0 %4879
  %v4882 = vsel %vm360, %v4880, 0
  %4884 = vmatpush.bf16.msra.mxu0 0
  %4885 = vmatpush.bf16.msra.mxu0 0
  %4886 = vmatpush.bf16.msra.mxu0 0
  %4887 = vmatpush.bf16.msra.mxu0 0
  %4888 = vmatpush.bf16.msra.mxu0 0
  %4889 = vmatpush.bf16.msra.mxu0 0
  %4890 = vmatpush.bf16.msra.mxu0 0
  %4891 = vmatpush.bf16.msra.mxu0 %v4878
  %4892 = vmatmul.bf16.gmra.mxu0 %v4882
  %v4893 = vpop.f32.mrf.mxu0
  %v4894 = vadd.f32 0.0, %v4893
  %v4895 = vpop.f32.mrf.mxu0
  %v4896 = vadd.f32 0.0, %v4895
  %4897 = vdwg.mxu0
  %v4898 = vmul.f32 %v4894, 0.25
  %v4899 = vmul.f32 %v4896, 0.25
  %v4900 = vadd.f32 %v4898, %v4706
  %v4901 = vadd.f32 %v4899, %v4707
  %v4902 = vsel %vm380, %v4900, -inf
  %v4903 = vsel %vm380, %v4901, -inf
  %v4904 = vmax.f32 %v4902, %v4903
  %v4905 = vrot.slane %v4904, 4
  %v4906 = vmax.f32 %v4904, %v4905
  %v4907 = vrot.slane %v4906, 2
  %v4908 = vmax.f32 %v4906, %v4907
  %v4909 = vrot.slane %v4908, 1
  %v4910 = vmax.f32 %v4908, %v4909
  %v4911 = vsub.f32 %v4900, %v4910
  %v4912 = vsub.f32 %v4901, %v4910
  %v4913 = vmul.f32 %v4911, 1.442695
  %v4914 = vpow.pop %v4913
  %v4915 = vmul.f32 %v4912, 1.442695
  %v4916 = vpow.pop %v4915
  %v4917 = vsel %vm380, %v4914, 0.0
  %v4918 = vsel %vm380, %v4916, 0.0
  %v4919 = vadd.f32 %v4917, %v4918
  %v4920 = vrot.slane %v4919, 4
  %v4921 = vadd.f32 %v4919, %v4920
  %v4922 = vrot.slane %v4921, 2
  %v4923 = vadd.f32 %v4921, %v4922
  %v4924 = vrot.slane %v4923, 1
  %v4925 = vadd.f32 %v4923, %v4924
  %v4926 = vrcp.pop %v4925
  %v4927 = vmul.f32 %v4925, %v4926
  %v4928 = vsub.f32 1.0, %v4927
  %v4929 = vmul.f32 %v4926, %v4928
  %v4930 = vadd.f32 %v4926, %v4929
  %vm4931 = vweird.f32 %v4925
  %vm4932 = vweird.f32 %v4926
  %vm4933 = vmor %vm4931, %vm4932
  %v4934 = vsel %vm4933, %v4926, %v4930
  %v4935 = vand.u32 2147483647, %v4925
  %vm4936 = vcmp.eq.f32.partialorder %v4935, 8.507059e+37
  %v4937 = vand.u32 %v4925, 2147483648
  %v4938 = vor.u32 1.1754944e-38, %v4937
  %v4939 = vsel %vm4936, %v4938, %v4934
  %v4940 = vmul.f32 %v4914, %v4939
  %v4941 = vmul.f32 %v4916, %v4939
  %v4942 = vpack.c.bf16 %v4675, %v4673
  %v4943 = vpack.c.bf16 %v4941, %v4940
  %v4945 = vsel %vm360, %v4942, 0
  %4947 = vmatpush.bf16.msra.mxu0 0
  %4948 = vmatpush.bf16.msra.mxu0 0
  %4949 = vmatpush.bf16.msra.mxu0 0
  %4950 = vmatpush.bf16.msra.mxu0 0
  %4951 = vmatpush.bf16.msra.mxu0 0
  %4952 = vmatpush.bf16.msra.mxu0 0
  %4953 = vmatpush.bf16.msra.mxu0 0
  %4954 = vmatpush.bf16.msra.mxu0 %v4943
  %4955 = vmatmul.bf16.gmra.mxu0 %v4945
  %v4956 = vpop.f32.mrf.mxu0
  %v4957 = vadd.f32 0.0, %v4956
  %v4958 = vpop.f32.mrf.mxu0
  %v4959 = vadd.f32 0.0, %v4958
  %4960 = vdwg.mxu0
  %4961 = vst.msk [vmem:[#allocation4 + $0x20] sm:$0xff] %vm380, %v4957
  %4962 = vst.msk [vmem:[#allocation4 + $0x28] sm:$0xff] %vm380, %v4959
  %v4963 = vpack.c.bf16 %v4348, %v4346
  %4964 = vrot.lane.b32.xlu0 %v4709, 80
  %v4965 = vpop.permute.xlu0 %4964
  %v4967 = vsel %vm360, %v4965, 0
  %4969 = vmatpush.bf16.msra.mxu0 0
  %4970 = vmatpush.bf16.msra.mxu0 0
  %4971 = vmatpush.bf16.msra.mxu0 0
  %4972 = vmatpush.bf16.msra.mxu0 0
  %4973 = vmatpush.bf16.msra.mxu0 0
  %4974 = vmatpush.bf16.msra.mxu0 0
  %4975 = vmatpush.bf16.msra.mxu0 0
  %4976 = vmatpush.bf16.msra.mxu0 %v4963
  %4977 = vmatmul.bf16.gmra.mxu0 %v4967
  %v4978 = vpop.f32.mrf.mxu0
  %v4979 = vadd.f32 0.0, %v4978
  %v4980 = vpop.f32.mrf.mxu0
  %v4981 = vadd.f32 0.0, %v4980
  %4982 = vdwg.mxu0
  %v4983 = vmul.f32 %v4979, 0.25
  %v4984 = vmul.f32 %v4981, 0.25
  %v4985 = vadd.f32 %v4983, %v4706
  %v4986 = vadd.f32 %v4984, %v4707
  %v4987 = vsel %vm380, %v4985, -inf
  %v4988 = vsel %vm380, %v4986, -inf
  %v4989 = vmax.f32 %v4987, %v4988
  %v4990 = vrot.slane %v4989, 4
  %v4991 = vmax.f32 %v4989, %v4990
  %v4992 = vrot.slane %v4991, 2
  %v4993 = vmax.f32 %v4991, %v4992
  %v4994 = vrot.slane %v4993, 1
  %v4995 = vmax.f32 %v4993, %v4994
  %v4996 = vsub.f32 %v4985, %v4995
  %v4997 = vsub.f32 %v4986, %v4995
  %v4998 = vmul.f32 %v4996, 1.442695
  %v4999 = vpow.pop %v4998
  %v5000 = vmul.f32 %v4997, 1.442695
  %v5001 = vpow.pop %v5000
  %v5002 = vsel %vm380, %v4999, 0.0
  %v5003 = vsel %vm380, %v5001, 0.0
  %v5004 = vadd.f32 %v5002, %v5003
  %v5005 = vrot.slane %v5004, 4
  %v5006 = vadd.f32 %v5004, %v5005
  %v5007 = vrot.slane %v5006, 2
  %v5008 = vadd.f32 %v5006, %v5007
  %v5009 = vrot.slane %v5008, 1
  %v5010 = vadd.f32 %v5008, %v5009
  %v5011 = vrcp.pop %v5010
  %v5012 = vmul.f32 %v5010, %v5011
  %v5013 = vsub.f32 1.0, %v5012
  %v5014 = vmul.f32 %v5011, %v5013
  %v5015 = vadd.f32 %v5011, %v5014
  %vm5016 = vweird.f32 %v5010
  %vm5017 = vweird.f32 %v5011
  %vm5018 = vmor %vm5016, %vm5017
  %v5019 = vsel %vm5018, %v5011, %v5015
  %v5020 = vand.u32 2147483647, %v5010
  %vm5021 = vcmp.eq.f32.partialorder %v5020, 8.507059e+37
  %v5022 = vand.u32 %v5010, 2147483648
  %v5023 = vor.u32 1.1754944e-38, %v5022
  %v5024 = vsel %vm5021, %v5023, %v5019
  %v5025 = vmul.f32 %v4999, %v5024
  %v5026 = vmul.f32 %v5001, %v5024
  %v5027 = vpack.c.bf16 %v4680, %v4678
  %v5028 = vpack.c.bf16 %v5026, %v5025
  %v5030 = vsel %vm360, %v5027, 0
  %5032 = vmatpush.bf16.msra.mxu0 0
  %5033 = vmatpush.bf16.msra.mxu0 0
  %5034 = vmatpush.bf16.msra.mxu0 0
  %5035 = vmatpush.bf16.msra.mxu0 0
  %5036 = vmatpush.bf16.msra.mxu0 0
  %5037 = vmatpush.bf16.msra.mxu0 0
  %5038 = vmatpush.bf16.msra.mxu0 0
  %5039 = vmatpush.bf16.msra.mxu0 %v5028
  %5040 = vmatmul.bf16.gmra.mxu0 %v5030
  %v5041 = vpop.f32.mrf.mxu0
  %v5042 = vadd.f32 0.0, %v5041
  %v5043 = vpop.f32.mrf.mxu0
  %v5044 = vadd.f32 0.0, %v5043
  %5045 = vdwg.mxu0
  %5046 = vst.msk [vmem:[#allocation4 + $0x30] sm:$0xff] %vm380, %v5042
  %5047 = vst.msk [vmem:[#allocation4 + $0x38] sm:$0xff] %vm380, %v5044
  %v5048 = vpack.c.bf16 %v4353, %v4351
  %5049 = vrot.lane.b32.xlu0 %v4709, 64
  %v5050 = vpop.permute.xlu0 %5049
  %v5052 = vsel %vm360, %v5050, 0
  %5054 = vmatpush.bf16.msra.mxu0 0
  %5055 = vmatpush.bf16.msra.mxu0 0
  %5056 = vmatpush.bf16.msra.mxu0 0
  %5057 = vmatpush.bf16.msra.mxu0 0
  %5058 = vmatpush.bf16.msra.mxu0 0
  %5059 = vmatpush.bf16.msra.mxu0 0
  %5060 = vmatpush.bf16.msra.mxu0 0
  %5061 = vmatpush.bf16.msra.mxu0 %v5048
  %5062 = vmatmul.bf16.gmra.mxu0 %v5052
  %v5063 = vpop.f32.mrf.mxu0
  %v5064 = vadd.f32 0.0, %v5063
  %v5065 = vpop.f32.mrf.mxu0
  %v5066 = vadd.f32 0.0, %v5065
  %5067 = vdwg.mxu0
  %v5068 = vmul.f32 %v5064, 0.25
  %v5069 = vmul.f32 %v5066, 0.25
  %v5070 = vadd.f32 %v5068, %v4706
  %v5071 = vadd.f32 %v5069, %v4707
  %v5072 = vsel %vm380, %v5070, -inf
  %v5073 = vsel %vm380, %v5071, -inf
  %v5074 = vmax.f32 %v5072, %v5073
  %v5075 = vrot.slane %v5074, 4
  %v5076 = vmax.f32 %v5074, %v5075
  %v5077 = vrot.slane %v5076, 2
  %v5078 = vmax.f32 %v5076, %v5077
  %v5079 = vrot.slane %v5078, 1
  %v5080 = vmax.f32 %v5078, %v5079
  %v5081 = vsub.f32 %v5070, %v5080
  %v5082 = vsub.f32 %v5071, %v5080
  %v5083 = vmul.f32 %v5081, 1.442695
  %v5084 = vpow.pop %v5083
  %v5085 = vmul.f32 %v5082, 1.442695
  %v5086 = vpow.pop %v5085
  %v5087 = vsel %vm380, %v5084, 0.0
  %v5088 = vsel %vm380, %v5086, 0.0
  %v5089 = vadd.f32 %v5087, %v5088
  %v5090 = vrot.slane %v5089, 4
  %v5091 = vadd.f32 %v5089, %v5090
  %v5092 = vrot.slane %v5091, 2
  %v5093 = vadd.f32 %v5091, %v5092
  %v5094 = vrot.slane %v5093, 1
  %v5095 = vadd.f32 %v5093, %v5094
  %v5096 = vrcp.pop %v5095
  %v5097 = vmul.f32 %v5095, %v5096
  %v5098 = vsub.f32 1.0, %v5097
  %v5099 = vmul.f32 %v5096, %v5098
  %v5100 = vadd.f32 %v5096, %v5099
  %vm5101 = vweird.f32 %v5095
  %vm5102 = vweird.f32 %v5096
  %vm5103 = vmor %vm5101, %vm5102
  %v5104 = vsel %vm5103, %v5096, %v5100
  %v5105 = vand.u32 2147483647, %v5095
  %vm5106 = vcmp.eq.f32.partialorder %v5105, 8.507059e+37
  %v5107 = vand.u32 %v5095, 2147483648
  %v5108 = vor.u32 1.1754944e-38, %v5107
  %v5109 = vsel %vm5106, %v5108, %v5104
  %v5110 = vmul.f32 %v5084, %v5109
  %v5111 = vmul.f32 %v5086, %v5109
  %v5112 = vpack.c.bf16 %v4685, %v4683
  %v5113 = vpack.c.bf16 %v5111, %v5110
  %v5115 = vsel %vm360, %v5112, 0
  %5117 = vmatpush.bf16.msra.mxu0 0
  %5118 = vmatpush.bf16.msra.mxu0 0
  %5119 = vmatpush.bf16.msra.mxu0 0
  %5120 = vmatpush.bf16.msra.mxu0 0
  %5121 = vmatpush.bf16.msra.mxu0 0
  %5122 = vmatpush.bf16.msra.mxu0 0
  %5123 = vmatpush.bf16.msra.mxu0 0
  %5124 = vmatpush.bf16.msra.mxu0 %v5113
  %5125 = vmatmul.bf16.gmra.mxu0 %v5115
  %v5126 = vpop.f32.mrf.mxu0
  %v5127 = vadd.f32 0.0, %v5126
  %v5128 = vpop.f32.mrf.mxu0
  %v5129 = vadd.f32 0.0, %v5128
  %5130 = vdwg.mxu0
  %5131 = vst.msk [vmem:[#allocation4 + $0x40] sm:$0xff] %vm380, %v5127
  %5132 = vst.msk [vmem:[#allocation4 + $0x48] sm:$0xff] %vm380, %v5129
  %v5133 = vpack.c.bf16 %v4358, %v4356
  %5134 = vrot.lane.b32.xlu0 %v4709, 48
  %v5135 = vpop.permute.xlu0 %5134
  %v5137 = vsel %vm360, %v5135, 0
  %5139 = vmatpush.bf16.msra.mxu0 0
  %5140 = vmatpush.bf16.msra.mxu0 0
  %5141 = vmatpush.bf16.msra.mxu0 0
  %5142 = vmatpush.bf16.msra.mxu0 0
  %5143 = vmatpush.bf16.msra.mxu0 0
  %5144 = vmatpush.bf16.msra.mxu0 0
  %5145 = vmatpush.bf16.msra.mxu0 0
  %5146 = vmatpush.bf16.msra.mxu0 %v5133
  %5147 = vmatmul.bf16.gmra.mxu0 %v5137
  %v5148 = vpop.f32.mrf.mxu0
  %v5149 = vadd.f32 0.0, %v5148
  %v5150 = vpop.f32.mrf.mxu0
  %v5151 = vadd.f32 0.0, %v5150
  %5152 = vdwg.mxu0
  %v5153 = vmul.f32 %v5149, 0.25
  %v5154 = vmul.f32 %v5151, 0.25
  %v5155 = vadd.f32 %v5153, %v4706
  %v5156 = vadd.f32 %v5154, %v4707
  %v5157 = vsel %vm380, %v5155, -inf
  %v5158 = vsel %vm380, %v5156, -inf
  %v5159 = vmax.f32 %v5157, %v5158
  %v5160 = vrot.slane %v5159, 4
  %v5161 = vmax.f32 %v5159, %v5160
  %v5162 = vrot.slane %v5161, 2
  %v5163 = vmax.f32 %v5161, %v5162
  %v5164 = vrot.slane %v5163, 1
  %v5165 = vmax.f32 %v5163, %v5164
  %v5166 = vsub.f32 %v5155, %v5165
  %v5167 = vsub.f32 %v5156, %v5165
  %v5168 = vmul.f32 %v5166, 1.442695
  %v5169 = vpow.pop %v5168
  %v5170 = vmul.f32 %v5167, 1.442695
  %v5171 = vpow.pop %v5170
  %v5172 = vsel %vm380, %v5169, 0.0
  %v5173 = vsel %vm380, %v5171, 0.0
  %v5174 = vadd.f32 %v5172, %v5173
  %v5175 = vrot.slane %v5174, 4
  %v5176 = vadd.f32 %v5174, %v5175
  %v5177 = vrot.slane %v5176, 2
  %v5178 = vadd.f32 %v5176, %v5177
  %v5179 = vrot.slane %v5178, 1
  %v5180 = vadd.f32 %v5178, %v5179
  %v5181 = vrcp.pop %v5180
  %v5182 = vmul.f32 %v5180, %v5181
  %v5183 = vsub.f32 1.0, %v5182
  %v5184 = vmul.f32 %v5181, %v5183
  %v5185 = vadd.f32 %v5181, %v5184
  %vm5186 = vweird.f32 %v5180
  %vm5187 = vweird.f32 %v5181
  %vm5188 = vmor %vm5186, %vm5187
  %v5189 = vsel %vm5188, %v5181, %v5185
  %v5190 = vand.u32 2147483647, %v5180
  %vm5191 = vcmp.eq.f32.partialorder %v5190, 8.507059e+37
  %v5192 = vand.u32 %v5180, 2147483648
  %v5193 = vor.u32 1.1754944e-38, %v5192
  %v5194 = vsel %vm5191, %v5193, %v5189
  %v5195 = vmul.f32 %v5169, %v5194
  %v5196 = vmul.f32 %v5171, %v5194
  %v5197 = vpack.c.bf16 %v4690, %v4688
  %v5198 = vpack.c.bf16 %v5196, %v5195
  %v5200 = vsel %vm360, %v5197, 0
  %5202 = vmatpush.bf16.msra.mxu0 0
  %5203 = vmatpush.bf16.msra.mxu0 0
  %5204 = vmatpush.bf16.msra.mxu0 0
  %5205 = vmatpush.bf16.msra.mxu0 0
  %5206 = vmatpush.bf16.msra.mxu0 0
  %5207 = vmatpush.bf16.msra.mxu0 0
  %5208 = vmatpush.bf16.msra.mxu0 0
  %5209 = vmatpush.bf16.msra.mxu0 %v5198
  %5210 = vmatmul.bf16.gmra.mxu0 %v5200
  %v5211 = vpop.f32.mrf.mxu0
  %v5212 = vadd.f32 0.0, %v5211
  %v5213 = vpop.f32.mrf.mxu0
  %v5214 = vadd.f32 0.0, %v5213
  %5215 = vdwg.mxu0
  %5216 = vst.msk [vmem:[#allocation4 + $0x50] sm:$0xff] %vm380, %v5212
  %5217 = vst.msk [vmem:[#allocation4 + $0x58] sm:$0xff] %vm380, %v5214
  %v5218 = vpack.c.bf16 %v4363, %v4361
  %5219 = vrot.lane.b32.xlu0 %v4709, 32
  %v5220 = vpop.permute.xlu0 %5219
  %v5222 = vsel %vm360, %v5220, 0
  %5224 = vmatpush.bf16.msra.mxu0 0
  %5225 = vmatpush.bf16.msra.mxu0 0
  %5226 = vmatpush.bf16.msra.mxu0 0
  %5227 = vmatpush.bf16.msra.mxu0 0
  %5228 = vmatpush.bf16.msra.mxu0 0
  %5229 = vmatpush.bf16.msra.mxu0 0
  %5230 = vmatpush.bf16.msra.mxu0 0
  %5231 = vmatpush.bf16.msra.mxu0 %v5218
  %5232 = vmatmul.bf16.gmra.mxu0 %v5222
  %v5233 = vpop.f32.mrf.mxu0
  %v5234 = vadd.f32 0.0, %v5233
  %v5235 = vpop.f32.mrf.mxu0
  %v5236 = vadd.f32 0.0, %v5235
  %5237 = vdwg.mxu0
  %v5238 = vmul.f32 %v5234, 0.25
  %v5239 = vmul.f32 %v5236, 0.25
  %v5240 = vadd.f32 %v5238, %v4706
  %v5241 = vadd.f32 %v5239, %v4707
  %v5242 = vsel %vm380, %v5240, -inf
  %v5243 = vsel %vm380, %v5241, -inf
  %v5244 = vmax.f32 %v5242, %v5243
  %v5245 = vrot.slane %v5244, 4
  %v5246 = vmax.f32 %v5244, %v5245
  %v5247 = vrot.slane %v5246, 2
  %v5248 = vmax.f32 %v5246, %v5247
  %v5249 = vrot.slane %v5248, 1
  %v5250 = vmax.f32 %v5248, %v5249
  %v5251 = vsub.f32 %v5240, %v5250
  %v5252 = vsub.f32 %v5241, %v5250
  %v5253 = vmul.f32 %v5251, 1.442695
  %v5254 = vpow.pop %v5253
  %v5255 = vmul.f32 %v5252, 1.442695
  %v5256 = vpow.pop %v5255
  %v5257 = vsel %vm380, %v5254, 0.0
  %v5258 = vsel %vm380, %v5256, 0.0
  %v5259 = vadd.f32 %v5257, %v5258
  %v5260 = vrot.slane %v5259, 4
  %v5261 = vadd.f32 %v5259, %v5260
  %v5262 = vrot.slane %v5261, 2
  %v5263 = vadd.f32 %v5261, %v5262
  %v5264 = vrot.slane %v5263, 1
  %v5265 = vadd.f32 %v5263, %v5264
  %v5266 = vrcp.pop %v5265
  %v5267 = vmul.f32 %v5265, %v5266
  %v5268 = vsub.f32 1.0, %v5267
  %v5269 = vmul.f32 %v5266, %v5268
  %v5270 = vadd.f32 %v5266, %v5269
  %vm5271 = vweird.f32 %v5265
  %vm5272 = vweird.f32 %v5266
  %vm5273 = vmor %vm5271, %vm5272
  %v5274 = vsel %vm5273, %v5266, %v5270
  %v5275 = vand.u32 2147483647, %v5265
  %vm5276 = vcmp.eq.f32.partialorder %v5275, 8.507059e+37
  %v5277 = vand.u32 %v5265, 2147483648
  %v5278 = vor.u32 1.1754944e-38, %v5277
  %v5279 = vsel %vm5276, %v5278, %v5274
  %v5280 = vmul.f32 %v5254, %v5279
  %v5281 = vmul.f32 %v5256, %v5279
  %v5282 = vpack.c.bf16 %v4695, %v4693
  %v5283 = vpack.c.bf16 %v5281, %v5280
  %v5285 = vsel %vm360, %v5282, 0
  %5287 = vmatpush.bf16.msra.mxu0 0
  %5288 = vmatpush.bf16.msra.mxu0 0
  %5289 = vmatpush.bf16.msra.mxu0 0
  %5290 = vmatpush.bf16.msra.mxu0 0
  %5291 = vmatpush.bf16.msra.mxu0 0
  %5292 = vmatpush.bf16.msra.mxu0 0
  %5293 = vmatpush.bf16.msra.mxu0 0
  %5294 = vmatpush.bf16.msra.mxu0 %v5283
  %5295 = vmatmul.bf16.gmra.mxu0 %v5285
  %v5296 = vpop.f32.mrf.mxu0
  %v5297 = vadd.f32 0.0, %v5296
  %v5298 = vpop.f32.mrf.mxu0
  %v5299 = vadd.f32 0.0, %v5298
  %5300 = vdwg.mxu0
  %5301 = vst.msk [vmem:[#allocation4 + $0x60] sm:$0xff] %vm380, %v5297
  %5302 = vst.msk [vmem:[#allocation4 + $0x68] sm:$0xff] %vm380, %v5299
  %v5303 = vpack.c.bf16 %v4368, %v4366
  %5304 = vrot.lane.b32.xlu0 %v4709, 16
  %v5305 = vpop.permute.xlu0 %5304
  %v5307 = vsel %vm360, %v5305, 0
  %5309 = vmatpush.bf16.msra.mxu0 0
  %5310 = vmatpush.bf16.msra.mxu0 0
  %5311 = vmatpush.bf16.msra.mxu0 0
  %5312 = vmatpush.bf16.msra.mxu0 0
  %5313 = vmatpush.bf16.msra.mxu0 0
  %5314 = vmatpush.bf16.msra.mxu0 0
  %5315 = vmatpush.bf16.msra.mxu0 0
  %5316 = vmatpush.bf16.msra.mxu0 %v5303
  %5317 = vmatmul.bf16.gmra.mxu0 %v5307
  %v5318 = vpop.f32.mrf.mxu0
  %v5319 = vadd.f32 0.0, %v5318
  %v5320 = vpop.f32.mrf.mxu0
  %v5321 = vadd.f32 0.0, %v5320
  %5322 = vdwg.mxu0
  %v5323 = vmul.f32 %v5319, 0.25
  %v5324 = vmul.f32 %v5321, 0.25
  %v5325 = vadd.f32 %v5323, %v4706
  %v5326 = vadd.f32 %v5324, %v4707
  %v5327 = vsel %vm380, %v5325, -inf
  %v5328 = vsel %vm380, %v5326, -inf
  %v5329 = vmax.f32 %v5327, %v5328
  %v5330 = vrot.slane %v5329, 4
  %v5331 = vmax.f32 %v5329, %v5330
  %v5332 = vrot.slane %v5331, 2
  %v5333 = vmax.f32 %v5331, %v5332
  %v5334 = vrot.slane %v5333, 1
  %v5335 = vmax.f32 %v5333, %v5334
  %v5336 = vsub.f32 %v5325, %v5335
  %v5337 = vsub.f32 %v5326, %v5335
  %v5338 = vmul.f32 %v5336, 1.442695
  %v5339 = vpow.pop %v5338
  %v5340 = vmul.f32 %v5337, 1.442695
  %v5341 = vpow.pop %v5340
  %v5342 = vsel %vm380, %v5339, 0.0
  %v5343 = vsel %vm380, %v5341, 0.0
  %v5344 = vadd.f32 %v5342, %v5343
  %v5345 = vrot.slane %v5344, 4
  %v5346 = vadd.f32 %v5344, %v5345
  %v5347 = vrot.slane %v5346, 2
  %v5348 = vadd.f32 %v5346, %v5347
  %v5349 = vrot.slane %v5348, 1
  %v5350 = vadd.f32 %v5348, %v5349
  %v5351 = vrcp.pop %v5350
  %v5352 = vmul.f32 %v5350, %v5351
  %v5353 = vsub.f32 1.0, %v5352
  %v5354 = vmul.f32 %v5351, %v5353
  %v5355 = vadd.f32 %v5351, %v5354
  %vm5356 = vweird.f32 %v5350
  %vm5357 = vweird.f32 %v5351
  %vm5358 = vmor %vm5356, %vm5357
  %v5359 = vsel %vm5358, %v5351, %v5355
  %v5360 = vand.u32 2147483647, %v5350
  %vm5361 = vcmp.eq.f32.partialorder %v5360, 8.507059e+37
  %v5362 = vand.u32 %v5350, 2147483648
  %v5363 = vor.u32 1.1754944e-38, %v5362
  %v5364 = vsel %vm5361, %v5363, %v5359
  %v5365 = vmul.f32 %v5339, %v5364
  %v5366 = vmul.f32 %v5341, %v5364
  %v5367 = vpack.c.bf16 %v4700, %v4698
  %v5368 = vpack.c.bf16 %v5366, %v5365
  %v5370 = vsel %vm360, %v5367, 0
  %5372 = vmatpush.bf16.msra.mxu0 0
  %5373 = vmatpush.bf16.msra.mxu0 0
  %5374 = vmatpush.bf16.msra.mxu0 0
  %5375 = vmatpush.bf16.msra.mxu0 0
  %5376 = vmatpush.bf16.msra.mxu0 0
  %5377 = vmatpush.bf16.msra.mxu0 0
  %5378 = vmatpush.bf16.msra.mxu0 0
  %5379 = vmatpush.bf16.msra.mxu0 %v5368
  %5380 = vmatmul.bf16.gmra.mxu0 %v5370
  %v5381 = vpop.f32.mrf.mxu0
  %v5382 = vadd.f32 0.0, %v5381
  %v5383 = vpop.f32.mrf.mxu0
  %v5384 = vadd.f32 0.0, %v5383
  %5385 = vdwg.mxu0
  %5386 = vst.msk [vmem:[#allocation4 + $0x70] sm:$0xff] %vm380, %v5382
  %5387 = vst.msk [vmem:[#allocation4 + $0x78] sm:$0xff] %vm380, %v5384
  %v5388 = vld [vmem:[%s129] sm:$0xf]
  %v5389 = vld [vmem:[%s129 + $0x4] sm:$0xf]
  %v5390 = vld [vmem:[%s129 + $0x8] sm:$0xf]
  %v5391 = vld [vmem:[%s129 + $0xc] sm:$0xf]
  %v5392 = vld [vmem:[%s129 + $0x10] sm:$0xf]
  %v5393 = vld [vmem:[%s129 + $0x14] sm:$0xf]
  %v5394 = vld [vmem:[%s129 + $0x18] sm:$0xf]
  %v5395 = vld [vmem:[%s129 + $0x1c] sm:$0xf]
  %v5396 = vld [vmem:[%s129 + $0x20] sm:$0xf]
  %v5397 = vld [vmem:[%s129 + $0x24] sm:$0xf]
  %v5398 = vld [vmem:[%s129 + $0x28] sm:$0xf]
  %v5399 = vld [vmem:[%s129 + $0x2c] sm:$0xf]
  %v5400 = vld [vmem:[%s129 + $0x30] sm:$0xf]
  %v5401 = vld [vmem:[%s129 + $0x34] sm:$0xf]
  %v5402 = vld [vmem:[%s129 + $0x38] sm:$0xf]
  %v5403 = vld [vmem:[%s129 + $0x3c] sm:$0xf]
  %v5404 = vld [vmem:[#allocation4] sm:$0xff]
  %v5405 = vld [vmem:[#allocation4 + $0x8] sm:$0xff]
  %v5406 = vld [vmem:[#allocation4 + $0x10] sm:$0xff]
  %v5407 = vld [vmem:[#allocation4 + $0x18] sm:$0xff]
  %v5408 = vld [vmem:[#allocation4 + $0x20] sm:$0xff]
  %v5409 = vld [vmem:[#allocation4 + $0x28] sm:$0xff]
  %v5410 = vld [vmem:[#allocation4 + $0x30] sm:$0xff]
  %v5411 = vld [vmem:[#allocation4 + $0x38] sm:$0xff]
  %v5412 = vld [vmem:[#allocation4 + $0x40] sm:$0xff]
  %v5413 = vld [vmem:[#allocation4 + $0x48] sm:$0xff]
  %v5414 = vld [vmem:[#allocation4 + $0x50] sm:$0xff]
  %v5415 = vld [vmem:[#allocation4 + $0x58] sm:$0xff]
  %v5416 = vld [vmem:[#allocation4 + $0x60] sm:$0xff]
  %v5417 = vld [vmem:[#allocation4 + $0x68] sm:$0xff]
  %v5418 = vld [vmem:[#allocation4 + $0x70] sm:$0xff]
  %v5419 = vld [vmem:[#allocation4 + $0x78] sm:$0xff]
  %v5420 = vpack.c.bf16 %v5405, %v5404
  %v5421 = vpack.c.bf16 %v5407, %v5406
  %v5422 = vpack.c.bf16 %v5409, %v5408
  %v5423 = vpack.c.bf16 %v5411, %v5410
  %v5424 = vpack.c.bf16 %v5413, %v5412
  %v5425 = vpack.c.bf16 %v5415, %v5414
  %v5426 = vpack.c.bf16 %v5417, %v5416
  %v5427 = vpack.c.bf16 %v5419, %v5418
  %v5428 = vld [vmem:[%s131] sm:$0xff]
  %v5429 = vld [vmem:[%s131 + $0x8] sm:$0xff]
  %v5430 = vld [vmem:[%s131 + $0x10] sm:$0xff]
  %v5431 = vld [vmem:[%s131 + $0x18] sm:$0xff]
  %v5432 = vld [vmem:[%s131 + $0x20] sm:$0xff]
  %v5433 = vld [vmem:[%s131 + $0x28] sm:$0xff]
  %v5434 = vld [vmem:[%s131 + $0x30] sm:$0xff]
  %v5435 = vld [vmem:[%s131 + $0x38] sm:$0xff]
  %v5436 = vld [vmem:[%s131 + $0x40] sm:$0xff]
  %v5437 = vld [vmem:[%s131 + $0x48] sm:$0xff]
  %v5438 = vld [vmem:[%s131 + $0x50] sm:$0xff]
  %v5439 = vld [vmem:[%s131 + $0x58] sm:$0xff]
  %v5440 = vld [vmem:[%s131 + $0x60] sm:$0xff]
  %v5441 = vld [vmem:[%s131 + $0x68] sm:$0xff]
  %v5442 = vld [vmem:[%s131 + $0x70] sm:$0xff]
  %v5443 = vld [vmem:[%s131 + $0x78] sm:$0xff]
  %5445 = vset.pattern.permute.xlu0 0
  %5446 = vperm.xlu0 %5445, %v5428
  %v5447 = vpop.permute.xlu0 %5446
  %5450 = vset.pattern.permute.xlu0 0
  %5451 = vperm.xlu0 %5450, %v5429
  %v5452 = vpop.permute.xlu0 %5451
  %5455 = vset.pattern.permute.xlu0 0
  %5456 = vperm.xlu0 %5455, %v5430
  %v5457 = vpop.permute.xlu0 %5456
  %5460 = vset.pattern.permute.xlu0 0
  %5461 = vperm.xlu0 %5460, %v5431
  %v5462 = vpop.permute.xlu0 %5461
  %5465 = vset.pattern.permute.xlu0 0
  %5466 = vperm.xlu0 %5465, %v5432
  %v5467 = vpop.permute.xlu0 %5466
  %5470 = vset.pattern.permute.xlu0 0
  %5471 = vperm.xlu0 %5470, %v5433
  %v5472 = vpop.permute.xlu0 %5471
  %5475 = vset.pattern.permute.xlu0 0
  %5476 = vperm.xlu0 %5475, %v5434
  %v5477 = vpop.permute.xlu0 %5476
  %5480 = vset.pattern.permute.xlu0 0
  %5481 = vperm.xlu0 %5480, %v5435
  %v5482 = vpop.permute.xlu0 %5481
  %5485 = vset.pattern.permute.xlu0 0
  %5486 = vperm.xlu0 %5485, %v5436
  %v5487 = vpop.permute.xlu0 %5486
  %5490 = vset.pattern.permute.xlu0 0
  %5491 = vperm.xlu0 %5490, %v5437
  %v5492 = vpop.permute.xlu0 %5491
  %5495 = vset.pattern.permute.xlu0 0
  %5496 = vperm.xlu0 %5495, %v5438
  %v5497 = vpop.permute.xlu0 %5496
  %5500 = vset.pattern.permute.xlu0 0
  %5501 = vperm.xlu0 %5500, %v5439
  %v5502 = vpop.permute.xlu0 %5501
  %5505 = vset.pattern.permute.xlu0 0
  %5506 = vperm.xlu0 %5505, %v5440
  %v5507 = vpop.permute.xlu0 %5506
  %5510 = vset.pattern.permute.xlu0 0
  %5511 = vperm.xlu0 %5510, %v5441
  %v5512 = vpop.permute.xlu0 %5511
  %5515 = vset.pattern.permute.xlu0 0
  %5516 = vperm.xlu0 %5515, %v5442
  %v5517 = vpop.permute.xlu0 %5516
  %5520 = vset.pattern.permute.xlu0 0
  %5521 = vperm.xlu0 %5520, %v5443
  %v5522 = vpop.permute.xlu0 %5521
  %v5540 = vunpack.c.l.b16 %v5388
  %v5541 = vunpack.c.l.b16 %v5389
  %v5542 = vunpack.c.l.b16 %v5390
  %v5543 = vunpack.c.l.b16 %v5391
  %v5544 = vunpack.c.l.b16 %v5392
  %v5545 = vunpack.c.l.b16 %v5393
  %v5546 = vunpack.c.l.b16 %v5394
  %v5547 = vunpack.c.l.b16 %v5395
  %v5548 = vunpack.c.l.b16 %v5396
  %v5549 = vunpack.c.l.b16 %v5397
  %v5550 = vunpack.c.l.b16 %v5398
  %v5551 = vunpack.c.l.b16 %v5399
  %v5552 = vunpack.c.l.b16 %v5400
  %v5553 = vunpack.c.l.b16 %v5401
  %v5554 = vunpack.c.l.b16 %v5402
  %v5555 = vunpack.c.l.b16 %v5403
  %v5556 = vpack.c.b16 %v5541, %v5540
  %v5557 = vpack.c.b16 %v5543, %v5542
  %v5558 = vpack.c.b16 %v5545, %v5544
  %v5559 = vpack.c.b16 %v5547, %v5546
  %v5560 = vpack.c.b16 %v5549, %v5548
  %v5561 = vpack.c.b16 %v5551, %v5550
  %v5562 = vpack.c.b16 %v5553, %v5552
  %v5563 = vpack.c.b16 %v5555, %v5554
  %5572 = vmatpush.bf16.msra.mxu0 %v5427
  %5573 = vmatpush.bf16.msra.mxu0 %v5426
  %5574 = vmatpush.bf16.msra.mxu0 %v5425
  %5575 = vmatpush.bf16.msra.mxu0 %v5424
  %5576 = vmatpush.bf16.msra.mxu0 %v5423
  %5577 = vmatpush.bf16.msra.mxu0 %v5422
  %5578 = vmatpush.bf16.msra.mxu0 %v5421
  %5579 = vmatpush.bf16.msra.mxu0 %v5420
  %5580 = vmatmul.bf16.gmra.mxu0 %v5556
  %v5581 = vpop.f32.mrf.mxu0
  %v5582 = vadd.f32 %v5447, %v5581
  %v5583 = vpop.f32.mrf.mxu0
  %v5584 = vadd.f32 %v5452, %v5583
  %5585 = vmatmul.bf16.gmra.mxu0 %v5557
  %v5586 = vpop.f32.mrf.mxu0
  %v5587 = vadd.f32 %v5457, %v5586
  %v5588 = vpop.f32.mrf.mxu0
  %v5589 = vadd.f32 %v5462, %v5588
  %5590 = vmatmul.bf16.gmra.mxu0 %v5558
  %v5591 = vpop.f32.mrf.mxu0
  %v5592 = vadd.f32 %v5467, %v5591
  %v5593 = vpop.f32.mrf.mxu0
  %v5594 = vadd.f32 %v5472, %v5593
  %5595 = vmatmul.bf16.gmra.mxu0 %v5559
  %v5596 = vpop.f32.mrf.mxu0
  %v5597 = vadd.f32 %v5477, %v5596
  %v5598 = vpop.f32.mrf.mxu0
  %v5599 = vadd.f32 %v5482, %v5598
  %5600 = vmatmul.bf16.gmra.mxu0 %v5560
  %v5601 = vpop.f32.mrf.mxu0
  %v5602 = vadd.f32 %v5487, %v5601
  %v5603 = vpop.f32.mrf.mxu0
  %v5604 = vadd.f32 %v5492, %v5603
  %5605 = vmatmul.bf16.gmra.mxu0 %v5561
  %v5606 = vpop.f32.mrf.mxu0
  %v5607 = vadd.f32 %v5497, %v5606
  %v5608 = vpop.f32.mrf.mxu0
  %v5609 = vadd.f32 %v5502, %v5608
  %5610 = vmatmul.bf16.gmra.mxu0 %v5562
  %v5611 = vpop.f32.mrf.mxu0
  %v5612 = vadd.f32 %v5507, %v5611
  %v5613 = vpop.f32.mrf.mxu0
  %v5614 = vadd.f32 %v5512, %v5613
  %5615 = vmatmul.bf16.gmra.mxu0 %v5563
  %v5616 = vpop.f32.mrf.mxu0
  %v5617 = vadd.f32 %v5517, %v5616
  %v5618 = vpop.f32.mrf.mxu0
  %v5619 = vadd.f32 %v5522, %v5618
  %5620 = vdwg.mxu0
  %5621 = vst.msk [vmem:[%s145] sm:$0xff] %vm380, %v5582
  %5622 = vst.msk [vmem:[%s145 + $0x8] sm:$0xff] %vm380, %v5584
  %5623 = vst.msk [vmem:[%s145 + $0x10] sm:$0xff] %vm380, %v5587
  %5624 = vst.msk [vmem:[%s145 + $0x18] sm:$0xff] %vm380, %v5589
  %5625 = vst.msk [vmem:[%s145 + $0x20] sm:$0xff] %vm380, %v5592
  %5626 = vst.msk [vmem:[%s145 + $0x28] sm:$0xff] %vm380, %v5594
  %5627 = vst.msk [vmem:[%s145 + $0x30] sm:$0xff] %vm380, %v5597
  %5628 = vst.msk [vmem:[%s145 + $0x38] sm:$0xff] %vm380, %v5599
  %5629 = vst.msk [vmem:[%s145 + $0x40] sm:$0xff] %vm380, %v5602
  %5630 = vst.msk [vmem:[%s145 + $0x48] sm:$0xff] %vm380, %v5604
  %5631 = vst.msk [vmem:[%s145 + $0x50] sm:$0xff] %vm380, %v5607
  %5632 = vst.msk [vmem:[%s145 + $0x58] sm:$0xff] %vm380, %v5609
  %5633 = vst.msk [vmem:[%s145 + $0x60] sm:$0xff] %vm380, %v5612
  %5634 = vst.msk [vmem:[%s145 + $0x68] sm:$0xff] %vm380, %v5614
  %5635 = vst.msk [vmem:[%s145 + $0x70] sm:$0xff] %vm380, %v5617
  %5636 = vst.msk [vmem:[%s145 + $0x78] sm:$0xff] %vm380, %v5619
  %v5637 = vld [vmem:[%s99] sm:$0xff]
  %v5638 = vld [vmem:[%s99 + $0x8] sm:$0xff]
  %v5639 = vld [vmem:[%s99 + $0x10] sm:$0xff]
  %v5640 = vld [vmem:[%s99 + $0x18] sm:$0xff]
  %v5641 = vld [vmem:[%s99 + $0x20] sm:$0xff]
  %v5642 = vld [vmem:[%s99 + $0x28] sm:$0xff]
  %v5643 = vld [vmem:[%s99 + $0x30] sm:$0xff]
  %v5644 = vld [vmem:[%s99 + $0x38] sm:$0xff]
  %v5645 = vld [vmem:[%s99 + $0x40] sm:$0xff]
  %v5646 = vld [vmem:[%s99 + $0x48] sm:$0xff]
  %v5647 = vld [vmem:[%s99 + $0x50] sm:$0xff]
  %v5648 = vld [vmem:[%s99 + $0x58] sm:$0xff]
  %v5649 = vld [vmem:[%s99 + $0x60] sm:$0xff]
  %v5650 = vld [vmem:[%s99 + $0x68] sm:$0xff]
  %v5651 = vld [vmem:[%s99 + $0x70] sm:$0xff]
  %v5652 = vld [vmem:[%s99 + $0x78] sm:$0xff]
  %5654 = vset.pattern.permute.xlu0 0
  %5655 = vperm.xlu0 %5654, %v5637
  %v5656 = vpop.permute.xlu0 %5655
  %5659 = vset.pattern.permute.xlu0 0
  %5660 = vperm.xlu0 %5659, %v5638
  %v5661 = vpop.permute.xlu0 %5660
  %5664 = vset.pattern.permute.xlu0 0
  %5665 = vperm.xlu0 %5664, %v5639
  %v5666 = vpop.permute.xlu0 %5665
  %5669 = vset.pattern.permute.xlu0 0
  %5670 = vperm.xlu0 %5669, %v5640
  %v5671 = vpop.permute.xlu0 %5670
  %5674 = vset.pattern.permute.xlu0 0
  %5675 = vperm.xlu0 %5674, %v5641
  %v5676 = vpop.permute.xlu0 %5675
  %5679 = vset.pattern.permute.xlu0 0
  %5680 = vperm.xlu0 %5679, %v5642
  %v5681 = vpop.permute.xlu0 %5680
  %5684 = vset.pattern.permute.xlu0 0
  %5685 = vperm.xlu0 %5684, %v5643
  %v5686 = vpop.permute.xlu0 %5685
  %5689 = vset.pattern.permute.xlu0 0
  %5690 = vperm.xlu0 %5689, %v5644
  %v5691 = vpop.permute.xlu0 %5690
  %5694 = vset.pattern.permute.xlu0 0
  %5695 = vperm.xlu0 %5694, %v5645
  %v5696 = vpop.permute.xlu0 %5695
  %5699 = vset.pattern.permute.xlu0 0
  %5700 = vperm.xlu0 %5699, %v5646
  %v5701 = vpop.permute.xlu0 %5700
  %5704 = vset.pattern.permute.xlu0 0
  %5705 = vperm.xlu0 %5704, %v5647
  %v5706 = vpop.permute.xlu0 %5705
  %5709 = vset.pattern.permute.xlu0 0
  %5710 = vperm.xlu0 %5709, %v5648
  %v5711 = vpop.permute.xlu0 %5710
  %5714 = vset.pattern.permute.xlu0 0
  %5715 = vperm.xlu0 %5714, %v5649
  %v5716 = vpop.permute.xlu0 %5715
  %5719 = vset.pattern.permute.xlu0 0
  %5720 = vperm.xlu0 %5719, %v5650
  %v5721 = vpop.permute.xlu0 %5720
  %5724 = vset.pattern.permute.xlu0 0
  %5725 = vperm.xlu0 %5724, %v5651
  %v5726 = vpop.permute.xlu0 %5725
  %5729 = vset.pattern.permute.xlu0 0
  %5730 = vperm.xlu0 %5729, %v5652
  %v5731 = vpop.permute.xlu0 %5730
  %v5733 = vmul.f32 %v3749, %v5656
  %v5734 = vmul.f32 %v3750, %v5661
  %v5735 = vmul.f32 %v3751, %v5666
  %v5736 = vmul.f32 %v3752, %v5671
  %v5737 = vmul.f32 %v3753, %v5676
  %v5738 = vmul.f32 %v3754, %v5681
  %v5739 = vmul.f32 %v3755, %v5686
  %v5740 = vmul.f32 %v3756, %v5691
  %v5741 = vmul.f32 %v3757, %v5696
  %v5742 = vmul.f32 %v3758, %v5701
  %v5743 = vmul.f32 %v3759, %v5706
  %v5744 = vmul.f32 %v3760, %v5711
  %v5745 = vmul.f32 %v3761, %v5716
  %v5746 = vmul.f32 %v3762, %v5721
  %v5747 = vmul.f32 %v3763, %v5726
  %v5748 = vmul.f32 %v3764, %v5731
  %5749 = vset.pattern.permute.xlu0 1
  %5750 = vperm.xlu0 %5749, %v5637
  %v5751 = vpop.permute.xlu0 %5750
  %5753 = vset.pattern.permute.xlu0 1
  %5754 = vperm.xlu0 %5753, %v5638
  %v5755 = vpop.permute.xlu0 %5754
  %5757 = vset.pattern.permute.xlu0 1
  %5758 = vperm.xlu0 %5757, %v5639
  %v5759 = vpop.permute.xlu0 %5758
  %5761 = vset.pattern.permute.xlu0 1
  %5762 = vperm.xlu0 %5761, %v5640
  %v5763 = vpop.permute.xlu0 %5762
  %5765 = vset.pattern.permute.xlu0 1
  %5766 = vperm.xlu0 %5765, %v5641
  %v5767 = vpop.permute.xlu0 %5766
  %5769 = vset.pattern.permute.xlu0 1
  %5770 = vperm.xlu0 %5769, %v5642
  %v5771 = vpop.permute.xlu0 %5770
  %5773 = vset.pattern.permute.xlu0 1
  %5774 = vperm.xlu0 %5773, %v5643
  %v5775 = vpop.permute.xlu0 %5774
  %5777 = vset.pattern.permute.xlu0 1
  %5778 = vperm.xlu0 %5777, %v5644
  %v5779 = vpop.permute.xlu0 %5778
  %5781 = vset.pattern.permute.xlu0 1
  %5782 = vperm.xlu0 %5781, %v5645
  %v5783 = vpop.permute.xlu0 %5782
  %5785 = vset.pattern.permute.xlu0 1
  %5786 = vperm.xlu0 %5785, %v5646
  %v5787 = vpop.permute.xlu0 %5786
  %5789 = vset.pattern.permute.xlu0 1
  %5790 = vperm.xlu0 %5789, %v5647
  %v5791 = vpop.permute.xlu0 %5790
  %5793 = vset.pattern.permute.xlu0 1
  %5794 = vperm.xlu0 %5793, %v5648
  %v5795 = vpop.permute.xlu0 %5794
  %5797 = vset.pattern.permute.xlu0 1
  %5798 = vperm.xlu0 %5797, %v5649
  %v5799 = vpop.permute.xlu0 %5798
  %5801 = vset.pattern.permute.xlu0 1
  %5802 = vperm.xlu0 %5801, %v5650
  %v5803 = vpop.permute.xlu0 %5802
  %5805 = vset.pattern.permute.xlu0 1
  %5806 = vperm.xlu0 %5805, %v5651
  %v5807 = vpop.permute.xlu0 %5806
  %5809 = vset.pattern.permute.xlu0 1
  %5810 = vperm.xlu0 %5809, %v5652
  %v5811 = vpop.permute.xlu0 %5810
  %v5813 = vmul.f32 %v3766, %v5751
  %v5814 = vmul.f32 %v3767, %v5755
  %v5815 = vmul.f32 %v3768, %v5759
  %v5816 = vmul.f32 %v3769, %v5763
  %v5817 = vmul.f32 %v3770, %v5767
  %v5818 = vmul.f32 %v3771, %v5771
  %v5819 = vmul.f32 %v3772, %v5775
  %v5820 = vmul.f32 %v3773, %v5779
  %v5821 = vmul.f32 %v3774, %v5783
  %v5822 = vmul.f32 %v3775, %v5787
  %v5823 = vmul.f32 %v3776, %v5791
  %v5824 = vmul.f32 %v3777, %v5795
  %v5825 = vmul.f32 %v3778, %v5799
  %v5826 = vmul.f32 %v3779, %v5803
  %v5827 = vmul.f32 %v3780, %v5807
  %v5828 = vmul.f32 %v3781, %v5811
  %5845 = vrot.lane.b32.xlu0 %v5813, 16
  %v5846 = vpop.permute.xlu0 %5845
  %5847 = vrot.lane.b32.xlu0 %v5814, 16
  %v5848 = vpop.permute.xlu0 %5847
  %5849 = vrot.lane.b32.xlu0 %v5815, 16
  %v5850 = vpop.permute.xlu0 %5849
  %5851 = vrot.lane.b32.xlu0 %v5816, 16
  %v5852 = vpop.permute.xlu0 %5851
  %5853 = vrot.lane.b32.xlu0 %v5817, 16
  %v5854 = vpop.permute.xlu0 %5853
  %5855 = vrot.lane.b32.xlu0 %v5818, 16
  %v5856 = vpop.permute.xlu0 %5855
  %5857 = vrot.lane.b32.xlu0 %v5819, 16
  %v5858 = vpop.permute.xlu0 %5857
  %5859 = vrot.lane.b32.xlu0 %v5820, 16
  %v5860 = vpop.permute.xlu0 %5859
  %5861 = vrot.lane.b32.xlu0 %v5821, 16
  %v5862 = vpop.permute.xlu0 %5861
  %5863 = vrot.lane.b32.xlu0 %v5822, 16
  %v5864 = vpop.permute.xlu0 %5863
  %5865 = vrot.lane.b32.xlu0 %v5823, 16
  %v5866 = vpop.permute.xlu0 %5865
  %5867 = vrot.lane.b32.xlu0 %v5824, 16
  %v5868 = vpop.permute.xlu0 %5867
  %5869 = vrot.lane.b32.xlu0 %v5825, 16
  %v5870 = vpop.permute.xlu0 %5869
  %5871 = vrot.lane.b32.xlu0 %v5826, 16
  %v5872 = vpop.permute.xlu0 %5871
  %5873 = vrot.lane.b32.xlu0 %v5827, 16
  %v5874 = vpop.permute.xlu0 %5873
  %5875 = vrot.lane.b32.xlu0 %v5828, 16
  %v5876 = vpop.permute.xlu0 %5875
  %v5893 = vsel %vm360, %v5733, %v5846
  %v5894 = vsel %vm360, %v5734, %v5848
  %v5895 = vsel %vm360, %v5735, %v5850
  %v5896 = vsel %vm360, %v5736, %v5852
  %v5897 = vsel %vm360, %v5737, %v5854
  %v5898 = vsel %vm360, %v5738, %v5856
  %v5899 = vsel %vm360, %v5739, %v5858
  %v5900 = vsel %vm360, %v5740, %v5860
  %v5901 = vsel %vm360, %v5741, %v5862
  %v5902 = vsel %vm360, %v5742, %v5864
  %v5903 = vsel %vm360, %v5743, %v5866
  %v5904 = vsel %vm360, %v5744, %v5868
  %v5905 = vsel %vm360, %v5745, %v5870
  %v5906 = vsel %vm360, %v5746, %v5872
  %v5907 = vsel %vm360, %v5747, %v5874
  %v5908 = vsel %vm360, %v5748, %v5876
  %v5909 = vpack.c.bf16 %v5894, %v5893
  %v5910 = vpack.c.bf16 %v5896, %v5895
  %v5911 = vpack.c.bf16 %v5898, %v5897
  %v5912 = vpack.c.bf16 %v5900, %v5899
  %v5913 = vpack.c.bf16 %v5902, %v5901
  %v5914 = vpack.c.bf16 %v5904, %v5903
  %v5915 = vpack.c.bf16 %v5906, %v5905
  %v5916 = vpack.c.bf16 %v5908, %v5907
  %v5917 = vld [vmem:[%s133] sm:$0xf]
  %v5918 = vld [vmem:[%s133 + $0x4] sm:$0xf]
  %v5919 = vld [vmem:[%s133 + $0x8] sm:$0xf]
  %v5920 = vld [vmem:[%s133 + $0xc] sm:$0xf]
  %v5921 = vld [vmem:[%s133 + $0x10] sm:$0xf]
  %v5922 = vld [vmem:[%s133 + $0x14] sm:$0xf]
  %v5923 = vld [vmem:[%s133 + $0x18] sm:$0xf]
  %v5924 = vld [vmem:[%s133 + $0x1c] sm:$0xf]
  %v5925 = vld [vmem:[%s133 + $0x20] sm:$0xf]
  %v5926 = vld [vmem:[%s133 + $0x24] sm:$0xf]
  %v5927 = vld [vmem:[%s133 + $0x28] sm:$0xf]
  %v5928 = vld [vmem:[%s133 + $0x2c] sm:$0xf]
  %v5929 = vld [vmem:[%s133 + $0x30] sm:$0xf]
  %v5930 = vld [vmem:[%s133 + $0x34] sm:$0xf]
  %v5931 = vld [vmem:[%s133 + $0x38] sm:$0xf]
  %v5932 = vld [vmem:[%s133 + $0x3c] sm:$0xf]
  %v5933 = vld [vmem:[%s135] sm:$0xff]
  %v5934 = vld [vmem:[%s135 + $0x8] sm:$0xff]
  %v5935 = vld [vmem:[%s135 + $0x10] sm:$0xff]
  %v5936 = vld [vmem:[%s135 + $0x18] sm:$0xff]
  %v5937 = vld [vmem:[%s135 + $0x20] sm:$0xff]
  %v5938 = vld [vmem:[%s135 + $0x28] sm:$0xff]
  %v5939 = vld [vmem:[%s135 + $0x30] sm:$0xff]
  %v5940 = vld [vmem:[%s135 + $0x38] sm:$0xff]
  %v5941 = vld [vmem:[%s135 + $0x40] sm:$0xff]
  %v5942 = vld [vmem:[%s135 + $0x48] sm:$0xff]
  %v5943 = vld [vmem:[%s135 + $0x50] sm:$0xff]
  %v5944 = vld [vmem:[%s135 + $0x58] sm:$0xff]
  %v5945 = vld [vmem:[%s135 + $0x60] sm:$0xff]
  %v5946 = vld [vmem:[%s135 + $0x68] sm:$0xff]
  %v5947 = vld [vmem:[%s135 + $0x70] sm:$0xff]
  %v5948 = vld [vmem:[%s135 + $0x78] sm:$0xff]
  %5950 = vset.pattern.permute.xlu0 0
  %5951 = vperm.xlu0 %5950, %v5933
  %v5952 = vpop.permute.xlu0 %5951
  %5955 = vset.pattern.permute.xlu0 0
  %5956 = vperm.xlu0 %5955, %v5934
  %v5957 = vpop.permute.xlu0 %5956
  %5960 = vset.pattern.permute.xlu0 0
  %5961 = vperm.xlu0 %5960, %v5935
  %v5962 = vpop.permute.xlu0 %5961
  %5965 = vset.pattern.permute.xlu0 0
  %5966 = vperm.xlu0 %5965, %v5936
  %v5967 = vpop.permute.xlu0 %5966
  %5970 = vset.pattern.permute.xlu0 0
  %5971 = vperm.xlu0 %5970, %v5937
  %v5972 = vpop.permute.xlu0 %5971
  %5975 = vset.pattern.permute.xlu0 0
  %5976 = vperm.xlu0 %5975, %v5938
  %v5977 = vpop.permute.xlu0 %5976
  %5980 = vset.pattern.permute.xlu0 0
  %5981 = vperm.xlu0 %5980, %v5939
  %v5982 = vpop.permute.xlu0 %5981
  %5985 = vset.pattern.permute.xlu0 0
  %5986 = vperm.xlu0 %5985, %v5940
  %v5987 = vpop.permute.xlu0 %5986
  %5990 = vset.pattern.permute.xlu0 0
  %5991 = vperm.xlu0 %5990, %v5941
  %v5992 = vpop.permute.xlu0 %5991
  %5995 = vset.pattern.permute.xlu0 0
  %5996 = vperm.xlu0 %5995, %v5942
  %v5997 = vpop.permute.xlu0 %5996
  %6000 = vset.pattern.permute.xlu0 0
  %6001 = vperm.xlu0 %6000, %v5943
  %v6002 = vpop.permute.xlu0 %6001
  %6005 = vset.pattern.permute.xlu0 0
  %6006 = vperm.xlu0 %6005, %v5944
  %v6007 = vpop.permute.xlu0 %6006
  %6010 = vset.pattern.permute.xlu0 0
  %6011 = vperm.xlu0 %6010, %v5945
  %v6012 = vpop.permute.xlu0 %6011
  %6015 = vset.pattern.permute.xlu0 0
  %6016 = vperm.xlu0 %6015, %v5946
  %v6017 = vpop.permute.xlu0 %6016
  %6020 = vset.pattern.permute.xlu0 0
  %6021 = vperm.xlu0 %6020, %v5947
  %v6022 = vpop.permute.xlu0 %6021
  %6025 = vset.pattern.permute.xlu0 0
  %6026 = vperm.xlu0 %6025, %v5948
  %v6027 = vpop.permute.xlu0 %6026
  %v6045 = vunpack.c.l.b16 %v5917
  %v6046 = vunpack.c.l.b16 %v5918
  %v6047 = vunpack.c.l.b16 %v5919
  %v6048 = vunpack.c.l.b16 %v5920
  %v6049 = vunpack.c.l.b16 %v5921
  %v6050 = vunpack.c.l.b16 %v5922
  %v6051 = vunpack.c.l.b16 %v5923
  %v6052 = vunpack.c.l.b16 %v5924
  %v6053 = vunpack.c.l.b16 %v5925
  %v6054 = vunpack.c.l.b16 %v5926
  %v6055 = vunpack.c.l.b16 %v5927
  %v6056 = vunpack.c.l.b16 %v5928
  %v6057 = vunpack.c.l.b16 %v5929
  %v6058 = vunpack.c.l.b16 %v5930
  %v6059 = vunpack.c.l.b16 %v5931
  %v6060 = vunpack.c.l.b16 %v5932
  %v6061 = vpack.c.b16 %v6046, %v6045
  %v6062 = vpack.c.b16 %v6048, %v6047
  %v6063 = vpack.c.b16 %v6050, %v6049
  %v6064 = vpack.c.b16 %v6052, %v6051
  %v6065 = vpack.c.b16 %v6054, %v6053
  %v6066 = vpack.c.b16 %v6056, %v6055
  %v6067 = vpack.c.b16 %v6058, %v6057
  %v6068 = vpack.c.b16 %v6060, %v6059
  %6077 = vmatpush.bf16.msra.mxu0 %v5916
  %6078 = vmatpush.bf16.msra.mxu0 %v5915
  %6079 = vmatpush.bf16.msra.mxu0 %v5914
  %6080 = vmatpush.bf16.msra.mxu0 %v5913
  %6081 = vmatpush.bf16.msra.mxu0 %v5912
  %6082 = vmatpush.bf16.msra.mxu0 %v5911
  %6083 = vmatpush.bf16.msra.mxu0 %v5910
  %6084 = vmatpush.bf16.msra.mxu0 %v5909
  %6085 = vmatmul.bf16.gmra.mxu0 %v6061
  %v6086 = vpop.f32.mrf.mxu0
  %v6087 = vadd.f32 %v5952, %v6086
  %v6088 = vpop.f32.mrf.mxu0
  %v6089 = vadd.f32 %v5957, %v6088
  %6090 = vmatmul.bf16.gmra.mxu0 %v6062
  %v6091 = vpop.f32.mrf.mxu0
  %v6092 = vadd.f32 %v5962, %v6091
  %v6093 = vpop.f32.mrf.mxu0
  %v6094 = vadd.f32 %v5967, %v6093
  %6095 = vmatmul.bf16.gmra.mxu0 %v6063
  %v6096 = vpop.f32.mrf.mxu0
  %v6097 = vadd.f32 %v5972, %v6096
  %v6098 = vpop.f32.mrf.mxu0
  %v6099 = vadd.f32 %v5977, %v6098
  %6100 = vmatmul.bf16.gmra.mxu0 %v6064
  %v6101 = vpop.f32.mrf.mxu0
  %v6102 = vadd.f32 %v5982, %v6101
  %v6103 = vpop.f32.mrf.mxu0
  %v6104 = vadd.f32 %v5987, %v6103
  %6105 = vmatmul.bf16.gmra.mxu0 %v6065
  %v6106 = vpop.f32.mrf.mxu0
  %v6107 = vadd.f32 %v5992, %v6106
  %v6108 = vpop.f32.mrf.mxu0
  %v6109 = vadd.f32 %v5997, %v6108
  %6110 = vmatmul.bf16.gmra.mxu0 %v6066
  %v6111 = vpop.f32.mrf.mxu0
  %v6112 = vadd.f32 %v6002, %v6111
  %v6113 = vpop.f32.mrf.mxu0
  %v6114 = vadd.f32 %v6007, %v6113
  %6115 = vmatmul.bf16.gmra.mxu0 %v6067
  %v6116 = vpop.f32.mrf.mxu0
  %v6117 = vadd.f32 %v6012, %v6116
  %v6118 = vpop.f32.mrf.mxu0
  %v6119 = vadd.f32 %v6017, %v6118
  %6120 = vmatmul.bf16.gmra.mxu0 %v6068
  %v6121 = vpop.f32.mrf.mxu0
  %v6122 = vadd.f32 %v6022, %v6121
  %v6123 = vpop.f32.mrf.mxu0
  %v6124 = vadd.f32 %v6027, %v6123
  %6125 = vdwg.mxu0
  %v6126 = vadd.f32 %v6087, %v3846
  %v6127 = vadd.f32 %v6089, %v3847
  %v6128 = vadd.f32 %v6092, %v3848
  %v6129 = vadd.f32 %v6094, %v3849
  %v6130 = vadd.f32 %v6097, %v3850
  %v6131 = vadd.f32 %v6099, %v3851
  %v6132 = vadd.f32 %v6102, %v3852
  %v6133 = vadd.f32 %v6104, %v3853
  %v6134 = vadd.f32 %v6107, %v3854
  %v6135 = vadd.f32 %v6109, %v3855
  %v6136 = vadd.f32 %v6112, %v3856
  %v6137 = vadd.f32 %v6114, %v3857
  %v6138 = vadd.f32 %v6117, %v3858
  %v6139 = vadd.f32 %v6119, %v3859
  %v6140 = vadd.f32 %v6122, %v3860
  %v6141 = vadd.f32 %v6124, %v3861
  %6142 = vst.msk [vmem:[%s147] sm:$0xff] %vm380, %v6126
  %6143 = vst.msk [vmem:[%s147 + $0x8] sm:$0xff] %vm380, %v6127
  %6144 = vst.msk [vmem:[%s147 + $0x10] sm:$0xff] %vm380, %v6128
  %6145 = vst.msk [vmem:[%s147 + $0x18] sm:$0xff] %vm380, %v6129
  %6146 = vst.msk [vmem:[%s147 + $0x20] sm:$0xff] %vm380, %v6130
  %6147 = vst.msk [vmem:[%s147 + $0x28] sm:$0xff] %vm380, %v6131
  %6148 = vst.msk [vmem:[%s147 + $0x30] sm:$0xff] %vm380, %v6132
  %6149 = vst.msk [vmem:[%s147 + $0x38] sm:$0xff] %vm380, %v6133
  %6150 = vst.msk [vmem:[%s147 + $0x40] sm:$0xff] %vm380, %v6134
  %6151 = vst.msk [vmem:[%s147 + $0x48] sm:$0xff] %vm380, %v6135
  %6152 = vst.msk [vmem:[%s147 + $0x50] sm:$0xff] %vm380, %v6136
  %6153 = vst.msk [vmem:[%s147 + $0x58] sm:$0xff] %vm380, %v6137
  %6154 = vst.msk [vmem:[%s147 + $0x60] sm:$0xff] %vm380, %v6138
  %6155 = vst.msk [vmem:[%s147 + $0x68] sm:$0xff] %vm380, %v6139
  %6156 = vst.msk [vmem:[%s147 + $0x70] sm:$0xff] %vm380, %v6140
  %6157 = vst.msk [vmem:[%s147 + $0x78] sm:$0xff] %vm380, %v6141
  // Predicated region
  $region274: #{three_stage_lgf_pallas.1} parent=0 // pred_check
    _
  $region275: #{three_stage_lgf_pallas.1} parent=0 // pred_check_branch
    %6159 = sbr.rel (0) target = $region277
  $region276: #{three_stage_lgf_pallas.1} parent=0 // pred_region
    _
  $region277: #{three_stage_lgf_pallas.1} parent=0 // pred_fallthru
    _
  // Predicated region
  $region278: #{three_stage_lgf_pallas.1} parent=0 // pred_check
    _
  $region279: #{three_stage_lgf_pallas.1} parent=0 // pred_check_branch
    %6161 = sbr.rel (0) target = $region281
  $region280: #{three_stage_lgf_pallas.1} parent=0 // pred_region
    _
  $region281: #{three_stage_lgf_pallas.1} parent=0 // pred_fallthru
    _
  // Predicated region
  $region282: #{three_stage_lgf_pallas.1} parent=0 // pred_check
    _
  $region283: #{three_stage_lgf_pallas.1} parent=0 // pred_check_branch
    %6163 = sbr.rel (0) target = $region285
  $region284: #{three_stage_lgf_pallas.1} parent=0 // pred_region
    _
  $region285: #{three_stage_lgf_pallas.1} parent=0 // pred_fallthru
    _
  // Predicated region
  $region286: #{three_stage_lgf_pallas.1} parent=0 // pred_check
    _
  $region287: #{three_stage_lgf_pallas.1} parent=0 // pred_check_branch
    %6165 = sbr.rel (0) target = $region289
  $region288: #{three_stage_lgf_pallas.1} parent=0 // pred_region
    _
  $region289: #{three_stage_lgf_pallas.1} parent=0 // pred_fallthru
    _
  // Predicated region
  $region290: #{three_stage_lgf_pallas.1} parent=0 // pred_check
    _
  $region291: #{three_stage_lgf_pallas.1} parent=0 // pred_check_branch
    %6167 = sbr.rel (0) target = $region293
  $region292: #{three_stage_lgf_pallas.1} parent=0 // pred_region
    _
  $region293: #{three_stage_lgf_pallas.1} parent=0 // pred_fallthru
    _
  // Predicated region
  $region294: #{three_stage_lgf_pallas.1} parent=0 // pred_check
    _
  $region295: #{three_stage_lgf_pallas.1} parent=0 // pred_check_branch
    %6169 = sbr.rel (0) target = $region297
  $region296: #{three_stage_lgf_pallas.1} parent=0 // pred_region
    _
  $region297: #{three_stage_lgf_pallas.1} parent=0 // pred_fallthru
    _
  // Predicated region
  $region298: #{three_stage_lgf_pallas.1} parent=0 // pred_check
    _
  $region299: #{three_stage_lgf_pallas.1} parent=0 // pred_check_branch
    %6171 = sbr.rel (0) target = $region301
  $region300: #{three_stage_lgf_pallas.1} parent=0 // pred_region
    _
  $region301: #{three_stage_lgf_pallas.1} parent=0 // pred_fallthru
    _
  // Predicated region
  $region302: #{three_stage_lgf_pallas.1} parent=0 // pred_check
    _
  $region303: #{three_stage_lgf_pallas.1} parent=0 // pred_check_branch
    %6173 = sbr.rel (0) target = $region305
  $region304: #{three_stage_lgf_pallas.1} parent=0 // pred_region
    _
  $region305: #{three_stage_lgf_pallas.1} parent=0 // pred_fallthru
    _
  // Predicated region
  $region306: #{three_stage_lgf_pallas.1} parent=0 // pred_check
    _
  $region307: #{three_stage_lgf_pallas.1} parent=0 // pred_check_branch
    %6175 = sbr.rel (0) target = $region309
  $region308: #{three_stage_lgf_pallas.1} parent=0 // pred_region
    _
  $region309: #{three_stage_lgf_pallas.1} parent=0 // pred_fallthru
    _
  // Predicated region
  $region310: #{three_stage_lgf_pallas.1} parent=0 // pred_check
    _
  $region311: #{three_stage_lgf_pallas.1} parent=0 // pred_check_branch
    %6177 = sbr.rel (0) target = $region313
  $region312: #{three_stage_lgf_pallas.1} parent=0 // pred_region
    _
  $region313: #{three_stage_lgf_pallas.1} parent=0 // pred_fallthru
    _
  // Predicated region
  $region314: #{three_stage_lgf_pallas.1} parent=0 // pred_check
    _
  $region315: #{three_stage_lgf_pallas.1} parent=0 // pred_check_branch
    %6179 = sbr.rel (0) target = $region317
  $region316: #{three_stage_lgf_pallas.1} parent=0 // pred_region
    _
  $region317: #{three_stage_lgf_pallas.1} parent=0 // pred_fallthru
    _
  // Predicated region
  $region318: #{three_stage_lgf_pallas.1} parent=0 // pred_check
    _
  $region319: #{three_stage_lgf_pallas.1} parent=0 // pred_check_branch
    %6181 = sbr.rel (0) target = $region321
  $region320: #{three_stage_lgf_pallas.1} parent=0 // pred_region
    _
  $region321: #{three_stage_lgf_pallas.1} parent=0 // pred_fallthru
    _

</llo_original>
